<compile_context>
chip_gen: v6e
topology: v6e:2x2x1
jax: 0.10.0
libtpu: 0.0.40
codegen_flags: <defaults>
</compile_context>

<pallas_src>
import jax
import jax.numpy as jnp
import numpy as np
from jax.experimental import pallas as pl
from jax.experimental.pallas import tpu as pltpu


# ----------------------------------------------------------------------------
# Fused kernel builder. All sizes are static (closed over).
# ----------------------------------------------------------------------------
def _build_fused_gru_kernel(T, B, C, H, L, dirs, S):
    TB = T * B
    H2 = 2 * H
    H3 = 3 * H
    DH = dirs * H

    def kernel(*refs):
        it = iter(refs)
        x_ref = next(it)                              # (T, B, C)
        wih0_ref = next(it)                           # (dirs, C, 3H)
        wihr_ref = next(it) if L >= 2 else None       # ((L-1)*dirs, DH, 3H)
        whh_ref = next(it)                            # (L*dirs, H, 3H)
        bgi_ref = next(it)                            # (L*dirs, 1, 3H) folded
        bhn_ref = next(it)                            # (L*dirs, 1, H)
        wcl_ref = next(it)                            # (DH, S)
        bcl_ref = next(it)                            # (1, S)
        out_ref = next(it)                            # (T, S)
        gi_ref = next(it)                             # VMEM (dirs, T, B, 3H)
        act_a = next(it)                              # VMEM (T, B, DH)
        act_b = next(it)                              # VMEM (T, B, DH)
        acts = (act_a, act_b)

        # hoisted once per kernel
        x2d = x_ref[...].reshape(TB, C)

        for l in range(L):
            in_act = None if l == 0 else acts[(l - 1) % 2]
            out_act = acts[l % 2]

            if l >= 1:
                a2d = in_act[...].reshape(TB, DH)     # hoisted once per layer

            # ---- gi pre-pass: ONE fused-gate matmul per direction ----------
            for d in range(dirs):
                cell = l * dirs + d
                if l == 0:
                    gi = jnp.dot(x2d, wih0_ref[d],
                                 preferred_element_type=jnp.float32)
                else:
                    gi = jnp.dot(a2d, wihr_ref[(l - 1) * dirs + d],
                                 preferred_element_type=jnp.float32)
                gi = gi + bgi_ref[cell]               # pre-folded biases
                gi_ref[d] = gi.reshape(T, B, H3)

            # ---- interleaved sequential recurrence (both dirs per step) ----
            whh_slabs = [whh_ref[l * dirs + d] for d in range(dirs)]   # (H,3H)
            bhn_cells = [bhn_ref[l * dirs + d] for d in range(dirs)]   # (1,H)
            hs = [None] * dirs
            for s in range(T):                        # static, fully unrolled
                for d in range(dirs):
                    t = s if d == 0 else (T - 1 - s)
                    gi_t = gi_ref[d, t]               # (B, 3H)
                    h = hs[d]
                    if h is None:                     # step 0: h == 0, no matmul
                        rz = jax.nn.sigmoid(gi_t[:, :H2])
                        r = rz[:, :H]
                        z = rz[:, H:H2]
                        n = jnp.tanh(gi_t[:, H2:] + r * bhn_cells[d])
                        h = (1.0 - z) * n
                    else:
                        gh = jnp.dot(h, whh_slabs[d],
                                     preferred_element_type=jnp.float32)
                        rz = jax.nn.sigmoid(gi_t[:, :H2] + gh[:, :H2])
                        r = rz[:, :H]
                        z = rz[:, H:H2]
                        n = jnp.tanh(gi_t[:, H2:] + r * (gh[:, H2:] + bhn_cells[d]))
                        h = (1.0 - z) * n + z * h
                    hs[d] = h
                    out_act[t, :, d * H:(d + 1) * H] = h

        # ---- head: mean over batch (dim=1 of (T,B,dirs*H)) + Linear ---------
        final = acts[(L - 1) % 2]
        m = jnp.mean(final[...], axis=1)              # (T, DH) sublane reduce
        out_ref[...] = (jnp.dot(m, wcl_ref[...],
                                preferred_element_type=jnp.float32)
                        + bcl_ref[...])

    return kernel


# ----------------------------------------------------------------------------
# Parameter init (PyTorch-like layout, deterministic) + one-time kernel prep.
# ----------------------------------------------------------------------------
def init_params(key, num_layers, num_stimuli, hidden, channels, bidirectional):
    dirs = 2 if bidirectional else 1
    s = 1.0 / np.sqrt(hidden)
    params = {"layers": []}
    k = key
    for l in range(num_layers):
        in_dim = channels if l == 0 else hidden * dirs
        layer = []
        for _d in range(dirs):
            k, k1, k2, k3, k4 = jax.random.split(k, 5)
            wih = jax.random.uniform(k1, (3 * hidden, in_dim), jnp.float32, -s, s)
            whh = jax.random.uniform(k2, (3 * hidden, hidden), jnp.float32, -s, s)
            bih = jax.random.uniform(k3, (3 * hidden,), jnp.float32, -s, s)
            bhh = jax.random.uniform(k4, (3 * hidden,), jnp.float32, -s, s)
            layer.append((wih, whh, bih, bhh))
        params["layers"].append(layer)
    out_dim = hidden * dirs
    k, k1, k2 = jax.random.split(k, 3)
    sc = 1.0 / np.sqrt(out_dim)
    params["w_cl"] = jax.random.uniform(k1, (num_stimuli, out_dim), jnp.float32, -sc, sc)
    params["b_cl"] = jax.random.uniform(k2, (num_stimuli,), jnp.float32, -sc, sc)
    return params


def prepare_params(params, num_layers, hidden, bidirectional):
    """One-time conversion from PyTorch layout to kernel layout:
    fused-gate (I,3H)/(H,3H) transposed weight slabs, folded biases."""
    dirs = 2 if bidirectional else 1
    H = hidden
    wih0_l, wihr_l, whh_l, bgi_l, bhn_l = [], [], [], [], []
    for l in range(num_layers):
        for d in range(dirs):
            wih, whh, bih, bhh = params["layers"][l][d]
            wih_t = wih.T                    # (I, 3H), gate order [r | z | n]
            whh_t = whh.T                    # (H, 3H)
            whh_l.append(whh_t)
            if l == 0:
                wih0_l.append(wih_t)         # (C, 3H)
            else:
                wihr_l.append(wih_t)         # (dirs*H, 3H)  (PyTorch concat order)
            bgi = jnp.concatenate([
                bih[0 * H:1 * H] + bhh[0 * H:1 * H],   # r: fold both
                bih[1 * H:2 * H] + bhh[1 * H:2 * H],   # z: fold both
                bih[2 * H:3 * H],                       # n: only b_in folds into gi
            ]).reshape(1, 3 * H)
            bgi_l.append(bgi)
            bhn_l.append(bhh[2 * H:3 * H].reshape(1, H))
    prepped = {
        "wih0": jnp.stack(wih0_l),           # (dirs, C, 3H)
        "whh": jnp.stack(whh_l),             # (L*dirs, H, 3H)
        "bgi": jnp.stack(bgi_l),             # (L*dirs, 1, 3H)
        "bhn": jnp.stack(bhn_l),             # (L*dirs, 1, H)
        "wcl": params["w_cl"].T,             # (dirs*H, S)
        "bcl": params["b_cl"].reshape(1, -1),
    }
    if num_layers >= 2:
        prepped["wihr"] = jnp.stack(wihr_l)  # ((L-1)*dirs, dirs*H, 3H)
    return prepped


# ----------------------------------------------------------------------------
# Forward pass (single pallas_call).
# ----------------------------------------------------------------------------
def gru_forward_pallas(prepped, x, *, num_layers, hidden, num_stimuli, bidirectional):
    # TODO(synk): training-mode inter-layer dropout not implemented (dropout=0.0 here).
    dirs = 2 if bidirectional else 1
    T, C, B = x.shape
    H, S, L = hidden, num_stimuli, num_layers
    x_tbc = jnp.transpose(x, (0, 2, 1)).astype(jnp.float32)     # (T, B, C)

    kernel = _build_fused_gru_kernel(T, B, C, H, L, dirs, S)
    args = [x_tbc, prepped["wih0"]]
    if L >= 2:
        args.append(prepped["wihr"])
    args += [prepped["whh"], prepped["bgi"], prepped["bhn"],
             prepped["wcl"], prepped["bcl"]]

    return pl.pallas_call(
        kernel,
        out_shape=jax.ShapeDtypeStruct((T, S), jnp.float32),
        scratch_shapes=[
            pltpu.VMEM((dirs, T, B, 3 * H), jnp.float32),   # gi (3H-wide, per dir)
            pltpu.VMEM((T, B, dirs * H), jnp.float32),      # activations ping
            pltpu.VMEM((T, B, dirs * H), jnp.float32),      # activations pong
        ],
    )(*args)


# ----------------------------------------------------------------------------
# Pure-JAX reference replicating PyTorch nn.GRU semantics (for validation).
# ----------------------------------------------------------------------------
def gru_model_ref(params, x, hidden, bidirectional):
    layer_in = jnp.transpose(x, (0, 2, 1)).astype(jnp.float32)
    T, B, _ = layer_in.shape
    dirs = 2 if bidirectional else 1
    for layer in params["layers"]:
        outs = []
        for d, (wih, whh, bih, bhh) in enumerate(layer):
            h = jnp.zeros((B, hidden), jnp.float32)
            ys = [None] * T
            order = range(T - 1, -1, -1) if d == 1 else range(T)
            for t in order:
                gi = layer_in[t] @ wih.T + bih
                gh = h @ whh.T + bhh
                r = jax.nn.sigmoid(gi[:, :hidden] + gh[:, :hidden])
                z = jax.nn.sigmoid(gi[:, hidden:2 * hidden] + gh[:, hidden:2 * hidden])
                n = jnp.tanh(gi[:, 2 * hidden:] + r * gh[:, 2 * hidden:])
                h = (1.0 - z) * n + z * h
                ys[t] = h
            outs.append(jnp.stack(ys, axis=0))
        layer_in = jnp.concatenate(outs, axis=-1) if dirs == 2 else outs[0]
    m = jnp.mean(layer_in, axis=1)
    return m @ params["w_cl"].T + params["b_cl"]


if __name__ == "__main__":
    number_levels = 2
    number_of_stimuli = 5
    number_hidden = 32
    NUMBER_OF_CHANNELS = 4
    bidirectional = True

    key = jax.random.PRNGKey(0)
    kx, kp = jax.random.split(key)
    # x mirrors the PyTorch call: (D0=8, C=4, D2=16); GRU sees seq=8, batch=16, feat=4.
    x = jax.random.normal(kx, (8, NUMBER_OF_CHANNELS, 16), dtype=jnp.float32)
    params = init_params(kp, number_levels, number_of_stimuli, number_hidden,
                         NUMBER_OF_CHANNELS, bidirectional)
    prepped = prepare_params(params, number_levels, number_hidden, bidirectional)

    fwd = jax.jit(lambda p, xx: gru_forward_pallas(
        p, xx, num_layers=number_levels, hidden=number_hidden,
        num_stimuli=number_of_stimuli, bidirectional=bidirectional))

    out = jax.block_until_ready(fwd(prepped, x))

    ref = gru_model_ref(params, x, number_hidden, bidirectional)
    assert out.shape == (8, number_of_stimuli), out.shape
    np.testing.assert_allclose(np.asarray(out), np.asarray(ref), rtol=2e-3, atol=2e-3)
    print("KERNEL_OK")
</pallas_src>

<mosaic_0001>
module attributes {stable_mosaic.version = 11 : i64} {
  func.func @kernel(%arg0: memref<8x16x4xf32, #tpu.memory_space<vmem>>, %arg1: memref<2x4x96xf32, #tpu.memory_space<vmem>>, %arg2: memref<2x64x96xf32, #tpu.memory_space<vmem>>, %arg3: memref<4x32x96xf32, #tpu.memory_space<vmem>>, %arg4: memref<4x1x96xf32, #tpu.memory_space<vmem>>, %arg5: memref<4x1x32xf32, #tpu.memory_space<vmem>>, %arg6: memref<64x5xf32, #tpu.memory_space<vmem>>, %arg7: memref<1x5xf32, #tpu.memory_space<vmem>>, %arg8: memref<8x5xf32, #tpu.memory_space<vmem>>, %arg9: memref<2x8x16x96xf32, #tpu.memory_space<vmem>>, %arg10: memref<8x16x64xf32, #tpu.memory_space<vmem>>, %arg11: memref<8x16x64xf32, #tpu.memory_space<vmem>>) attributes {dimension_semantics = [], scalar_prefetch = 0 : i64, scratch_operands = 3 : i64, tpu.core_type = #tpu.core_type<tc>} {
    %c0 = arith.constant 0 : index
    %c0_0 = arith.constant 0 : index
    %c0_1 = arith.constant 0 : index
    %0 = vector.load %arg0[%c0, %c0_0, %c0_1] : memref<8x16x4xf32, #tpu.memory_space<vmem>>, vector<8x16x4xf32>
    %1 = vector.shape_cast %0 : vector<8x16x4xf32> to vector<128x4xf32>
    %c0_2 = arith.constant 0 : index
    %c0_3 = arith.constant 0 : index
    %c0_4 = arith.constant 0 : index
    %2 = vector.load %arg1[%c0_2, %c0_3, %c0_4] : memref<2x4x96xf32, #tpu.memory_space<vmem>>, vector<1x4x96xf32>
    %3 = vector.shape_cast %2 : vector<1x4x96xf32> to vector<4x96xf32>
    %cst = arith.constant dense<0.000000e+00> : vector<128x96xf32>
    %4 = tpu.matmul %1, %3, %cst {dimension_numbers = #tpu.dot_dimension_numbers<[1], [0], [0], [1], [0, 0, 1, 1], [], []>} : vector<128x4xf32>, vector<4x96xf32>, vector<128x96xf32> -> vector<128x96xf32>
    %c0_5 = arith.constant 0 : index
    %c0_6 = arith.constant 0 : index
    %c0_7 = arith.constant 0 : index
    %5 = vector.load %arg4[%c0_5, %c0_6, %c0_7] : memref<4x1x96xf32, #tpu.memory_space<vmem>>, vector<1x1x96xf32>
    %6 = vector.shape_cast %5 : vector<1x1x96xf32> to vector<1x96xf32>
    %7 = vector.broadcast %6 : vector<1x96xf32> to vector<128x96xf32>
    %8 = arith.addf %4, %7 : vector<128x96xf32>
    %9 = vector.shape_cast %8 : vector<128x96xf32> to vector<8x16x96xf32>
    %c0_8 = arith.constant 0 : index
    %c0_9 = arith.constant 0 : index
    %c0_10 = arith.constant 0 : index
    %c0_11 = arith.constant 0 : index
    %10 = vector.load %arg9[%c0_8, %c0_9, %c0_10, %c0_11] : memref<2x8x16x96xf32, #tpu.memory_space<vmem>>, vector<1x8x16x96xf32>
    %11 = vector.shape_cast %10 : vector<1x8x16x96xf32> to vector<8x16x96xf32>
    %12 = vector.shape_cast %9 : vector<8x16x96xf32> to vector<1x8x16x96xf32>
    tpu.vector_store %arg9[%c0_8, %c0_9, %c0_10, %c0_11], %12 {strides = array<i32>} : memref<2x8x16x96xf32, #tpu.memory_space<vmem>>, vector<1x8x16x96xf32>,
    %c1 = arith.constant 1 : index
    %c0_12 = arith.constant 0 : index
    %c0_13 = arith.constant 0 : index
    %13 = vector.load %arg1[%c1, %c0_12, %c0_13] : memref<2x4x96xf32, #tpu.memory_space<vmem>>, vector<1x4x96xf32>
    %14 = vector.shape_cast %13 : vector<1x4x96xf32> to vector<4x96xf32>
    %cst_14 = arith.constant dense<0.000000e+00> : vector<128x96xf32>
    %15 = tpu.matmul %1, %14, %cst_14 {dimension_numbers = #tpu.dot_dimension_numbers<[1], [0], [0], [1], [0, 0, 1, 1], [], []>} : vector<128x4xf32>, vector<4x96xf32>, vector<128x96xf32> -> vector<128x96xf32>
    %c1_15 = arith.constant 1 : index
    %c0_16 = arith.constant 0 : index
    %c0_17 = arith.constant 0 : index
    %16 = vector.load %arg4[%c1_15, %c0_16, %c0_17] : memref<4x1x96xf32, #tpu.memory_space<vmem>>, vector<1x1x96xf32>
    %17 = vector.shape_cast %16 : vector<1x1x96xf32> to vector<1x96xf32>
    %18 = vector.broadcast %17 : vector<1x96xf32> to vector<128x96xf32>
    %19 = arith.addf %15, %18 : vector<128x96xf32>
    %20 = vector.shape_cast %19 : vector<128x96xf32> to vector<8x16x96xf32>
    %c1_18 = arith.constant 1 : index
    %c0_19 = arith.constant 0 : index
    %c0_20 = arith.constant 0 : index
    %c0_21 = arith.constant 0 : index
    %21 = vector.load %arg9[%c1_18, %c0_19, %c0_20, %c0_21] : memref<2x8x16x96xf32, #tpu.memory_space<vmem>>, vector<1x8x16x96xf32>
    %22 = vector.shape_cast %21 : vector<1x8x16x96xf32> to vector<8x16x96xf32>
    %23 = vector.shape_cast %20 : vector<8x16x96xf32> to vector<1x8x16x96xf32>
    tpu.vector_store %arg9[%c1_18, %c0_19, %c0_20, %c0_21], %23 {strides = array<i32>} : memref<2x8x16x96xf32, #tpu.memory_space<vmem>>, vector<1x8x16x96xf32>,
    %c0_22 = arith.constant 0 : index
    %c0_23 = arith.constant 0 : index
    %c0_24 = arith.constant 0 : index
    %24 = vector.load %arg3[%c0_22, %c0_23, %c0_24] : memref<4x32x96xf32, #tpu.memory_space<vmem>>, vector<1x32x96xf32>
    %25 = vector.shape_cast %24 : vector<1x32x96xf32> to vector<32x96xf32>
    %c1_25 = arith.constant 1 : index
    %c0_26 = arith.constant 0 : index
    %c0_27 = arith.constant 0 : index
    %26 = vector.load %arg3[%c1_25, %c0_26, %c0_27] : memref<4x32x96xf32, #tpu.memory_space<vmem>>, vector<1x32x96xf32>
    %27 = vector.shape_cast %26 : vector<1x32x96xf32> to vector<32x96xf32>
    %c0_28 = arith.constant 0 : index
    %c0_29 = arith.constant 0 : index
    %c0_30 = arith.constant 0 : index
    %28 = vector.load %arg5[%c0_28, %c0_29, %c0_30] : memref<4x1x32xf32, #tpu.memory_space<vmem>>, vector<1x1x32xf32>
    %29 = vector.shape_cast %28 : vector<1x1x32xf32> to vector<1x32xf32>
    %c1_31 = arith.constant 1 : index
    %c0_32 = arith.constant 0 : index
    %c0_33 = arith.constant 0 : index
    %30 = vector.load %arg5[%c1_31, %c0_32, %c0_33] : memref<4x1x32xf32, #tpu.memory_space<vmem>>, vector<1x1x32xf32>
    %31 = vector.shape_cast %30 : vector<1x1x32xf32> to vector<1x32xf32>
    %c0_34 = arith.constant 0 : index
    %c0_35 = arith.constant 0 : index
    %c0_36 = arith.constant 0 : index
    %c0_37 = arith.constant 0 : index
    %32 = vector.load %arg9[%c0_34, %c0_35, %c0_36, %c0_37] : memref<2x8x16x96xf32, #tpu.memory_space<vmem>>, vector<1x1x16x96xf32>
    %33 = vector.shape_cast %32 : vector<1x1x16x96xf32> to vector<16x96xf32>
    %34 = vector.extract_strided_slice %33 {offsets = [0, 0], sizes = [16, 64], strides = [1, 1]} : vector<16x96xf32> to vector<16x64xf32>
    %35 = arith.negf %34 : vector<16x64xf32>
    %36 = math.exp %35 : vector<16x64xf32>
    %cst_38 = arith.constant 1.000000e+00 : f32
    %37 = vector.broadcast %cst_38 : f32 to vector<16x64xf32>
    %38 = arith.addf %37, %36 : vector<16x64xf32>
    %39 = arith.divf %37, %38 : vector<16x64xf32>
    %40 = vector.extract_strided_slice %39 {offsets = [0, 0], sizes = [16, 32], strides = [1, 1]} : vector<16x64xf32> to vector<16x32xf32>
    %41 = vector.extract_strided_slice %39 {offsets = [0, 32], sizes = [16, 32], strides = [1, 1]} : vector<16x64xf32> to vector<16x32xf32>
    %42 = vector.extract_strided_slice %33 {offsets = [0, 64], sizes = [16, 32], strides = [1, 1]} : vector<16x96xf32> to vector<16x32xf32>
    %43 = vector.broadcast %29 : vector<1x32xf32> to vector<16x32xf32>
    %44 = arith.mulf %40, %43 : vector<16x32xf32>
    %45 = arith.addf %42, %44 : vector<16x32xf32>
    %46 = math.tanh %45 : vector<16x32xf32>
    %cst_39 = arith.constant 1.000000e+00 : f32
    %47 = vector.broadcast %cst_39 : f32 to vector<16x32xf32>
    %48 = arith.subf %47, %41 : vector<16x32xf32>
    %49 = arith.mulf %48, %46 : vector<16x32xf32>
    %c0_40 = arith.constant 0 : index
    %c0_41 = arith.constant 0 : index
    %c0_42 = arith.constant 0 : index
    %50 = vector.load %arg10[%c0_40, %c0_41, %c0_42] : memref<8x16x64xf32, #tpu.memory_space<vmem>>, vector<1x16x32xf32>
    %51 = vector.shape_cast %50 : vector<1x16x32xf32> to vector<16x32xf32>
    %52 = vector.shape_cast %49 : vector<16x32xf32> to vector<1x16x32xf32>
    tpu.vector_store %arg10[%c0_40, %c0_41, %c0_42], %52 {strides = array<i32>} : memref<8x16x64xf32, #tpu.memory_space<vmem>>, vector<1x16x32xf32>,
    %c1_43 = arith.constant 1 : index
    %c7 = arith.constant 7 : index
    %c0_44 = arith.constant 0 : index
    %c0_45 = arith.constant 0 : index
    %53 = vector.load %arg9[%c1_43, %c7, %c0_44, %c0_45] : memref<2x8x16x96xf32, #tpu.memory_space<vmem>>, vector<1x1x16x96xf32>
    %54 = vector.shape_cast %53 : vector<1x1x16x96xf32> to vector<16x96xf32>
    %55 = vector.extract_strided_slice %54 {offsets = [0, 0], sizes = [16, 64], strides = [1, 1]} : vector<16x96xf32> to vector<16x64xf32>
    %56 = arith.negf %55 : vector<16x64xf32>
    %57 = math.exp %56 : vector<16x64xf32>
    %cst_46 = arith.constant 1.000000e+00 : f32
    %58 = vector.broadcast %cst_46 : f32 to vector<16x64xf32>
    %59 = arith.addf %58, %57 : vector<16x64xf32>
    %60 = arith.divf %58, %59 : vector<16x64xf32>
    %61 = vector.extract_strided_slice %60 {offsets = [0, 0], sizes = [16, 32], strides = [1, 1]} : vector<16x64xf32> to vector<16x32xf32>
    %62 = vector.extract_strided_slice %60 {offsets = [0, 32], sizes = [16, 32], strides = [1, 1]} : vector<16x64xf32> to vector<16x32xf32>
    %63 = vector.extract_strided_slice %54 {offsets = [0, 64], sizes = [16, 32], strides = [1, 1]} : vector<16x96xf32> to vector<16x32xf32>
    %64 = vector.broadcast %31 : vector<1x32xf32> to vector<16x32xf32>
    %65 = arith.mulf %61, %64 : vector<16x32xf32>
    %66 = arith.addf %63, %65 : vector<16x32xf32>
    %67 = math.tanh %66 : vector<16x32xf32>
    %cst_47 = arith.constant 1.000000e+00 : f32
    %68 = vector.broadcast %cst_47 : f32 to vector<16x32xf32>
    %69 = arith.subf %68, %62 : vector<16x32xf32>
    %70 = arith.mulf %69, %67 : vector<16x32xf32>
    %c7_48 = arith.constant 7 : index
    %c0_49 = arith.constant 0 : index
    %c32 = arith.constant 32 : index
    %71 = vector.load %arg10[%c7_48, %c0_49, %c32] : memref<8x16x64xf32, #tpu.memory_space<vmem>>, vector<1x16x32xf32>
    %72 = vector.shape_cast %71 : vector<1x16x32xf32> to vector<16x32xf32>
    %73 = vector.shape_cast %70 : vector<16x32xf32> to vector<1x16x32xf32>
    tpu.vector_store %arg10[%c7_48, %c0_49, %c32], %73 {strides = array<i32>} : memref<8x16x64xf32, #tpu.memory_space<vmem>>, vector<1x16x32xf32>,
    %c0_50 = arith.constant 0 : index
    %c1_51 = arith.constant 1 : index
    %c0_52 = arith.constant 0 : index
    %c0_53 = arith.constant 0 : index
    %74 = vector.load %arg9[%c0_50, %c1_51, %c0_52, %c0_53] : memref<2x8x16x96xf32, #tpu.memory_space<vmem>>, vector<1x1x16x96xf32>
    %75 = vector.shape_cast %74 : vector<1x1x16x96xf32> to vector<16x96xf32>
    %cst_54 = arith.constant dense<0.000000e+00> : vector<16x96xf32>
    %76 = tpu.matmul %49, %25, %cst_54 {dimension_numbers = #tpu.dot_dimension_numbers<[1], [0], [0], [1], [0, 0, 1, 1], [], []>} : vector<16x32xf32>, vector<32x96xf32>, vector<16x96xf32> -> vector<16x96xf32>
    %77 = vector.extract_strided_slice %75 {offsets = [0, 0], sizes = [16, 64], strides = [1, 1]} : vector<16x96xf32> to vector<16x64xf32>
    %78 = vector.extract_strided_slice %76 {offsets = [0, 0], sizes = [16, 64], strides = [1, 1]} : vector<16x96xf32> to vector<16x64xf32>
    %79 = arith.addf %77, %78 : vector<16x64xf32>
    %80 = arith.negf %79 : vector<16x64xf32>
    %81 = math.exp %80 : vector<16x64xf32>
    %cst_55 = arith.constant 1.000000e+00 : f32
    %82 = vector.broadcast %cst_55 : f32 to vector<16x64xf32>
    %83 = arith.addf %82, %81 : vector<16x64xf32>
    %84 = arith.divf %82, %83 : vector<16x64xf32>
    %85 = vector.extract_strided_slice %84 {offsets = [0, 0], sizes = [16, 32], strides = [1, 1]} : vector<16x64xf32> to vector<16x32xf32>
    %86 = vector.extract_strided_slice %84 {offsets = [0, 32], sizes = [16, 32], strides = [1, 1]} : vector<16x64xf32> to vector<16x32xf32>
    %87 = vector.extract_strided_slice %75 {offsets = [0, 64], sizes = [16, 32], strides = [1, 1]} : vector<16x96xf32> to vector<16x32xf32>
    %88 = vector.extract_strided_slice %76 {offsets = [0, 64], sizes = [16, 32], strides = [1, 1]} : vector<16x96xf32> to vector<16x32xf32>
    %89 = vector.broadcast %29 : vector<1x32xf32> to vector<16x32xf32>
    %90 = arith.addf %88, %89 : vector<16x32xf32>
    %91 = arith.mulf %85, %90 : vector<16x32xf32>
    %92 = arith.addf %87, %91 : vector<16x32xf32>
    %93 = math.tanh %92 : vector<16x32xf32>
    %cst_56 = arith.constant 1.000000e+00 : f32
    %94 = vector.broadcast %cst_56 : f32 to vector<16x32xf32>
    %95 = arith.subf %94, %86 : vector<16x32xf32>
    %96 = arith.mulf %95, %93 : vector<16x32xf32>
    %97 = arith.mulf %86, %49 : vector<16x32xf32>
    %98 = arith.addf %96, %97 : vector<16x32xf32>
    %c1_57 = arith.constant 1 : index
    %c0_58 = arith.constant 0 : index
    %c0_59 = arith.constant 0 : index
    %99 = vector.load %arg10[%c1_57, %c0_58, %c0_59] : memref<8x16x64xf32, #tpu.memory_space<vmem>>, vector<1x16x32xf32>
    %100 = vector.shape_cast %99 : vector<1x16x32xf32> to vector<16x32xf32>
    %101 = vector.shape_cast %98 : vector<16x32xf32> to vector<1x16x32xf32>
    tpu.vector_store %arg10[%c1_57, %c0_58, %c0_59], %101 {strides = array<i32>} : memref<8x16x64xf32, #tpu.memory_space<vmem>>, vector<1x16x32xf32>,
    %c1_60 = arith.constant 1 : index
    %c6 = arith.constant 6 : index
    %c0_61 = arith.constant 0 : index
    %c0_62 = arith.constant 0 : index
    %102 = vector.load %arg9[%c1_60, %c6, %c0_61, %c0_62] : memref<2x8x16x96xf32, #tpu.memory_space<vmem>>, vector<1x1x16x96xf32>
    %103 = vector.shape_cast %102 : vector<1x1x16x96xf32> to vector<16x96xf32>
    %cst_63 = arith.constant dense<0.000000e+00> : vector<16x96xf32>
    %104 = tpu.matmul %70, %27, %cst_63 {dimension_numbers = #tpu.dot_dimension_numbers<[1], [0], [0], [1], [0, 0, 1, 1], [], []>} : vector<16x32xf32>, vector<32x96xf32>, vector<16x96xf32> -> vector<16x96xf32>
    %105 = vector.extract_strided_slice %103 {offsets = [0, 0], sizes = [16, 64], strides = [1, 1]} : vector<16x96xf32> to vector<16x64xf32>
    %106 = vector.extract_strided_slice %104 {offsets = [0, 0], sizes = [16, 64], strides = [1, 1]} : vector<16x96xf32> to vector<16x64xf32>
    %107 = arith.addf %105, %106 : vector<16x64xf32>
    %108 = arith.negf %107 : vector<16x64xf32>
    %109 = math.exp %108 : vector<16x64xf32>
    %cst_64 = arith.constant 1.000000e+00 : f32
    %110 = vector.broadcast %cst_64 : f32 to vector<16x64xf32>
    %111 = arith.addf %110, %109 : vector<16x64xf32>
    %112 = arith.divf %110, %111 : vector<16x64xf32>
    %113 = vector.extract_strided_slice %112 {offsets = [0, 0], sizes = [16, 32], strides = [1, 1]} : vector<16x64xf32> to vector<16x32xf32>
    %114 = vector.extract_strided_slice %112 {offsets = [0, 32], sizes = [16, 32], strides = [1, 1]} : vector<16x64xf32> to vector<16x32xf32>
    %115 = vector.extract_strided_slice %103 {offsets = [0, 64], sizes = [16, 32], strides = [1, 1]} : vector<16x96xf32> to vector<16x32xf32>
    %116 = vector.extract_strided_slice %104 {offsets = [0, 64], sizes = [16, 32], strides = [1, 1]} : vector<16x96xf32> to vector<16x32xf32>
    %117 = vector.broadcast %31 : vector<1x32xf32> to vector<16x32xf32>
    %118 = arith.addf %116, %117 : vector<16x32xf32>
    %119 = arith.mulf %113, %118 : vector<16x32xf32>
    %120 = arith.addf %115, %119 : vector<16x32xf32>
    %121 = math.tanh %120 : vector<16x32xf32>
    %cst_65 = arith.constant 1.000000e+00 : f32
    %122 = vector.broadcast %cst_65 : f32 to vector<16x32xf32>
    %123 = arith.subf %122, %114 : vector<16x32xf32>
    %124 = arith.mulf %123, %121 : vector<16x32xf32>
    %125 = arith.mulf %114, %70 : vector<16x32xf32>
    %126 = arith.addf %124, %125 : vector<16x32xf32>
    %c6_66 = arith.constant 6 : index
    %c0_67 = arith.constant 0 : index
    %c32_68 = arith.constant 32 : index
    %127 = vector.load %arg10[%c6_66, %c0_67, %c32_68] : memref<8x16x64xf32, #tpu.memory_space<vmem>>, vector<1x16x32xf32>
    %128 = vector.shape_cast %127 : vector<1x16x32xf32> to vector<16x32xf32>
    %129 = vector.shape_cast %126 : vector<16x32xf32> to vector<1x16x32xf32>
    tpu.vector_store %arg10[%c6_66, %c0_67, %c32_68], %129 {strides = array<i32>} : memref<8x16x64xf32, #tpu.memory_space<vmem>>, vector<1x16x32xf32>,
    %c0_69 = arith.constant 0 : index
    %c2 = arith.constant 2 : index
    %c0_70 = arith.constant 0 : index
    %c0_71 = arith.constant 0 : index
    %130 = vector.load %arg9[%c0_69, %c2, %c0_70, %c0_71] : memref<2x8x16x96xf32, #tpu.memory_space<vmem>>, vector<1x1x16x96xf32>
    %131 = vector.shape_cast %130 : vector<1x1x16x96xf32> to vector<16x96xf32>
    %cst_72 = arith.constant dense<0.000000e+00> : vector<16x96xf32>
    %132 = tpu.matmul %98, %25, %cst_72 {dimension_numbers = #tpu.dot_dimension_numbers<[1], [0], [0], [1], [0, 0, 1, 1], [], []>} : vector<16x32xf32>, vector<32x96xf32>, vector<16x96xf32> -> vector<16x96xf32>
    %133 = vector.extract_strided_slice %131 {offsets = [0, 0], sizes = [16, 64], strides = [1, 1]} : vector<16x96xf32> to vector<16x64xf32>
    %134 = vector.extract_strided_slice %132 {offsets = [0, 0], sizes = [16, 64], strides = [1, 1]} : vector<16x96xf32> to vector<16x64xf32>
    %135 = arith.addf %133, %134 : vector<16x64xf32>
    %136 = arith.negf %135 : vector<16x64xf32>
    %137 = math.exp %136 : vector<16x64xf32>
    %cst_73 = arith.constant 1.000000e+00 : f32
    %138 = vector.broadcast %cst_73 : f32 to vector<16x64xf32>
    %139 = arith.addf %138, %137 : vector<16x64xf32>
    %140 = arith.divf %138, %139 : vector<16x64xf32>
    %141 = vector.extract_strided_slice %140 {offsets = [0, 0], sizes = [16, 32], strides = [1, 1]} : vector<16x64xf32> to vector<16x32xf32>
    %142 = vector.extract_strided_slice %140 {offsets = [0, 32], sizes = [16, 32], strides = [1, 1]} : vector<16x64xf32> to vector<16x32xf32>
    %143 = vector.extract_strided_slice %131 {offsets = [0, 64], sizes = [16, 32], strides = [1, 1]} : vector<16x96xf32> to vector<16x32xf32>
    %144 = vector.extract_strided_slice %132 {offsets = [0, 64], sizes = [16, 32], strides = [1, 1]} : vector<16x96xf32> to vector<16x32xf32>
    %145 = vector.broadcast %29 : vector<1x32xf32> to vector<16x32xf32>
    %146 = arith.addf %144, %145 : vector<16x32xf32>
    %147 = arith.mulf %141, %146 : vector<16x32xf32>
    %148 = arith.addf %143, %147 : vector<16x32xf32>
    %149 = math.tanh %148 : vector<16x32xf32>
    %cst_74 = arith.constant 1.000000e+00 : f32
    %150 = vector.broadcast %cst_74 : f32 to vector<16x32xf32>
    %151 = arith.subf %150, %142 : vector<16x32xf32>
    %152 = arith.mulf %151, %149 : vector<16x32xf32>
    %153 = arith.mulf %142, %98 : vector<16x32xf32>
    %154 = arith.addf %152, %153 : vector<16x32xf32>
    %c2_75 = arith.constant 2 : index
    %c0_76 = arith.constant 0 : index
    %c0_77 = arith.constant 0 : index
    %155 = vector.load %arg10[%c2_75, %c0_76, %c0_77] : memref<8x16x64xf32, #tpu.memory_space<vmem>>, vector<1x16x32xf32>
    %156 = vector.shape_cast %155 : vector<1x16x32xf32> to vector<16x32xf32>
    %157 = vector.shape_cast %154 : vector<16x32xf32> to vector<1x16x32xf32>
    tpu.vector_store %arg10[%c2_75, %c0_76, %c0_77], %157 {strides = array<i32>} : memref<8x16x64xf32, #tpu.memory_space<vmem>>, vector<1x16x32xf32>,
    %c1_78 = arith.constant 1 : index
    %c5 = arith.constant 5 : index
    %c0_79 = arith.constant 0 : index
    %c0_80 = arith.constant 0 : index
    %158 = vector.load %arg9[%c1_78, %c5, %c0_79, %c0_80] : memref<2x8x16x96xf32, #tpu.memory_space<vmem>>, vector<1x1x16x96xf32>
    %159 = vector.shape_cast %158 : vector<1x1x16x96xf32> to vector<16x96xf32>
    %cst_81 = arith.constant dense<0.000000e+00> : vector<16x96xf32>
    %160 = tpu.matmul %126, %27, %cst_81 {dimension_numbers = #tpu.dot_dimension_numbers<[1], [0], [0], [1], [0, 0, 1, 1], [], []>} : vector<16x32xf32>, vector<32x96xf32>, vector<16x96xf32> -> vector<16x96xf32>
    %161 = vector.extract_strided_slice %159 {offsets = [0, 0], sizes = [16, 64], strides = [1, 1]} : vector<16x96xf32> to vector<16x64xf32>
    %162 = vector.extract_strided_slice %160 {offsets = [0, 0], sizes = [16, 64], strides = [1, 1]} : vector<16x96xf32> to vector<16x64xf32>
    %163 = arith.addf %161, %162 : vector<16x64xf32>
    %164 = arith.negf %163 : vector<16x64xf32>
    %165 = math.exp %164 : vector<16x64xf32>
    %cst_82 = arith.constant 1.000000e+00 : f32
    %166 = vector.broadcast %cst_82 : f32 to vector<16x64xf32>
    %167 = arith.addf %166, %165 : vector<16x64xf32>
    %168 = arith.divf %166, %167 : vector<16x64xf32>
    %169 = vector.extract_strided_slice %168 {offsets = [0, 0], sizes = [16, 32], strides = [1, 1]} : vector<16x64xf32> to vector<16x32xf32>
    %170 = vector.extract_strided_slice %168 {offsets = [0, 32], sizes = [16, 32], strides = [1, 1]} : vector<16x64xf32> to vector<16x32xf32>
    %171 = vector.extract_strided_slice %159 {offsets = [0, 64], sizes = [16, 32], strides = [1, 1]} : vector<16x96xf32> to vector<16x32xf32>
    %172 = vector.extract_strided_slice %160 {offsets = [0, 64], sizes = [16, 32], strides = [1, 1]} : vector<16x96xf32> to vector<16x32xf32>
    %173 = vector.broadcast %31 : vector<1x32xf32> to vector<16x32xf32>
    %174 = arith.addf %172, %173 : vector<16x32xf32>
    %175 = arith.mulf %169, %174 : vector<16x32xf32>
    %176 = arith.addf %171, %175 : vector<16x32xf32>
    %177 = math.tanh %176 : vector<16x32xf32>
    %cst_83 = arith.constant 1.000000e+00 : f32
    %178 = vector.broadcast %cst_83 : f32 to vector<16x32xf32>
    %179 = arith.subf %178, %170 : vector<16x32xf32>
    %180 = arith.mulf %179, %177 : vector<16x32xf32>
    %181 = arith.mulf %170, %126 : vector<16x32xf32>
    %182 = arith.addf %180, %181 : vector<16x32xf32>
    %c5_84 = arith.constant 5 : index
    %c0_85 = arith.constant 0 : index
    %c32_86 = arith.constant 32 : index
    %183 = vector.load %arg10[%c5_84, %c0_85, %c32_86] : memref<8x16x64xf32, #tpu.memory_space<vmem>>, vector<1x16x32xf32>
    %184 = vector.shape_cast %183 : vector<1x16x32xf32> to vector<16x32xf32>
    %185 = vector.shape_cast %182 : vector<16x32xf32> to vector<1x16x32xf32>
    tpu.vector_store %arg10[%c5_84, %c0_85, %c32_86], %185 {strides = array<i32>} : memref<8x16x64xf32, #tpu.memory_space<vmem>>, vector<1x16x32xf32>,
    %c0_87 = arith.constant 0 : index
    %c3 = arith.constant 3 : index
    %c0_88 = arith.constant 0 : index
    %c0_89 = arith.constant 0 : index
    %186 = vector.load %arg9[%c0_87, %c3, %c0_88, %c0_89] : memref<2x8x16x96xf32, #tpu.memory_space<vmem>>, vector<1x1x16x96xf32>
    %187 = vector.shape_cast %186 : vector<1x1x16x96xf32> to vector<16x96xf32>
    %cst_90 = arith.constant dense<0.000000e+00> : vector<16x96xf32>
    %188 = tpu.matmul %154, %25, %cst_90 {dimension_numbers = #tpu.dot_dimension_numbers<[1], [0], [0], [1], [0, 0, 1, 1], [], []>} : vector<16x32xf32>, vector<32x96xf32>, vector<16x96xf32> -> vector<16x96xf32>
    %189 = vector.extract_strided_slice %187 {offsets = [0, 0], sizes = [16, 64], strides = [1, 1]} : vector<16x96xf32> to vector<16x64xf32>
    %190 = vector.extract_strided_slice %188 {offsets = [0, 0], sizes = [16, 64], strides = [1, 1]} : vector<16x96xf32> to vector<16x64xf32>
    %191 = arith.addf %189, %190 : vector<16x64xf32>
    %192 = arith.negf %191 : vector<16x64xf32>
    %193 = math.exp %192 : vector<16x64xf32>
    %cst_91 = arith.constant 1.000000e+00 : f32
    %194 = vector.broadcast %cst_91 : f32 to vector<16x64xf32>
    %195 = arith.addf %194, %193 : vector<16x64xf32>
    %196 = arith.divf %194, %195 : vector<16x64xf32>
    %197 = vector.extract_strided_slice %196 {offsets = [0, 0], sizes = [16, 32], strides = [1, 1]} : vector<16x64xf32> to vector<16x32xf32>
    %198 = vector.extract_strided_slice %196 {offsets = [0, 32], sizes = [16, 32], strides = [1, 1]} : vector<16x64xf32> to vector<16x32xf32>
    %199 = vector.extract_strided_slice %187 {offsets = [0, 64], sizes = [16, 32], strides = [1, 1]} : vector<16x96xf32> to vector<16x32xf32>
    %200 = vector.extract_strided_slice %188 {offsets = [0, 64], sizes = [16, 32], strides = [1, 1]} : vector<16x96xf32> to vector<16x32xf32>
    %201 = vector.broadcast %29 : vector<1x32xf32> to vector<16x32xf32>
    %202 = arith.addf %200, %201 : vector<16x32xf32>
    %203 = arith.mulf %197, %202 : vector<16x32xf32>
    %204 = arith.addf %199, %203 : vector<16x32xf32>
    %205 = math.tanh %204 : vector<16x32xf32>
    %cst_92 = arith.constant 1.000000e+00 : f32
    %206 = vector.broadcast %cst_92 : f32 to vector<16x32xf32>
    %207 = arith.subf %206, %198 : vector<16x32xf32>
    %208 = arith.mulf %207, %205 : vector<16x32xf32>
    %209 = arith.mulf %198, %154 : vector<16x32xf32>
    %210 = arith.addf %208, %209 : vector<16x32xf32>
    %c3_93 = arith.constant 3 : index
    %c0_94 = arith.constant 0 : index
    %c0_95 = arith.constant 0 : index
    %211 = vector.load %arg10[%c3_93, %c0_94, %c0_95] : memref<8x16x64xf32, #tpu.memory_space<vmem>>, vector<1x16x32xf32>
    %212 = vector.shape_cast %211 : vector<1x16x32xf32> to vector<16x32xf32>
    %213 = vector.shape_cast %210 : vector<16x32xf32> to vector<1x16x32xf32>
    tpu.vector_store %arg10[%c3_93, %c0_94, %c0_95], %213 {strides = array<i32>} : memref<8x16x64xf32, #tpu.memory_space<vmem>>, vector<1x16x32xf32>,
    %c1_96 = arith.constant 1 : index
    %c4 = arith.constant 4 : index
    %c0_97 = arith.constant 0 : index
    %c0_98 = arith.constant 0 : index
    %214 = vector.load %arg9[%c1_96, %c4, %c0_97, %c0_98] : memref<2x8x16x96xf32, #tpu.memory_space<vmem>>, vector<1x1x16x96xf32>
    %215 = vector.shape_cast %214 : vector<1x1x16x96xf32> to vector<16x96xf32>
    %cst_99 = arith.constant dense<0.000000e+00> : vector<16x96xf32>
    %216 = tpu.matmul %182, %27, %cst_99 {dimension_numbers = #tpu.dot_dimension_numbers<[1], [0], [0], [1], [0, 0, 1, 1], [], []>} : vector<16x32xf32>, vector<32x96xf32>, vector<16x96xf32> -> vector<16x96xf32>
    %217 = vector.extract_strided_slice %215 {offsets = [0, 0], sizes = [16, 64], strides = [1, 1]} : vector<16x96xf32> to vector<16x64xf32>
    %218 = vector.extract_strided_slice %216 {offsets = [0, 0], sizes = [16, 64], strides = [1, 1]} : vector<16x96xf32> to vector<16x64xf32>
    %219 = arith.addf %217, %218 : vector<16x64xf32>
    %220 = arith.negf %219 : vector<16x64xf32>
    %221 = math.exp %220 : vector<16x64xf32>
    %cst_100 = arith.constant 1.000000e+00 : f32
    %222 = vector.broadcast %cst_100 : f32 to vector<16x64xf32>
    %223 = arith.addf %222, %221 : vector<16x64xf32>
    %224 = arith.divf %222, %223 : vector<16x64xf32>
    %225 = vector.extract_strided_slice %224 {offsets = [0, 0], sizes = [16, 32], strides = [1, 1]} : vector<16x64xf32> to vector<16x32xf32>
    %226 = vector.extract_strided_slice %224 {offsets = [0, 32], sizes = [16, 32], strides = [1, 1]} : vector<16x64xf32> to vector<16x32xf32>
    %227 = vector.extract_strided_slice %215 {offsets = [0, 64], sizes = [16, 32], strides = [1, 1]} : vector<16x96xf32> to vector<16x32xf32>
    %228 = vector.extract_strided_slice %216 {offsets = [0, 64], sizes = [16, 32], strides = [1, 1]} : vector<16x96xf32> to vector<16x32xf32>
    %229 = vector.broadcast %31 : vector<1x32xf32> to vector<16x32xf32>
    %230 = arith.addf %228, %229 : vector<16x32xf32>
    %231 = arith.mulf %225, %230 : vector<16x32xf32>
    %232 = arith.addf %227, %231 : vector<16x32xf32>
    %233 = math.tanh %232 : vector<16x32xf32>
    %cst_101 = arith.constant 1.000000e+00 : f32
    %234 = vector.broadcast %cst_101 : f32 to vector<16x32xf32>
    %235 = arith.subf %234, %226 : vector<16x32xf32>
    %236 = arith.mulf %235, %233 : vector<16x32xf32>
    %237 = arith.mulf %226, %182 : vector<16x32xf32>
    %238 = arith.addf %236, %237 : vector<16x32xf32>
    %c4_102 = arith.constant 4 : index
    %c0_103 = arith.constant 0 : index
    %c32_104 = arith.constant 32 : index
    %239 = vector.load %arg10[%c4_102, %c0_103, %c32_104] : memref<8x16x64xf32, #tpu.memory_space<vmem>>, vector<1x16x32xf32>
    %240 = vector.shape_cast %239 : vector<1x16x32xf32> to vector<16x32xf32>
    %241 = vector.shape_cast %238 : vector<16x32xf32> to vector<1x16x32xf32>
    tpu.vector_store %arg10[%c4_102, %c0_103, %c32_104], %241 {strides = array<i32>} : memref<8x16x64xf32, #tpu.memory_space<vmem>>, vector<1x16x32xf32>,
    %c0_105 = arith.constant 0 : index
    %c4_106 = arith.constant 4 : index
    %c0_107 = arith.constant 0 : index
    %c0_108 = arith.constant 0 : index
    %242 = vector.load %arg9[%c0_105, %c4_106, %c0_107, %c0_108] : memref<2x8x16x96xf32, #tpu.memory_space<vmem>>, vector<1x1x16x96xf32>
    %243 = vector.shape_cast %242 : vector<1x1x16x96xf32> to vector<16x96xf32>
    %cst_109 = arith.constant dense<0.000000e+00> : vector<16x96xf32>
    %244 = tpu.matmul %210, %25, %cst_109 {dimension_numbers = #tpu.dot_dimension_numbers<[1], [0], [0], [1], [0, 0, 1, 1], [], []>} : vector<16x32xf32>, vector<32x96xf32>, vector<16x96xf32> -> vector<16x96xf32>
    %245 = vector.extract_strided_slice %243 {offsets = [0, 0], sizes = [16, 64], strides = [1, 1]} : vector<16x96xf32> to vector<16x64xf32>
    %246 = vector.extract_strided_slice %244 {offsets = [0, 0], sizes = [16, 64], strides = [1, 1]} : vector<16x96xf32> to vector<16x64xf32>
    %247 = arith.addf %245, %246 : vector<16x64xf32>
    %248 = arith.negf %247 : vector<16x64xf32>
    %249 = math.exp %248 : vector<16x64xf32>
    %cst_110 = arith.constant 1.000000e+00 : f32
    %250 = vector.broadcast %cst_110 : f32 to vector<16x64xf32>
    %251 = arith.addf %250, %249 : vector<16x64xf32>
    %252 = arith.divf %250, %251 : vector<16x64xf32>
    %253 = vector.extract_strided_slice %252 {offsets = [0, 0], sizes = [16, 32], strides = [1, 1]} : vector<16x64xf32> to vector<16x32xf32>
    %254 = vector.extract_strided_slice %252 {offsets = [0, 32], sizes = [16, 32], strides = [1, 1]} : vector<16x64xf32> to vector<16x32xf32>
    %255 = vector.extract_strided_slice %243 {offsets = [0, 64], sizes = [16, 32], strides = [1, 1]} : vector<16x96xf32> to vector<16x32xf32>
    %256 = vector.extract_strided_slice %244 {offsets = [0, 64], sizes = [16, 32], strides = [1, 1]} : vector<16x96xf32> to vector<16x32xf32>
    %257 = vector.broadcast %29 : vector<1x32xf32> to vector<16x32xf32>
    %258 = arith.addf %256, %257 : vector<16x32xf32>
    %259 = arith.mulf %253, %258 : vector<16x32xf32>
    %260 = arith.addf %255, %259 : vector<16x32xf32>
    %261 = math.tanh %260 : vector<16x32xf32>
    %cst_111 = arith.constant 1.000000e+00 : f32
    %262 = vector.broadcast %cst_111 : f32 to vector<16x32xf32>
    %263 = arith.subf %262, %254 : vector<16x32xf32>
    %264 = arith.mulf %263, %261 : vector<16x32xf32>
    %265 = arith.mulf %254, %210 : vector<16x32xf32>
    %266 = arith.addf %264, %265 : vector<16x32xf32>
    %c4_112 = arith.constant 4 : index
    %c0_113 = arith.constant 0 : index
    %c0_114 = arith.constant 0 : index
    %267 = vector.load %arg10[%c4_112, %c0_113, %c0_114] : memref<8x16x64xf32, #tpu.memory_space<vmem>>, vector<1x16x32xf32>
    %268 = vector.shape_cast %267 : vector<1x16x32xf32> to vector<16x32xf32>
    %269 = vector.shape_cast %266 : vector<16x32xf32> to vector<1x16x32xf32>
    tpu.vector_store %arg10[%c4_112, %c0_113, %c0_114], %269 {strides = array<i32>} : memref<8x16x64xf32, #tpu.memory_space<vmem>>, vector<1x16x32xf32>,
    %c1_115 = arith.constant 1 : index
    %c3_116 = arith.constant 3 : index
    %c0_117 = arith.constant 0 : index
    %c0_118 = arith.constant 0 : index
    %270 = vector.load %arg9[%c1_115, %c3_116, %c0_117, %c0_118] : memref<2x8x16x96xf32, #tpu.memory_space<vmem>>, vector<1x1x16x96xf32>
    %271 = vector.shape_cast %270 : vector<1x1x16x96xf32> to vector<16x96xf32>
    %cst_119 = arith.constant dense<0.000000e+00> : vector<16x96xf32>
    %272 = tpu.matmul %238, %27, %cst_119 {dimension_numbers = #tpu.dot_dimension_numbers<[1], [0], [0], [1], [0, 0, 1, 1], [], []>} : vector<16x32xf32>, vector<32x96xf32>, vector<16x96xf32> -> vector<16x96xf32>
    %273 = vector.extract_strided_slice %271 {offsets = [0, 0], sizes = [16, 64], strides = [1, 1]} : vector<16x96xf32> to vector<16x64xf32>
    %274 = vector.extract_strided_slice %272 {offsets = [0, 0], sizes = [16, 64], strides = [1, 1]} : vector<16x96xf32> to vector<16x64xf32>
    %275 = arith.addf %273, %274 : vector<16x64xf32>
    %276 = arith.negf %275 : vector<16x64xf32>
    %277 = math.exp %276 : vector<16x64xf32>
    %cst_120 = arith.constant 1.000000e+00 : f32
    %278 = vector.broadcast %cst_120 : f32 to vector<16x64xf32>
    %279 = arith.addf %278, %277 : vector<16x64xf32>
    %280 = arith.divf %278, %279 : vector<16x64xf32>
    %281 = vector.extract_strided_slice %280 {offsets = [0, 0], sizes = [16, 32], strides = [1, 1]} : vector<16x64xf32> to vector<16x32xf32>
    %282 = vector.extract_strided_slice %280 {offsets = [0, 32], sizes = [16, 32], strides = [1, 1]} : vector<16x64xf32> to vector<16x32xf32>
    %283 = vector.extract_strided_slice %271 {offsets = [0, 64], sizes = [16, 32], strides = [1, 1]} : vector<16x96xf32> to vector<16x32xf32>
    %284 = vector.extract_strided_slice %272 {offsets = [0, 64], sizes = [16, 32], strides = [1, 1]} : vector<16x96xf32> to vector<16x32xf32>
    %285 = vector.broadcast %31 : vector<1x32xf32> to vector<16x32xf32>
    %286 = arith.addf %284, %285 : vector<16x32xf32>
    %287 = arith.mulf %281, %286 : vector<16x32xf32>
    %288 = arith.addf %283, %287 : vector<16x32xf32>
    %289 = math.tanh %288 : vector<16x32xf32>
    %cst_121 = arith.constant 1.000000e+00 : f32
    %290 = vector.broadcast %cst_121 : f32 to vector<16x32xf32>
    %291 = arith.subf %290, %282 : vector<16x32xf32>
    %292 = arith.mulf %291, %289 : vector<16x32xf32>
    %293 = arith.mulf %282, %238 : vector<16x32xf32>
    %294 = arith.addf %292, %293 : vector<16x32xf32>
    %c3_122 = arith.constant 3 : index
    %c0_123 = arith.constant 0 : index
    %c32_124 = arith.constant 32 : index
    %295 = vector.load %arg10[%c3_122, %c0_123, %c32_124] : memref<8x16x64xf32, #tpu.memory_space<vmem>>, vector<1x16x32xf32>
    %296 = vector.shape_cast %295 : vector<1x16x32xf32> to vector<16x32xf32>
    %297 = vector.shape_cast %294 : vector<16x32xf32> to vector<1x16x32xf32>
    tpu.vector_store %arg10[%c3_122, %c0_123, %c32_124], %297 {strides = array<i32>} : memref<8x16x64xf32, #tpu.memory_space<vmem>>, vector<1x16x32xf32>,
    %c0_125 = arith.constant 0 : index
    %c5_126 = arith.constant 5 : index
    %c0_127 = arith.constant 0 : index
    %c0_128 = arith.constant 0 : index
    %298 = vector.load %arg9[%c0_125, %c5_126, %c0_127, %c0_128] : memref<2x8x16x96xf32, #tpu.memory_space<vmem>>, vector<1x1x16x96xf32>
    %299 = vector.shape_cast %298 : vector<1x1x16x96xf32> to vector<16x96xf32>
    %cst_129 = arith.constant dense<0.000000e+00> : vector<16x96xf32>
    %300 = tpu.matmul %266, %25, %cst_129 {dimension_numbers = #tpu.dot_dimension_numbers<[1], [0], [0], [1], [0, 0, 1, 1], [], []>} : vector<16x32xf32>, vector<32x96xf32>, vector<16x96xf32> -> vector<16x96xf32>
    %301 = vector.extract_strided_slice %299 {offsets = [0, 0], sizes = [16, 64], strides = [1, 1]} : vector<16x96xf32> to vector<16x64xf32>
    %302 = vector.extract_strided_slice %300 {offsets = [0, 0], sizes = [16, 64], strides = [1, 1]} : vector<16x96xf32> to vector<16x64xf32>
    %303 = arith.addf %301, %302 : vector<16x64xf32>
    %304 = arith.negf %303 : vector<16x64xf32>
    %305 = math.exp %304 : vector<16x64xf32>
    %cst_130 = arith.constant 1.000000e+00 : f32
    %306 = vector.broadcast %cst_130 : f32 to vector<16x64xf32>
    %307 = arith.addf %306, %305 : vector<16x64xf32>
    %308 = arith.divf %306, %307 : vector<16x64xf32>
    %309 = vector.extract_strided_slice %308 {offsets = [0, 0], sizes = [16, 32], strides = [1, 1]} : vector<16x64xf32> to vector<16x32xf32>
    %310 = vector.extract_strided_slice %308 {offsets = [0, 32], sizes = [16, 32], strides = [1, 1]} : vector<16x64xf32> to vector<16x32xf32>
    %311 = vector.extract_strided_slice %299 {offsets = [0, 64], sizes = [16, 32], strides = [1, 1]} : vector<16x96xf32> to vector<16x32xf32>
    %312 = vector.extract_strided_slice %300 {offsets = [0, 64], sizes = [16, 32], strides = [1, 1]} : vector<16x96xf32> to vector<16x32xf32>
    %313 = vector.broadcast %29 : vector<1x32xf32> to vector<16x32xf32>
    %314 = arith.addf %312, %313 : vector<16x32xf32>
    %315 = arith.mulf %309, %314 : vector<16x32xf32>
    %316 = arith.addf %311, %315 : vector<16x32xf32>
    %317 = math.tanh %316 : vector<16x32xf32>
    %cst_131 = arith.constant 1.000000e+00 : f32
    %318 = vector.broadcast %cst_131 : f32 to vector<16x32xf32>
    %319 = arith.subf %318, %310 : vector<16x32xf32>
    %320 = arith.mulf %319, %317 : vector<16x32xf32>
    %321 = arith.mulf %310, %266 : vector<16x32xf32>
    %322 = arith.addf %320, %321 : vector<16x32xf32>
    %c5_132 = arith.constant 5 : index
    %c0_133 = arith.constant 0 : index
    %c0_134 = arith.constant 0 : index
    %323 = vector.load %arg10[%c5_132, %c0_133, %c0_134] : memref<8x16x64xf32, #tpu.memory_space<vmem>>, vector<1x16x32xf32>
    %324 = vector.shape_cast %323 : vector<1x16x32xf32> to vector<16x32xf32>
    %325 = vector.shape_cast %322 : vector<16x32xf32> to vector<1x16x32xf32>
    tpu.vector_store %arg10[%c5_132, %c0_133, %c0_134], %325 {strides = array<i32>} : memref<8x16x64xf32, #tpu.memory_space<vmem>>, vector<1x16x32xf32>,
    %c1_135 = arith.constant 1 : index
    %c2_136 = arith.constant 2 : index
    %c0_137 = arith.constant 0 : index
    %c0_138 = arith.constant 0 : index
    %326 = vector.load %arg9[%c1_135, %c2_136, %c0_137, %c0_138] : memref<2x8x16x96xf32, #tpu.memory_space<vmem>>, vector<1x1x16x96xf32>
    %327 = vector.shape_cast %326 : vector<1x1x16x96xf32> to vector<16x96xf32>
    %cst_139 = arith.constant dense<0.000000e+00> : vector<16x96xf32>
    %328 = tpu.matmul %294, %27, %cst_139 {dimension_numbers = #tpu.dot_dimension_numbers<[1], [0], [0], [1], [0, 0, 1, 1], [], []>} : vector<16x32xf32>, vector<32x96xf32>, vector<16x96xf32> -> vector<16x96xf32>
    %329 = vector.extract_strided_slice %327 {offsets = [0, 0], sizes = [16, 64], strides = [1, 1]} : vector<16x96xf32> to vector<16x64xf32>
    %330 = vector.extract_strided_slice %328 {offsets = [0, 0], sizes = [16, 64], strides = [1, 1]} : vector<16x96xf32> to vector<16x64xf32>
    %331 = arith.addf %329, %330 : vector<16x64xf32>
    %332 = arith.negf %331 : vector<16x64xf32>
    %333 = math.exp %332 : vector<16x64xf32>
    %cst_140 = arith.constant 1.000000e+00 : f32
    %334 = vector.broadcast %cst_140 : f32 to vector<16x64xf32>
    %335 = arith.addf %334, %333 : vector<16x64xf32>
    %336 = arith.divf %334, %335 : vector<16x64xf32>
    %337 = vector.extract_strided_slice %336 {offsets = [0, 0], sizes = [16, 32], strides = [1, 1]} : vector<16x64xf32> to vector<16x32xf32>
    %338 = vector.extract_strided_slice %336 {offsets = [0, 32], sizes = [16, 32], strides = [1, 1]} : vector<16x64xf32> to vector<16x32xf32>
    %339 = vector.extract_strided_slice %327 {offsets = [0, 64], sizes = [16, 32], strides = [1, 1]} : vector<16x96xf32> to vector<16x32xf32>
    %340 = vector.extract_strided_slice %328 {offsets = [0, 64], sizes = [16, 32], strides = [1, 1]} : vector<16x96xf32> to vector<16x32xf32>
    %341 = vector.broadcast %31 : vector<1x32xf32> to vector<16x32xf32>
    %342 = arith.addf %340, %341 : vector<16x32xf32>
    %343 = arith.mulf %337, %342 : vector<16x32xf32>
    %344 = arith.addf %339, %343 : vector<16x32xf32>
    %345 = math.tanh %344 : vector<16x32xf32>
    %cst_141 = arith.constant 1.000000e+00 : f32
    %346 = vector.broadcast %cst_141 : f32 to vector<16x32xf32>
    %347 = arith.subf %346, %338 : vector<16x32xf32>
    %348 = arith.mulf %347, %345 : vector<16x32xf32>
    %349 = arith.mulf %338, %294 : vector<16x32xf32>
    %350 = arith.addf %348, %349 : vector<16x32xf32>
    %c2_142 = arith.constant 2 : index
    %c0_143 = arith.constant 0 : index
    %c32_144 = arith.constant 32 : index
    %351 = vector.load %arg10[%c2_142, %c0_143, %c32_144] : memref<8x16x64xf32, #tpu.memory_space<vmem>>, vector<1x16x32xf32>
    %352 = vector.shape_cast %351 : vector<1x16x32xf32> to vector<16x32xf32>
    %353 = vector.shape_cast %350 : vector<16x32xf32> to vector<1x16x32xf32>
    tpu.vector_store %arg10[%c2_142, %c0_143, %c32_144], %353 {strides = array<i32>} : memref<8x16x64xf32, #tpu.memory_space<vmem>>, vector<1x16x32xf32>,
    %c0_145 = arith.constant 0 : index
    %c6_146 = arith.constant 6 : index
    %c0_147 = arith.constant 0 : index
    %c0_148 = arith.constant 0 : index
    %354 = vector.load %arg9[%c0_145, %c6_146, %c0_147, %c0_148] : memref<2x8x16x96xf32, #tpu.memory_space<vmem>>, vector<1x1x16x96xf32>
    %355 = vector.shape_cast %354 : vector<1x1x16x96xf32> to vector<16x96xf32>
    %cst_149 = arith.constant dense<0.000000e+00> : vector<16x96xf32>
    %356 = tpu.matmul %322, %25, %cst_149 {dimension_numbers = #tpu.dot_dimension_numbers<[1], [0], [0], [1], [0, 0, 1, 1], [], []>} : vector<16x32xf32>, vector<32x96xf32>, vector<16x96xf32> -> vector<16x96xf32>
    %357 = vector.extract_strided_slice %355 {offsets = [0, 0], sizes = [16, 64], strides = [1, 1]} : vector<16x96xf32> to vector<16x64xf32>
    %358 = vector.extract_strided_slice %356 {offsets = [0, 0], sizes = [16, 64], strides = [1, 1]} : vector<16x96xf32> to vector<16x64xf32>
    %359 = arith.addf %357, %358 : vector<16x64xf32>
    %360 = arith.negf %359 : vector<16x64xf32>
    %361 = math.exp %360 : vector<16x64xf32>
    %cst_150 = arith.constant 1.000000e+00 : f32
    %362 = vector.broadcast %cst_150 : f32 to vector<16x64xf32>
    %363 = arith.addf %362, %361 : vector<16x64xf32>
    %364 = arith.divf %362, %363 : vector<16x64xf32>
    %365 = vector.extract_strided_slice %364 {offsets = [0, 0], sizes = [16, 32], strides = [1, 1]} : vector<16x64xf32> to vector<16x32xf32>
    %366 = vector.extract_strided_slice %364 {offsets = [0, 32], sizes = [16, 32], strides = [1, 1]} : vector<16x64xf32> to vector<16x32xf32>
    %367 = vector.extract_strided_slice %355 {offsets = [0, 64], sizes = [16, 32], strides = [1, 1]} : vector<16x96xf32> to vector<16x32xf32>
    %368 = vector.extract_strided_slice %356 {offsets = [0, 64], sizes = [16, 32], strides = [1, 1]} : vector<16x96xf32> to vector<16x32xf32>
    %369 = vector.broadcast %29 : vector<1x32xf32> to vector<16x32xf32>
    %370 = arith.addf %368, %369 : vector<16x32xf32>
    %371 = arith.mulf %365, %370 : vector<16x32xf32>
    %372 = arith.addf %367, %371 : vector<16x32xf32>
    %373 = math.tanh %372 : vector<16x32xf32>
    %cst_151 = arith.constant 1.000000e+00 : f32
    %374 = vector.broadcast %cst_151 : f32 to vector<16x32xf32>
    %375 = arith.subf %374, %366 : vector<16x32xf32>
    %376 = arith.mulf %375, %373 : vector<16x32xf32>
    %377 = arith.mulf %366, %322 : vector<16x32xf32>
    %378 = arith.addf %376, %377 : vector<16x32xf32>
    %c6_152 = arith.constant 6 : index
    %c0_153 = arith.constant 0 : index
    %c0_154 = arith.constant 0 : index
    %379 = vector.load %arg10[%c6_152, %c0_153, %c0_154] : memref<8x16x64xf32, #tpu.memory_space<vmem>>, vector<1x16x32xf32>
    %380 = vector.shape_cast %379 : vector<1x16x32xf32> to vector<16x32xf32>
    %381 = vector.shape_cast %378 : vector<16x32xf32> to vector<1x16x32xf32>
    tpu.vector_store %arg10[%c6_152, %c0_153, %c0_154], %381 {strides = array<i32>} : memref<8x16x64xf32, #tpu.memory_space<vmem>>, vector<1x16x32xf32>,
    %c1_155 = arith.constant 1 : index
    %c1_156 = arith.constant 1 : index
    %c0_157 = arith.constant 0 : index
    %c0_158 = arith.constant 0 : index
    %382 = vector.load %arg9[%c1_155, %c1_156, %c0_157, %c0_158] : memref<2x8x16x96xf32, #tpu.memory_space<vmem>>, vector<1x1x16x96xf32>
    %383 = vector.shape_cast %382 : vector<1x1x16x96xf32> to vector<16x96xf32>
    %cst_159 = arith.constant dense<0.000000e+00> : vector<16x96xf32>
    %384 = tpu.matmul %350, %27, %cst_159 {dimension_numbers = #tpu.dot_dimension_numbers<[1], [0], [0], [1], [0, 0, 1, 1], [], []>} : vector<16x32xf32>, vector<32x96xf32>, vector<16x96xf32> -> vector<16x96xf32>
    %385 = vector.extract_strided_slice %383 {offsets = [0, 0], sizes = [16, 64], strides = [1, 1]} : vector<16x96xf32> to vector<16x64xf32>
    %386 = vector.extract_strided_slice %384 {offsets = [0, 0], sizes = [16, 64], strides = [1, 1]} : vector<16x96xf32> to vector<16x64xf32>
    %387 = arith.addf %385, %386 : vector<16x64xf32>
    %388 = arith.negf %387 : vector<16x64xf32>
    %389 = math.exp %388 : vector<16x64xf32>
    %cst_160 = arith.constant 1.000000e+00 : f32
    %390 = vector.broadcast %cst_160 : f32 to vector<16x64xf32>
    %391 = arith.addf %390, %389 : vector<16x64xf32>
    %392 = arith.divf %390, %391 : vector<16x64xf32>
    %393 = vector.extract_strided_slice %392 {offsets = [0, 0], sizes = [16, 32], strides = [1, 1]} : vector<16x64xf32> to vector<16x32xf32>
    %394 = vector.extract_strided_slice %392 {offsets = [0, 32], sizes = [16, 32], strides = [1, 1]} : vector<16x64xf32> to vector<16x32xf32>
    %395 = vector.extract_strided_slice %383 {offsets = [0, 64], sizes = [16, 32], strides = [1, 1]} : vector<16x96xf32> to vector<16x32xf32>
    %396 = vector.extract_strided_slice %384 {offsets = [0, 64], sizes = [16, 32], strides = [1, 1]} : vector<16x96xf32> to vector<16x32xf32>
    %397 = vector.broadcast %31 : vector<1x32xf32> to vector<16x32xf32>
    %398 = arith.addf %396, %397 : vector<16x32xf32>
    %399 = arith.mulf %393, %398 : vector<16x32xf32>
    %400 = arith.addf %395, %399 : vector<16x32xf32>
    %401 = math.tanh %400 : vector<16x32xf32>
    %cst_161 = arith.constant 1.000000e+00 : f32
    %402 = vector.broadcast %cst_161 : f32 to vector<16x32xf32>
    %403 = arith.subf %402, %394 : vector<16x32xf32>
    %404 = arith.mulf %403, %401 : vector<16x32xf32>
    %405 = arith.mulf %394, %350 : vector<16x32xf32>
    %406 = arith.addf %404, %405 : vector<16x32xf32>
    %c1_162 = arith.constant 1 : index
    %c0_163 = arith.constant 0 : index
    %c32_164 = arith.constant 32 : index
    %407 = vector.load %arg10[%c1_162, %c0_163, %c32_164] : memref<8x16x64xf32, #tpu.memory_space<vmem>>, vector<1x16x32xf32>
    %408 = vector.shape_cast %407 : vector<1x16x32xf32> to vector<16x32xf32>
    %409 = vector.shape_cast %406 : vector<16x32xf32> to vector<1x16x32xf32>
    tpu.vector_store %arg10[%c1_162, %c0_163, %c32_164], %409 {strides = array<i32>} : memref<8x16x64xf32, #tpu.memory_space<vmem>>, vector<1x16x32xf32>,
    %c0_165 = arith.constant 0 : index
    %c7_166 = arith.constant 7 : index
    %c0_167 = arith.constant 0 : index
    %c0_168 = arith.constant 0 : index
    %410 = vector.load %arg9[%c0_165, %c7_166, %c0_167, %c0_168] : memref<2x8x16x96xf32, #tpu.memory_space<vmem>>, vector<1x1x16x96xf32>
    %411 = vector.shape_cast %410 : vector<1x1x16x96xf32> to vector<16x96xf32>
    %cst_169 = arith.constant dense<0.000000e+00> : vector<16x96xf32>
    %412 = tpu.matmul %378, %25, %cst_169 {dimension_numbers = #tpu.dot_dimension_numbers<[1], [0], [0], [1], [0, 0, 1, 1], [], []>} : vector<16x32xf32>, vector<32x96xf32>, vector<16x96xf32> -> vector<16x96xf32>
    %413 = vector.extract_strided_slice %411 {offsets = [0, 0], sizes = [16, 64], strides = [1, 1]} : vector<16x96xf32> to vector<16x64xf32>
    %414 = vector.extract_strided_slice %412 {offsets = [0, 0], sizes = [16, 64], strides = [1, 1]} : vector<16x96xf32> to vector<16x64xf32>
    %415 = arith.addf %413, %414 : vector<16x64xf32>
    %416 = arith.negf %415 : vector<16x64xf32>
    %417 = math.exp %416 : vector<16x64xf32>
    %cst_170 = arith.constant 1.000000e+00 : f32
    %418 = vector.broadcast %cst_170 : f32 to vector<16x64xf32>
    %419 = arith.addf %418, %417 : vector<16x64xf32>
    %420 = arith.divf %418, %419 : vector<16x64xf32>
    %421 = vector.extract_strided_slice %420 {offsets = [0, 0], sizes = [16, 32], strides = [1, 1]} : vector<16x64xf32> to vector<16x32xf32>
    %422 = vector.extract_strided_slice %420 {offsets = [0, 32], sizes = [16, 32], strides = [1, 1]} : vector<16x64xf32> to vector<16x32xf32>
    %423 = vector.extract_strided_slice %411 {offsets = [0, 64], sizes = [16, 32], strides = [1, 1]} : vector<16x96xf32> to vector<16x32xf32>
    %424 = vector.extract_strided_slice %412 {offsets = [0, 64], sizes = [16, 32], strides = [1, 1]} : vector<16x96xf32> to vector<16x32xf32>
    %425 = vector.broadcast %29 : vector<1x32xf32> to vector<16x32xf32>
    %426 = arith.addf %424, %425 : vector<16x32xf32>
    %427 = arith.mulf %421, %426 : vector<16x32xf32>
    %428 = arith.addf %423, %427 : vector<16x32xf32>
    %429 = math.tanh %428 : vector<16x32xf32>
    %cst_171 = arith.constant 1.000000e+00 : f32
    %430 = vector.broadcast %cst_171 : f32 to vector<16x32xf32>
    %431 = arith.subf %430, %422 : vector<16x32xf32>
    %432 = arith.mulf %431, %429 : vector<16x32xf32>
    %433 = arith.mulf %422, %378 : vector<16x32xf32>
    %434 = arith.addf %432, %433 : vector<16x32xf32>
    %c7_172 = arith.constant 7 : index
    %c0_173 = arith.constant 0 : index
    %c0_174 = arith.constant 0 : index
    %435 = vector.load %arg10[%c7_172, %c0_173, %c0_174] : memref<8x16x64xf32, #tpu.memory_space<vmem>>, vector<1x16x32xf32>
    %436 = vector.shape_cast %435 : vector<1x16x32xf32> to vector<16x32xf32>
    %437 = vector.shape_cast %434 : vector<16x32xf32> to vector<1x16x32xf32>
    tpu.vector_store %arg10[%c7_172, %c0_173, %c0_174], %437 {strides = array<i32>} : memref<8x16x64xf32, #tpu.memory_space<vmem>>, vector<1x16x32xf32>,
    %c1_175 = arith.constant 1 : index
    %c0_176 = arith.constant 0 : index
    %c0_177 = arith.constant 0 : index
    %c0_178 = arith.constant 0 : index
    %438 = vector.load %arg9[%c1_175, %c0_176, %c0_177, %c0_178] : memref<2x8x16x96xf32, #tpu.memory_space<vmem>>, vector<1x1x16x96xf32>
    %439 = vector.shape_cast %438 : vector<1x1x16x96xf32> to vector<16x96xf32>
    %cst_179 = arith.constant dense<0.000000e+00> : vector<16x96xf32>
    %440 = tpu.matmul %406, %27, %cst_179 {dimension_numbers = #tpu.dot_dimension_numbers<[1], [0], [0], [1], [0, 0, 1, 1], [], []>} : vector<16x32xf32>, vector<32x96xf32>, vector<16x96xf32> -> vector<16x96xf32>
    %441 = vector.extract_strided_slice %439 {offsets = [0, 0], sizes = [16, 64], strides = [1, 1]} : vector<16x96xf32> to vector<16x64xf32>
    %442 = vector.extract_strided_slice %440 {offsets = [0, 0], sizes = [16, 64], strides = [1, 1]} : vector<16x96xf32> to vector<16x64xf32>
    %443 = arith.addf %441, %442 : vector<16x64xf32>
    %444 = arith.negf %443 : vector<16x64xf32>
    %445 = math.exp %444 : vector<16x64xf32>
    %cst_180 = arith.constant 1.000000e+00 : f32
    %446 = vector.broadcast %cst_180 : f32 to vector<16x64xf32>
    %447 = arith.addf %446, %445 : vector<16x64xf32>
    %448 = arith.divf %446, %447 : vector<16x64xf32>
    %449 = vector.extract_strided_slice %448 {offsets = [0, 0], sizes = [16, 32], strides = [1, 1]} : vector<16x64xf32> to vector<16x32xf32>
    %450 = vector.extract_strided_slice %448 {offsets = [0, 32], sizes = [16, 32], strides = [1, 1]} : vector<16x64xf32> to vector<16x32xf32>
    %451 = vector.extract_strided_slice %439 {offsets = [0, 64], sizes = [16, 32], strides = [1, 1]} : vector<16x96xf32> to vector<16x32xf32>
    %452 = vector.extract_strided_slice %440 {offsets = [0, 64], sizes = [16, 32], strides = [1, 1]} : vector<16x96xf32> to vector<16x32xf32>
    %453 = vector.broadcast %31 : vector<1x32xf32> to vector<16x32xf32>
    %454 = arith.addf %452, %453 : vector<16x32xf32>
    %455 = arith.mulf %449, %454 : vector<16x32xf32>
    %456 = arith.addf %451, %455 : vector<16x32xf32>
    %457 = math.tanh %456 : vector<16x32xf32>
    %cst_181 = arith.constant 1.000000e+00 : f32
    %458 = vector.broadcast %cst_181 : f32 to vector<16x32xf32>
    %459 = arith.subf %458, %450 : vector<16x32xf32>
    %460 = arith.mulf %459, %457 : vector<16x32xf32>
    %461 = arith.mulf %450, %406 : vector<16x32xf32>
    %462 = arith.addf %460, %461 : vector<16x32xf32>
    %c0_182 = arith.constant 0 : index
    %c0_183 = arith.constant 0 : index
    %c32_184 = arith.constant 32 : index
    %463 = vector.load %arg10[%c0_182, %c0_183, %c32_184] : memref<8x16x64xf32, #tpu.memory_space<vmem>>, vector<1x16x32xf32>
    %464 = vector.shape_cast %463 : vector<1x16x32xf32> to vector<16x32xf32>
    %465 = vector.shape_cast %462 : vector<16x32xf32> to vector<1x16x32xf32>
    tpu.vector_store %arg10[%c0_182, %c0_183, %c32_184], %465 {strides = array<i32>} : memref<8x16x64xf32, #tpu.memory_space<vmem>>, vector<1x16x32xf32>,
    %c0_185 = arith.constant 0 : index
    %c0_186 = arith.constant 0 : index
    %c0_187 = arith.constant 0 : index
    %466 = vector.load %arg10[%c0_185, %c0_186, %c0_187] : memref<8x16x64xf32, #tpu.memory_space<vmem>>, vector<8x16x64xf32>
    %467 = vector.shape_cast %466 : vector<8x16x64xf32> to vector<128x64xf32>
    %c0_188 = arith.constant 0 : index
    %c0_189 = arith.constant 0 : index
    %c0_190 = arith.constant 0 : index
    %468 = vector.load %arg2[%c0_188, %c0_189, %c0_190] : memref<2x64x96xf32, #tpu.memory_space<vmem>>, vector<1x64x96xf32>
    %469 = vector.shape_cast %468 : vector<1x64x96xf32> to vector<64x96xf32>
    %cst_191 = arith.constant dense<0.000000e+00> : vector<128x96xf32>
    %470 = tpu.matmul %467, %469, %cst_191 {dimension_numbers = #tpu.dot_dimension_numbers<[1], [0], [0], [1], [0, 0, 1, 1], [], []>} : vector<128x64xf32>, vector<64x96xf32>, vector<128x96xf32> -> vector<128x96xf32>
    %c2_192 = arith.constant 2 : index
    %c0_193 = arith.constant 0 : index
    %c0_194 = arith.constant 0 : index
    %471 = vector.load %arg4[%c2_192, %c0_193, %c0_194] : memref<4x1x96xf32, #tpu.memory_space<vmem>>, vector<1x1x96xf32>
    %472 = vector.shape_cast %471 : vector<1x1x96xf32> to vector<1x96xf32>
    %473 = vector.broadcast %472 : vector<1x96xf32> to vector<128x96xf32>
    %474 = arith.addf %470, %473 : vector<128x96xf32>
    %475 = vector.shape_cast %474 : vector<128x96xf32> to vector<8x16x96xf32>
    %c0_195 = arith.constant 0 : index
    %c0_196 = arith.constant 0 : index
    %c0_197 = arith.constant 0 : index
    %c0_198 = arith.constant 0 : index
    %476 = vector.load %arg9[%c0_195, %c0_196, %c0_197, %c0_198] : memref<2x8x16x96xf32, #tpu.memory_space<vmem>>, vector<1x8x16x96xf32>
    %477 = vector.shape_cast %476 : vector<1x8x16x96xf32> to vector<8x16x96xf32>
    %478 = vector.shape_cast %475 : vector<8x16x96xf32> to vector<1x8x16x96xf32>
    tpu.vector_store %arg9[%c0_195, %c0_196, %c0_197, %c0_198], %478 {strides = array<i32>} : memref<2x8x16x96xf32, #tpu.memory_space<vmem>>, vector<1x8x16x96xf32>,
    %c1_199 = arith.constant 1 : index
    %c0_200 = arith.constant 0 : index
    %c0_201 = arith.constant 0 : index
    %479 = vector.load %arg2[%c1_199, %c0_200, %c0_201] : memref<2x64x96xf32, #tpu.memory_space<vmem>>, vector<1x64x96xf32>
    %480 = vector.shape_cast %479 : vector<1x64x96xf32> to vector<64x96xf32>
    %cst_202 = arith.constant dense<0.000000e+00> : vector<128x96xf32>
    %481 = tpu.matmul %467, %480, %cst_202 {dimension_numbers = #tpu.dot_dimension_numbers<[1], [0], [0], [1], [0, 0, 1, 1], [], []>} : vector<128x64xf32>, vector<64x96xf32>, vector<128x96xf32> -> vector<128x96xf32>
    %c3_203 = arith.constant 3 : index
    %c0_204 = arith.constant 0 : index
    %c0_205 = arith.constant 0 : index
    %482 = vector.load %arg4[%c3_203, %c0_204, %c0_205] : memref<4x1x96xf32, #tpu.memory_space<vmem>>, vector<1x1x96xf32>
    %483 = vector.shape_cast %482 : vector<1x1x96xf32> to vector<1x96xf32>
    %484 = vector.broadcast %483 : vector<1x96xf32> to vector<128x96xf32>
    %485 = arith.addf %481, %484 : vector<128x96xf32>
    %486 = vector.shape_cast %485 : vector<128x96xf32> to vector<8x16x96xf32>
    %c1_206 = arith.constant 1 : index
    %c0_207 = arith.constant 0 : index
    %c0_208 = arith.constant 0 : index
    %c0_209 = arith.constant 0 : index
    %487 = vector.load %arg9[%c1_206, %c0_207, %c0_208, %c0_209] : memref<2x8x16x96xf32, #tpu.memory_space<vmem>>, vector<1x8x16x96xf32>
    %488 = vector.shape_cast %487 : vector<1x8x16x96xf32> to vector<8x16x96xf32>
    %489 = vector.shape_cast %486 : vector<8x16x96xf32> to vector<1x8x16x96xf32>
    tpu.vector_store %arg9[%c1_206, %c0_207, %c0_208, %c0_209], %489 {strides = array<i32>} : memref<2x8x16x96xf32, #tpu.memory_space<vmem>>, vector<1x8x16x96xf32>,
    %c2_210 = arith.constant 2 : index
    %c0_211 = arith.constant 0 : index
    %c0_212 = arith.constant 0 : index
    %490 = vector.load %arg3[%c2_210, %c0_211, %c0_212] : memref<4x32x96xf32, #tpu.memory_space<vmem>>, vector<1x32x96xf32>
    %491 = vector.shape_cast %490 : vector<1x32x96xf32> to vector<32x96xf32>
    %c3_213 = arith.constant 3 : index
    %c0_214 = arith.constant 0 : index
    %c0_215 = arith.constant 0 : index
    %492 = vector.load %arg3[%c3_213, %c0_214, %c0_215] : memref<4x32x96xf32, #tpu.memory_space<vmem>>, vector<1x32x96xf32>
    %493 = vector.shape_cast %492 : vector<1x32x96xf32> to vector<32x96xf32>
    %c2_216 = arith.constant 2 : index
    %c0_217 = arith.constant 0 : index
    %c0_218 = arith.constant 0 : index
    %494 = vector.load %arg5[%c2_216, %c0_217, %c0_218] : memref<4x1x32xf32, #tpu.memory_space<vmem>>, vector<1x1x32xf32>
    %495 = vector.shape_cast %494 : vector<1x1x32xf32> to vector<1x32xf32>
    %c3_219 = arith.constant 3 : index
    %c0_220 = arith.constant 0 : index
    %c0_221 = arith.constant 0 : index
    %496 = vector.load %arg5[%c3_219, %c0_220, %c0_221] : memref<4x1x32xf32, #tpu.memory_space<vmem>>, vector<1x1x32xf32>
    %497 = vector.shape_cast %496 : vector<1x1x32xf32> to vector<1x32xf32>
    %c0_222 = arith.constant 0 : index
    %c0_223 = arith.constant 0 : index
    %c0_224 = arith.constant 0 : index
    %c0_225 = arith.constant 0 : index
    %498 = vector.load %arg9[%c0_222, %c0_223, %c0_224, %c0_225] : memref<2x8x16x96xf32, #tpu.memory_space<vmem>>, vector<1x1x16x96xf32>
    %499 = vector.shape_cast %498 : vector<1x1x16x96xf32> to vector<16x96xf32>
    %500 = vector.extract_strided_slice %499 {offsets = [0, 0], sizes = [16, 64], strides = [1, 1]} : vector<16x96xf32> to vector<16x64xf32>
    %501 = arith.negf %500 : vector<16x64xf32>
    %502 = math.exp %501 : vector<16x64xf32>
    %cst_226 = arith.constant 1.000000e+00 : f32
    %503 = vector.broadcast %cst_226 : f32 to vector<16x64xf32>
    %504 = arith.addf %503, %502 : vector<16x64xf32>
    %505 = arith.divf %503, %504 : vector<16x64xf32>
    %506 = vector.extract_strided_slice %505 {offsets = [0, 0], sizes = [16, 32], strides = [1, 1]} : vector<16x64xf32> to vector<16x32xf32>
    %507 = vector.extract_strided_slice %505 {offsets = [0, 32], sizes = [16, 32], strides = [1, 1]} : vector<16x64xf32> to vector<16x32xf32>
    %508 = vector.extract_strided_slice %499 {offsets = [0, 64], sizes = [16, 32], strides = [1, 1]} : vector<16x96xf32> to vector<16x32xf32>
    %509 = vector.broadcast %495 : vector<1x32xf32> to vector<16x32xf32>
    %510 = arith.mulf %506, %509 : vector<16x32xf32>
    %511 = arith.addf %508, %510 : vector<16x32xf32>
    %512 = math.tanh %511 : vector<16x32xf32>
    %cst_227 = arith.constant 1.000000e+00 : f32
    %513 = vector.broadcast %cst_227 : f32 to vector<16x32xf32>
    %514 = arith.subf %513, %507 : vector<16x32xf32>
    %515 = arith.mulf %514, %512 : vector<16x32xf32>
    %c0_228 = arith.constant 0 : index
    %c0_229 = arith.constant 0 : index
    %c0_230 = arith.constant 0 : index
    %516 = vector.load %arg11[%c0_228, %c0_229, %c0_230] : memref<8x16x64xf32, #tpu.memory_space<vmem>>, vector<1x16x32xf32>
    %517 = vector.shape_cast %516 : vector<1x16x32xf32> to vector<16x32xf32>
    %518 = vector.shape_cast %515 : vector<16x32xf32> to vector<1x16x32xf32>
    tpu.vector_store %arg11[%c0_228, %c0_229, %c0_230], %518 {strides = array<i32>} : memref<8x16x64xf32, #tpu.memory_space<vmem>>, vector<1x16x32xf32>,
    %c1_231 = arith.constant 1 : index
    %c7_232 = arith.constant 7 : index
    %c0_233 = arith.constant 0 : index
    %c0_234 = arith.constant 0 : index
    %519 = vector.load %arg9[%c1_231, %c7_232, %c0_233, %c0_234] : memref<2x8x16x96xf32, #tpu.memory_space<vmem>>, vector<1x1x16x96xf32>
    %520 = vector.shape_cast %519 : vector<1x1x16x96xf32> to vector<16x96xf32>
    %521 = vector.extract_strided_slice %520 {offsets = [0, 0], sizes = [16, 64], strides = [1, 1]} : vector<16x96xf32> to vector<16x64xf32>
    %522 = arith.negf %521 : vector<16x64xf32>
    %523 = math.exp %522 : vector<16x64xf32>
    %cst_235 = arith.constant 1.000000e+00 : f32
    %524 = vector.broadcast %cst_235 : f32 to vector<16x64xf32>
    %525 = arith.addf %524, %523 : vector<16x64xf32>
    %526 = arith.divf %524, %525 : vector<16x64xf32>
    %527 = vector.extract_strided_slice %526 {offsets = [0, 0], sizes = [16, 32], strides = [1, 1]} : vector<16x64xf32> to vector<16x32xf32>
    %528 = vector.extract_strided_slice %526 {offsets = [0, 32], sizes = [16, 32], strides = [1, 1]} : vector<16x64xf32> to vector<16x32xf32>
    %529 = vector.extract_strided_slice %520 {offsets = [0, 64], sizes = [16, 32], strides = [1, 1]} : vector<16x96xf32> to vector<16x32xf32>
    %530 = vector.broadcast %497 : vector<1x32xf32> to vector<16x32xf32>
    %531 = arith.mulf %527, %530 : vector<16x32xf32>
    %532 = arith.addf %529, %531 : vector<16x32xf32>
    %533 = math.tanh %532 : vector<16x32xf32>
    %cst_236 = arith.constant 1.000000e+00 : f32
    %534 = vector.broadcast %cst_236 : f32 to vector<16x32xf32>
    %535 = arith.subf %534, %528 : vector<16x32xf32>
    %536 = arith.mulf %535, %533 : vector<16x32xf32>
    %c7_237 = arith.constant 7 : index
    %c0_238 = arith.constant 0 : index
    %c32_239 = arith.constant 32 : index
    %537 = vector.load %arg11[%c7_237, %c0_238, %c32_239] : memref<8x16x64xf32, #tpu.memory_space<vmem>>, vector<1x16x32xf32>
    %538 = vector.shape_cast %537 : vector<1x16x32xf32> to vector<16x32xf32>
    %539 = vector.shape_cast %536 : vector<16x32xf32> to vector<1x16x32xf32>
    tpu.vector_store %arg11[%c7_237, %c0_238, %c32_239], %539 {strides = array<i32>} : memref<8x16x64xf32, #tpu.memory_space<vmem>>, vector<1x16x32xf32>,
    %c0_240 = arith.constant 0 : index
    %c1_241 = arith.constant 1 : index
    %c0_242 = arith.constant 0 : index
    %c0_243 = arith.constant 0 : index
    %540 = vector.load %arg9[%c0_240, %c1_241, %c0_242, %c0_243] : memref<2x8x16x96xf32, #tpu.memory_space<vmem>>, vector<1x1x16x96xf32>
    %541 = vector.shape_cast %540 : vector<1x1x16x96xf32> to vector<16x96xf32>
    %cst_244 = arith.constant dense<0.000000e+00> : vector<16x96xf32>
    %542 = tpu.matmul %515, %491, %cst_244 {dimension_numbers = #tpu.dot_dimension_numbers<[1], [0], [0], [1], [0, 0, 1, 1], [], []>} : vector<16x32xf32>, vector<32x96xf32>, vector<16x96xf32> -> vector<16x96xf32>
    %543 = vector.extract_strided_slice %541 {offsets = [0, 0], sizes = [16, 64], strides = [1, 1]} : vector<16x96xf32> to vector<16x64xf32>
    %544 = vector.extract_strided_slice %542 {offsets = [0, 0], sizes = [16, 64], strides = [1, 1]} : vector<16x96xf32> to vector<16x64xf32>
    %545 = arith.addf %543, %544 : vector<16x64xf32>
    %546 = arith.negf %545 : vector<16x64xf32>
    %547 = math.exp %546 : vector<16x64xf32>
    %cst_245 = arith.constant 1.000000e+00 : f32
    %548 = vector.broadcast %cst_245 : f32 to vector<16x64xf32>
    %549 = arith.addf %548, %547 : vector<16x64xf32>
    %550 = arith.divf %548, %549 : vector<16x64xf32>
    %551 = vector.extract_strided_slice %550 {offsets = [0, 0], sizes = [16, 32], strides = [1, 1]} : vector<16x64xf32> to vector<16x32xf32>
    %552 = vector.extract_strided_slice %550 {offsets = [0, 32], sizes = [16, 32], strides = [1, 1]} : vector<16x64xf32> to vector<16x32xf32>
    %553 = vector.extract_strided_slice %541 {offsets = [0, 64], sizes = [16, 32], strides = [1, 1]} : vector<16x96xf32> to vector<16x32xf32>
    %554 = vector.extract_strided_slice %542 {offsets = [0, 64], sizes = [16, 32], strides = [1, 1]} : vector<16x96xf32> to vector<16x32xf32>
    %555 = vector.broadcast %495 : vector<1x32xf32> to vector<16x32xf32>
    %556 = arith.addf %554, %555 : vector<16x32xf32>
    %557 = arith.mulf %551, %556 : vector<16x32xf32>
    %558 = arith.addf %553, %557 : vector<16x32xf32>
    %559 = math.tanh %558 : vector<16x32xf32>
    %cst_246 = arith.constant 1.000000e+00 : f32
    %560 = vector.broadcast %cst_246 : f32 to vector<16x32xf32>
    %561 = arith.subf %560, %552 : vector<16x32xf32>
    %562 = arith.mulf %561, %559 : vector<16x32xf32>
    %563 = arith.mulf %552, %515 : vector<16x32xf32>
    %564 = arith.addf %562, %563 : vector<16x32xf32>
    %c1_247 = arith.constant 1 : index
    %c0_248 = arith.constant 0 : index
    %c0_249 = arith.constant 0 : index
    %565 = vector.load %arg11[%c1_247, %c0_248, %c0_249] : memref<8x16x64xf32, #tpu.memory_space<vmem>>, vector<1x16x32xf32>
    %566 = vector.shape_cast %565 : vector<1x16x32xf32> to vector<16x32xf32>
    %567 = vector.shape_cast %564 : vector<16x32xf32> to vector<1x16x32xf32>
    tpu.vector_store %arg11[%c1_247, %c0_248, %c0_249], %567 {strides = array<i32>} : memref<8x16x64xf32, #tpu.memory_space<vmem>>, vector<1x16x32xf32>,
    %c1_250 = arith.constant 1 : index
    %c6_251 = arith.constant 6 : index
    %c0_252 = arith.constant 0 : index
    %c0_253 = arith.constant 0 : index
    %568 = vector.load %arg9[%c1_250, %c6_251, %c0_252, %c0_253] : memref<2x8x16x96xf32, #tpu.memory_space<vmem>>, vector<1x1x16x96xf32>
    %569 = vector.shape_cast %568 : vector<1x1x16x96xf32> to vector<16x96xf32>
    %cst_254 = arith.constant dense<0.000000e+00> : vector<16x96xf32>
    %570 = tpu.matmul %536, %493, %cst_254 {dimension_numbers = #tpu.dot_dimension_numbers<[1], [0], [0], [1], [0, 0, 1, 1], [], []>} : vector<16x32xf32>, vector<32x96xf32>, vector<16x96xf32> -> vector<16x96xf32>
    %571 = vector.extract_strided_slice %569 {offsets = [0, 0], sizes = [16, 64], strides = [1, 1]} : vector<16x96xf32> to vector<16x64xf32>
    %572 = vector.extract_strided_slice %570 {offsets = [0, 0], sizes = [16, 64], strides = [1, 1]} : vector<16x96xf32> to vector<16x64xf32>
    %573 = arith.addf %571, %572 : vector<16x64xf32>
    %574 = arith.negf %573 : vector<16x64xf32>
    %575 = math.exp %574 : vector<16x64xf32>
    %cst_255 = arith.constant 1.000000e+00 : f32
    %576 = vector.broadcast %cst_255 : f32 to vector<16x64xf32>
    %577 = arith.addf %576, %575 : vector<16x64xf32>
    %578 = arith.divf %576, %577 : vector<16x64xf32>
    %579 = vector.extract_strided_slice %578 {offsets = [0, 0], sizes = [16, 32], strides = [1, 1]} : vector<16x64xf32> to vector<16x32xf32>
    %580 = vector.extract_strided_slice %578 {offsets = [0, 32], sizes = [16, 32], strides = [1, 1]} : vector<16x64xf32> to vector<16x32xf32>
    %581 = vector.extract_strided_slice %569 {offsets = [0, 64], sizes = [16, 32], strides = [1, 1]} : vector<16x96xf32> to vector<16x32xf32>
    %582 = vector.extract_strided_slice %570 {offsets = [0, 64], sizes = [16, 32], strides = [1, 1]} : vector<16x96xf32> to vector<16x32xf32>
    %583 = vector.broadcast %497 : vector<1x32xf32> to vector<16x32xf32>
    %584 = arith.addf %582, %583 : vector<16x32xf32>
    %585 = arith.mulf %579, %584 : vector<16x32xf32>
    %586 = arith.addf %581, %585 : vector<16x32xf32>
    %587 = math.tanh %586 : vector<16x32xf32>
    %cst_256 = arith.constant 1.000000e+00 : f32
    %588 = vector.broadcast %cst_256 : f32 to vector<16x32xf32>
    %589 = arith.subf %588, %580 : vector<16x32xf32>
    %590 = arith.mulf %589, %587 : vector<16x32xf32>
    %591 = arith.mulf %580, %536 : vector<16x32xf32>
    %592 = arith.addf %590, %591 : vector<16x32xf32>
    %c6_257 = arith.constant 6 : index
    %c0_258 = arith.constant 0 : index
    %c32_259 = arith.constant 32 : index
    %593 = vector.load %arg11[%c6_257, %c0_258, %c32_259] : memref<8x16x64xf32, #tpu.memory_space<vmem>>, vector<1x16x32xf32>
    %594 = vector.shape_cast %593 : vector<1x16x32xf32> to vector<16x32xf32>
    %595 = vector.shape_cast %592 : vector<16x32xf32> to vector<1x16x32xf32>
    tpu.vector_store %arg11[%c6_257, %c0_258, %c32_259], %595 {strides = array<i32>} : memref<8x16x64xf32, #tpu.memory_space<vmem>>, vector<1x16x32xf32>,
    %c0_260 = arith.constant 0 : index
    %c2_261 = arith.constant 2 : index
    %c0_262 = arith.constant 0 : index
    %c0_263 = arith.constant 0 : index
    %596 = vector.load %arg9[%c0_260, %c2_261, %c0_262, %c0_263] : memref<2x8x16x96xf32, #tpu.memory_space<vmem>>, vector<1x1x16x96xf32>
    %597 = vector.shape_cast %596 : vector<1x1x16x96xf32> to vector<16x96xf32>
    %cst_264 = arith.constant dense<0.000000e+00> : vector<16x96xf32>
    %598 = tpu.matmul %564, %491, %cst_264 {dimension_numbers = #tpu.dot_dimension_numbers<[1], [0], [0], [1], [0, 0, 1, 1], [], []>} : vector<16x32xf32>, vector<32x96xf32>, vector<16x96xf32> -> vector<16x96xf32>
    %599 = vector.extract_strided_slice %597 {offsets = [0, 0], sizes = [16, 64], strides = [1, 1]} : vector<16x96xf32> to vector<16x64xf32>
    %600 = vector.extract_strided_slice %598 {offsets = [0, 0], sizes = [16, 64], strides = [1, 1]} : vector<16x96xf32> to vector<16x64xf32>
    %601 = arith.addf %599, %600 : vector<16x64xf32>
    %602 = arith.negf %601 : vector<16x64xf32>
    %603 = math.exp %602 : vector<16x64xf32>
    %cst_265 = arith.constant 1.000000e+00 : f32
    %604 = vector.broadcast %cst_265 : f32 to vector<16x64xf32>
    %605 = arith.addf %604, %603 : vector<16x64xf32>
    %606 = arith.divf %604, %605 : vector<16x64xf32>
    %607 = vector.extract_strided_slice %606 {offsets = [0, 0], sizes = [16, 32], strides = [1, 1]} : vector<16x64xf32> to vector<16x32xf32>
    %608 = vector.extract_strided_slice %606 {offsets = [0, 32], sizes = [16, 32], strides = [1, 1]} : vector<16x64xf32> to vector<16x32xf32>
    %609 = vector.extract_strided_slice %597 {offsets = [0, 64], sizes = [16, 32], strides = [1, 1]} : vector<16x96xf32> to vector<16x32xf32>
    %610 = vector.extract_strided_slice %598 {offsets = [0, 64], sizes = [16, 32], strides = [1, 1]} : vector<16x96xf32> to vector<16x32xf32>
    %611 = vector.broadcast %495 : vector<1x32xf32> to vector<16x32xf32>
    %612 = arith.addf %610, %611 : vector<16x32xf32>
    %613 = arith.mulf %607, %612 : vector<16x32xf32>
    %614 = arith.addf %609, %613 : vector<16x32xf32>
    %615 = math.tanh %614 : vector<16x32xf32>
    %cst_266 = arith.constant 1.000000e+00 : f32
    %616 = vector.broadcast %cst_266 : f32 to vector<16x32xf32>
    %617 = arith.subf %616, %608 : vector<16x32xf32>
    %618 = arith.mulf %617, %615 : vector<16x32xf32>
    %619 = arith.mulf %608, %564 : vector<16x32xf32>
    %620 = arith.addf %618, %619 : vector<16x32xf32>
    %c2_267 = arith.constant 2 : index
    %c0_268 = arith.constant 0 : index
    %c0_269 = arith.constant 0 : index
    %621 = vector.load %arg11[%c2_267, %c0_268, %c0_269] : memref<8x16x64xf32, #tpu.memory_space<vmem>>, vector<1x16x32xf32>
    %622 = vector.shape_cast %621 : vector<1x16x32xf32> to vector<16x32xf32>
    %623 = vector.shape_cast %620 : vector<16x32xf32> to vector<1x16x32xf32>
    tpu.vector_store %arg11[%c2_267, %c0_268, %c0_269], %623 {strides = array<i32>} : memref<8x16x64xf32, #tpu.memory_space<vmem>>, vector<1x16x32xf32>,
    %c1_270 = arith.constant 1 : index
    %c5_271 = arith.constant 5 : index
    %c0_272 = arith.constant 0 : index
    %c0_273 = arith.constant 0 : index
    %624 = vector.load %arg9[%c1_270, %c5_271, %c0_272, %c0_273] : memref<2x8x16x96xf32, #tpu.memory_space<vmem>>, vector<1x1x16x96xf32>
    %625 = vector.shape_cast %624 : vector<1x1x16x96xf32> to vector<16x96xf32>
    %cst_274 = arith.constant dense<0.000000e+00> : vector<16x96xf32>
    %626 = tpu.matmul %592, %493, %cst_274 {dimension_numbers = #tpu.dot_dimension_numbers<[1], [0], [0], [1], [0, 0, 1, 1], [], []>} : vector<16x32xf32>, vector<32x96xf32>, vector<16x96xf32> -> vector<16x96xf32>
    %627 = vector.extract_strided_slice %625 {offsets = [0, 0], sizes = [16, 64], strides = [1, 1]} : vector<16x96xf32> to vector<16x64xf32>
    %628 = vector.extract_strided_slice %626 {offsets = [0, 0], sizes = [16, 64], strides = [1, 1]} : vector<16x96xf32> to vector<16x64xf32>
    %629 = arith.addf %627, %628 : vector<16x64xf32>
    %630 = arith.negf %629 : vector<16x64xf32>
    %631 = math.exp %630 : vector<16x64xf32>
    %cst_275 = arith.constant 1.000000e+00 : f32
    %632 = vector.broadcast %cst_275 : f32 to vector<16x64xf32>
    %633 = arith.addf %632, %631 : vector<16x64xf32>
    %634 = arith.divf %632, %633 : vector<16x64xf32>
    %635 = vector.extract_strided_slice %634 {offsets = [0, 0], sizes = [16, 32], strides = [1, 1]} : vector<16x64xf32> to vector<16x32xf32>
    %636 = vector.extract_strided_slice %634 {offsets = [0, 32], sizes = [16, 32], strides = [1, 1]} : vector<16x64xf32> to vector<16x32xf32>
    %637 = vector.extract_strided_slice %625 {offsets = [0, 64], sizes = [16, 32], strides = [1, 1]} : vector<16x96xf32> to vector<16x32xf32>
    %638 = vector.extract_strided_slice %626 {offsets = [0, 64], sizes = [16, 32], strides = [1, 1]} : vector<16x96xf32> to vector<16x32xf32>
    %639 = vector.broadcast %497 : vector<1x32xf32> to vector<16x32xf32>
    %640 = arith.addf %638, %639 : vector<16x32xf32>
    %641 = arith.mulf %635, %640 : vector<16x32xf32>
    %642 = arith.addf %637, %641 : vector<16x32xf32>
    %643 = math.tanh %642 : vector<16x32xf32>
    %cst_276 = arith.constant 1.000000e+00 : f32
    %644 = vector.broadcast %cst_276 : f32 to vector<16x32xf32>
    %645 = arith.subf %644, %636 : vector<16x32xf32>
    %646 = arith.mulf %645, %643 : vector<16x32xf32>
    %647 = arith.mulf %636, %592 : vector<16x32xf32>
    %648 = arith.addf %646, %647 : vector<16x32xf32>
    %c5_277 = arith.constant 5 : index
    %c0_278 = arith.constant 0 : index
    %c32_279 = arith.constant 32 : index
    %649 = vector.load %arg11[%c5_277, %c0_278, %c32_279] : memref<8x16x64xf32, #tpu.memory_space<vmem>>, vector<1x16x32xf32>
    %650 = vector.shape_cast %649 : vector<1x16x32xf32> to vector<16x32xf32>
    %651 = vector.shape_cast %648 : vector<16x32xf32> to vector<1x16x32xf32>
    tpu.vector_store %arg11[%c5_277, %c0_278, %c32_279], %651 {strides = array<i32>} : memref<8x16x64xf32, #tpu.memory_space<vmem>>, vector<1x16x32xf32>,
    %c0_280 = arith.constant 0 : index
    %c3_281 = arith.constant 3 : index
    %c0_282 = arith.constant 0 : index
    %c0_283 = arith.constant 0 : index
    %652 = vector.load %arg9[%c0_280, %c3_281, %c0_282, %c0_283] : memref<2x8x16x96xf32, #tpu.memory_space<vmem>>, vector<1x1x16x96xf32>
    %653 = vector.shape_cast %652 : vector<1x1x16x96xf32> to vector<16x96xf32>
    %cst_284 = arith.constant dense<0.000000e+00> : vector<16x96xf32>
    %654 = tpu.matmul %620, %491, %cst_284 {dimension_numbers = #tpu.dot_dimension_numbers<[1], [0], [0], [1], [0, 0, 1, 1], [], []>} : vector<16x32xf32>, vector<32x96xf32>, vector<16x96xf32> -> vector<16x96xf32>
    %655 = vector.extract_strided_slice %653 {offsets = [0, 0], sizes = [16, 64], strides = [1, 1]} : vector<16x96xf32> to vector<16x64xf32>
    %656 = vector.extract_strided_slice %654 {offsets = [0, 0], sizes = [16, 64], strides = [1, 1]} : vector<16x96xf32> to vector<16x64xf32>
    %657 = arith.addf %655, %656 : vector<16x64xf32>
    %658 = arith.negf %657 : vector<16x64xf32>
    %659 = math.exp %658 : vector<16x64xf32>
    %cst_285 = arith.constant 1.000000e+00 : f32
    %660 = vector.broadcast %cst_285 : f32 to vector<16x64xf32>
    %661 = arith.addf %660, %659 : vector<16x64xf32>
    %662 = arith.divf %660, %661 : vector<16x64xf32>
    %663 = vector.extract_strided_slice %662 {offsets = [0, 0], sizes = [16, 32], strides = [1, 1]} : vector<16x64xf32> to vector<16x32xf32>
    %664 = vector.extract_strided_slice %662 {offsets = [0, 32], sizes = [16, 32], strides = [1, 1]} : vector<16x64xf32> to vector<16x32xf32>
    %665 = vector.extract_strided_slice %653 {offsets = [0, 64], sizes = [16, 32], strides = [1, 1]} : vector<16x96xf32> to vector<16x32xf32>
    %666 = vector.extract_strided_slice %654 {offsets = [0, 64], sizes = [16, 32], strides = [1, 1]} : vector<16x96xf32> to vector<16x32xf32>
    %667 = vector.broadcast %495 : vector<1x32xf32> to vector<16x32xf32>
    %668 = arith.addf %666, %667 : vector<16x32xf32>
    %669 = arith.mulf %663, %668 : vector<16x32xf32>
    %670 = arith.addf %665, %669 : vector<16x32xf32>
    %671 = math.tanh %670 : vector<16x32xf32>
    %cst_286 = arith.constant 1.000000e+00 : f32
    %672 = vector.broadcast %cst_286 : f32 to vector<16x32xf32>
    %673 = arith.subf %672, %664 : vector<16x32xf32>
    %674 = arith.mulf %673, %671 : vector<16x32xf32>
    %675 = arith.mulf %664, %620 : vector<16x32xf32>
    %676 = arith.addf %674, %675 : vector<16x32xf32>
    %c3_287 = arith.constant 3 : index
    %c0_288 = arith.constant 0 : index
    %c0_289 = arith.constant 0 : index
    %677 = vector.load %arg11[%c3_287, %c0_288, %c0_289] : memref<8x16x64xf32, #tpu.memory_space<vmem>>, vector<1x16x32xf32>
    %678 = vector.shape_cast %677 : vector<1x16x32xf32> to vector<16x32xf32>
    %679 = vector.shape_cast %676 : vector<16x32xf32> to vector<1x16x32xf32>
    tpu.vector_store %arg11[%c3_287, %c0_288, %c0_289], %679 {strides = array<i32>} : memref<8x16x64xf32, #tpu.memory_space<vmem>>, vector<1x16x32xf32>,
    %c1_290 = arith.constant 1 : index
    %c4_291 = arith.constant 4 : index
    %c0_292 = arith.constant 0 : index
    %c0_293 = arith.constant 0 : index
    %680 = vector.load %arg9[%c1_290, %c4_291, %c0_292, %c0_293] : memref<2x8x16x96xf32, #tpu.memory_space<vmem>>, vector<1x1x16x96xf32>
    %681 = vector.shape_cast %680 : vector<1x1x16x96xf32> to vector<16x96xf32>
    %cst_294 = arith.constant dense<0.000000e+00> : vector<16x96xf32>
    %682 = tpu.matmul %648, %493, %cst_294 {dimension_numbers = #tpu.dot_dimension_numbers<[1], [0], [0], [1], [0, 0, 1, 1], [], []>} : vector<16x32xf32>, vector<32x96xf32>, vector<16x96xf32> -> vector<16x96xf32>
    %683 = vector.extract_strided_slice %681 {offsets = [0, 0], sizes = [16, 64], strides = [1, 1]} : vector<16x96xf32> to vector<16x64xf32>
    %684 = vector.extract_strided_slice %682 {offsets = [0, 0], sizes = [16, 64], strides = [1, 1]} : vector<16x96xf32> to vector<16x64xf32>
    %685 = arith.addf %683, %684 : vector<16x64xf32>
    %686 = arith.negf %685 : vector<16x64xf32>
    %687 = math.exp %686 : vector<16x64xf32>
    %cst_295 = arith.constant 1.000000e+00 : f32
    %688 = vector.broadcast %cst_295 : f32 to vector<16x64xf32>
    %689 = arith.addf %688, %687 : vector<16x64xf32>
    %690 = arith.divf %688, %689 : vector<16x64xf32>
    %691 = vector.extract_strided_slice %690 {offsets = [0, 0], sizes = [16, 32], strides = [1, 1]} : vector<16x64xf32> to vector<16x32xf32>
    %692 = vector.extract_strided_slice %690 {offsets = [0, 32], sizes = [16, 32], strides = [1, 1]} : vector<16x64xf32> to vector<16x32xf32>
    %693 = vector.extract_strided_slice %681 {offsets = [0, 64], sizes = [16, 32], strides = [1, 1]} : vector<16x96xf32> to vector<16x32xf32>
    %694 = vector.extract_strided_slice %682 {offsets = [0, 64], sizes = [16, 32], strides = [1, 1]} : vector<16x96xf32> to vector<16x32xf32>
    %695 = vector.broadcast %497 : vector<1x32xf32> to vector<16x32xf32>
    %696 = arith.addf %694, %695 : vector<16x32xf32>
    %697 = arith.mulf %691, %696 : vector<16x32xf32>
    %698 = arith.addf %693, %697 : vector<16x32xf32>
    %699 = math.tanh %698 : vector<16x32xf32>
    %cst_296 = arith.constant 1.000000e+00 : f32
    %700 = vector.broadcast %cst_296 : f32 to vector<16x32xf32>
    %701 = arith.subf %700, %692 : vector<16x32xf32>
    %702 = arith.mulf %701, %699 : vector<16x32xf32>
    %703 = arith.mulf %692, %648 : vector<16x32xf32>
    %704 = arith.addf %702, %703 : vector<16x32xf32>
    %c4_297 = arith.constant 4 : index
    %c0_298 = arith.constant 0 : index
    %c32_299 = arith.constant 32 : index
    %705 = vector.load %arg11[%c4_297, %c0_298, %c32_299] : memref<8x16x64xf32, #tpu.memory_space<vmem>>, vector<1x16x32xf32>
    %706 = vector.shape_cast %705 : vector<1x16x32xf32> to vector<16x32xf32>
    %707 = vector.shape_cast %704 : vector<16x32xf32> to vector<1x16x32xf32>
    tpu.vector_store %arg11[%c4_297, %c0_298, %c32_299], %707 {strides = array<i32>} : memref<8x16x64xf32, #tpu.memory_space<vmem>>, vector<1x16x32xf32>,
    %c0_300 = arith.constant 0 : index
    %c4_301 = arith.constant 4 : index
    %c0_302 = arith.constant 0 : index
    %c0_303 = arith.constant 0 : index
    %708 = vector.load %arg9[%c0_300, %c4_301, %c0_302, %c0_303] : memref<2x8x16x96xf32, #tpu.memory_space<vmem>>, vector<1x1x16x96xf32>
    %709 = vector.shape_cast %708 : vector<1x1x16x96xf32> to vector<16x96xf32>
    %cst_304 = arith.constant dense<0.000000e+00> : vector<16x96xf32>
    %710 = tpu.matmul %676, %491, %cst_304 {dimension_numbers = #tpu.dot_dimension_numbers<[1], [0], [0], [1], [0, 0, 1, 1], [], []>} : vector<16x32xf32>, vector<32x96xf32>, vector<16x96xf32> -> vector<16x96xf32>
    %711 = vector.extract_strided_slice %709 {offsets = [0, 0], sizes = [16, 64], strides = [1, 1]} : vector<16x96xf32> to vector<16x64xf32>
    %712 = vector.extract_strided_slice %710 {offsets = [0, 0], sizes = [16, 64], strides = [1, 1]} : vector<16x96xf32> to vector<16x64xf32>
    %713 = arith.addf %711, %712 : vector<16x64xf32>
    %714 = arith.negf %713 : vector<16x64xf32>
    %715 = math.exp %714 : vector<16x64xf32>
    %cst_305 = arith.constant 1.000000e+00 : f32
    %716 = vector.broadcast %cst_305 : f32 to vector<16x64xf32>
    %717 = arith.addf %716, %715 : vector<16x64xf32>
    %718 = arith.divf %716, %717 : vector<16x64xf32>
    %719 = vector.extract_strided_slice %718 {offsets = [0, 0], sizes = [16, 32], strides = [1, 1]} : vector<16x64xf32> to vector<16x32xf32>
    %720 = vector.extract_strided_slice %718 {offsets = [0, 32], sizes = [16, 32], strides = [1, 1]} : vector<16x64xf32> to vector<16x32xf32>
    %721 = vector.extract_strided_slice %709 {offsets = [0, 64], sizes = [16, 32], strides = [1, 1]} : vector<16x96xf32> to vector<16x32xf32>
    %722 = vector.extract_strided_slice %710 {offsets = [0, 64], sizes = [16, 32], strides = [1, 1]} : vector<16x96xf32> to vector<16x32xf32>
    %723 = vector.broadcast %495 : vector<1x32xf32> to vector<16x32xf32>
    %724 = arith.addf %722, %723 : vector<16x32xf32>
    %725 = arith.mulf %719, %724 : vector<16x32xf32>
    %726 = arith.addf %721, %725 : vector<16x32xf32>
    %727 = math.tanh %726 : vector<16x32xf32>
    %cst_306 = arith.constant 1.000000e+00 : f32
    %728 = vector.broadcast %cst_306 : f32 to vector<16x32xf32>
    %729 = arith.subf %728, %720 : vector<16x32xf32>
    %730 = arith.mulf %729, %727 : vector<16x32xf32>
    %731 = arith.mulf %720, %676 : vector<16x32xf32>
    %732 = arith.addf %730, %731 : vector<16x32xf32>
    %c4_307 = arith.constant 4 : index
    %c0_308 = arith.constant 0 : index
    %c0_309 = arith.constant 0 : index
    %733 = vector.load %arg11[%c4_307, %c0_308, %c0_309] : memref<8x16x64xf32, #tpu.memory_space<vmem>>, vector<1x16x32xf32>
    %734 = vector.shape_cast %733 : vector<1x16x32xf32> to vector<16x32xf32>
    %735 = vector.shape_cast %732 : vector<16x32xf32> to vector<1x16x32xf32>
    tpu.vector_store %arg11[%c4_307, %c0_308, %c0_309], %735 {strides = array<i32>} : memref<8x16x64xf32, #tpu.memory_space<vmem>>, vector<1x16x32xf32>,
    %c1_310 = arith.constant 1 : index
    %c3_311 = arith.constant 3 : index
    %c0_312 = arith.constant 0 : index
    %c0_313 = arith.constant 0 : index
    %736 = vector.load %arg9[%c1_310, %c3_311, %c0_312, %c0_313] : memref<2x8x16x96xf32, #tpu.memory_space<vmem>>, vector<1x1x16x96xf32>
    %737 = vector.shape_cast %736 : vector<1x1x16x96xf32> to vector<16x96xf32>
    %cst_314 = arith.constant dense<0.000000e+00> : vector<16x96xf32>
    %738 = tpu.matmul %704, %493, %cst_314 {dimension_numbers = #tpu.dot_dimension_numbers<[1], [0], [0], [1], [0, 0, 1, 1], [], []>} : vector<16x32xf32>, vector<32x96xf32>, vector<16x96xf32> -> vector<16x96xf32>
    %739 = vector.extract_strided_slice %737 {offsets = [0, 0], sizes = [16, 64], strides = [1, 1]} : vector<16x96xf32> to vector<16x64xf32>
    %740 = vector.extract_strided_slice %738 {offsets = [0, 0], sizes = [16, 64], strides = [1, 1]} : vector<16x96xf32> to vector<16x64xf32>
    %741 = arith.addf %739, %740 : vector<16x64xf32>
    %742 = arith.negf %741 : vector<16x64xf32>
    %743 = math.exp %742 : vector<16x64xf32>
    %cst_315 = arith.constant 1.000000e+00 : f32
    %744 = vector.broadcast %cst_315 : f32 to vector<16x64xf32>
    %745 = arith.addf %744, %743 : vector<16x64xf32>
    %746 = arith.divf %744, %745 : vector<16x64xf32>
    %747 = vector.extract_strided_slice %746 {offsets = [0, 0], sizes = [16, 32], strides = [1, 1]} : vector<16x64xf32> to vector<16x32xf32>
    %748 = vector.extract_strided_slice %746 {offsets = [0, 32], sizes = [16, 32], strides = [1, 1]} : vector<16x64xf32> to vector<16x32xf32>
    %749 = vector.extract_strided_slice %737 {offsets = [0, 64], sizes = [16, 32], strides = [1, 1]} : vector<16x96xf32> to vector<16x32xf32>
    %750 = vector.extract_strided_slice %738 {offsets = [0, 64], sizes = [16, 32], strides = [1, 1]} : vector<16x96xf32> to vector<16x32xf32>
    %751 = vector.broadcast %497 : vector<1x32xf32> to vector<16x32xf32>
    %752 = arith.addf %750, %751 : vector<16x32xf32>
    %753 = arith.mulf %747, %752 : vector<16x32xf32>
    %754 = arith.addf %749, %753 : vector<16x32xf32>
    %755 = math.tanh %754 : vector<16x32xf32>
    %cst_316 = arith.constant 1.000000e+00 : f32
    %756 = vector.broadcast %cst_316 : f32 to vector<16x32xf32>
    %757 = arith.subf %756, %748 : vector<16x32xf32>
    %758 = arith.mulf %757, %755 : vector<16x32xf32>
    %759 = arith.mulf %748, %704 : vector<16x32xf32>
    %760 = arith.addf %758, %759 : vector<16x32xf32>
    %c3_317 = arith.constant 3 : index
    %c0_318 = arith.constant 0 : index
    %c32_319 = arith.constant 32 : index
    %761 = vector.load %arg11[%c3_317, %c0_318, %c32_319] : memref<8x16x64xf32, #tpu.memory_space<vmem>>, vector<1x16x32xf32>
    %762 = vector.shape_cast %761 : vector<1x16x32xf32> to vector<16x32xf32>
    %763 = vector.shape_cast %760 : vector<16x32xf32> to vector<1x16x32xf32>
    tpu.vector_store %arg11[%c3_317, %c0_318, %c32_319], %763 {strides = array<i32>} : memref<8x16x64xf32, #tpu.memory_space<vmem>>, vector<1x16x32xf32>,
    %c0_320 = arith.constant 0 : index
    %c5_321 = arith.constant 5 : index
    %c0_322 = arith.constant 0 : index
    %c0_323 = arith.constant 0 : index
    %764 = vector.load %arg9[%c0_320, %c5_321, %c0_322, %c0_323] : memref<2x8x16x96xf32, #tpu.memory_space<vmem>>, vector<1x1x16x96xf32>
    %765 = vector.shape_cast %764 : vector<1x1x16x96xf32> to vector<16x96xf32>
    %cst_324 = arith.constant dense<0.000000e+00> : vector<16x96xf32>
    %766 = tpu.matmul %732, %491, %cst_324 {dimension_numbers = #tpu.dot_dimension_numbers<[1], [0], [0], [1], [0, 0, 1, 1], [], []>} : vector<16x32xf32>, vector<32x96xf32>, vector<16x96xf32> -> vector<16x96xf32>
    %767 = vector.extract_strided_slice %765 {offsets = [0, 0], sizes = [16, 64], strides = [1, 1]} : vector<16x96xf32> to vector<16x64xf32>
    %768 = vector.extract_strided_slice %766 {offsets = [0, 0], sizes = [16, 64], strides = [1, 1]} : vector<16x96xf32> to vector<16x64xf32>
    %769 = arith.addf %767, %768 : vector<16x64xf32>
    %770 = arith.negf %769 : vector<16x64xf32>
    %771 = math.exp %770 : vector<16x64xf32>
    %cst_325 = arith.constant 1.000000e+00 : f32
    %772 = vector.broadcast %cst_325 : f32 to vector<16x64xf32>
    %773 = arith.addf %772, %771 : vector<16x64xf32>
    %774 = arith.divf %772, %773 : vector<16x64xf32>
    %775 = vector.extract_strided_slice %774 {offsets = [0, 0], sizes = [16, 32], strides = [1, 1]} : vector<16x64xf32> to vector<16x32xf32>
    %776 = vector.extract_strided_slice %774 {offsets = [0, 32], sizes = [16, 32], strides = [1, 1]} : vector<16x64xf32> to vector<16x32xf32>
    %777 = vector.extract_strided_slice %765 {offsets = [0, 64], sizes = [16, 32], strides = [1, 1]} : vector<16x96xf32> to vector<16x32xf32>
    %778 = vector.extract_strided_slice %766 {offsets = [0, 64], sizes = [16, 32], strides = [1, 1]} : vector<16x96xf32> to vector<16x32xf32>
    %779 = vector.broadcast %495 : vector<1x32xf32> to vector<16x32xf32>
    %780 = arith.addf %778, %779 : vector<16x32xf32>
    %781 = arith.mulf %775, %780 : vector<16x32xf32>
    %782 = arith.addf %777, %781 : vector<16x32xf32>
    %783 = math.tanh %782 : vector<16x32xf32>
    %cst_326 = arith.constant 1.000000e+00 : f32
    %784 = vector.broadcast %cst_326 : f32 to vector<16x32xf32>
    %785 = arith.subf %784, %776 : vector<16x32xf32>
    %786 = arith.mulf %785, %783 : vector<16x32xf32>
    %787 = arith.mulf %776, %732 : vector<16x32xf32>
    %788 = arith.addf %786, %787 : vector<16x32xf32>
    %c5_327 = arith.constant 5 : index
    %c0_328 = arith.constant 0 : index
    %c0_329 = arith.constant 0 : index
    %789 = vector.load %arg11[%c5_327, %c0_328, %c0_329] : memref<8x16x64xf32, #tpu.memory_space<vmem>>, vector<1x16x32xf32>
    %790 = vector.shape_cast %789 : vector<1x16x32xf32> to vector<16x32xf32>
    %791 = vector.shape_cast %788 : vector<16x32xf32> to vector<1x16x32xf32>
    tpu.vector_store %arg11[%c5_327, %c0_328, %c0_329], %791 {strides = array<i32>} : memref<8x16x64xf32, #tpu.memory_space<vmem>>, vector<1x16x32xf32>,
    %c1_330 = arith.constant 1 : index
    %c2_331 = arith.constant 2 : index
    %c0_332 = arith.constant 0 : index
    %c0_333 = arith.constant 0 : index
    %792 = vector.load %arg9[%c1_330, %c2_331, %c0_332, %c0_333] : memref<2x8x16x96xf32, #tpu.memory_space<vmem>>, vector<1x1x16x96xf32>
    %793 = vector.shape_cast %792 : vector<1x1x16x96xf32> to vector<16x96xf32>
    %cst_334 = arith.constant dense<0.000000e+00> : vector<16x96xf32>
    %794 = tpu.matmul %760, %493, %cst_334 {dimension_numbers = #tpu.dot_dimension_numbers<[1], [0], [0], [1], [0, 0, 1, 1], [], []>} : vector<16x32xf32>, vector<32x96xf32>, vector<16x96xf32> -> vector<16x96xf32>
    %795 = vector.extract_strided_slice %793 {offsets = [0, 0], sizes = [16, 64], strides = [1, 1]} : vector<16x96xf32> to vector<16x64xf32>
    %796 = vector.extract_strided_slice %794 {offsets = [0, 0], sizes = [16, 64], strides = [1, 1]} : vector<16x96xf32> to vector<16x64xf32>
    %797 = arith.addf %795, %796 : vector<16x64xf32>
    %798 = arith.negf %797 : vector<16x64xf32>
    %799 = math.exp %798 : vector<16x64xf32>
    %cst_335 = arith.constant 1.000000e+00 : f32
    %800 = vector.broadcast %cst_335 : f32 to vector<16x64xf32>
    %801 = arith.addf %800, %799 : vector<16x64xf32>
    %802 = arith.divf %800, %801 : vector<16x64xf32>
    %803 = vector.extract_strided_slice %802 {offsets = [0, 0], sizes = [16, 32], strides = [1, 1]} : vector<16x64xf32> to vector<16x32xf32>
    %804 = vector.extract_strided_slice %802 {offsets = [0, 32], sizes = [16, 32], strides = [1, 1]} : vector<16x64xf32> to vector<16x32xf32>
    %805 = vector.extract_strided_slice %793 {offsets = [0, 64], sizes = [16, 32], strides = [1, 1]} : vector<16x96xf32> to vector<16x32xf32>
    %806 = vector.extract_strided_slice %794 {offsets = [0, 64], sizes = [16, 32], strides = [1, 1]} : vector<16x96xf32> to vector<16x32xf32>
    %807 = vector.broadcast %497 : vector<1x32xf32> to vector<16x32xf32>
    %808 = arith.addf %806, %807 : vector<16x32xf32>
    %809 = arith.mulf %803, %808 : vector<16x32xf32>
    %810 = arith.addf %805, %809 : vector<16x32xf32>
    %811 = math.tanh %810 : vector<16x32xf32>
    %cst_336 = arith.constant 1.000000e+00 : f32
    %812 = vector.broadcast %cst_336 : f32 to vector<16x32xf32>
    %813 = arith.subf %812, %804 : vector<16x32xf32>
    %814 = arith.mulf %813, %811 : vector<16x32xf32>
    %815 = arith.mulf %804, %760 : vector<16x32xf32>
    %816 = arith.addf %814, %815 : vector<16x32xf32>
    %c2_337 = arith.constant 2 : index
    %c0_338 = arith.constant 0 : index
    %c32_339 = arith.constant 32 : index
    %817 = vector.load %arg11[%c2_337, %c0_338, %c32_339] : memref<8x16x64xf32, #tpu.memory_space<vmem>>, vector<1x16x32xf32>
    %818 = vector.shape_cast %817 : vector<1x16x32xf32> to vector<16x32xf32>
    %819 = vector.shape_cast %816 : vector<16x32xf32> to vector<1x16x32xf32>
    tpu.vector_store %arg11[%c2_337, %c0_338, %c32_339], %819 {strides = array<i32>} : memref<8x16x64xf32, #tpu.memory_space<vmem>>, vector<1x16x32xf32>,
    %c0_340 = arith.constant 0 : index
    %c6_341 = arith.constant 6 : index
    %c0_342 = arith.constant 0 : index
    %c0_343 = arith.constant 0 : index
    %820 = vector.load %arg9[%c0_340, %c6_341, %c0_342, %c0_343] : memref<2x8x16x96xf32, #tpu.memory_space<vmem>>, vector<1x1x16x96xf32>
    %821 = vector.shape_cast %820 : vector<1x1x16x96xf32> to vector<16x96xf32>
    %cst_344 = arith.constant dense<0.000000e+00> : vector<16x96xf32>
    %822 = tpu.matmul %788, %491, %cst_344 {dimension_numbers = #tpu.dot_dimension_numbers<[1], [0], [0], [1], [0, 0, 1, 1], [], []>} : vector<16x32xf32>, vector<32x96xf32>, vector<16x96xf32> -> vector<16x96xf32>
    %823 = vector.extract_strided_slice %821 {offsets = [0, 0], sizes = [16, 64], strides = [1, 1]} : vector<16x96xf32> to vector<16x64xf32>
    %824 = vector.extract_strided_slice %822 {offsets = [0, 0], sizes = [16, 64], strides = [1, 1]} : vector<16x96xf32> to vector<16x64xf32>
    %825 = arith.addf %823, %824 : vector<16x64xf32>
    %826 = arith.negf %825 : vector<16x64xf32>
    %827 = math.exp %826 : vector<16x64xf32>
    %cst_345 = arith.constant 1.000000e+00 : f32
    %828 = vector.broadcast %cst_345 : f32 to vector<16x64xf32>
    %829 = arith.addf %828, %827 : vector<16x64xf32>
    %830 = arith.divf %828, %829 : vector<16x64xf32>
    %831 = vector.extract_strided_slice %830 {offsets = [0, 0], sizes = [16, 32], strides = [1, 1]} : vector<16x64xf32> to vector<16x32xf32>
    %832 = vector.extract_strided_slice %830 {offsets = [0, 32], sizes = [16, 32], strides = [1, 1]} : vector<16x64xf32> to vector<16x32xf32>
    %833 = vector.extract_strided_slice %821 {offsets = [0, 64], sizes = [16, 32], strides = [1, 1]} : vector<16x96xf32> to vector<16x32xf32>
    %834 = vector.extract_strided_slice %822 {offsets = [0, 64], sizes = [16, 32], strides = [1, 1]} : vector<16x96xf32> to vector<16x32xf32>
    %835 = vector.broadcast %495 : vector<1x32xf32> to vector<16x32xf32>
    %836 = arith.addf %834, %835 : vector<16x32xf32>
    %837 = arith.mulf %831, %836 : vector<16x32xf32>
    %838 = arith.addf %833, %837 : vector<16x32xf32>
    %839 = math.tanh %838 : vector<16x32xf32>
    %cst_346 = arith.constant 1.000000e+00 : f32
    %840 = vector.broadcast %cst_346 : f32 to vector<16x32xf32>
    %841 = arith.subf %840, %832 : vector<16x32xf32>
    %842 = arith.mulf %841, %839 : vector<16x32xf32>
    %843 = arith.mulf %832, %788 : vector<16x32xf32>
    %844 = arith.addf %842, %843 : vector<16x32xf32>
    %c6_347 = arith.constant 6 : index
    %c0_348 = arith.constant 0 : index
    %c0_349 = arith.constant 0 : index
    %845 = vector.load %arg11[%c6_347, %c0_348, %c0_349] : memref<8x16x64xf32, #tpu.memory_space<vmem>>, vector<1x16x32xf32>
    %846 = vector.shape_cast %845 : vector<1x16x32xf32> to vector<16x32xf32>
    %847 = vector.shape_cast %844 : vector<16x32xf32> to vector<1x16x32xf32>
    tpu.vector_store %arg11[%c6_347, %c0_348, %c0_349], %847 {strides = array<i32>} : memref<8x16x64xf32, #tpu.memory_space<vmem>>, vector<1x16x32xf32>,
    %c1_350 = arith.constant 1 : index
    %c1_351 = arith.constant 1 : index
    %c0_352 = arith.constant 0 : index
    %c0_353 = arith.constant 0 : index
    %848 = vector.load %arg9[%c1_350, %c1_351, %c0_352, %c0_353] : memref<2x8x16x96xf32, #tpu.memory_space<vmem>>, vector<1x1x16x96xf32>
    %849 = vector.shape_cast %848 : vector<1x1x16x96xf32> to vector<16x96xf32>
    %cst_354 = arith.constant dense<0.000000e+00> : vector<16x96xf32>
    %850 = tpu.matmul %816, %493, %cst_354 {dimension_numbers = #tpu.dot_dimension_numbers<[1], [0], [0], [1], [0, 0, 1, 1], [], []>} : vector<16x32xf32>, vector<32x96xf32>, vector<16x96xf32> -> vector<16x96xf32>
    %851 = vector.extract_strided_slice %849 {offsets = [0, 0], sizes = [16, 64], strides = [1, 1]} : vector<16x96xf32> to vector<16x64xf32>
    %852 = vector.extract_strided_slice %850 {offsets = [0, 0], sizes = [16, 64], strides = [1, 1]} : vector<16x96xf32> to vector<16x64xf32>
    %853 = arith.addf %851, %852 : vector<16x64xf32>
    %854 = arith.negf %853 : vector<16x64xf32>
    %855 = math.exp %854 : vector<16x64xf32>
    %cst_355 = arith.constant 1.000000e+00 : f32
    %856 = vector.broadcast %cst_355 : f32 to vector<16x64xf32>
    %857 = arith.addf %856, %855 : vector<16x64xf32>
    %858 = arith.divf %856, %857 : vector<16x64xf32>
    %859 = vector.extract_strided_slice %858 {offsets = [0, 0], sizes = [16, 32], strides = [1, 1]} : vector<16x64xf32> to vector<16x32xf32>
    %860 = vector.extract_strided_slice %858 {offsets = [0, 32], sizes = [16, 32], strides = [1, 1]} : vector<16x64xf32> to vector<16x32xf32>
    %861 = vector.extract_strided_slice %849 {offsets = [0, 64], sizes = [16, 32], strides = [1, 1]} : vector<16x96xf32> to vector<16x32xf32>
    %862 = vector.extract_strided_slice %850 {offsets = [0, 64], sizes = [16, 32], strides = [1, 1]} : vector<16x96xf32> to vector<16x32xf32>
    %863 = vector.broadcast %497 : vector<1x32xf32> to vector<16x32xf32>
    %864 = arith.addf %862, %863 : vector<16x32xf32>
    %865 = arith.mulf %859, %864 : vector<16x32xf32>
    %866 = arith.addf %861, %865 : vector<16x32xf32>
    %867 = math.tanh %866 : vector<16x32xf32>
    %cst_356 = arith.constant 1.000000e+00 : f32
    %868 = vector.broadcast %cst_356 : f32 to vector<16x32xf32>
    %869 = arith.subf %868, %860 : vector<16x32xf32>
    %870 = arith.mulf %869, %867 : vector<16x32xf32>
    %871 = arith.mulf %860, %816 : vector<16x32xf32>
    %872 = arith.addf %870, %871 : vector<16x32xf32>
    %c1_357 = arith.constant 1 : index
    %c0_358 = arith.constant 0 : index
    %c32_359 = arith.constant 32 : index
    %873 = vector.load %arg11[%c1_357, %c0_358, %c32_359] : memref<8x16x64xf32, #tpu.memory_space<vmem>>, vector<1x16x32xf32>
    %874 = vector.shape_cast %873 : vector<1x16x32xf32> to vector<16x32xf32>
    %875 = vector.shape_cast %872 : vector<16x32xf32> to vector<1x16x32xf32>
    tpu.vector_store %arg11[%c1_357, %c0_358, %c32_359], %875 {strides = array<i32>} : memref<8x16x64xf32, #tpu.memory_space<vmem>>, vector<1x16x32xf32>,
    %c0_360 = arith.constant 0 : index
    %c7_361 = arith.constant 7 : index
    %c0_362 = arith.constant 0 : index
    %c0_363 = arith.constant 0 : index
    %876 = vector.load %arg9[%c0_360, %c7_361, %c0_362, %c0_363] : memref<2x8x16x96xf32, #tpu.memory_space<vmem>>, vector<1x1x16x96xf32>
    %877 = vector.shape_cast %876 : vector<1x1x16x96xf32> to vector<16x96xf32>
    %cst_364 = arith.constant dense<0.000000e+00> : vector<16x96xf32>
    %878 = tpu.matmul %844, %491, %cst_364 {dimension_numbers = #tpu.dot_dimension_numbers<[1], [0], [0], [1], [0, 0, 1, 1], [], []>} : vector<16x32xf32>, vector<32x96xf32>, vector<16x96xf32> -> vector<16x96xf32>
    %879 = vector.extract_strided_slice %877 {offsets = [0, 0], sizes = [16, 64], strides = [1, 1]} : vector<16x96xf32> to vector<16x64xf32>
    %880 = vector.extract_strided_slice %878 {offsets = [0, 0], sizes = [16, 64], strides = [1, 1]} : vector<16x96xf32> to vector<16x64xf32>
    %881 = arith.addf %879, %880 : vector<16x64xf32>
    %882 = arith.negf %881 : vector<16x64xf32>
    %883 = math.exp %882 : vector<16x64xf32>
    %cst_365 = arith.constant 1.000000e+00 : f32
    %884 = vector.broadcast %cst_365 : f32 to vector<16x64xf32>
    %885 = arith.addf %884, %883 : vector<16x64xf32>
    %886 = arith.divf %884, %885 : vector<16x64xf32>
    %887 = vector.extract_strided_slice %886 {offsets = [0, 0], sizes = [16, 32], strides = [1, 1]} : vector<16x64xf32> to vector<16x32xf32>
    %888 = vector.extract_strided_slice %886 {offsets = [0, 32], sizes = [16, 32], strides = [1, 1]} : vector<16x64xf32> to vector<16x32xf32>
    %889 = vector.extract_strided_slice %877 {offsets = [0, 64], sizes = [16, 32], strides = [1, 1]} : vector<16x96xf32> to vector<16x32xf32>
    %890 = vector.extract_strided_slice %878 {offsets = [0, 64], sizes = [16, 32], strides = [1, 1]} : vector<16x96xf32> to vector<16x32xf32>
    %891 = vector.broadcast %495 : vector<1x32xf32> to vector<16x32xf32>
    %892 = arith.addf %890, %891 : vector<16x32xf32>
    %893 = arith.mulf %887, %892 : vector<16x32xf32>
    %894 = arith.addf %889, %893 : vector<16x32xf32>
    %895 = math.tanh %894 : vector<16x32xf32>
    %cst_366 = arith.constant 1.000000e+00 : f32
    %896 = vector.broadcast %cst_366 : f32 to vector<16x32xf32>
    %897 = arith.subf %896, %888 : vector<16x32xf32>
    %898 = arith.mulf %897, %895 : vector<16x32xf32>
    %899 = arith.mulf %888, %844 : vector<16x32xf32>
    %900 = arith.addf %898, %899 : vector<16x32xf32>
    %c7_367 = arith.constant 7 : index
    %c0_368 = arith.constant 0 : index
    %c0_369 = arith.constant 0 : index
    %901 = vector.load %arg11[%c7_367, %c0_368, %c0_369] : memref<8x16x64xf32, #tpu.memory_space<vmem>>, vector<1x16x32xf32>
    %902 = vector.shape_cast %901 : vector<1x16x32xf32> to vector<16x32xf32>
    %903 = vector.shape_cast %900 : vector<16x32xf32> to vector<1x16x32xf32>
    tpu.vector_store %arg11[%c7_367, %c0_368, %c0_369], %903 {strides = array<i32>} : memref<8x16x64xf32, #tpu.memory_space<vmem>>, vector<1x16x32xf32>,
    %c1_370 = arith.constant 1 : index
    %c0_371 = arith.constant 0 : index
    %c0_372 = arith.constant 0 : index
    %c0_373 = arith.constant 0 : index
    %904 = vector.load %arg9[%c1_370, %c0_371, %c0_372, %c0_373] : memref<2x8x16x96xf32, #tpu.memory_space<vmem>>, vector<1x1x16x96xf32>
    %905 = vector.shape_cast %904 : vector<1x1x16x96xf32> to vector<16x96xf32>
    %cst_374 = arith.constant dense<0.000000e+00> : vector<16x96xf32>
    %906 = tpu.matmul %872, %493, %cst_374 {dimension_numbers = #tpu.dot_dimension_numbers<[1], [0], [0], [1], [0, 0, 1, 1], [], []>} : vector<16x32xf32>, vector<32x96xf32>, vector<16x96xf32> -> vector<16x96xf32>
    %907 = vector.extract_strided_slice %905 {offsets = [0, 0], sizes = [16, 64], strides = [1, 1]} : vector<16x96xf32> to vector<16x64xf32>
    %908 = vector.extract_strided_slice %906 {offsets = [0, 0], sizes = [16, 64], strides = [1, 1]} : vector<16x96xf32> to vector<16x64xf32>
    %909 = arith.addf %907, %908 : vector<16x64xf32>
    %910 = arith.negf %909 : vector<16x64xf32>
    %911 = math.exp %910 : vector<16x64xf32>
    %cst_375 = arith.constant 1.000000e+00 : f32
    %912 = vector.broadcast %cst_375 : f32 to vector<16x64xf32>
    %913 = arith.addf %912, %911 : vector<16x64xf32>
    %914 = arith.divf %912, %913 : vector<16x64xf32>
    %915 = vector.extract_strided_slice %914 {offsets = [0, 0], sizes = [16, 32], strides = [1, 1]} : vector<16x64xf32> to vector<16x32xf32>
    %916 = vector.extract_strided_slice %914 {offsets = [0, 32], sizes = [16, 32], strides = [1, 1]} : vector<16x64xf32> to vector<16x32xf32>
    %917 = vector.extract_strided_slice %905 {offsets = [0, 64], sizes = [16, 32], strides = [1, 1]} : vector<16x96xf32> to vector<16x32xf32>
    %918 = vector.extract_strided_slice %906 {offsets = [0, 64], sizes = [16, 32], strides = [1, 1]} : vector<16x96xf32> to vector<16x32xf32>
    %919 = vector.broadcast %497 : vector<1x32xf32> to vector<16x32xf32>
    %920 = arith.addf %918, %919 : vector<16x32xf32>
    %921 = arith.mulf %915, %920 : vector<16x32xf32>
    %922 = arith.addf %917, %921 : vector<16x32xf32>
    %923 = math.tanh %922 : vector<16x32xf32>
    %cst_376 = arith.constant 1.000000e+00 : f32
    %924 = vector.broadcast %cst_376 : f32 to vector<16x32xf32>
    %925 = arith.subf %924, %916 : vector<16x32xf32>
    %926 = arith.mulf %925, %923 : vector<16x32xf32>
    %927 = arith.mulf %916, %872 : vector<16x32xf32>
    %928 = arith.addf %926, %927 : vector<16x32xf32>
    %c0_377 = arith.constant 0 : index
    %c0_378 = arith.constant 0 : index
    %c32_379 = arith.constant 32 : index
    %929 = vector.load %arg11[%c0_377, %c0_378, %c32_379] : memref<8x16x64xf32, #tpu.memory_space<vmem>>, vector<1x16x32xf32>
    %930 = vector.shape_cast %929 : vector<1x16x32xf32> to vector<16x32xf32>
    %931 = vector.shape_cast %928 : vector<16x32xf32> to vector<1x16x32xf32>
    tpu.vector_store %arg11[%c0_377, %c0_378, %c32_379], %931 {strides = array<i32>} : memref<8x16x64xf32, #tpu.memory_space<vmem>>, vector<1x16x32xf32>,
    %c0_380 = arith.constant 0 : index
    %c0_381 = arith.constant 0 : index
    %c0_382 = arith.constant 0 : index
    %932 = vector.load %arg11[%c0_380, %c0_381, %c0_382] : memref<8x16x64xf32, #tpu.memory_space<vmem>>, vector<8x16x64xf32>
    %cst_383 = arith.constant dense<0.000000e+00> : vector<8x64xf32>
    %933 = vector.multi_reduction <add>, %932, %cst_383 [1] : vector<8x16x64xf32> to vector<8x64xf32>
    %cst_384 = arith.constant 1.600000e+01 : f32
    %934 = vector.broadcast %cst_384 : f32 to vector<8x64xf32>
    %935 = arith.divf %933, %934 : vector<8x64xf32>
    %c0_385 = arith.constant 0 : index
    %c0_386 = arith.constant 0 : index
    %936 = vector.load %arg6[%c0_385, %c0_386] : memref<64x5xf32, #tpu.memory_space<vmem>>, vector<64x5xf32>
    %cst_387 = arith.constant dense<0.000000e+00> : vector<8x5xf32>
    %937 = tpu.matmul %935, %936, %cst_387 {dimension_numbers = #tpu.dot_dimension_numbers<[1], [0], [0], [1], [0, 0, 1, 1], [], []>} : vector<8x64xf32>, vector<64x5xf32>, vector<8x5xf32> -> vector<8x5xf32>
    %c0_388 = arith.constant 0 : index
    %c0_389 = arith.constant 0 : index
    %938 = vector.load %arg7[%c0_388, %c0_389] : memref<1x5xf32, #tpu.memory_space<vmem>>, vector<1x5xf32>
    %939 = vector.broadcast %938 : vector<1x5xf32> to vector<8x5xf32>
    %940 = arith.addf %937, %939 : vector<8x5xf32>
    %c0_390 = arith.constant 0 : index
    %c0_391 = arith.constant 0 : index
    %941 = vector.load %arg8[%c0_390, %c0_391] : memref<8x5xf32, #tpu.memory_space<vmem>>, vector<8x5xf32>
    tpu.vector_store %arg8[%c0_390, %c0_391], %940 {strides = array<i32>} : memref<8x5xf32, #tpu.memory_space<vmem>>, vector<8x5xf32>,
    return
  }
}

</mosaic_0001>

<llo_original>
// kernel: _lambda_.1
$region0: #{_lambda_.1}
  #allocation0 [shape = 'u32[]', space=smem, size = 0x4, offset = 0x4, fixed_abs, tag = 'smem constant byte address 0x4 - core index']
  #allocation1 [shape = 'u32[144,128]{1,0:T(1,128)}', space=vmem, size = 0x12000, scoped, tag = 'internal scratch']
  #allocation2 [shape = 'f32[2,8,16,96]{3,2,1,0:T(8,128)}', space=vmem, size = 0x20000, scoped, tag = 'scratch operand']
  #allocation3 [shape = 'f32[8,16,64]{2,1,0:T(8,128)}', space=vmem, size = 0x10000, scoped, tag = 'scratch operand']
  #allocation4 [shape = 'f32[8,16,64]{2,1,0:T(8,128)}', space=vmem, size = 0x10000, scoped, tag = 'scratch operand']
  %s0 = inlined_call_operand.vmem [shape: f32[8,16,4], index: 0, kind: input, shape index: {}]
  %s1 = inlined_call_operand.vmem [shape: f32[2,4,96], index: 1, kind: input, shape index: {}]
  %s2 = inlined_call_operand.vmem [shape: f32[2,64,96], index: 2, kind: input, shape index: {}]
  %s3 = inlined_call_operand.hbm [shape: f32[4,32,96], index: 3, kind: input, shape index: {}]
  %s4 = inlined_call_operand.vmem [shape: f32[4,1,96], index: 4, kind: input, shape index: {}]
  %s5 = inlined_call_operand.vmem [shape: f32[4,1,32], index: 5, kind: input, shape index: {}]
  %s6 = inlined_call_operand.vmem [shape: f32[64,5], index: 6, kind: input, shape index: {}]
  %s7 = inlined_call_operand.vmem [shape: f32[1,5], index: 7, kind: input, shape index: {}]
  %s8 = inlined_call_operand.hbm [shape: f32[8,5], index: 8, kind: output, shape index: {}]
  %s9 = sld [smem:[#allocation0]]
  $region46: #{_lambda_.1} parent=0
    _
  %s11 = ssub.s32 1, %s9
  %s12 = scalar_select 0, %s11, %s9
  $region1: #{_lambda_.1} parent=0
    #allocation5 [shape = 'u8[65536]{0}', space=vmem, size = 0x10000, scoped, tag = 'input window, operand 3, single buffered']
    #allocation6 [shape = 's32[1]{0}', space=sflag, size = 0x4, scoped, tag = 'scoped memory for _lambda_.1']
    #allocation7 [shape = 's32[1]{0}', space=sflag, size = 0x4, scoped, tag = 'scoped memory for _lambda_.1']
    #allocation8 [shape = 'u8[4096]{0}', space=vmem, size = 0x1000, scoped, tag = 'output window, operand 0, single buffered']
    %13 = vsyncpa [#allocation6], 0
    %14 = vsyncpa [#allocation7], 0
    // Predicated region
    $region2: #{_lambda_.1} parent=1 // pred_check
      _
    $region3: #{_lambda_.1} parent=1 // pred_check_branch
      %16 = sbr.rel (0) target = $region5
    $region4: #{_lambda_.1} parent=1 // pred_region
      _
    $region5: #{_lambda_.1} parent=1 // pred_fallthru
      _
    // Predicated region
    $region6: #{_lambda_.1} parent=1 // pred_check
      _
    $region7: #{_lambda_.1} parent=1 // pred_check_branch
      %18 = sbr.rel (0) target = $region9
    $region8: #{_lambda_.1} parent=1 // pred_region
      _
    $region9: #{_lambda_.1} parent=1 // pred_fallthru
      _
    // Predicated region
    $region10: #{_lambda_.1} parent=1 // pred_check
      _
    $region11: #{_lambda_.1} parent=1 // pred_check_branch
      %20 = sbr.rel (0) target = $region13
    $region12: #{_lambda_.1} parent=1 // pred_region
      _
    $region13: #{_lambda_.1} parent=1 // pred_fallthru
      _
    // Predicated region
    $region14: #{_lambda_.1} parent=1 // pred_check
      _
    $region15: #{_lambda_.1} parent=1 // pred_check_branch
      %22 = sbr.rel (0) target = $region17
    $region16: #{_lambda_.1} parent=1 // pred_region
      %s24 = ssub.s32 2048, 2048
      %25 = vsyncadd [#allocation6], %s24
      %s26 = sshll.u32 [#allocation5], 4
      %s27 = int_to_ptr.vmem [resolvable:$true] %s26
      %32 = dma.hbm_to_vmem [thread:$0]  %s3, 2048, %s27, [#allocation6], 128, 128, 8
    $region17: #{_lambda_.1} parent=1 // pred_fallthru
      _
    // Predicated region
    $region18: #{_lambda_.1} parent=1 // pred_check
      _
    $region19: #{_lambda_.1} parent=1 // pred_check_branch
      %34 = sbr.rel (0) target = $region21
    $region20: #{_lambda_.1} parent=1 // pred_region
      _
    $region21: #{_lambda_.1} parent=1 // pred_fallthru
      _
    // Predicated region
    $region22: #{_lambda_.1} parent=1 // pred_check
      _
    $region23: #{_lambda_.1} parent=1 // pred_check_branch
      %36 = sbr.rel (0) target = $region25
    $region24: #{_lambda_.1} parent=1 // pred_region
      _
    $region25: #{_lambda_.1} parent=1 // pred_fallthru
      _
    // Predicated region
    $region26: #{_lambda_.1} parent=1 // pred_check
      _
    $region27: #{_lambda_.1} parent=1 // pred_check_branch
      %38 = sbr.rel (0) target = $region29
    $region28: #{_lambda_.1} parent=1 // pred_region
      _
    $region29: #{_lambda_.1} parent=1 // pred_fallthru
      _
    // Predicated region
    $region30: #{_lambda_.1} parent=1 // pred_check
      _
    $region31: #{_lambda_.1} parent=1 // pred_check_branch
      %40 = sbr.rel (0) target = $region33
    $region32: #{_lambda_.1} parent=1 // pred_region
      _
    $region33: #{_lambda_.1} parent=1 // pred_fallthru
      _
    // Predicated region
    $region34: #{_lambda_.1} parent=1 // pred_check
      _
    $region35: #{_lambda_.1} parent=1 // pred_check_branch
      %42 = sbr.rel (0) target = $region37
    $region36: #{_lambda_.1} parent=1 // pred_region
      %43 = dma.done [#allocation6], 2048
    $region37: #{_lambda_.1} parent=1 // pred_fallthru
      _
    %v44 = vld [vmem:[%s0] sm:$0xff]
    %v45 = vld [vmem:[%s0 + $0x8] sm:$0xff]
    %v46 = vld [vmem:[%s0 + $0x10] sm:$0xff]
    %v47 = vld [vmem:[%s0 + $0x18] sm:$0xff]
    %v48 = vld [vmem:[%s0 + $0x20] sm:$0xff]
    %v49 = vld [vmem:[%s0 + $0x28] sm:$0xff]
    %v50 = vld [vmem:[%s0 + $0x30] sm:$0xff]
    %v51 = vld [vmem:[%s0 + $0x38] sm:$0xff]
    %v52 = vld [vmem:[%s0 + $0x40] sm:$0xff]
    %v53 = vld [vmem:[%s0 + $0x48] sm:$0xff]
    %v54 = vld [vmem:[%s0 + $0x50] sm:$0xff]
    %v55 = vld [vmem:[%s0 + $0x58] sm:$0xff]
    %v56 = vld [vmem:[%s0 + $0x60] sm:$0xff]
    %v57 = vld [vmem:[%s0 + $0x68] sm:$0xff]
    %v58 = vld [vmem:[%s0 + $0x70] sm:$0xff]
    %v59 = vld [vmem:[%s0 + $0x78] sm:$0xff]
    %v60 = vld [vmem:[%s1] sm:$0xf]
    %v61 = vld [vmem:[%s4] sm:$0x1]
    %v63 = vlaneseq
    %v64 = vshrl.u32 %v63, 7
    %v65 = vsub.s32 0, %v64
    %v66 = vrot.slane %v61, %v65
    %vm68 = vcmask 31744
    %v70 = vsel %vm68, %v44, 0
    %v73 = vsel %vm68, %v45, 0
    %v76 = vsel %vm68, %v46, 0
    %v79 = vsel %vm68, %v47, 0
    %v82 = vsel %vm68, %v48, 0
    %v85 = vsel %vm68, %v49, 0
    %v88 = vsel %vm68, %v50, 0
    %v91 = vsel %vm68, %v51, 0
    %v94 = vsel %vm68, %v52, 0
    %v97 = vsel %vm68, %v53, 0
    %v100 = vsel %vm68, %v54, 0
    %v103 = vsel %vm68, %v55, 0
    %v106 = vsel %vm68, %v56, 0
    %v109 = vsel %vm68, %v57, 0
    %v112 = vsel %vm68, %v58, 0
    %v115 = vsel %vm68, %v59, 0
    %vm117 = vcmask 1043456
    %v119 = vsel %vm117, %v60, 0
    %121 = vmatprep.subr.mxu0 0.0
    %122 = vmatpush1.msra.mxu0 0.0
    %123 = vmatprep.subr.mxu0 0.0
    %124 = vmatpush1.msra.mxu0 0.0
    %125 = vmatprep.subr.mxu0 0.0
    %126 = vmatpush1.msra.mxu0 0.0
    %127 = vmatprep.subr.mxu0 0.0
    %128 = vmatpush1.msra.mxu0 0.0
    %129 = vmatprep.subr.mxu0 0.0
    %130 = vmatpush1.msra.mxu0 0.0
    %131 = vmatprep.subr.mxu0 0.0
    %132 = vmatpush1.msra.mxu0 0.0
    %133 = vmatprep.subr.mxu0 0.0
    %134 = vmatpush1.msra.mxu0 0.0
    %135 = vmatprep.subr.mxu0 0.0
    %136 = vmatpush1.msra.mxu0 0.0
    %137 = vmatprep.subr.mxu0 0.0
    %138 = vmatpush1.msra.mxu0 0.0
    %139 = vmatprep.subr.mxu0 0.0
    %140 = vmatpush1.msra.mxu0 0.0
    %141 = vmatprep.subr.mxu0 0.0
    %142 = vmatpush1.msra.mxu0 0.0
    %143 = vmatprep.subr.mxu0 0.0
    %144 = vmatpush1.msra.mxu0 0.0
    %145 = vmatprep.subr.mxu0 0.0
    %146 = vmatpush1.msra.mxu0 0.0
    %147 = vmatprep.subr.mxu0 0.0
    %148 = vmatpush1.msra.mxu0 0.0
    %149 = vmatprep.subr.mxu0 0.0
    %150 = vmatpush1.msra.mxu0 0.0
    %151 = vmatprep.subr.mxu0 0.0
    %152 = vmatpush1.msra.mxu0 %v119
    %153 = vmatprep.subr.mxu0 0.0
    %154 = vmatpush2.msra.mxu0 0.0
    %155 = vmatprep.subr.mxu0 0.0
    %156 = vmatpush2.msra.mxu0 0.0
    %157 = vmatprep.subr.mxu0 0.0
    %158 = vmatpush2.msra.mxu0 0.0
    %159 = vmatprep.subr.mxu0 0.0
    %160 = vmatpush2.msra.mxu0 0.0
    %161 = vmatprep.subr.mxu0 0.0
    %162 = vmatpush2.msra.mxu0 0.0
    %163 = vmatprep.subr.mxu0 0.0
    %164 = vmatpush2.msra.mxu0 0.0
    %165 = vmatprep.subr.mxu0 0.0
    %166 = vmatpush2.msra.mxu0 0.0
    %167 = vmatprep.subr.mxu0 0.0
    %168 = vmatpush2.msra.mxu0 0.0
    %169 = vmatprep.subr.mxu0 0.0
    %170 = vmatpush2.msra.mxu0 0.0
    %171 = vmatprep.subr.mxu0 0.0
    %172 = vmatpush2.msra.mxu0 0.0
    %173 = vmatprep.subr.mxu0 0.0
    %174 = vmatpush2.msra.mxu0 0.0
    %175 = vmatprep.subr.mxu0 0.0
    %176 = vmatpush2.msra.mxu0 0.0
    %177 = vmatprep.subr.mxu0 0.0
    %178 = vmatpush2.msra.mxu0 0.0
    %179 = vmatprep.subr.mxu0 0.0
    %180 = vmatpush2.msra.mxu0 0.0
    %181 = vmatprep.subr.mxu0 0.0
    %182 = vmatpush2.msra.mxu0 0.0
    %183 = vmatprep.subr.mxu0 0.0
    %184 = vmatpush2.msra.mxu0 0.0
    %185 = vmatprep.mubr.f32.mxu0 0.0
    %186 = vmatmul.mubr.f32.gmra.mxu0 %v70
    %v187 = vpop.f32.mrf.mxu0
    %v188 = vadd.f32 %v66, %v187
    %v189 = vpop.f32.mrf.mxu0
    %190 = vmatprep.mubr.f32.mxu0 0.0
    %191 = vmatmul.mubr.f32.gmra.mxu0 %v73
    %v192 = vpop.f32.mrf.mxu0
    %v193 = vadd.f32 %v66, %v192
    %v194 = vpop.f32.mrf.mxu0
    %195 = vmatprep.mubr.f32.mxu0 0.0
    %196 = vmatmul.mubr.f32.gmra.mxu0 %v76
    %v197 = vpop.f32.mrf.mxu0
    %v198 = vadd.f32 %v66, %v197
    %v199 = vpop.f32.mrf.mxu0
    %200 = vmatprep.mubr.f32.mxu0 0.0
    %201 = vmatmul.mubr.f32.gmra.mxu0 %v79
    %v202 = vpop.f32.mrf.mxu0
    %v203 = vadd.f32 %v66, %v202
    %v204 = vpop.f32.mrf.mxu0
    %205 = vmatprep.mubr.f32.mxu0 0.0
    %206 = vmatmul.mubr.f32.gmra.mxu0 %v82
    %v207 = vpop.f32.mrf.mxu0
    %v208 = vadd.f32 %v66, %v207
    %v209 = vpop.f32.mrf.mxu0
    %210 = vmatprep.mubr.f32.mxu0 0.0
    %211 = vmatmul.mubr.f32.gmra.mxu0 %v85
    %v212 = vpop.f32.mrf.mxu0
    %v213 = vadd.f32 %v66, %v212
    %v214 = vpop.f32.mrf.mxu0
    %215 = vmatprep.mubr.f32.mxu0 0.0
    %216 = vmatmul.mubr.f32.gmra.mxu0 %v88
    %v217 = vpop.f32.mrf.mxu0
    %v218 = vadd.f32 %v66, %v217
    %v219 = vpop.f32.mrf.mxu0
    %220 = vmatprep.mubr.f32.mxu0 0.0
    %221 = vmatmul.mubr.f32.gmra.mxu0 %v91
    %v222 = vpop.f32.mrf.mxu0
    %v223 = vadd.f32 %v66, %v222
    %v224 = vpop.f32.mrf.mxu0
    %225 = vmatprep.mubr.f32.mxu0 0.0
    %226 = vmatmul.mubr.f32.gmra.mxu0 %v94
    %v227 = vpop.f32.mrf.mxu0
    %v228 = vadd.f32 %v66, %v227
    %v229 = vpop.f32.mrf.mxu0
    %230 = vmatprep.mubr.f32.mxu0 0.0
    %231 = vmatmul.mubr.f32.gmra.mxu0 %v97
    %v232 = vpop.f32.mrf.mxu0
    %v233 = vadd.f32 %v66, %v232
    %v234 = vpop.f32.mrf.mxu0
    %235 = vmatprep.mubr.f32.mxu0 0.0
    %236 = vmatmul.mubr.f32.gmra.mxu0 %v100
    %v237 = vpop.f32.mrf.mxu0
    %v238 = vadd.f32 %v66, %v237
    %v239 = vpop.f32.mrf.mxu0
    %240 = vmatprep.mubr.f32.mxu0 0.0
    %241 = vmatmul.mubr.f32.gmra.mxu0 %v103
    %v242 = vpop.f32.mrf.mxu0
    %v243 = vadd.f32 %v66, %v242
    %v244 = vpop.f32.mrf.mxu0
    %245 = vmatprep.mubr.f32.mxu0 0.0
    %246 = vmatmul.mubr.f32.gmra.mxu0 %v106
    %v247 = vpop.f32.mrf.mxu0
    %v248 = vadd.f32 %v66, %v247
    %v249 = vpop.f32.mrf.mxu0
    %250 = vmatprep.mubr.f32.mxu0 0.0
    %251 = vmatmul.mubr.f32.gmra.mxu0 %v109
    %v252 = vpop.f32.mrf.mxu0
    %v253 = vadd.f32 %v66, %v252
    %v254 = vpop.f32.mrf.mxu0
    %255 = vmatprep.mubr.f32.mxu0 0.0
    %256 = vmatmul.mubr.f32.gmra.mxu0 %v112
    %v257 = vpop.f32.mrf.mxu0
    %v258 = vadd.f32 %v66, %v257
    %v259 = vpop.f32.mrf.mxu0
    %260 = vmatprep.mubr.f32.mxu0 0.0
    %261 = vmatmul.mubr.f32.gmra.mxu0 %v115
    %v262 = vpop.f32.mrf.mxu0
    %v263 = vadd.f32 %v66, %v262
    %v264 = vpop.f32.mrf.mxu0
    %265 = vdwg.mxu0
    %vm266 = vcmask 785408
    %267 = vst.msk [vmem:[#allocation2] sm:$0xff] %vm266, %v188
    %268 = vst.msk [vmem:[#allocation2 + $0x8] sm:$0xff] %vm266, %v193
    %269 = vst.msk [vmem:[#allocation2 + $0x10] sm:$0xff] %vm266, %v198
    %270 = vst.msk [vmem:[#allocation2 + $0x18] sm:$0xff] %vm266, %v203
    %271 = vst.msk [vmem:[#allocation2 + $0x20] sm:$0xff] %vm266, %v208
    %272 = vst.msk [vmem:[#allocation2 + $0x28] sm:$0xff] %vm266, %v213
    %273 = vst.msk [vmem:[#allocation2 + $0x30] sm:$0xff] %vm266, %v218
    %274 = vst.msk [vmem:[#allocation2 + $0x38] sm:$0xff] %vm266, %v223
    %275 = vst.msk [vmem:[#allocation2 + $0x40] sm:$0xff] %vm266, %v228
    %276 = vst.msk [vmem:[#allocation2 + $0x48] sm:$0xff] %vm266, %v233
    %277 = vst.msk [vmem:[#allocation2 + $0x50] sm:$0xff] %vm266, %v238
    %278 = vst.msk [vmem:[#allocation2 + $0x58] sm:$0xff] %vm266, %v243
    %279 = vst.msk [vmem:[#allocation2 + $0x60] sm:$0xff] %vm266, %v248
    %280 = vst.msk [vmem:[#allocation2 + $0x68] sm:$0xff] %vm266, %v253
    %281 = vst.msk [vmem:[#allocation2 + $0x70] sm:$0xff] %vm266, %v258
    %282 = vst.msk [vmem:[#allocation2 + $0x78] sm:$0xff] %vm266, %v263
    %s283 = scalar_lea.vmem %s1, 4
    %v284 = vld [vmem:[%s283] sm:$0xf]
    %s285 = scalar_lea.vmem %s4, 1
    %v286 = vld [vmem:[%s285] sm:$0x1]
    %v288 = vlaneseq
    %v289 = vshrl.u32 %v288, 7
    %v290 = vsub.s32 0, %v289
    %v291 = vrot.slane %v286, %v290
    %v294 = vsel %vm117, %v284, 0
    %296 = vmatprep.subr.mxu0 0.0
    %297 = vmatpush1.msra.mxu0 0.0
    %298 = vmatprep.subr.mxu0 0.0
    %299 = vmatpush1.msra.mxu0 0.0
    %300 = vmatprep.subr.mxu0 0.0
    %301 = vmatpush1.msra.mxu0 0.0
    %302 = vmatprep.subr.mxu0 0.0
    %303 = vmatpush1.msra.mxu0 0.0
    %304 = vmatprep.subr.mxu0 0.0
    %305 = vmatpush1.msra.mxu0 0.0
    %306 = vmatprep.subr.mxu0 0.0
    %307 = vmatpush1.msra.mxu0 0.0
    %308 = vmatprep.subr.mxu0 0.0
    %309 = vmatpush1.msra.mxu0 0.0
    %310 = vmatprep.subr.mxu0 0.0
    %311 = vmatpush1.msra.mxu0 0.0
    %312 = vmatprep.subr.mxu0 0.0
    %313 = vmatpush1.msra.mxu0 0.0
    %314 = vmatprep.subr.mxu0 0.0
    %315 = vmatpush1.msra.mxu0 0.0
    %316 = vmatprep.subr.mxu0 0.0
    %317 = vmatpush1.msra.mxu0 0.0
    %318 = vmatprep.subr.mxu0 0.0
    %319 = vmatpush1.msra.mxu0 0.0
    %320 = vmatprep.subr.mxu0 0.0
    %321 = vmatpush1.msra.mxu0 0.0
    %322 = vmatprep.subr.mxu0 0.0
    %323 = vmatpush1.msra.mxu0 0.0
    %324 = vmatprep.subr.mxu0 0.0
    %325 = vmatpush1.msra.mxu0 0.0
    %326 = vmatprep.subr.mxu0 0.0
    %327 = vmatpush1.msra.mxu0 %v294
    %328 = vmatprep.subr.mxu0 0.0
    %329 = vmatpush2.msra.mxu0 0.0
    %330 = vmatprep.subr.mxu0 0.0
    %331 = vmatpush2.msra.mxu0 0.0
    %332 = vmatprep.subr.mxu0 0.0
    %333 = vmatpush2.msra.mxu0 0.0
    %334 = vmatprep.subr.mxu0 0.0
    %335 = vmatpush2.msra.mxu0 0.0
    %336 = vmatprep.subr.mxu0 0.0
    %337 = vmatpush2.msra.mxu0 0.0
    %338 = vmatprep.subr.mxu0 0.0
    %339 = vmatpush2.msra.mxu0 0.0
    %340 = vmatprep.subr.mxu0 0.0
    %341 = vmatpush2.msra.mxu0 0.0
    %342 = vmatprep.subr.mxu0 0.0
    %343 = vmatpush2.msra.mxu0 0.0
    %344 = vmatprep.subr.mxu0 0.0
    %345 = vmatpush2.msra.mxu0 0.0
    %346 = vmatprep.subr.mxu0 0.0
    %347 = vmatpush2.msra.mxu0 0.0
    %348 = vmatprep.subr.mxu0 0.0
    %349 = vmatpush2.msra.mxu0 0.0
    %350 = vmatprep.subr.mxu0 0.0
    %351 = vmatpush2.msra.mxu0 0.0
    %352 = vmatprep.subr.mxu0 0.0
    %353 = vmatpush2.msra.mxu0 0.0
    %354 = vmatprep.subr.mxu0 0.0
    %355 = vmatpush2.msra.mxu0 0.0
    %356 = vmatprep.subr.mxu0 0.0
    %357 = vmatpush2.msra.mxu0 0.0
    %358 = vmatprep.subr.mxu0 0.0
    %359 = vmatpush2.msra.mxu0 0.0
    %360 = vmatprep.mubr.f32.mxu0 0.0
    %361 = vmatmul.mubr.f32.gmra.mxu0 %v70
    %v362 = vpop.f32.mrf.mxu0
    %v363 = vadd.f32 %v291, %v362
    %v364 = vpop.f32.mrf.mxu0
    %365 = vmatprep.mubr.f32.mxu0 0.0
    %366 = vmatmul.mubr.f32.gmra.mxu0 %v73
    %v367 = vpop.f32.mrf.mxu0
    %v368 = vadd.f32 %v291, %v367
    %v369 = vpop.f32.mrf.mxu0
    %370 = vmatprep.mubr.f32.mxu0 0.0
    %371 = vmatmul.mubr.f32.gmra.mxu0 %v76
    %v372 = vpop.f32.mrf.mxu0
    %v373 = vadd.f32 %v291, %v372
    %v374 = vpop.f32.mrf.mxu0
    %375 = vmatprep.mubr.f32.mxu0 0.0
    %376 = vmatmul.mubr.f32.gmra.mxu0 %v79
    %v377 = vpop.f32.mrf.mxu0
    %v378 = vadd.f32 %v291, %v377
    %v379 = vpop.f32.mrf.mxu0
    %380 = vmatprep.mubr.f32.mxu0 0.0
    %381 = vmatmul.mubr.f32.gmra.mxu0 %v82
    %v382 = vpop.f32.mrf.mxu0
    %v383 = vadd.f32 %v291, %v382
    %v384 = vpop.f32.mrf.mxu0
    %385 = vmatprep.mubr.f32.mxu0 0.0
    %386 = vmatmul.mubr.f32.gmra.mxu0 %v85
    %v387 = vpop.f32.mrf.mxu0
    %v388 = vadd.f32 %v291, %v387
    %v389 = vpop.f32.mrf.mxu0
    %390 = vmatprep.mubr.f32.mxu0 0.0
    %391 = vmatmul.mubr.f32.gmra.mxu0 %v88
    %v392 = vpop.f32.mrf.mxu0
    %v393 = vadd.f32 %v291, %v392
    %v394 = vpop.f32.mrf.mxu0
    %395 = vmatprep.mubr.f32.mxu0 0.0
    %396 = vmatmul.mubr.f32.gmra.mxu0 %v91
    %v397 = vpop.f32.mrf.mxu0
    %v398 = vadd.f32 %v291, %v397
    %v399 = vpop.f32.mrf.mxu0
    %400 = vmatprep.mubr.f32.mxu0 0.0
    %401 = vmatmul.mubr.f32.gmra.mxu0 %v94
    %v402 = vpop.f32.mrf.mxu0
    %v403 = vadd.f32 %v291, %v402
    %v404 = vpop.f32.mrf.mxu0
    %405 = vmatprep.mubr.f32.mxu0 0.0
    %406 = vmatmul.mubr.f32.gmra.mxu0 %v97
    %v407 = vpop.f32.mrf.mxu0
    %v408 = vadd.f32 %v291, %v407
    %v409 = vpop.f32.mrf.mxu0
    %410 = vmatprep.mubr.f32.mxu0 0.0
    %411 = vmatmul.mubr.f32.gmra.mxu0 %v100
    %v412 = vpop.f32.mrf.mxu0
    %v413 = vadd.f32 %v291, %v412
    %v414 = vpop.f32.mrf.mxu0
    %415 = vmatprep.mubr.f32.mxu0 0.0
    %416 = vmatmul.mubr.f32.gmra.mxu0 %v103
    %v417 = vpop.f32.mrf.mxu0
    %v418 = vadd.f32 %v291, %v417
    %v419 = vpop.f32.mrf.mxu0
    %420 = vmatprep.mubr.f32.mxu0 0.0
    %421 = vmatmul.mubr.f32.gmra.mxu0 %v106
    %v422 = vpop.f32.mrf.mxu0
    %v423 = vadd.f32 %v291, %v422
    %v424 = vpop.f32.mrf.mxu0
    %425 = vmatprep.mubr.f32.mxu0 0.0
    %426 = vmatmul.mubr.f32.gmra.mxu0 %v109
    %v427 = vpop.f32.mrf.mxu0
    %v428 = vadd.f32 %v291, %v427
    %v429 = vpop.f32.mrf.mxu0
    %430 = vmatprep.mubr.f32.mxu0 0.0
    %431 = vmatmul.mubr.f32.gmra.mxu0 %v112
    %v432 = vpop.f32.mrf.mxu0
    %v433 = vadd.f32 %v291, %v432
    %v434 = vpop.f32.mrf.mxu0
    %435 = vmatprep.mubr.f32.mxu0 0.0
    %436 = vmatmul.mubr.f32.gmra.mxu0 %v115
    %v437 = vpop.f32.mrf.mxu0
    %v438 = vadd.f32 %v291, %v437
    %v439 = vpop.f32.mrf.mxu0
    %440 = vdwg.mxu0
    %s441 = scalar_lea.vmem [#allocation2], 128
    %442 = vst.msk [vmem:[%s441] sm:$0xff] %vm266, %v363
    %443 = vst.msk [vmem:[%s441 + $0x8] sm:$0xff] %vm266, %v368
    %444 = vst.msk [vmem:[%s441 + $0x10] sm:$0xff] %vm266, %v373
    %445 = vst.msk [vmem:[%s441 + $0x18] sm:$0xff] %vm266, %v378
    %446 = vst.msk [vmem:[%s441 + $0x20] sm:$0xff] %vm266, %v383
    %447 = vst.msk [vmem:[%s441 + $0x28] sm:$0xff] %vm266, %v388
    %448 = vst.msk [vmem:[%s441 + $0x30] sm:$0xff] %vm266, %v393
    %449 = vst.msk [vmem:[%s441 + $0x38] sm:$0xff] %vm266, %v398
    %450 = vst.msk [vmem:[%s441 + $0x40] sm:$0xff] %vm266, %v403
    %451 = vst.msk [vmem:[%s441 + $0x48] sm:$0xff] %vm266, %v408
    %452 = vst.msk [vmem:[%s441 + $0x50] sm:$0xff] %vm266, %v413
    %453 = vst.msk [vmem:[%s441 + $0x58] sm:$0xff] %vm266, %v418
    %454 = vst.msk [vmem:[%s441 + $0x60] sm:$0xff] %vm266, %v423
    %455 = vst.msk [vmem:[%s441 + $0x68] sm:$0xff] %vm266, %v428
    %456 = vst.msk [vmem:[%s441 + $0x70] sm:$0xff] %vm266, %v433
    %457 = vst.msk [vmem:[%s441 + $0x78] sm:$0xff] %vm266, %v438
    %v458 = vld [vmem:[#allocation5] sm:$0xff]
    %v459 = vld [vmem:[#allocation5 + $0x8] sm:$0xff]
    %v460 = vld [vmem:[#allocation5 + $0x10] sm:$0xff]
    %v461 = vld [vmem:[#allocation5 + $0x18] sm:$0xff]
    %s462 = scalar_lea.vmem [#allocation5], 32
    %v463 = vld [vmem:[%s462] sm:$0xff]
    %v464 = vld [vmem:[%s462 + $0x8] sm:$0xff]
    %v465 = vld [vmem:[%s462 + $0x10] sm:$0xff]
    %v466 = vld [vmem:[%s462 + $0x18] sm:$0xff]
    %v467 = vld [vmem:[%s5] sm:$0x1]
    %s468 = scalar_lea.vmem %s5, 1
    %v469 = vld [vmem:[%s468] sm:$0x1]
    %v470 = vld [vmem:[#allocation2] sm:$0xff]
    %v471 = vld [vmem:[#allocation2 + $0x8] sm:$0xff]
    %v472 = vxor.u32 %v470, 2147483648
    %v473 = vxor.u32 %v471, 2147483648
    %v474 = vmul.f32 %v472, 1.442695
    %v475 = vpow.pop %v474
    %v476 = vmul.f32 %v473, 1.442695
    %v477 = vpow.pop %v476
    %v478 = vadd.f32 %v475, 1.0
    %v479 = vadd.f32 %v477, 1.0
    %v480 = vrcp.pop %v478
    %v481 = vmul.f32 1.0, %v480
    %v482 = vrcp.pop %v479
    %v483 = vmul.f32 1.0, %v482
    %v485 = vlaneseq
    %v486 = vshrl.u32 %v485, 7
    %v487 = vsub.s32 0, %v486
    %v488 = vrot.slane %v467, %v487
    %v490 = vmul.f32 %v481, %v488
    %v491 = vmul.f32 %v483, %v488
    %494 = vrot.lane.b32.xlu0 %v490, 64
    %v495 = vpop.permute.xlu0 %494
    %496 = vrot.lane.b32.xlu0 %v491, 64
    %v497 = vpop.permute.xlu0 %496
    %v500 = vadd.f32 %v470, %v495
    %v501 = vadd.f32 %v471, %v497
    %v502 = vtanh.pop %v500
    %v503 = vtanh.pop %v501
    %v504 = vsub.f32 1.0, %v481
    %v505 = vsub.f32 1.0, %v483
    %508 = vrot.lane.b32.xlu0 %v502, 96
    %v509 = vpop.permute.xlu0 %508
    %510 = vrot.lane.b32.xlu0 %v503, 96
    %v511 = vpop.permute.xlu0 %510
    %v514 = vmul.f32 %v504, %v509
    %v515 = vmul.f32 %v505, %v511
    %518 = vrot.lane.b32.xlu0 %v514, 96
    %v519 = vpop.permute.xlu0 %518
    %520 = vrot.lane.b32.xlu0 %v515, 96
    %v521 = vpop.permute.xlu0 %520
    %vm524 = vcmask 261120
    %525 = vst.msk [vmem:[#allocation3] sm:$0xff] %vm524, %v519
    %526 = vst.msk [vmem:[#allocation3 + $0x8] sm:$0xff] %vm524, %v521
    %s527 = scalar_lea.vmem [#allocation2], 240
    %v528 = vld [vmem:[%s527] sm:$0xff]
    %v529 = vld [vmem:[%s527 + $0x8] sm:$0xff]
    %v530 = vxor.u32 %v528, 2147483648
    %v531 = vxor.u32 %v529, 2147483648
    %v532 = vmul.f32 %v530, 1.442695
    %v533 = vpow.pop %v532
    %v534 = vmul.f32 %v531, 1.442695
    %v535 = vpow.pop %v534
    %v536 = vadd.f32 %v533, 1.0
    %v537 = vadd.f32 %v535, 1.0
    %v538 = vrcp.pop %v536
    %v539 = vmul.f32 1.0, %v538
    %v540 = vrcp.pop %v537
    %v541 = vmul.f32 1.0, %v540
    %v543 = vlaneseq
    %v544 = vshrl.u32 %v543, 7
    %v545 = vsub.s32 0, %v544
    %v546 = vrot.slane %v469, %v545
    %v548 = vmul.f32 %v539, %v546
    %v549 = vmul.f32 %v541, %v546
    %552 = vrot.lane.b32.xlu0 %v548, 64
    %v553 = vpop.permute.xlu0 %552
    %554 = vrot.lane.b32.xlu0 %v549, 64
    %v555 = vpop.permute.xlu0 %554
    %v558 = vadd.f32 %v528, %v553
    %v559 = vadd.f32 %v529, %v555
    %v560 = vtanh.pop %v558
    %v561 = vtanh.pop %v559
    %v562 = vsub.f32 1.0, %v539
    %v563 = vsub.f32 1.0, %v541
    %566 = vrot.lane.b32.xlu0 %v560, 96
    %v567 = vpop.permute.xlu0 %566
    %568 = vrot.lane.b32.xlu0 %v561, 96
    %v569 = vpop.permute.xlu0 %568
    %v572 = vmul.f32 %v562, %v567
    %v573 = vmul.f32 %v563, %v569
    %s574 = scalar_lea.vmem [#allocation3], 112
    %vm575 = vcmask 523520
    %576 = vst.msk [vmem:[%s574] sm:$0xff] %vm575, %v572
    %577 = vst.msk [vmem:[%s574 + $0x8] sm:$0xff] %vm575, %v573
    %s578 = scalar_lea.vmem [#allocation2], 16
    %v579 = vld [vmem:[%s578] sm:$0xff]
    %v580 = vld [vmem:[%s578 + $0x8] sm:$0xff]
    %v581 = vsel %vm524, %v519, 0
    %v583 = vsel %vm524, %v521, 0
    %585 = vmatprep.subr.mxu0 0.0
    %586 = vmatpush1.msra.mxu0 0.0
    %587 = vmatprep.subr.mxu0 0.0
    %588 = vmatpush1.msra.mxu0 0.0
    %589 = vmatprep.subr.mxu0 0.0
    %590 = vmatpush1.msra.mxu0 0.0
    %591 = vmatprep.subr.mxu0 0.0
    %592 = vmatpush1.msra.mxu0 0.0
    %593 = vmatprep.subr.mxu0 0.0
    %594 = vmatpush1.msra.mxu0 0.0
    %595 = vmatprep.subr.mxu0 0.0
    %596 = vmatpush1.msra.mxu0 0.0
    %597 = vmatprep.subr.mxu0 0.0
    %598 = vmatpush1.msra.mxu0 0.0
    %599 = vmatprep.subr.mxu0 0.0
    %600 = vmatpush1.msra.mxu0 0.0
    %601 = vmatprep.subr.mxu0 0.0
    %602 = vmatpush1.msra.mxu0 0.0
    %603 = vmatprep.subr.mxu0 0.0
    %604 = vmatpush1.msra.mxu0 0.0
    %605 = vmatprep.subr.mxu0 0.0
    %606 = vmatpush1.msra.mxu0 0.0
    %607 = vmatprep.subr.mxu0 0.0
    %608 = vmatpush1.msra.mxu0 0.0
    %609 = vmatprep.subr.mxu0 0.0
    %610 = vmatpush1.msra.mxu0 %v461
    %611 = vmatprep.subr.mxu0 0.0
    %612 = vmatpush1.msra.mxu0 %v460
    %613 = vmatprep.subr.mxu0 0.0
    %614 = vmatpush1.msra.mxu0 %v459
    %615 = vmatprep.subr.mxu0 0.0
    %616 = vmatpush1.msra.mxu0 %v458
    %617 = vmatprep.subr.mxu0 0.0
    %618 = vmatpush2.msra.mxu0 0.0
    %619 = vmatprep.subr.mxu0 0.0
    %620 = vmatpush2.msra.mxu0 0.0
    %621 = vmatprep.subr.mxu0 0.0
    %622 = vmatpush2.msra.mxu0 0.0
    %623 = vmatprep.subr.mxu0 0.0
    %624 = vmatpush2.msra.mxu0 0.0
    %625 = vmatprep.subr.mxu0 0.0
    %626 = vmatpush2.msra.mxu0 0.0
    %627 = vmatprep.subr.mxu0 0.0
    %628 = vmatpush2.msra.mxu0 0.0
    %629 = vmatprep.subr.mxu0 0.0
    %630 = vmatpush2.msra.mxu0 0.0
    %631 = vmatprep.subr.mxu0 0.0
    %632 = vmatpush2.msra.mxu0 0.0
    %633 = vmatprep.subr.mxu0 0.0
    %634 = vmatpush2.msra.mxu0 0.0
    %635 = vmatprep.subr.mxu0 0.0
    %636 = vmatpush2.msra.mxu0 0.0
    %637 = vmatprep.subr.mxu0 0.0
    %638 = vmatpush2.msra.mxu0 0.0
    %639 = vmatprep.subr.mxu0 0.0
    %640 = vmatpush2.msra.mxu0 0.0
    %641 = vmatprep.subr.mxu0 0.0
    %642 = vmatpush2.msra.mxu0 0.0
    %643 = vmatprep.subr.mxu0 0.0
    %644 = vmatpush2.msra.mxu0 0.0
    %645 = vmatprep.subr.mxu0 0.0
    %646 = vmatpush2.msra.mxu0 0.0
    %647 = vmatprep.subr.mxu0 0.0
    %648 = vmatpush2.msra.mxu0 0.0
    %649 = vmatprep.mubr.f32.mxu0 0.0
    %650 = vmatmul.mubr.f32.gmra.mxu0 %v581
    %v651 = vpop.f32.mrf.mxu0
    %v652 = vadd.f32 0.0, %v651
    %v653 = vpop.f32.mrf.mxu0
    %654 = vmatprep.mubr.f32.mxu0 0.0
    %655 = vmatmul.mubr.f32.gmra.mxu0 %v583
    %v656 = vpop.f32.mrf.mxu0
    %v657 = vadd.f32 0.0, %v656
    %v658 = vpop.f32.mrf.mxu0
    %659 = vdwg.mxu0
    %v660 = vadd.f32 %v579, %v652
    %v661 = vadd.f32 %v580, %v657
    %v662 = vxor.u32 %v660, 2147483648
    %v663 = vxor.u32 %v661, 2147483648
    %v664 = vmul.f32 %v662, 1.442695
    %v665 = vpow.pop %v664
    %v666 = vmul.f32 %v663, 1.442695
    %v667 = vpow.pop %v666
    %v668 = vadd.f32 %v665, 1.0
    %v669 = vadd.f32 %v667, 1.0
    %v670 = vrcp.pop %v668
    %v671 = vmul.f32 1.0, %v670
    %v672 = vrcp.pop %v669
    %v673 = vmul.f32 1.0, %v672
    %674 = vrot.lane.b32.xlu0 %v488, 64
    %v675 = vpop.permute.xlu0 %674
    %v677 = vadd.f32 %v652, %v675
    %v678 = vadd.f32 %v657, %v675
    %681 = vrot.lane.b32.xlu0 %v677, 64
    %v682 = vpop.permute.xlu0 %681
    %683 = vrot.lane.b32.xlu0 %v678, 64
    %v684 = vpop.permute.xlu0 %683
    %v687 = vmul.f32 %v671, %v682
    %v688 = vmul.f32 %v673, %v684
    %691 = vrot.lane.b32.xlu0 %v687, 64
    %v692 = vpop.permute.xlu0 %691
    %693 = vrot.lane.b32.xlu0 %v688, 64
    %v694 = vpop.permute.xlu0 %693
    %v697 = vadd.f32 %v579, %v692
    %v698 = vadd.f32 %v580, %v694
    %v699 = vtanh.pop %v697
    %v700 = vtanh.pop %v698
    %v701 = vsub.f32 1.0, %v671
    %v702 = vsub.f32 1.0, %v673
    %705 = vrot.lane.b32.xlu0 %v699, 96
    %v706 = vpop.permute.xlu0 %705
    %707 = vrot.lane.b32.xlu0 %v700, 96
    %v708 = vpop.permute.xlu0 %707
    %v711 = vmul.f32 %v701, %v706
    %v712 = vmul.f32 %v702, %v708
    %v713 = vmul.f32 %v671, %v514
    %v714 = vmul.f32 %v673, %v515
    %v715 = vadd.f32 %v711, %v713
    %v716 = vadd.f32 %v712, %v714
    %719 = vrot.lane.b32.xlu0 %v715, 96
    %v720 = vpop.permute.xlu0 %719
    %721 = vrot.lane.b32.xlu0 %v716, 96
    %v722 = vpop.permute.xlu0 %721
    %s725 = scalar_lea.vmem [#allocation3], 16
    %726 = vst.msk [vmem:[%s725] sm:$0xff] %vm524, %v720
    %727 = vst.msk [vmem:[%s725 + $0x8] sm:$0xff] %vm524, %v722
    %s728 = scalar_lea.vmem [#allocation2], 224
    %v729 = vld [vmem:[%s728] sm:$0xff]
    %v730 = vld [vmem:[%s728 + $0x8] sm:$0xff]
    %733 = vrot.lane.b32.xlu0 %v572, 96
    %v734 = vpop.permute.xlu0 %733
    %735 = vrot.lane.b32.xlu0 %v573, 96
    %v736 = vpop.permute.xlu0 %735
    %v737 = vsel %vm524, %v734, 0
    %v739 = vsel %vm524, %v736, 0
    %741 = vmatprep.subr.mxu0 0.0
    %742 = vmatpush1.msra.mxu0 0.0
    %743 = vmatprep.subr.mxu0 0.0
    %744 = vmatpush1.msra.mxu0 0.0
    %745 = vmatprep.subr.mxu0 0.0
    %746 = vmatpush1.msra.mxu0 0.0
    %747 = vmatprep.subr.mxu0 0.0
    %748 = vmatpush1.msra.mxu0 0.0
    %749 = vmatprep.subr.mxu0 0.0
    %750 = vmatpush1.msra.mxu0 0.0
    %751 = vmatprep.subr.mxu0 0.0
    %752 = vmatpush1.msra.mxu0 0.0
    %753 = vmatprep.subr.mxu0 0.0
    %754 = vmatpush1.msra.mxu0 0.0
    %755 = vmatprep.subr.mxu0 0.0
    %756 = vmatpush1.msra.mxu0 0.0
    %757 = vmatprep.subr.mxu0 0.0
    %758 = vmatpush1.msra.mxu0 0.0
    %759 = vmatprep.subr.mxu0 0.0
    %760 = vmatpush1.msra.mxu0 0.0
    %761 = vmatprep.subr.mxu0 0.0
    %762 = vmatpush1.msra.mxu0 0.0
    %763 = vmatprep.subr.mxu0 0.0
    %764 = vmatpush1.msra.mxu0 0.0
    %765 = vmatprep.subr.mxu0 0.0
    %766 = vmatpush1.msra.mxu0 %v466
    %767 = vmatprep.subr.mxu0 0.0
    %768 = vmatpush1.msra.mxu0 %v465
    %769 = vmatprep.subr.mxu0 0.0
    %770 = vmatpush1.msra.mxu0 %v464
    %771 = vmatprep.subr.mxu0 0.0
    %772 = vmatpush1.msra.mxu0 %v463
    %773 = vmatprep.subr.mxu0 0.0
    %774 = vmatpush2.msra.mxu0 0.0
    %775 = vmatprep.subr.mxu0 0.0
    %776 = vmatpush2.msra.mxu0 0.0
    %777 = vmatprep.subr.mxu0 0.0
    %778 = vmatpush2.msra.mxu0 0.0
    %779 = vmatprep.subr.mxu0 0.0
    %780 = vmatpush2.msra.mxu0 0.0
    %781 = vmatprep.subr.mxu0 0.0
    %782 = vmatpush2.msra.mxu0 0.0
    %783 = vmatprep.subr.mxu0 0.0
    %784 = vmatpush2.msra.mxu0 0.0
    %785 = vmatprep.subr.mxu0 0.0
    %786 = vmatpush2.msra.mxu0 0.0
    %787 = vmatprep.subr.mxu0 0.0
    %788 = vmatpush2.msra.mxu0 0.0
    %789 = vmatprep.subr.mxu0 0.0
    %790 = vmatpush2.msra.mxu0 0.0
    %791 = vmatprep.subr.mxu0 0.0
    %792 = vmatpush2.msra.mxu0 0.0
    %793 = vmatprep.subr.mxu0 0.0
    %794 = vmatpush2.msra.mxu0 0.0
    %795 = vmatprep.subr.mxu0 0.0
    %796 = vmatpush2.msra.mxu0 0.0
    %797 = vmatprep.subr.mxu0 0.0
    %798 = vmatpush2.msra.mxu0 0.0
    %799 = vmatprep.subr.mxu0 0.0
    %800 = vmatpush2.msra.mxu0 0.0
    %801 = vmatprep.subr.mxu0 0.0
    %802 = vmatpush2.msra.mxu0 0.0
    %803 = vmatprep.subr.mxu0 0.0
    %804 = vmatpush2.msra.mxu0 0.0
    %805 = vmatprep.mubr.f32.mxu0 0.0
    %806 = vmatmul.mubr.f32.gmra.mxu0 %v737
    %v807 = vpop.f32.mrf.mxu0
    %v808 = vadd.f32 0.0, %v807
    %v809 = vpop.f32.mrf.mxu0
    %810 = vmatprep.mubr.f32.mxu0 0.0
    %811 = vmatmul.mubr.f32.gmra.mxu0 %v739
    %v812 = vpop.f32.mrf.mxu0
    %v813 = vadd.f32 0.0, %v812
    %v814 = vpop.f32.mrf.mxu0
    %815 = vdwg.mxu0
    %v816 = vadd.f32 %v729, %v808
    %v817 = vadd.f32 %v730, %v813
    %v818 = vxor.u32 %v816, 2147483648
    %v819 = vxor.u32 %v817, 2147483648
    %v820 = vmul.f32 %v818, 1.442695
    %v821 = vpow.pop %v820
    %v822 = vmul.f32 %v819, 1.442695
    %v823 = vpow.pop %v822
    %v824 = vadd.f32 %v821, 1.0
    %v825 = vadd.f32 %v823, 1.0
    %v826 = vrcp.pop %v824
    %v827 = vmul.f32 1.0, %v826
    %v828 = vrcp.pop %v825
    %v829 = vmul.f32 1.0, %v828
    %830 = vrot.lane.b32.xlu0 %v546, 64
    %v831 = vpop.permute.xlu0 %830
    %v833 = vadd.f32 %v808, %v831
    %v834 = vadd.f32 %v813, %v831
    %837 = vrot.lane.b32.xlu0 %v833, 64
    %v838 = vpop.permute.xlu0 %837
    %839 = vrot.lane.b32.xlu0 %v834, 64
    %v840 = vpop.permute.xlu0 %839
    %v843 = vmul.f32 %v827, %v838
    %v844 = vmul.f32 %v829, %v840
    %847 = vrot.lane.b32.xlu0 %v843, 64
    %v848 = vpop.permute.xlu0 %847
    %849 = vrot.lane.b32.xlu0 %v844, 64
    %v850 = vpop.permute.xlu0 %849
    %v853 = vadd.f32 %v729, %v848
    %v854 = vadd.f32 %v730, %v850
    %v855 = vtanh.pop %v853
    %v856 = vtanh.pop %v854
    %v857 = vsub.f32 1.0, %v827
    %v858 = vsub.f32 1.0, %v829
    %861 = vrot.lane.b32.xlu0 %v855, 96
    %v862 = vpop.permute.xlu0 %861
    %863 = vrot.lane.b32.xlu0 %v856, 96
    %v864 = vpop.permute.xlu0 %863
    %v867 = vmul.f32 %v857, %v862
    %v868 = vmul.f32 %v858, %v864
    %v869 = vmul.f32 %v827, %v572
    %v870 = vmul.f32 %v829, %v573
    %v871 = vadd.f32 %v867, %v869
    %v872 = vadd.f32 %v868, %v870
    %s873 = scalar_lea.vmem [#allocation3], 96
    %874 = vst.msk [vmem:[%s873] sm:$0xff] %vm575, %v871
    %875 = vst.msk [vmem:[%s873 + $0x8] sm:$0xff] %vm575, %v872
    %s876 = scalar_lea.vmem [#allocation2], 32
    %v877 = vld [vmem:[%s876] sm:$0xff]
    %v878 = vld [vmem:[%s876 + $0x8] sm:$0xff]
    %v879 = vsel %vm524, %v720, 0
    %v881 = vsel %vm524, %v722, 0
    %883 = vmatprep.subr.mxu0 0.0
    %884 = vmatpush1.msra.mxu0 0.0
    %885 = vmatprep.subr.mxu0 0.0
    %886 = vmatpush1.msra.mxu0 0.0
    %887 = vmatprep.subr.mxu0 0.0
    %888 = vmatpush1.msra.mxu0 0.0
    %889 = vmatprep.subr.mxu0 0.0
    %890 = vmatpush1.msra.mxu0 0.0
    %891 = vmatprep.subr.mxu0 0.0
    %892 = vmatpush1.msra.mxu0 0.0
    %893 = vmatprep.subr.mxu0 0.0
    %894 = vmatpush1.msra.mxu0 0.0
    %895 = vmatprep.subr.mxu0 0.0
    %896 = vmatpush1.msra.mxu0 0.0
    %897 = vmatprep.subr.mxu0 0.0
    %898 = vmatpush1.msra.mxu0 0.0
    %899 = vmatprep.subr.mxu0 0.0
    %900 = vmatpush1.msra.mxu0 0.0
    %901 = vmatprep.subr.mxu0 0.0
    %902 = vmatpush1.msra.mxu0 0.0
    %903 = vmatprep.subr.mxu0 0.0
    %904 = vmatpush1.msra.mxu0 0.0
    %905 = vmatprep.subr.mxu0 0.0
    %906 = vmatpush1.msra.mxu0 0.0
    %907 = vmatprep.subr.mxu0 0.0
    %908 = vmatpush1.msra.mxu0 %v461
    %909 = vmatprep.subr.mxu0 0.0
    %910 = vmatpush1.msra.mxu0 %v460
    %911 = vmatprep.subr.mxu0 0.0
    %912 = vmatpush1.msra.mxu0 %v459
    %913 = vmatprep.subr.mxu0 0.0
    %914 = vmatpush1.msra.mxu0 %v458
    %915 = vmatprep.subr.mxu0 0.0
    %916 = vmatpush2.msra.mxu0 0.0
    %917 = vmatprep.subr.mxu0 0.0
    %918 = vmatpush2.msra.mxu0 0.0
    %919 = vmatprep.subr.mxu0 0.0
    %920 = vmatpush2.msra.mxu0 0.0
    %921 = vmatprep.subr.mxu0 0.0
    %922 = vmatpush2.msra.mxu0 0.0
    %923 = vmatprep.subr.mxu0 0.0
    %924 = vmatpush2.msra.mxu0 0.0
    %925 = vmatprep.subr.mxu0 0.0
    %926 = vmatpush2.msra.mxu0 0.0
    %927 = vmatprep.subr.mxu0 0.0
    %928 = vmatpush2.msra.mxu0 0.0
    %929 = vmatprep.subr.mxu0 0.0
    %930 = vmatpush2.msra.mxu0 0.0
    %931 = vmatprep.subr.mxu0 0.0
    %932 = vmatpush2.msra.mxu0 0.0
    %933 = vmatprep.subr.mxu0 0.0
    %934 = vmatpush2.msra.mxu0 0.0
    %935 = vmatprep.subr.mxu0 0.0
    %936 = vmatpush2.msra.mxu0 0.0
    %937 = vmatprep.subr.mxu0 0.0
    %938 = vmatpush2.msra.mxu0 0.0
    %939 = vmatprep.subr.mxu0 0.0
    %940 = vmatpush2.msra.mxu0 0.0
    %941 = vmatprep.subr.mxu0 0.0
    %942 = vmatpush2.msra.mxu0 0.0
    %943 = vmatprep.subr.mxu0 0.0
    %944 = vmatpush2.msra.mxu0 0.0
    %945 = vmatprep.subr.mxu0 0.0
    %946 = vmatpush2.msra.mxu0 0.0
    %947 = vmatprep.mubr.f32.mxu0 0.0
    %948 = vmatmul.mubr.f32.gmra.mxu0 %v879
    %v949 = vpop.f32.mrf.mxu0
    %v950 = vadd.f32 0.0, %v949
    %v951 = vpop.f32.mrf.mxu0
    %952 = vmatprep.mubr.f32.mxu0 0.0
    %953 = vmatmul.mubr.f32.gmra.mxu0 %v881
    %v954 = vpop.f32.mrf.mxu0
    %v955 = vadd.f32 0.0, %v954
    %v956 = vpop.f32.mrf.mxu0
    %957 = vdwg.mxu0
    %v958 = vadd.f32 %v877, %v950
    %v959 = vadd.f32 %v878, %v955
    %v960 = vxor.u32 %v958, 2147483648
    %v961 = vxor.u32 %v959, 2147483648
    %v962 = vmul.f32 %v960, 1.442695
    %v963 = vpow.pop %v962
    %v964 = vmul.f32 %v961, 1.442695
    %v965 = vpow.pop %v964
    %v966 = vadd.f32 %v963, 1.0
    %v967 = vadd.f32 %v965, 1.0
    %v968 = vrcp.pop %v966
    %v969 = vmul.f32 1.0, %v968
    %v970 = vrcp.pop %v967
    %v971 = vmul.f32 1.0, %v970
    %v972 = vadd.f32 %v950, %v675
    %v973 = vadd.f32 %v955, %v675
    %976 = vrot.lane.b32.xlu0 %v972, 64
    %v977 = vpop.permute.xlu0 %976
    %978 = vrot.lane.b32.xlu0 %v973, 64
    %v979 = vpop.permute.xlu0 %978
    %v982 = vmul.f32 %v969, %v977
    %v983 = vmul.f32 %v971, %v979
    %986 = vrot.lane.b32.xlu0 %v982, 64
    %v987 = vpop.permute.xlu0 %986
    %988 = vrot.lane.b32.xlu0 %v983, 64
    %v989 = vpop.permute.xlu0 %988
    %v992 = vadd.f32 %v877, %v987
    %v993 = vadd.f32 %v878, %v989
    %v994 = vtanh.pop %v992
    %v995 = vtanh.pop %v993
    %v996 = vsub.f32 1.0, %v969
    %v997 = vsub.f32 1.0, %v971
    %1000 = vrot.lane.b32.xlu0 %v994, 96
    %v1001 = vpop.permute.xlu0 %1000
    %1002 = vrot.lane.b32.xlu0 %v995, 96
    %v1003 = vpop.permute.xlu0 %1002
    %v1006 = vmul.f32 %v996, %v1001
    %v1007 = vmul.f32 %v997, %v1003
    %v1008 = vmul.f32 %v969, %v715
    %v1009 = vmul.f32 %v971, %v716
    %v1010 = vadd.f32 %v1006, %v1008
    %v1011 = vadd.f32 %v1007, %v1009
    %1014 = vrot.lane.b32.xlu0 %v1010, 96
    %v1015 = vpop.permute.xlu0 %1014
    %1016 = vrot.lane.b32.xlu0 %v1011, 96
    %v1017 = vpop.permute.xlu0 %1016
    %s1020 = scalar_lea.vmem [#allocation3], 32
    %1021 = vst.msk [vmem:[%s1020] sm:$0xff] %vm524, %v1015
    %1022 = vst.msk [vmem:[%s1020 + $0x8] sm:$0xff] %vm524, %v1017
    %s1023 = scalar_lea.vmem [#allocation2], 208
    %v1024 = vld [vmem:[%s1023] sm:$0xff]
    %v1025 = vld [vmem:[%s1023 + $0x8] sm:$0xff]
    %1028 = vrot.lane.b32.xlu0 %v871, 96
    %v1029 = vpop.permute.xlu0 %1028
    %1030 = vrot.lane.b32.xlu0 %v872, 96
    %v1031 = vpop.permute.xlu0 %1030
    %v1032 = vsel %vm524, %v1029, 0
    %v1034 = vsel %vm524, %v1031, 0
    %1036 = vmatprep.subr.mxu0 0.0
    %1037 = vmatpush1.msra.mxu0 0.0
    %1038 = vmatprep.subr.mxu0 0.0
    %1039 = vmatpush1.msra.mxu0 0.0
    %1040 = vmatprep.subr.mxu0 0.0
    %1041 = vmatpush1.msra.mxu0 0.0
    %1042 = vmatprep.subr.mxu0 0.0
    %1043 = vmatpush1.msra.mxu0 0.0
    %1044 = vmatprep.subr.mxu0 0.0
    %1045 = vmatpush1.msra.mxu0 0.0
    %1046 = vmatprep.subr.mxu0 0.0
    %1047 = vmatpush1.msra.mxu0 0.0
    %1048 = vmatprep.subr.mxu0 0.0
    %1049 = vmatpush1.msra.mxu0 0.0
    %1050 = vmatprep.subr.mxu0 0.0
    %1051 = vmatpush1.msra.mxu0 0.0
    %1052 = vmatprep.subr.mxu0 0.0
    %1053 = vmatpush1.msra.mxu0 0.0
    %1054 = vmatprep.subr.mxu0 0.0
    %1055 = vmatpush1.msra.mxu0 0.0
    %1056 = vmatprep.subr.mxu0 0.0
    %1057 = vmatpush1.msra.mxu0 0.0
    %1058 = vmatprep.subr.mxu0 0.0
    %1059 = vmatpush1.msra.mxu0 0.0
    %1060 = vmatprep.subr.mxu0 0.0
    %1061 = vmatpush1.msra.mxu0 %v466
    %1062 = vmatprep.subr.mxu0 0.0
    %1063 = vmatpush1.msra.mxu0 %v465
    %1064 = vmatprep.subr.mxu0 0.0
    %1065 = vmatpush1.msra.mxu0 %v464
    %1066 = vmatprep.subr.mxu0 0.0
    %1067 = vmatpush1.msra.mxu0 %v463
    %1068 = vmatprep.subr.mxu0 0.0
    %1069 = vmatpush2.msra.mxu0 0.0
    %1070 = vmatprep.subr.mxu0 0.0
    %1071 = vmatpush2.msra.mxu0 0.0
    %1072 = vmatprep.subr.mxu0 0.0
    %1073 = vmatpush2.msra.mxu0 0.0
    %1074 = vmatprep.subr.mxu0 0.0
    %1075 = vmatpush2.msra.mxu0 0.0
    %1076 = vmatprep.subr.mxu0 0.0
    %1077 = vmatpush2.msra.mxu0 0.0
    %1078 = vmatprep.subr.mxu0 0.0
    %1079 = vmatpush2.msra.mxu0 0.0
    %1080 = vmatprep.subr.mxu0 0.0
    %1081 = vmatpush2.msra.mxu0 0.0
    %1082 = vmatprep.subr.mxu0 0.0
    %1083 = vmatpush2.msra.mxu0 0.0
    %1084 = vmatprep.subr.mxu0 0.0
    %1085 = vmatpush2.msra.mxu0 0.0
    %1086 = vmatprep.subr.mxu0 0.0
    %1087 = vmatpush2.msra.mxu0 0.0
    %1088 = vmatprep.subr.mxu0 0.0
    %1089 = vmatpush2.msra.mxu0 0.0
    %1090 = vmatprep.subr.mxu0 0.0
    %1091 = vmatpush2.msra.mxu0 0.0
    %1092 = vmatprep.subr.mxu0 0.0
    %1093 = vmatpush2.msra.mxu0 0.0
    %1094 = vmatprep.subr.mxu0 0.0
    %1095 = vmatpush2.msra.mxu0 0.0
    %1096 = vmatprep.subr.mxu0 0.0
    %1097 = vmatpush2.msra.mxu0 0.0
    %1098 = vmatprep.subr.mxu0 0.0
    %1099 = vmatpush2.msra.mxu0 0.0
    %1100 = vmatprep.mubr.f32.mxu0 0.0
    %1101 = vmatmul.mubr.f32.gmra.mxu0 %v1032
    %v1102 = vpop.f32.mrf.mxu0
    %v1103 = vadd.f32 0.0, %v1102
    %v1104 = vpop.f32.mrf.mxu0
    %1105 = vmatprep.mubr.f32.mxu0 0.0
    %1106 = vmatmul.mubr.f32.gmra.mxu0 %v1034
    %v1107 = vpop.f32.mrf.mxu0
    %v1108 = vadd.f32 0.0, %v1107
    %v1109 = vpop.f32.mrf.mxu0
    %1110 = vdwg.mxu0
    %v1111 = vadd.f32 %v1024, %v1103
    %v1112 = vadd.f32 %v1025, %v1108
    %v1113 = vxor.u32 %v1111, 2147483648
    %v1114 = vxor.u32 %v1112, 2147483648
    %v1115 = vmul.f32 %v1113, 1.442695
    %v1116 = vpow.pop %v1115
    %v1117 = vmul.f32 %v1114, 1.442695
    %v1118 = vpow.pop %v1117
    %v1119 = vadd.f32 %v1116, 1.0
    %v1120 = vadd.f32 %v1118, 1.0
    %v1121 = vrcp.pop %v1119
    %v1122 = vmul.f32 1.0, %v1121
    %v1123 = vrcp.pop %v1120
    %v1124 = vmul.f32 1.0, %v1123
    %v1125 = vadd.f32 %v1103, %v831
    %v1126 = vadd.f32 %v1108, %v831
    %1129 = vrot.lane.b32.xlu0 %v1125, 64
    %v1130 = vpop.permute.xlu0 %1129
    %1131 = vrot.lane.b32.xlu0 %v1126, 64
    %v1132 = vpop.permute.xlu0 %1131
    %v1135 = vmul.f32 %v1122, %v1130
    %v1136 = vmul.f32 %v1124, %v1132
    %1139 = vrot.lane.b32.xlu0 %v1135, 64
    %v1140 = vpop.permute.xlu0 %1139
    %1141 = vrot.lane.b32.xlu0 %v1136, 64
    %v1142 = vpop.permute.xlu0 %1141
    %v1145 = vadd.f32 %v1024, %v1140
    %v1146 = vadd.f32 %v1025, %v1142
    %v1147 = vtanh.pop %v1145
    %v1148 = vtanh.pop %v1146
    %v1149 = vsub.f32 1.0, %v1122
    %v1150 = vsub.f32 1.0, %v1124
    %1153 = vrot.lane.b32.xlu0 %v1147, 96
    %v1154 = vpop.permute.xlu0 %1153
    %1155 = vrot.lane.b32.xlu0 %v1148, 96
    %v1156 = vpop.permute.xlu0 %1155
    %v1159 = vmul.f32 %v1149, %v1154
    %v1160 = vmul.f32 %v1150, %v1156
    %v1161 = vmul.f32 %v1122, %v871
    %v1162 = vmul.f32 %v1124, %v872
    %v1163 = vadd.f32 %v1159, %v1161
    %v1164 = vadd.f32 %v1160, %v1162
    %s1165 = scalar_lea.vmem [#allocation3], 80
    %1166 = vst.msk [vmem:[%s1165] sm:$0xff] %vm575, %v1163
    %1167 = vst.msk [vmem:[%s1165 + $0x8] sm:$0xff] %vm575, %v1164
    %s1168 = scalar_lea.vmem [#allocation2], 48
    %v1169 = vld [vmem:[%s1168] sm:$0xff]
    %v1170 = vld [vmem:[%s1168 + $0x8] sm:$0xff]
    %v1171 = vsel %vm524, %v1015, 0
    %v1173 = vsel %vm524, %v1017, 0
    %1175 = vmatprep.subr.mxu0 0.0
    %1176 = vmatpush1.msra.mxu0 0.0
    %1177 = vmatprep.subr.mxu0 0.0
    %1178 = vmatpush1.msra.mxu0 0.0
    %1179 = vmatprep.subr.mxu0 0.0
    %1180 = vmatpush1.msra.mxu0 0.0
    %1181 = vmatprep.subr.mxu0 0.0
    %1182 = vmatpush1.msra.mxu0 0.0
    %1183 = vmatprep.subr.mxu0 0.0
    %1184 = vmatpush1.msra.mxu0 0.0
    %1185 = vmatprep.subr.mxu0 0.0
    %1186 = vmatpush1.msra.mxu0 0.0
    %1187 = vmatprep.subr.mxu0 0.0
    %1188 = vmatpush1.msra.mxu0 0.0
    %1189 = vmatprep.subr.mxu0 0.0
    %1190 = vmatpush1.msra.mxu0 0.0
    %1191 = vmatprep.subr.mxu0 0.0
    %1192 = vmatpush1.msra.mxu0 0.0
    %1193 = vmatprep.subr.mxu0 0.0
    %1194 = vmatpush1.msra.mxu0 0.0
    %1195 = vmatprep.subr.mxu0 0.0
    %1196 = vmatpush1.msra.mxu0 0.0
    %1197 = vmatprep.subr.mxu0 0.0
    %1198 = vmatpush1.msra.mxu0 0.0
    %1199 = vmatprep.subr.mxu0 0.0
    %1200 = vmatpush1.msra.mxu0 %v461
    %1201 = vmatprep.subr.mxu0 0.0
    %1202 = vmatpush1.msra.mxu0 %v460
    %1203 = vmatprep.subr.mxu0 0.0
    %1204 = vmatpush1.msra.mxu0 %v459
    %1205 = vmatprep.subr.mxu0 0.0
    %1206 = vmatpush1.msra.mxu0 %v458
    %1207 = vmatprep.subr.mxu0 0.0
    %1208 = vmatpush2.msra.mxu0 0.0
    %1209 = vmatprep.subr.mxu0 0.0
    %1210 = vmatpush2.msra.mxu0 0.0
    %1211 = vmatprep.subr.mxu0 0.0
    %1212 = vmatpush2.msra.mxu0 0.0
    %1213 = vmatprep.subr.mxu0 0.0
    %1214 = vmatpush2.msra.mxu0 0.0
    %1215 = vmatprep.subr.mxu0 0.0
    %1216 = vmatpush2.msra.mxu0 0.0
    %1217 = vmatprep.subr.mxu0 0.0
    %1218 = vmatpush2.msra.mxu0 0.0
    %1219 = vmatprep.subr.mxu0 0.0
    %1220 = vmatpush2.msra.mxu0 0.0
    %1221 = vmatprep.subr.mxu0 0.0
    %1222 = vmatpush2.msra.mxu0 0.0
    %1223 = vmatprep.subr.mxu0 0.0
    %1224 = vmatpush2.msra.mxu0 0.0
    %1225 = vmatprep.subr.mxu0 0.0
    %1226 = vmatpush2.msra.mxu0 0.0
    %1227 = vmatprep.subr.mxu0 0.0
    %1228 = vmatpush2.msra.mxu0 0.0
    %1229 = vmatprep.subr.mxu0 0.0
    %1230 = vmatpush2.msra.mxu0 0.0
    %1231 = vmatprep.subr.mxu0 0.0
    %1232 = vmatpush2.msra.mxu0 0.0
    %1233 = vmatprep.subr.mxu0 0.0
    %1234 = vmatpush2.msra.mxu0 0.0
    %1235 = vmatprep.subr.mxu0 0.0
    %1236 = vmatpush2.msra.mxu0 0.0
    %1237 = vmatprep.subr.mxu0 0.0
    %1238 = vmatpush2.msra.mxu0 0.0
    %1239 = vmatprep.mubr.f32.mxu0 0.0
    %1240 = vmatmul.mubr.f32.gmra.mxu0 %v1171
    %v1241 = vpop.f32.mrf.mxu0
    %v1242 = vadd.f32 0.0, %v1241
    %v1243 = vpop.f32.mrf.mxu0
    %1244 = vmatprep.mubr.f32.mxu0 0.0
    %1245 = vmatmul.mubr.f32.gmra.mxu0 %v1173
    %v1246 = vpop.f32.mrf.mxu0
    %v1247 = vadd.f32 0.0, %v1246
    %v1248 = vpop.f32.mrf.mxu0
    %1249 = vdwg.mxu0
    %v1250 = vadd.f32 %v1169, %v1242
    %v1251 = vadd.f32 %v1170, %v1247
    %v1252 = vxor.u32 %v1250, 2147483648
    %v1253 = vxor.u32 %v1251, 2147483648
    %v1254 = vmul.f32 %v1252, 1.442695
    %v1255 = vpow.pop %v1254
    %v1256 = vmul.f32 %v1253, 1.442695
    %v1257 = vpow.pop %v1256
    %v1258 = vadd.f32 %v1255, 1.0
    %v1259 = vadd.f32 %v1257, 1.0
    %v1260 = vrcp.pop %v1258
    %v1261 = vmul.f32 1.0, %v1260
    %v1262 = vrcp.pop %v1259
    %v1263 = vmul.f32 1.0, %v1262
    %v1264 = vadd.f32 %v1242, %v675
    %v1265 = vadd.f32 %v1247, %v675
    %1268 = vrot.lane.b32.xlu0 %v1264, 64
    %v1269 = vpop.permute.xlu0 %1268
    %1270 = vrot.lane.b32.xlu0 %v1265, 64
    %v1271 = vpop.permute.xlu0 %1270
    %v1274 = vmul.f32 %v1261, %v1269
    %v1275 = vmul.f32 %v1263, %v1271
    %1278 = vrot.lane.b32.xlu0 %v1274, 64
    %v1279 = vpop.permute.xlu0 %1278
    %1280 = vrot.lane.b32.xlu0 %v1275, 64
    %v1281 = vpop.permute.xlu0 %1280
    %v1284 = vadd.f32 %v1169, %v1279
    %v1285 = vadd.f32 %v1170, %v1281
    %v1286 = vtanh.pop %v1284
    %v1287 = vtanh.pop %v1285
    %v1288 = vsub.f32 1.0, %v1261
    %v1289 = vsub.f32 1.0, %v1263
    %1292 = vrot.lane.b32.xlu0 %v1286, 96
    %v1293 = vpop.permute.xlu0 %1292
    %1294 = vrot.lane.b32.xlu0 %v1287, 96
    %v1295 = vpop.permute.xlu0 %1294
    %v1298 = vmul.f32 %v1288, %v1293
    %v1299 = vmul.f32 %v1289, %v1295
    %v1300 = vmul.f32 %v1261, %v1010
    %v1301 = vmul.f32 %v1263, %v1011
    %v1302 = vadd.f32 %v1298, %v1300
    %v1303 = vadd.f32 %v1299, %v1301
    %1306 = vrot.lane.b32.xlu0 %v1302, 96
    %v1307 = vpop.permute.xlu0 %1306
    %1308 = vrot.lane.b32.xlu0 %v1303, 96
    %v1309 = vpop.permute.xlu0 %1308
    %s1312 = scalar_lea.vmem [#allocation3], 48
    %1313 = vst.msk [vmem:[%s1312] sm:$0xff] %vm524, %v1307
    %1314 = vst.msk [vmem:[%s1312 + $0x8] sm:$0xff] %vm524, %v1309
    %s1315 = scalar_lea.vmem [#allocation2], 192
    %v1316 = vld [vmem:[%s1315] sm:$0xff]
    %v1317 = vld [vmem:[%s1315 + $0x8] sm:$0xff]
    %1320 = vrot.lane.b32.xlu0 %v1163, 96
    %v1321 = vpop.permute.xlu0 %1320
    %1322 = vrot.lane.b32.xlu0 %v1164, 96
    %v1323 = vpop.permute.xlu0 %1322
    %v1324 = vsel %vm524, %v1321, 0
    %v1326 = vsel %vm524, %v1323, 0
    %1328 = vmatprep.subr.mxu0 0.0
    %1329 = vmatpush1.msra.mxu0 0.0
    %1330 = vmatprep.subr.mxu0 0.0
    %1331 = vmatpush1.msra.mxu0 0.0
    %1332 = vmatprep.subr.mxu0 0.0
    %1333 = vmatpush1.msra.mxu0 0.0
    %1334 = vmatprep.subr.mxu0 0.0
    %1335 = vmatpush1.msra.mxu0 0.0
    %1336 = vmatprep.subr.mxu0 0.0
    %1337 = vmatpush1.msra.mxu0 0.0
    %1338 = vmatprep.subr.mxu0 0.0
    %1339 = vmatpush1.msra.mxu0 0.0
    %1340 = vmatprep.subr.mxu0 0.0
    %1341 = vmatpush1.msra.mxu0 0.0
    %1342 = vmatprep.subr.mxu0 0.0
    %1343 = vmatpush1.msra.mxu0 0.0
    %1344 = vmatprep.subr.mxu0 0.0
    %1345 = vmatpush1.msra.mxu0 0.0
    %1346 = vmatprep.subr.mxu0 0.0
    %1347 = vmatpush1.msra.mxu0 0.0
    %1348 = vmatprep.subr.mxu0 0.0
    %1349 = vmatpush1.msra.mxu0 0.0
    %1350 = vmatprep.subr.mxu0 0.0
    %1351 = vmatpush1.msra.mxu0 0.0
    %1352 = vmatprep.subr.mxu0 0.0
    %1353 = vmatpush1.msra.mxu0 %v466
    %1354 = vmatprep.subr.mxu0 0.0
    %1355 = vmatpush1.msra.mxu0 %v465
    %1356 = vmatprep.subr.mxu0 0.0
    %1357 = vmatpush1.msra.mxu0 %v464
    %1358 = vmatprep.subr.mxu0 0.0
    %1359 = vmatpush1.msra.mxu0 %v463
    %1360 = vmatprep.subr.mxu0 0.0
    %1361 = vmatpush2.msra.mxu0 0.0
    %1362 = vmatprep.subr.mxu0 0.0
    %1363 = vmatpush2.msra.mxu0 0.0
    %1364 = vmatprep.subr.mxu0 0.0
    %1365 = vmatpush2.msra.mxu0 0.0
    %1366 = vmatprep.subr.mxu0 0.0
    %1367 = vmatpush2.msra.mxu0 0.0
    %1368 = vmatprep.subr.mxu0 0.0
    %1369 = vmatpush2.msra.mxu0 0.0
    %1370 = vmatprep.subr.mxu0 0.0
    %1371 = vmatpush2.msra.mxu0 0.0
    %1372 = vmatprep.subr.mxu0 0.0
    %1373 = vmatpush2.msra.mxu0 0.0
    %1374 = vmatprep.subr.mxu0 0.0
    %1375 = vmatpush2.msra.mxu0 0.0
    %1376 = vmatprep.subr.mxu0 0.0
    %1377 = vmatpush2.msra.mxu0 0.0
    %1378 = vmatprep.subr.mxu0 0.0
    %1379 = vmatpush2.msra.mxu0 0.0
    %1380 = vmatprep.subr.mxu0 0.0
    %1381 = vmatpush2.msra.mxu0 0.0
    %1382 = vmatprep.subr.mxu0 0.0
    %1383 = vmatpush2.msra.mxu0 0.0
    %1384 = vmatprep.subr.mxu0 0.0
    %1385 = vmatpush2.msra.mxu0 0.0
    %1386 = vmatprep.subr.mxu0 0.0
    %1387 = vmatpush2.msra.mxu0 0.0
    %1388 = vmatprep.subr.mxu0 0.0
    %1389 = vmatpush2.msra.mxu0 0.0
    %1390 = vmatprep.subr.mxu0 0.0
    %1391 = vmatpush2.msra.mxu0 0.0
    %1392 = vmatprep.mubr.f32.mxu0 0.0
    %1393 = vmatmul.mubr.f32.gmra.mxu0 %v1324
    %v1394 = vpop.f32.mrf.mxu0
    %v1395 = vadd.f32 0.0, %v1394
    %v1396 = vpop.f32.mrf.mxu0
    %1397 = vmatprep.mubr.f32.mxu0 0.0
    %1398 = vmatmul.mubr.f32.gmra.mxu0 %v1326
    %v1399 = vpop.f32.mrf.mxu0
    %v1400 = vadd.f32 0.0, %v1399
    %v1401 = vpop.f32.mrf.mxu0
    %1402 = vdwg.mxu0
    %v1403 = vadd.f32 %v1316, %v1395
    %v1404 = vadd.f32 %v1317, %v1400
    %v1405 = vxor.u32 %v1403, 2147483648
    %v1406 = vxor.u32 %v1404, 2147483648
    %v1407 = vmul.f32 %v1405, 1.442695
    %v1408 = vpow.pop %v1407
    %v1409 = vmul.f32 %v1406, 1.442695
    %v1410 = vpow.pop %v1409
    %v1411 = vadd.f32 %v1408, 1.0
    %v1412 = vadd.f32 %v1410, 1.0
    %v1413 = vrcp.pop %v1411
    %v1414 = vmul.f32 1.0, %v1413
    %v1415 = vrcp.pop %v1412
    %v1416 = vmul.f32 1.0, %v1415
    %v1417 = vadd.f32 %v1395, %v831
    %v1418 = vadd.f32 %v1400, %v831
    %1421 = vrot.lane.b32.xlu0 %v1417, 64
    %v1422 = vpop.permute.xlu0 %1421
    %1423 = vrot.lane.b32.xlu0 %v1418, 64
    %v1424 = vpop.permute.xlu0 %1423
    %v1427 = vmul.f32 %v1414, %v1422
    %v1428 = vmul.f32 %v1416, %v1424
    %1431 = vrot.lane.b32.xlu0 %v1427, 64
    %v1432 = vpop.permute.xlu0 %1431
    %1433 = vrot.lane.b32.xlu0 %v1428, 64
    %v1434 = vpop.permute.xlu0 %1433
    %v1437 = vadd.f32 %v1316, %v1432
    %v1438 = vadd.f32 %v1317, %v1434
    %v1439 = vtanh.pop %v1437
    %v1440 = vtanh.pop %v1438
    %v1441 = vsub.f32 1.0, %v1414
    %v1442 = vsub.f32 1.0, %v1416
    %1445 = vrot.lane.b32.xlu0 %v1439, 96
    %v1446 = vpop.permute.xlu0 %1445
    %1447 = vrot.lane.b32.xlu0 %v1440, 96
    %v1448 = vpop.permute.xlu0 %1447
    %v1451 = vmul.f32 %v1441, %v1446
    %v1452 = vmul.f32 %v1442, %v1448
    %v1453 = vmul.f32 %v1414, %v1163
    %v1454 = vmul.f32 %v1416, %v1164
    %v1455 = vadd.f32 %v1451, %v1453
    %v1456 = vadd.f32 %v1452, %v1454
    %s1457 = scalar_lea.vmem [#allocation3], 64
    %1458 = vst.msk [vmem:[%s1457] sm:$0xff] %vm575, %v1455
    %1459 = vst.msk [vmem:[%s1457 + $0x8] sm:$0xff] %vm575, %v1456
    %s1460 = scalar_lea.vmem [#allocation2], 64
    %v1461 = vld [vmem:[%s1460] sm:$0xff]
    %v1462 = vld [vmem:[%s1460 + $0x8] sm:$0xff]
    %v1463 = vsel %vm524, %v1307, 0
    %v1465 = vsel %vm524, %v1309, 0
    %1467 = vmatprep.subr.mxu0 0.0
    %1468 = vmatpush1.msra.mxu0 0.0
    %1469 = vmatprep.subr.mxu0 0.0
    %1470 = vmatpush1.msra.mxu0 0.0
    %1471 = vmatprep.subr.mxu0 0.0
    %1472 = vmatpush1.msra.mxu0 0.0
    %1473 = vmatprep.subr.mxu0 0.0
    %1474 = vmatpush1.msra.mxu0 0.0
    %1475 = vmatprep.subr.mxu0 0.0
    %1476 = vmatpush1.msra.mxu0 0.0
    %1477 = vmatprep.subr.mxu0 0.0
    %1478 = vmatpush1.msra.mxu0 0.0
    %1479 = vmatprep.subr.mxu0 0.0
    %1480 = vmatpush1.msra.mxu0 0.0
    %1481 = vmatprep.subr.mxu0 0.0
    %1482 = vmatpush1.msra.mxu0 0.0
    %1483 = vmatprep.subr.mxu0 0.0
    %1484 = vmatpush1.msra.mxu0 0.0
    %1485 = vmatprep.subr.mxu0 0.0
    %1486 = vmatpush1.msra.mxu0 0.0
    %1487 = vmatprep.subr.mxu0 0.0
    %1488 = vmatpush1.msra.mxu0 0.0
    %1489 = vmatprep.subr.mxu0 0.0
    %1490 = vmatpush1.msra.mxu0 0.0
    %1491 = vmatprep.subr.mxu0 0.0
    %1492 = vmatpush1.msra.mxu0 %v461
    %1493 = vmatprep.subr.mxu0 0.0
    %1494 = vmatpush1.msra.mxu0 %v460
    %1495 = vmatprep.subr.mxu0 0.0
    %1496 = vmatpush1.msra.mxu0 %v459
    %1497 = vmatprep.subr.mxu0 0.0
    %1498 = vmatpush1.msra.mxu0 %v458
    %1499 = vmatprep.subr.mxu0 0.0
    %1500 = vmatpush2.msra.mxu0 0.0
    %1501 = vmatprep.subr.mxu0 0.0
    %1502 = vmatpush2.msra.mxu0 0.0
    %1503 = vmatprep.subr.mxu0 0.0
    %1504 = vmatpush2.msra.mxu0 0.0
    %1505 = vmatprep.subr.mxu0 0.0
    %1506 = vmatpush2.msra.mxu0 0.0
    %1507 = vmatprep.subr.mxu0 0.0
    %1508 = vmatpush2.msra.mxu0 0.0
    %1509 = vmatprep.subr.mxu0 0.0
    %1510 = vmatpush2.msra.mxu0 0.0
    %1511 = vmatprep.subr.mxu0 0.0
    %1512 = vmatpush2.msra.mxu0 0.0
    %1513 = vmatprep.subr.mxu0 0.0
    %1514 = vmatpush2.msra.mxu0 0.0
    %1515 = vmatprep.subr.mxu0 0.0
    %1516 = vmatpush2.msra.mxu0 0.0
    %1517 = vmatprep.subr.mxu0 0.0
    %1518 = vmatpush2.msra.mxu0 0.0
    %1519 = vmatprep.subr.mxu0 0.0
    %1520 = vmatpush2.msra.mxu0 0.0
    %1521 = vmatprep.subr.mxu0 0.0
    %1522 = vmatpush2.msra.mxu0 0.0
    %1523 = vmatprep.subr.mxu0 0.0
    %1524 = vmatpush2.msra.mxu0 0.0
    %1525 = vmatprep.subr.mxu0 0.0
    %1526 = vmatpush2.msra.mxu0 0.0
    %1527 = vmatprep.subr.mxu0 0.0
    %1528 = vmatpush2.msra.mxu0 0.0
    %1529 = vmatprep.subr.mxu0 0.0
    %1530 = vmatpush2.msra.mxu0 0.0
    %1531 = vmatprep.mubr.f32.mxu0 0.0
    %1532 = vmatmul.mubr.f32.gmra.mxu0 %v1463
    %v1533 = vpop.f32.mrf.mxu0
    %v1534 = vadd.f32 0.0, %v1533
    %v1535 = vpop.f32.mrf.mxu0
    %1536 = vmatprep.mubr.f32.mxu0 0.0
    %1537 = vmatmul.mubr.f32.gmra.mxu0 %v1465
    %v1538 = vpop.f32.mrf.mxu0
    %v1539 = vadd.f32 0.0, %v1538
    %v1540 = vpop.f32.mrf.mxu0
    %1541 = vdwg.mxu0
    %v1542 = vadd.f32 %v1461, %v1534
    %v1543 = vadd.f32 %v1462, %v1539
    %v1544 = vxor.u32 %v1542, 2147483648
    %v1545 = vxor.u32 %v1543, 2147483648
    %v1546 = vmul.f32 %v1544, 1.442695
    %v1547 = vpow.pop %v1546
    %v1548 = vmul.f32 %v1545, 1.442695
    %v1549 = vpow.pop %v1548
    %v1550 = vadd.f32 %v1547, 1.0
    %v1551 = vadd.f32 %v1549, 1.0
    %v1552 = vrcp.pop %v1550
    %v1553 = vmul.f32 1.0, %v1552
    %v1554 = vrcp.pop %v1551
    %v1555 = vmul.f32 1.0, %v1554
    %v1556 = vadd.f32 %v1534, %v675
    %v1557 = vadd.f32 %v1539, %v675
    %1560 = vrot.lane.b32.xlu0 %v1556, 64
    %v1561 = vpop.permute.xlu0 %1560
    %1562 = vrot.lane.b32.xlu0 %v1557, 64
    %v1563 = vpop.permute.xlu0 %1562
    %v1566 = vmul.f32 %v1553, %v1561
    %v1567 = vmul.f32 %v1555, %v1563
    %1570 = vrot.lane.b32.xlu0 %v1566, 64
    %v1571 = vpop.permute.xlu0 %1570
    %1572 = vrot.lane.b32.xlu0 %v1567, 64
    %v1573 = vpop.permute.xlu0 %1572
    %v1576 = vadd.f32 %v1461, %v1571
    %v1577 = vadd.f32 %v1462, %v1573
    %v1578 = vtanh.pop %v1576
    %v1579 = vtanh.pop %v1577
    %v1580 = vsub.f32 1.0, %v1553
    %v1581 = vsub.f32 1.0, %v1555
    %1584 = vrot.lane.b32.xlu0 %v1578, 96
    %v1585 = vpop.permute.xlu0 %1584
    %1586 = vrot.lane.b32.xlu0 %v1579, 96
    %v1587 = vpop.permute.xlu0 %1586
    %v1590 = vmul.f32 %v1580, %v1585
    %v1591 = vmul.f32 %v1581, %v1587
    %v1592 = vmul.f32 %v1553, %v1302
    %v1593 = vmul.f32 %v1555, %v1303
    %v1594 = vadd.f32 %v1590, %v1592
    %v1595 = vadd.f32 %v1591, %v1593
    %1598 = vrot.lane.b32.xlu0 %v1594, 96
    %v1599 = vpop.permute.xlu0 %1598
    %1600 = vrot.lane.b32.xlu0 %v1595, 96
    %v1601 = vpop.permute.xlu0 %1600
    %1604 = vst.msk [vmem:[%s1457] sm:$0xff] %vm524, %v1599
    %1605 = vst.msk [vmem:[%s1457 + $0x8] sm:$0xff] %vm524, %v1601
    %s1606 = scalar_lea.vmem [#allocation2], 176
    %v1607 = vld [vmem:[%s1606] sm:$0xff]
    %v1608 = vld [vmem:[%s1606 + $0x8] sm:$0xff]
    %1611 = vrot.lane.b32.xlu0 %v1455, 96
    %v1612 = vpop.permute.xlu0 %1611
    %1613 = vrot.lane.b32.xlu0 %v1456, 96
    %v1614 = vpop.permute.xlu0 %1613
    %v1615 = vsel %vm524, %v1612, 0
    %v1617 = vsel %vm524, %v1614, 0
    %1619 = vmatprep.subr.mxu0 0.0
    %1620 = vmatpush1.msra.mxu0 0.0
    %1621 = vmatprep.subr.mxu0 0.0
    %1622 = vmatpush1.msra.mxu0 0.0
    %1623 = vmatprep.subr.mxu0 0.0
    %1624 = vmatpush1.msra.mxu0 0.0
    %1625 = vmatprep.subr.mxu0 0.0
    %1626 = vmatpush1.msra.mxu0 0.0
    %1627 = vmatprep.subr.mxu0 0.0
    %1628 = vmatpush1.msra.mxu0 0.0
    %1629 = vmatprep.subr.mxu0 0.0
    %1630 = vmatpush1.msra.mxu0 0.0
    %1631 = vmatprep.subr.mxu0 0.0
    %1632 = vmatpush1.msra.mxu0 0.0
    %1633 = vmatprep.subr.mxu0 0.0
    %1634 = vmatpush1.msra.mxu0 0.0
    %1635 = vmatprep.subr.mxu0 0.0
    %1636 = vmatpush1.msra.mxu0 0.0
    %1637 = vmatprep.subr.mxu0 0.0
    %1638 = vmatpush1.msra.mxu0 0.0
    %1639 = vmatprep.subr.mxu0 0.0
    %1640 = vmatpush1.msra.mxu0 0.0
    %1641 = vmatprep.subr.mxu0 0.0
    %1642 = vmatpush1.msra.mxu0 0.0
    %1643 = vmatprep.subr.mxu0 0.0
    %1644 = vmatpush1.msra.mxu0 %v466
    %1645 = vmatprep.subr.mxu0 0.0
    %1646 = vmatpush1.msra.mxu0 %v465
    %1647 = vmatprep.subr.mxu0 0.0
    %1648 = vmatpush1.msra.mxu0 %v464
    %1649 = vmatprep.subr.mxu0 0.0
    %1650 = vmatpush1.msra.mxu0 %v463
    %1651 = vmatprep.subr.mxu0 0.0
    %1652 = vmatpush2.msra.mxu0 0.0
    %1653 = vmatprep.subr.mxu0 0.0
    %1654 = vmatpush2.msra.mxu0 0.0
    %1655 = vmatprep.subr.mxu0 0.0
    %1656 = vmatpush2.msra.mxu0 0.0
    %1657 = vmatprep.subr.mxu0 0.0
    %1658 = vmatpush2.msra.mxu0 0.0
    %1659 = vmatprep.subr.mxu0 0.0
    %1660 = vmatpush2.msra.mxu0 0.0
    %1661 = vmatprep.subr.mxu0 0.0
    %1662 = vmatpush2.msra.mxu0 0.0
    %1663 = vmatprep.subr.mxu0 0.0
    %1664 = vmatpush2.msra.mxu0 0.0
    %1665 = vmatprep.subr.mxu0 0.0
    %1666 = vmatpush2.msra.mxu0 0.0
    %1667 = vmatprep.subr.mxu0 0.0
    %1668 = vmatpush2.msra.mxu0 0.0
    %1669 = vmatprep.subr.mxu0 0.0
    %1670 = vmatpush2.msra.mxu0 0.0
    %1671 = vmatprep.subr.mxu0 0.0
    %1672 = vmatpush2.msra.mxu0 0.0
    %1673 = vmatprep.subr.mxu0 0.0
    %1674 = vmatpush2.msra.mxu0 0.0
    %1675 = vmatprep.subr.mxu0 0.0
    %1676 = vmatpush2.msra.mxu0 0.0
    %1677 = vmatprep.subr.mxu0 0.0
    %1678 = vmatpush2.msra.mxu0 0.0
    %1679 = vmatprep.subr.mxu0 0.0
    %1680 = vmatpush2.msra.mxu0 0.0
    %1681 = vmatprep.subr.mxu0 0.0
    %1682 = vmatpush2.msra.mxu0 0.0
    %1683 = vmatprep.mubr.f32.mxu0 0.0
    %1684 = vmatmul.mubr.f32.gmra.mxu0 %v1615
    %v1685 = vpop.f32.mrf.mxu0
    %v1686 = vadd.f32 0.0, %v1685
    %v1687 = vpop.f32.mrf.mxu0
    %1688 = vmatprep.mubr.f32.mxu0 0.0
    %1689 = vmatmul.mubr.f32.gmra.mxu0 %v1617
    %v1690 = vpop.f32.mrf.mxu0
    %v1691 = vadd.f32 0.0, %v1690
    %v1692 = vpop.f32.mrf.mxu0
    %1693 = vdwg.mxu0
    %v1694 = vadd.f32 %v1607, %v1686
    %v1695 = vadd.f32 %v1608, %v1691
    %v1696 = vxor.u32 %v1694, 2147483648
    %v1697 = vxor.u32 %v1695, 2147483648
    %v1698 = vmul.f32 %v1696, 1.442695
    %v1699 = vpow.pop %v1698
    %v1700 = vmul.f32 %v1697, 1.442695
    %v1701 = vpow.pop %v1700
    %v1702 = vadd.f32 %v1699, 1.0
    %v1703 = vadd.f32 %v1701, 1.0
    %v1704 = vrcp.pop %v1702
    %v1705 = vmul.f32 1.0, %v1704
    %v1706 = vrcp.pop %v1703
    %v1707 = vmul.f32 1.0, %v1706
    %v1708 = vadd.f32 %v1686, %v831
    %v1709 = vadd.f32 %v1691, %v831
    %1712 = vrot.lane.b32.xlu0 %v1708, 64
    %v1713 = vpop.permute.xlu0 %1712
    %1714 = vrot.lane.b32.xlu0 %v1709, 64
    %v1715 = vpop.permute.xlu0 %1714
    %v1718 = vmul.f32 %v1705, %v1713
    %v1719 = vmul.f32 %v1707, %v1715
    %1722 = vrot.lane.b32.xlu0 %v1718, 64
    %v1723 = vpop.permute.xlu0 %1722
    %1724 = vrot.lane.b32.xlu0 %v1719, 64
    %v1725 = vpop.permute.xlu0 %1724
    %v1728 = vadd.f32 %v1607, %v1723
    %v1729 = vadd.f32 %v1608, %v1725
    %v1730 = vtanh.pop %v1728
    %v1731 = vtanh.pop %v1729
    %v1732 = vsub.f32 1.0, %v1705
    %v1733 = vsub.f32 1.0, %v1707
    %1736 = vrot.lane.b32.xlu0 %v1730, 96
    %v1737 = vpop.permute.xlu0 %1736
    %1738 = vrot.lane.b32.xlu0 %v1731, 96
    %v1739 = vpop.permute.xlu0 %1738
    %v1742 = vmul.f32 %v1732, %v1737
    %v1743 = vmul.f32 %v1733, %v1739
    %v1744 = vmul.f32 %v1705, %v1455
    %v1745 = vmul.f32 %v1707, %v1456
    %v1746 = vadd.f32 %v1742, %v1744
    %v1747 = vadd.f32 %v1743, %v1745
    %1748 = vst.msk [vmem:[%s1312] sm:$0xff] %vm575, %v1746
    %1749 = vst.msk [vmem:[%s1312 + $0x8] sm:$0xff] %vm575, %v1747
    %s1750 = scalar_lea.vmem [#allocation2], 80
    %v1751 = vld [vmem:[%s1750] sm:$0xff]
    %v1752 = vld [vmem:[%s1750 + $0x8] sm:$0xff]
    %v1753 = vsel %vm524, %v1599, 0
    %v1755 = vsel %vm524, %v1601, 0
    %1757 = vmatprep.subr.mxu0 0.0
    %1758 = vmatpush1.msra.mxu0 0.0
    %1759 = vmatprep.subr.mxu0 0.0
    %1760 = vmatpush1.msra.mxu0 0.0
    %1761 = vmatprep.subr.mxu0 0.0
    %1762 = vmatpush1.msra.mxu0 0.0
    %1763 = vmatprep.subr.mxu0 0.0
    %1764 = vmatpush1.msra.mxu0 0.0
    %1765 = vmatprep.subr.mxu0 0.0
    %1766 = vmatpush1.msra.mxu0 0.0
    %1767 = vmatprep.subr.mxu0 0.0
    %1768 = vmatpush1.msra.mxu0 0.0
    %1769 = vmatprep.subr.mxu0 0.0
    %1770 = vmatpush1.msra.mxu0 0.0
    %1771 = vmatprep.subr.mxu0 0.0
    %1772 = vmatpush1.msra.mxu0 0.0
    %1773 = vmatprep.subr.mxu0 0.0
    %1774 = vmatpush1.msra.mxu0 0.0
    %1775 = vmatprep.subr.mxu0 0.0
    %1776 = vmatpush1.msra.mxu0 0.0
    %1777 = vmatprep.subr.mxu0 0.0
    %1778 = vmatpush1.msra.mxu0 0.0
    %1779 = vmatprep.subr.mxu0 0.0
    %1780 = vmatpush1.msra.mxu0 0.0
    %1781 = vmatprep.subr.mxu0 0.0
    %1782 = vmatpush1.msra.mxu0 %v461
    %1783 = vmatprep.subr.mxu0 0.0
    %1784 = vmatpush1.msra.mxu0 %v460
    %1785 = vmatprep.subr.mxu0 0.0
    %1786 = vmatpush1.msra.mxu0 %v459
    %1787 = vmatprep.subr.mxu0 0.0
    %1788 = vmatpush1.msra.mxu0 %v458
    %1789 = vmatprep.subr.mxu0 0.0
    %1790 = vmatpush2.msra.mxu0 0.0
    %1791 = vmatprep.subr.mxu0 0.0
    %1792 = vmatpush2.msra.mxu0 0.0
    %1793 = vmatprep.subr.mxu0 0.0
    %1794 = vmatpush2.msra.mxu0 0.0
    %1795 = vmatprep.subr.mxu0 0.0
    %1796 = vmatpush2.msra.mxu0 0.0
    %1797 = vmatprep.subr.mxu0 0.0
    %1798 = vmatpush2.msra.mxu0 0.0
    %1799 = vmatprep.subr.mxu0 0.0
    %1800 = vmatpush2.msra.mxu0 0.0
    %1801 = vmatprep.subr.mxu0 0.0
    %1802 = vmatpush2.msra.mxu0 0.0
    %1803 = vmatprep.subr.mxu0 0.0
    %1804 = vmatpush2.msra.mxu0 0.0
    %1805 = vmatprep.subr.mxu0 0.0
    %1806 = vmatpush2.msra.mxu0 0.0
    %1807 = vmatprep.subr.mxu0 0.0
    %1808 = vmatpush2.msra.mxu0 0.0
    %1809 = vmatprep.subr.mxu0 0.0
    %1810 = vmatpush2.msra.mxu0 0.0
    %1811 = vmatprep.subr.mxu0 0.0
    %1812 = vmatpush2.msra.mxu0 0.0
    %1813 = vmatprep.subr.mxu0 0.0
    %1814 = vmatpush2.msra.mxu0 0.0
    %1815 = vmatprep.subr.mxu0 0.0
    %1816 = vmatpush2.msra.mxu0 0.0
    %1817 = vmatprep.subr.mxu0 0.0
    %1818 = vmatpush2.msra.mxu0 0.0
    %1819 = vmatprep.subr.mxu0 0.0
    %1820 = vmatpush2.msra.mxu0 0.0
    %1821 = vmatprep.mubr.f32.mxu0 0.0
    %1822 = vmatmul.mubr.f32.gmra.mxu0 %v1753
    %v1823 = vpop.f32.mrf.mxu0
    %v1824 = vadd.f32 0.0, %v1823
    %v1825 = vpop.f32.mrf.mxu0
    %1826 = vmatprep.mubr.f32.mxu0 0.0
    %1827 = vmatmul.mubr.f32.gmra.mxu0 %v1755
    %v1828 = vpop.f32.mrf.mxu0
    %v1829 = vadd.f32 0.0, %v1828
    %v1830 = vpop.f32.mrf.mxu0
    %1831 = vdwg.mxu0
    %v1832 = vadd.f32 %v1751, %v1824
    %v1833 = vadd.f32 %v1752, %v1829
    %v1834 = vxor.u32 %v1832, 2147483648
    %v1835 = vxor.u32 %v1833, 2147483648
    %v1836 = vmul.f32 %v1834, 1.442695
    %v1837 = vpow.pop %v1836
    %v1838 = vmul.f32 %v1835, 1.442695
    %v1839 = vpow.pop %v1838
    %v1840 = vadd.f32 %v1837, 1.0
    %v1841 = vadd.f32 %v1839, 1.0
    %v1842 = vrcp.pop %v1840
    %v1843 = vmul.f32 1.0, %v1842
    %v1844 = vrcp.pop %v1841
    %v1845 = vmul.f32 1.0, %v1844
    %v1846 = vadd.f32 %v1824, %v675
    %v1847 = vadd.f32 %v1829, %v675
    %1850 = vrot.lane.b32.xlu0 %v1846, 64
    %v1851 = vpop.permute.xlu0 %1850
    %1852 = vrot.lane.b32.xlu0 %v1847, 64
    %v1853 = vpop.permute.xlu0 %1852
    %v1856 = vmul.f32 %v1843, %v1851
    %v1857 = vmul.f32 %v1845, %v1853
    %1860 = vrot.lane.b32.xlu0 %v1856, 64
    %v1861 = vpop.permute.xlu0 %1860
    %1862 = vrot.lane.b32.xlu0 %v1857, 64
    %v1863 = vpop.permute.xlu0 %1862
    %v1866 = vadd.f32 %v1751, %v1861
    %v1867 = vadd.f32 %v1752, %v1863
    %v1868 = vtanh.pop %v1866
    %v1869 = vtanh.pop %v1867
    %v1870 = vsub.f32 1.0, %v1843
    %v1871 = vsub.f32 1.0, %v1845
    %1874 = vrot.lane.b32.xlu0 %v1868, 96
    %v1875 = vpop.permute.xlu0 %1874
    %1876 = vrot.lane.b32.xlu0 %v1869, 96
    %v1877 = vpop.permute.xlu0 %1876
    %v1880 = vmul.f32 %v1870, %v1875
    %v1881 = vmul.f32 %v1871, %v1877
    %v1882 = vmul.f32 %v1843, %v1594
    %v1883 = vmul.f32 %v1845, %v1595
    %v1884 = vadd.f32 %v1880, %v1882
    %v1885 = vadd.f32 %v1881, %v1883
    %1888 = vrot.lane.b32.xlu0 %v1884, 96
    %v1889 = vpop.permute.xlu0 %1888
    %1890 = vrot.lane.b32.xlu0 %v1885, 96
    %v1891 = vpop.permute.xlu0 %1890
    %1894 = vst.msk [vmem:[%s1165] sm:$0xff] %vm524, %v1889
    %1895 = vst.msk [vmem:[%s1165 + $0x8] sm:$0xff] %vm524, %v1891
    %s1896 = scalar_lea.vmem [#allocation2], 160
    %v1897 = vld [vmem:[%s1896] sm:$0xff]
    %v1898 = vld [vmem:[%s1896 + $0x8] sm:$0xff]
    %1901 = vrot.lane.b32.xlu0 %v1746, 96
    %v1902 = vpop.permute.xlu0 %1901
    %1903 = vrot.lane.b32.xlu0 %v1747, 96
    %v1904 = vpop.permute.xlu0 %1903
    %v1905 = vsel %vm524, %v1902, 0
    %v1907 = vsel %vm524, %v1904, 0
    %1909 = vmatprep.subr.mxu0 0.0
    %1910 = vmatpush1.msra.mxu0 0.0
    %1911 = vmatprep.subr.mxu0 0.0
    %1912 = vmatpush1.msra.mxu0 0.0
    %1913 = vmatprep.subr.mxu0 0.0
    %1914 = vmatpush1.msra.mxu0 0.0
    %1915 = vmatprep.subr.mxu0 0.0
    %1916 = vmatpush1.msra.mxu0 0.0
    %1917 = vmatprep.subr.mxu0 0.0
    %1918 = vmatpush1.msra.mxu0 0.0
    %1919 = vmatprep.subr.mxu0 0.0
    %1920 = vmatpush1.msra.mxu0 0.0
    %1921 = vmatprep.subr.mxu0 0.0
    %1922 = vmatpush1.msra.mxu0 0.0
    %1923 = vmatprep.subr.mxu0 0.0
    %1924 = vmatpush1.msra.mxu0 0.0
    %1925 = vmatprep.subr.mxu0 0.0
    %1926 = vmatpush1.msra.mxu0 0.0
    %1927 = vmatprep.subr.mxu0 0.0
    %1928 = vmatpush1.msra.mxu0 0.0
    %1929 = vmatprep.subr.mxu0 0.0
    %1930 = vmatpush1.msra.mxu0 0.0
    %1931 = vmatprep.subr.mxu0 0.0
    %1932 = vmatpush1.msra.mxu0 0.0
    %1933 = vmatprep.subr.mxu0 0.0
    %1934 = vmatpush1.msra.mxu0 %v466
    %1935 = vmatprep.subr.mxu0 0.0
    %1936 = vmatpush1.msra.mxu0 %v465
    %1937 = vmatprep.subr.mxu0 0.0
    %1938 = vmatpush1.msra.mxu0 %v464
    %1939 = vmatprep.subr.mxu0 0.0
    %1940 = vmatpush1.msra.mxu0 %v463
    %1941 = vmatprep.subr.mxu0 0.0
    %1942 = vmatpush2.msra.mxu0 0.0
    %1943 = vmatprep.subr.mxu0 0.0
    %1944 = vmatpush2.msra.mxu0 0.0
    %1945 = vmatprep.subr.mxu0 0.0
    %1946 = vmatpush2.msra.mxu0 0.0
    %1947 = vmatprep.subr.mxu0 0.0
    %1948 = vmatpush2.msra.mxu0 0.0
    %1949 = vmatprep.subr.mxu0 0.0
    %1950 = vmatpush2.msra.mxu0 0.0
    %1951 = vmatprep.subr.mxu0 0.0
    %1952 = vmatpush2.msra.mxu0 0.0
    %1953 = vmatprep.subr.mxu0 0.0
    %1954 = vmatpush2.msra.mxu0 0.0
    %1955 = vmatprep.subr.mxu0 0.0
    %1956 = vmatpush2.msra.mxu0 0.0
    %1957 = vmatprep.subr.mxu0 0.0
    %1958 = vmatpush2.msra.mxu0 0.0
    %1959 = vmatprep.subr.mxu0 0.0
    %1960 = vmatpush2.msra.mxu0 0.0
    %1961 = vmatprep.subr.mxu0 0.0
    %1962 = vmatpush2.msra.mxu0 0.0
    %1963 = vmatprep.subr.mxu0 0.0
    %1964 = vmatpush2.msra.mxu0 0.0
    %1965 = vmatprep.subr.mxu0 0.0
    %1966 = vmatpush2.msra.mxu0 0.0
    %1967 = vmatprep.subr.mxu0 0.0
    %1968 = vmatpush2.msra.mxu0 0.0
    %1969 = vmatprep.subr.mxu0 0.0
    %1970 = vmatpush2.msra.mxu0 0.0
    %1971 = vmatprep.subr.mxu0 0.0
    %1972 = vmatpush2.msra.mxu0 0.0
    %1973 = vmatprep.mubr.f32.mxu0 0.0
    %1974 = vmatmul.mubr.f32.gmra.mxu0 %v1905
    %v1975 = vpop.f32.mrf.mxu0
    %v1976 = vadd.f32 0.0, %v1975
    %v1977 = vpop.f32.mrf.mxu0
    %1978 = vmatprep.mubr.f32.mxu0 0.0
    %1979 = vmatmul.mubr.f32.gmra.mxu0 %v1907
    %v1980 = vpop.f32.mrf.mxu0
    %v1981 = vadd.f32 0.0, %v1980
    %v1982 = vpop.f32.mrf.mxu0
    %1983 = vdwg.mxu0
    %v1984 = vadd.f32 %v1897, %v1976
    %v1985 = vadd.f32 %v1898, %v1981
    %v1986 = vxor.u32 %v1984, 2147483648
    %v1987 = vxor.u32 %v1985, 2147483648
    %v1988 = vmul.f32 %v1986, 1.442695
    %v1989 = vpow.pop %v1988
    %v1990 = vmul.f32 %v1987, 1.442695
    %v1991 = vpow.pop %v1990
    %v1992 = vadd.f32 %v1989, 1.0
    %v1993 = vadd.f32 %v1991, 1.0
    %v1994 = vrcp.pop %v1992
    %v1995 = vmul.f32 1.0, %v1994
    %v1996 = vrcp.pop %v1993
    %v1997 = vmul.f32 1.0, %v1996
    %v1998 = vadd.f32 %v1976, %v831
    %v1999 = vadd.f32 %v1981, %v831
    %2002 = vrot.lane.b32.xlu0 %v1998, 64
    %v2003 = vpop.permute.xlu0 %2002
    %2004 = vrot.lane.b32.xlu0 %v1999, 64
    %v2005 = vpop.permute.xlu0 %2004
    %v2008 = vmul.f32 %v1995, %v2003
    %v2009 = vmul.f32 %v1997, %v2005
    %2012 = vrot.lane.b32.xlu0 %v2008, 64
    %v2013 = vpop.permute.xlu0 %2012
    %2014 = vrot.lane.b32.xlu0 %v2009, 64
    %v2015 = vpop.permute.xlu0 %2014
    %v2018 = vadd.f32 %v1897, %v2013
    %v2019 = vadd.f32 %v1898, %v2015
    %v2020 = vtanh.pop %v2018
    %v2021 = vtanh.pop %v2019
    %v2022 = vsub.f32 1.0, %v1995
    %v2023 = vsub.f32 1.0, %v1997
    %2026 = vrot.lane.b32.xlu0 %v2020, 96
    %v2027 = vpop.permute.xlu0 %2026
    %2028 = vrot.lane.b32.xlu0 %v2021, 96
    %v2029 = vpop.permute.xlu0 %2028
    %v2032 = vmul.f32 %v2022, %v2027
    %v2033 = vmul.f32 %v2023, %v2029
    %v2034 = vmul.f32 %v1995, %v1746
    %v2035 = vmul.f32 %v1997, %v1747
    %v2036 = vadd.f32 %v2032, %v2034
    %v2037 = vadd.f32 %v2033, %v2035
    %2038 = vst.msk [vmem:[%s1020] sm:$0xff] %vm575, %v2036
    %2039 = vst.msk [vmem:[%s1020 + $0x8] sm:$0xff] %vm575, %v2037
    %s2040 = scalar_lea.vmem [#allocation2], 96
    %v2041 = vld [vmem:[%s2040] sm:$0xff]
    %v2042 = vld [vmem:[%s2040 + $0x8] sm:$0xff]
    %v2043 = vsel %vm524, %v1889, 0
    %v2045 = vsel %vm524, %v1891, 0
    %2047 = vmatprep.subr.mxu0 0.0
    %2048 = vmatpush1.msra.mxu0 0.0
    %2049 = vmatprep.subr.mxu0 0.0
    %2050 = vmatpush1.msra.mxu0 0.0
    %2051 = vmatprep.subr.mxu0 0.0
    %2052 = vmatpush1.msra.mxu0 0.0
    %2053 = vmatprep.subr.mxu0 0.0
    %2054 = vmatpush1.msra.mxu0 0.0
    %2055 = vmatprep.subr.mxu0 0.0
    %2056 = vmatpush1.msra.mxu0 0.0
    %2057 = vmatprep.subr.mxu0 0.0
    %2058 = vmatpush1.msra.mxu0 0.0
    %2059 = vmatprep.subr.mxu0 0.0
    %2060 = vmatpush1.msra.mxu0 0.0
    %2061 = vmatprep.subr.mxu0 0.0
    %2062 = vmatpush1.msra.mxu0 0.0
    %2063 = vmatprep.subr.mxu0 0.0
    %2064 = vmatpush1.msra.mxu0 0.0
    %2065 = vmatprep.subr.mxu0 0.0
    %2066 = vmatpush1.msra.mxu0 0.0
    %2067 = vmatprep.subr.mxu0 0.0
    %2068 = vmatpush1.msra.mxu0 0.0
    %2069 = vmatprep.subr.mxu0 0.0
    %2070 = vmatpush1.msra.mxu0 0.0
    %2071 = vmatprep.subr.mxu0 0.0
    %2072 = vmatpush1.msra.mxu0 %v461
    %2073 = vmatprep.subr.mxu0 0.0
    %2074 = vmatpush1.msra.mxu0 %v460
    %2075 = vmatprep.subr.mxu0 0.0
    %2076 = vmatpush1.msra.mxu0 %v459
    %2077 = vmatprep.subr.mxu0 0.0
    %2078 = vmatpush1.msra.mxu0 %v458
    %2079 = vmatprep.subr.mxu0 0.0
    %2080 = vmatpush2.msra.mxu0 0.0
    %2081 = vmatprep.subr.mxu0 0.0
    %2082 = vmatpush2.msra.mxu0 0.0
    %2083 = vmatprep.subr.mxu0 0.0
    %2084 = vmatpush2.msra.mxu0 0.0
    %2085 = vmatprep.subr.mxu0 0.0
    %2086 = vmatpush2.msra.mxu0 0.0
    %2087 = vmatprep.subr.mxu0 0.0
    %2088 = vmatpush2.msra.mxu0 0.0
    %2089 = vmatprep.subr.mxu0 0.0
    %2090 = vmatpush2.msra.mxu0 0.0
    %2091 = vmatprep.subr.mxu0 0.0
    %2092 = vmatpush2.msra.mxu0 0.0
    %2093 = vmatprep.subr.mxu0 0.0
    %2094 = vmatpush2.msra.mxu0 0.0
    %2095 = vmatprep.subr.mxu0 0.0
    %2096 = vmatpush2.msra.mxu0 0.0
    %2097 = vmatprep.subr.mxu0 0.0
    %2098 = vmatpush2.msra.mxu0 0.0
    %2099 = vmatprep.subr.mxu0 0.0
    %2100 = vmatpush2.msra.mxu0 0.0
    %2101 = vmatprep.subr.mxu0 0.0
    %2102 = vmatpush2.msra.mxu0 0.0
    %2103 = vmatprep.subr.mxu0 0.0
    %2104 = vmatpush2.msra.mxu0 0.0
    %2105 = vmatprep.subr.mxu0 0.0
    %2106 = vmatpush2.msra.mxu0 0.0
    %2107 = vmatprep.subr.mxu0 0.0
    %2108 = vmatpush2.msra.mxu0 0.0
    %2109 = vmatprep.subr.mxu0 0.0
    %2110 = vmatpush2.msra.mxu0 0.0
    %2111 = vmatprep.mubr.f32.mxu0 0.0
    %2112 = vmatmul.mubr.f32.gmra.mxu0 %v2043
    %v2113 = vpop.f32.mrf.mxu0
    %v2114 = vadd.f32 0.0, %v2113
    %v2115 = vpop.f32.mrf.mxu0
    %2116 = vmatprep.mubr.f32.mxu0 0.0
    %2117 = vmatmul.mubr.f32.gmra.mxu0 %v2045
    %v2118 = vpop.f32.mrf.mxu0
    %v2119 = vadd.f32 0.0, %v2118
    %v2120 = vpop.f32.mrf.mxu0
    %2121 = vdwg.mxu0
    %v2122 = vadd.f32 %v2041, %v2114
    %v2123 = vadd.f32 %v2042, %v2119
    %v2124 = vxor.u32 %v2122, 2147483648
    %v2125 = vxor.u32 %v2123, 2147483648
    %v2126 = vmul.f32 %v2124, 1.442695
    %v2127 = vpow.pop %v2126
    %v2128 = vmul.f32 %v2125, 1.442695
    %v2129 = vpow.pop %v2128
    %v2130 = vadd.f32 %v2127, 1.0
    %v2131 = vadd.f32 %v2129, 1.0
    %v2132 = vrcp.pop %v2130
    %v2133 = vmul.f32 1.0, %v2132
    %v2134 = vrcp.pop %v2131
    %v2135 = vmul.f32 1.0, %v2134
    %v2136 = vadd.f32 %v2114, %v675
    %v2137 = vadd.f32 %v2119, %v675
    %2140 = vrot.lane.b32.xlu0 %v2136, 64
    %v2141 = vpop.permute.xlu0 %2140
    %2142 = vrot.lane.b32.xlu0 %v2137, 64
    %v2143 = vpop.permute.xlu0 %2142
    %v2146 = vmul.f32 %v2133, %v2141
    %v2147 = vmul.f32 %v2135, %v2143
    %2150 = vrot.lane.b32.xlu0 %v2146, 64
    %v2151 = vpop.permute.xlu0 %2150
    %2152 = vrot.lane.b32.xlu0 %v2147, 64
    %v2153 = vpop.permute.xlu0 %2152
    %v2156 = vadd.f32 %v2041, %v2151
    %v2157 = vadd.f32 %v2042, %v2153
    %v2158 = vtanh.pop %v2156
    %v2159 = vtanh.pop %v2157
    %v2160 = vsub.f32 1.0, %v2133
    %v2161 = vsub.f32 1.0, %v2135
    %2164 = vrot.lane.b32.xlu0 %v2158, 96
    %v2165 = vpop.permute.xlu0 %2164
    %2166 = vrot.lane.b32.xlu0 %v2159, 96
    %v2167 = vpop.permute.xlu0 %2166
    %v2170 = vmul.f32 %v2160, %v2165
    %v2171 = vmul.f32 %v2161, %v2167
    %v2172 = vmul.f32 %v2133, %v1884
    %v2173 = vmul.f32 %v2135, %v1885
    %v2174 = vadd.f32 %v2170, %v2172
    %v2175 = vadd.f32 %v2171, %v2173
    %2178 = vrot.lane.b32.xlu0 %v2174, 96
    %v2179 = vpop.permute.xlu0 %2178
    %2180 = vrot.lane.b32.xlu0 %v2175, 96
    %v2181 = vpop.permute.xlu0 %2180
    %2184 = vst.msk [vmem:[%s873] sm:$0xff] %vm524, %v2179
    %2185 = vst.msk [vmem:[%s873 + $0x8] sm:$0xff] %vm524, %v2181
    %s2186 = scalar_lea.vmem [#allocation2], 144
    %v2187 = vld [vmem:[%s2186] sm:$0xff]
    %v2188 = vld [vmem:[%s2186 + $0x8] sm:$0xff]
    %2191 = vrot.lane.b32.xlu0 %v2036, 96
    %v2192 = vpop.permute.xlu0 %2191
    %2193 = vrot.lane.b32.xlu0 %v2037, 96
    %v2194 = vpop.permute.xlu0 %2193
    %v2195 = vsel %vm524, %v2192, 0
    %v2197 = vsel %vm524, %v2194, 0
    %2199 = vmatprep.subr.mxu0 0.0
    %2200 = vmatpush1.msra.mxu0 0.0
    %2201 = vmatprep.subr.mxu0 0.0
    %2202 = vmatpush1.msra.mxu0 0.0
    %2203 = vmatprep.subr.mxu0 0.0
    %2204 = vmatpush1.msra.mxu0 0.0
    %2205 = vmatprep.subr.mxu0 0.0
    %2206 = vmatpush1.msra.mxu0 0.0
    %2207 = vmatprep.subr.mxu0 0.0
    %2208 = vmatpush1.msra.mxu0 0.0
    %2209 = vmatprep.subr.mxu0 0.0
    %2210 = vmatpush1.msra.mxu0 0.0
    %2211 = vmatprep.subr.mxu0 0.0
    %2212 = vmatpush1.msra.mxu0 0.0
    %2213 = vmatprep.subr.mxu0 0.0
    %2214 = vmatpush1.msra.mxu0 0.0
    %2215 = vmatprep.subr.mxu0 0.0
    %2216 = vmatpush1.msra.mxu0 0.0
    %2217 = vmatprep.subr.mxu0 0.0
    %2218 = vmatpush1.msra.mxu0 0.0
    %2219 = vmatprep.subr.mxu0 0.0
    %2220 = vmatpush1.msra.mxu0 0.0
    %2221 = vmatprep.subr.mxu0 0.0
    %2222 = vmatpush1.msra.mxu0 0.0
    %2223 = vmatprep.subr.mxu0 0.0
    %2224 = vmatpush1.msra.mxu0 %v466
    %2225 = vmatprep.subr.mxu0 0.0
    %2226 = vmatpush1.msra.mxu0 %v465
    %2227 = vmatprep.subr.mxu0 0.0
    %2228 = vmatpush1.msra.mxu0 %v464
    %2229 = vmatprep.subr.mxu0 0.0
    %2230 = vmatpush1.msra.mxu0 %v463
    %2231 = vmatprep.subr.mxu0 0.0
    %2232 = vmatpush2.msra.mxu0 0.0
    %2233 = vmatprep.subr.mxu0 0.0
    %2234 = vmatpush2.msra.mxu0 0.0
    %2235 = vmatprep.subr.mxu0 0.0
    %2236 = vmatpush2.msra.mxu0 0.0
    %2237 = vmatprep.subr.mxu0 0.0
    %2238 = vmatpush2.msra.mxu0 0.0
    %2239 = vmatprep.subr.mxu0 0.0
    %2240 = vmatpush2.msra.mxu0 0.0
    %2241 = vmatprep.subr.mxu0 0.0
    %2242 = vmatpush2.msra.mxu0 0.0
    %2243 = vmatprep.subr.mxu0 0.0
    %2244 = vmatpush2.msra.mxu0 0.0
    %2245 = vmatprep.subr.mxu0 0.0
    %2246 = vmatpush2.msra.mxu0 0.0
    %2247 = vmatprep.subr.mxu0 0.0
    %2248 = vmatpush2.msra.mxu0 0.0
    %2249 = vmatprep.subr.mxu0 0.0
    %2250 = vmatpush2.msra.mxu0 0.0
    %2251 = vmatprep.subr.mxu0 0.0
    %2252 = vmatpush2.msra.mxu0 0.0
    %2253 = vmatprep.subr.mxu0 0.0
    %2254 = vmatpush2.msra.mxu0 0.0
    %2255 = vmatprep.subr.mxu0 0.0
    %2256 = vmatpush2.msra.mxu0 0.0
    %2257 = vmatprep.subr.mxu0 0.0
    %2258 = vmatpush2.msra.mxu0 0.0
    %2259 = vmatprep.subr.mxu0 0.0
    %2260 = vmatpush2.msra.mxu0 0.0
    %2261 = vmatprep.subr.mxu0 0.0
    %2262 = vmatpush2.msra.mxu0 0.0
    %2263 = vmatprep.mubr.f32.mxu0 0.0
    %2264 = vmatmul.mubr.f32.gmra.mxu0 %v2195
    %v2265 = vpop.f32.mrf.mxu0
    %v2266 = vadd.f32 0.0, %v2265
    %v2267 = vpop.f32.mrf.mxu0
    %2268 = vmatprep.mubr.f32.mxu0 0.0
    %2269 = vmatmul.mubr.f32.gmra.mxu0 %v2197
    %v2270 = vpop.f32.mrf.mxu0
    %v2271 = vadd.f32 0.0, %v2270
    %v2272 = vpop.f32.mrf.mxu0
    %2273 = vdwg.mxu0
    %v2274 = vadd.f32 %v2187, %v2266
    %v2275 = vadd.f32 %v2188, %v2271
    %v2276 = vxor.u32 %v2274, 2147483648
    %v2277 = vxor.u32 %v2275, 2147483648
    %v2278 = vmul.f32 %v2276, 1.442695
    %v2279 = vpow.pop %v2278
    %v2280 = vmul.f32 %v2277, 1.442695
    %v2281 = vpow.pop %v2280
    %v2282 = vadd.f32 %v2279, 1.0
    %v2283 = vadd.f32 %v2281, 1.0
    %v2284 = vrcp.pop %v2282
    %v2285 = vmul.f32 1.0, %v2284
    %v2286 = vrcp.pop %v2283
    %v2287 = vmul.f32 1.0, %v2286
    %v2288 = vadd.f32 %v2266, %v831
    %v2289 = vadd.f32 %v2271, %v831
    %2292 = vrot.lane.b32.xlu0 %v2288, 64
    %v2293 = vpop.permute.xlu0 %2292
    %2294 = vrot.lane.b32.xlu0 %v2289, 64
    %v2295 = vpop.permute.xlu0 %2294
    %v2298 = vmul.f32 %v2285, %v2293
    %v2299 = vmul.f32 %v2287, %v2295
    %2302 = vrot.lane.b32.xlu0 %v2298, 64
    %v2303 = vpop.permute.xlu0 %2302
    %2304 = vrot.lane.b32.xlu0 %v2299, 64
    %v2305 = vpop.permute.xlu0 %2304
    %v2308 = vadd.f32 %v2187, %v2303
    %v2309 = vadd.f32 %v2188, %v2305
    %v2310 = vtanh.pop %v2308
    %v2311 = vtanh.pop %v2309
    %v2312 = vsub.f32 1.0, %v2285
    %v2313 = vsub.f32 1.0, %v2287
    %2316 = vrot.lane.b32.xlu0 %v2310, 96
    %v2317 = vpop.permute.xlu0 %2316
    %2318 = vrot.lane.b32.xlu0 %v2311, 96
    %v2319 = vpop.permute.xlu0 %2318
    %v2322 = vmul.f32 %v2312, %v2317
    %v2323 = vmul.f32 %v2313, %v2319
    %v2324 = vmul.f32 %v2285, %v2036
    %v2325 = vmul.f32 %v2287, %v2037
    %v2326 = vadd.f32 %v2322, %v2324
    %v2327 = vadd.f32 %v2323, %v2325
    %2328 = vst.msk [vmem:[%s725] sm:$0xff] %vm575, %v2326
    %2329 = vst.msk [vmem:[%s725 + $0x8] sm:$0xff] %vm575, %v2327
    %s2330 = scalar_lea.vmem [#allocation2], 112
    %v2331 = vld [vmem:[%s2330] sm:$0xff]
    %v2332 = vld [vmem:[%s2330 + $0x8] sm:$0xff]
    %v2333 = vsel %vm524, %v2179, 0
    %v2335 = vsel %vm524, %v2181, 0
    %2337 = vmatprep.subr.mxu0 0.0
    %2338 = vmatpush1.msra.mxu0 0.0
    %2339 = vmatprep.subr.mxu0 0.0
    %2340 = vmatpush1.msra.mxu0 0.0
    %2341 = vmatprep.subr.mxu0 0.0
    %2342 = vmatpush1.msra.mxu0 0.0
    %2343 = vmatprep.subr.mxu0 0.0
    %2344 = vmatpush1.msra.mxu0 0.0
    %2345 = vmatprep.subr.mxu0 0.0
    %2346 = vmatpush1.msra.mxu0 0.0
    %2347 = vmatprep.subr.mxu0 0.0
    %2348 = vmatpush1.msra.mxu0 0.0
    %2349 = vmatprep.subr.mxu0 0.0
    %2350 = vmatpush1.msra.mxu0 0.0
    %2351 = vmatprep.subr.mxu0 0.0
    %2352 = vmatpush1.msra.mxu0 0.0
    %2353 = vmatprep.subr.mxu0 0.0
    %2354 = vmatpush1.msra.mxu0 0.0
    %2355 = vmatprep.subr.mxu0 0.0
    %2356 = vmatpush1.msra.mxu0 0.0
    %2357 = vmatprep.subr.mxu0 0.0
    %2358 = vmatpush1.msra.mxu0 0.0
    %2359 = vmatprep.subr.mxu0 0.0
    %2360 = vmatpush1.msra.mxu0 0.0
    %2361 = vmatprep.subr.mxu0 0.0
    %2362 = vmatpush1.msra.mxu0 %v461
    %2363 = vmatprep.subr.mxu0 0.0
    %2364 = vmatpush1.msra.mxu0 %v460
    %2365 = vmatprep.subr.mxu0 0.0
    %2366 = vmatpush1.msra.mxu0 %v459
    %2367 = vmatprep.subr.mxu0 0.0
    %2368 = vmatpush1.msra.mxu0 %v458
    %2369 = vmatprep.subr.mxu0 0.0
    %2370 = vmatpush2.msra.mxu0 0.0
    %2371 = vmatprep.subr.mxu0 0.0
    %2372 = vmatpush2.msra.mxu0 0.0
    %2373 = vmatprep.subr.mxu0 0.0
    %2374 = vmatpush2.msra.mxu0 0.0
    %2375 = vmatprep.subr.mxu0 0.0
    %2376 = vmatpush2.msra.mxu0 0.0
    %2377 = vmatprep.subr.mxu0 0.0
    %2378 = vmatpush2.msra.mxu0 0.0
    %2379 = vmatprep.subr.mxu0 0.0
    %2380 = vmatpush2.msra.mxu0 0.0
    %2381 = vmatprep.subr.mxu0 0.0
    %2382 = vmatpush2.msra.mxu0 0.0
    %2383 = vmatprep.subr.mxu0 0.0
    %2384 = vmatpush2.msra.mxu0 0.0
    %2385 = vmatprep.subr.mxu0 0.0
    %2386 = vmatpush2.msra.mxu0 0.0
    %2387 = vmatprep.subr.mxu0 0.0
    %2388 = vmatpush2.msra.mxu0 0.0
    %2389 = vmatprep.subr.mxu0 0.0
    %2390 = vmatpush2.msra.mxu0 0.0
    %2391 = vmatprep.subr.mxu0 0.0
    %2392 = vmatpush2.msra.mxu0 0.0
    %2393 = vmatprep.subr.mxu0 0.0
    %2394 = vmatpush2.msra.mxu0 0.0
    %2395 = vmatprep.subr.mxu0 0.0
    %2396 = vmatpush2.msra.mxu0 0.0
    %2397 = vmatprep.subr.mxu0 0.0
    %2398 = vmatpush2.msra.mxu0 0.0
    %2399 = vmatprep.subr.mxu0 0.0
    %2400 = vmatpush2.msra.mxu0 0.0
    %2401 = vmatprep.mubr.f32.mxu0 0.0
    %2402 = vmatmul.mubr.f32.gmra.mxu0 %v2333
    %v2403 = vpop.f32.mrf.mxu0
    %v2404 = vadd.f32 0.0, %v2403
    %v2405 = vpop.f32.mrf.mxu0
    %2406 = vmatprep.mubr.f32.mxu0 0.0
    %2407 = vmatmul.mubr.f32.gmra.mxu0 %v2335
    %v2408 = vpop.f32.mrf.mxu0
    %v2409 = vadd.f32 0.0, %v2408
    %v2410 = vpop.f32.mrf.mxu0
    %2411 = vdwg.mxu0
    %v2412 = vadd.f32 %v2331, %v2404
    %v2413 = vadd.f32 %v2332, %v2409
    %v2414 = vxor.u32 %v2412, 2147483648
    %v2415 = vxor.u32 %v2413, 2147483648
    %v2416 = vmul.f32 %v2414, 1.442695
    %v2417 = vpow.pop %v2416
    %v2418 = vmul.f32 %v2415, 1.442695
    %v2419 = vpow.pop %v2418
    %v2420 = vadd.f32 %v2417, 1.0
    %v2421 = vadd.f32 %v2419, 1.0
    %v2422 = vrcp.pop %v2420
    %v2423 = vmul.f32 1.0, %v2422
    %v2424 = vrcp.pop %v2421
    %v2425 = vmul.f32 1.0, %v2424
    %v2426 = vadd.f32 %v2404, %v675
    %v2427 = vadd.f32 %v2409, %v675
    %2430 = vrot.lane.b32.xlu0 %v2426, 64
    %v2431 = vpop.permute.xlu0 %2430
    %2432 = vrot.lane.b32.xlu0 %v2427, 64
    %v2433 = vpop.permute.xlu0 %2432
    %v2436 = vmul.f32 %v2423, %v2431
    %v2437 = vmul.f32 %v2425, %v2433
    %2440 = vrot.lane.b32.xlu0 %v2436, 64
    %v2441 = vpop.permute.xlu0 %2440
    %2442 = vrot.lane.b32.xlu0 %v2437, 64
    %v2443 = vpop.permute.xlu0 %2442
    %v2446 = vadd.f32 %v2331, %v2441
    %v2447 = vadd.f32 %v2332, %v2443
    %v2448 = vtanh.pop %v2446
    %v2449 = vtanh.pop %v2447
    %v2450 = vsub.f32 1.0, %v2423
    %v2451 = vsub.f32 1.0, %v2425
    %2454 = vrot.lane.b32.xlu0 %v2448, 96
    %v2455 = vpop.permute.xlu0 %2454
    %2456 = vrot.lane.b32.xlu0 %v2449, 96
    %v2457 = vpop.permute.xlu0 %2456
    %v2460 = vmul.f32 %v2450, %v2455
    %v2461 = vmul.f32 %v2451, %v2457
    %v2462 = vmul.f32 %v2423, %v2174
    %v2463 = vmul.f32 %v2425, %v2175
    %v2464 = vadd.f32 %v2460, %v2462
    %v2465 = vadd.f32 %v2461, %v2463
    %2468 = vrot.lane.b32.xlu0 %v2464, 96
    %v2469 = vpop.permute.xlu0 %2468
    %2470 = vrot.lane.b32.xlu0 %v2465, 96
    %v2471 = vpop.permute.xlu0 %2470
    %2474 = vst.msk [vmem:[%s574] sm:$0xff] %vm524, %v2469
    %2475 = vst.msk [vmem:[%s574 + $0x8] sm:$0xff] %vm524, %v2471
    %v2476 = vld [vmem:[%s441] sm:$0xff]
    %v2477 = vld [vmem:[%s441 + $0x8] sm:$0xff]
    %2480 = vrot.lane.b32.xlu0 %v2326, 96
    %v2481 = vpop.permute.xlu0 %2480
    %2482 = vrot.lane.b32.xlu0 %v2327, 96
    %v2483 = vpop.permute.xlu0 %2482
    %v2484 = vsel %vm524, %v2481, 0
    %v2486 = vsel %vm524, %v2483, 0
    %2488 = vmatprep.subr.mxu0 0.0
    %2489 = vmatpush1.msra.mxu0 0.0
    %2490 = vmatprep.subr.mxu0 0.0
    %2491 = vmatpush1.msra.mxu0 0.0
    %2492 = vmatprep.subr.mxu0 0.0
    %2493 = vmatpush1.msra.mxu0 0.0
    %2494 = vmatprep.subr.mxu0 0.0
    %2495 = vmatpush1.msra.mxu0 0.0
    %2496 = vmatprep.subr.mxu0 0.0
    %2497 = vmatpush1.msra.mxu0 0.0
    %2498 = vmatprep.subr.mxu0 0.0
    %2499 = vmatpush1.msra.mxu0 0.0
    %2500 = vmatprep.subr.mxu0 0.0
    %2501 = vmatpush1.msra.mxu0 0.0
    %2502 = vmatprep.subr.mxu0 0.0
    %2503 = vmatpush1.msra.mxu0 0.0
    %2504 = vmatprep.subr.mxu0 0.0
    %2505 = vmatpush1.msra.mxu0 0.0
    %2506 = vmatprep.subr.mxu0 0.0
    %2507 = vmatpush1.msra.mxu0 0.0
    %2508 = vmatprep.subr.mxu0 0.0
    %2509 = vmatpush1.msra.mxu0 0.0
    %2510 = vmatprep.subr.mxu0 0.0
    %2511 = vmatpush1.msra.mxu0 0.0
    %2512 = vmatprep.subr.mxu0 0.0
    %2513 = vmatpush1.msra.mxu0 %v466
    %2514 = vmatprep.subr.mxu0 0.0
    %2515 = vmatpush1.msra.mxu0 %v465
    %2516 = vmatprep.subr.mxu0 0.0
    %2517 = vmatpush1.msra.mxu0 %v464
    %2518 = vmatprep.subr.mxu0 0.0
    %2519 = vmatpush1.msra.mxu0 %v463
    %2520 = vmatprep.subr.mxu0 0.0
    %2521 = vmatpush2.msra.mxu0 0.0
    %2522 = vmatprep.subr.mxu0 0.0
    %2523 = vmatpush2.msra.mxu0 0.0
    %2524 = vmatprep.subr.mxu0 0.0
    %2525 = vmatpush2.msra.mxu0 0.0
    %2526 = vmatprep.subr.mxu0 0.0
    %2527 = vmatpush2.msra.mxu0 0.0
    %2528 = vmatprep.subr.mxu0 0.0
    %2529 = vmatpush2.msra.mxu0 0.0
    %2530 = vmatprep.subr.mxu0 0.0
    %2531 = vmatpush2.msra.mxu0 0.0
    %2532 = vmatprep.subr.mxu0 0.0
    %2533 = vmatpush2.msra.mxu0 0.0
    %2534 = vmatprep.subr.mxu0 0.0
    %2535 = vmatpush2.msra.mxu0 0.0
    %2536 = vmatprep.subr.mxu0 0.0
    %2537 = vmatpush2.msra.mxu0 0.0
    %2538 = vmatprep.subr.mxu0 0.0
    %2539 = vmatpush2.msra.mxu0 0.0
    %2540 = vmatprep.subr.mxu0 0.0
    %2541 = vmatpush2.msra.mxu0 0.0
    %2542 = vmatprep.subr.mxu0 0.0
    %2543 = vmatpush2.msra.mxu0 0.0
    %2544 = vmatprep.subr.mxu0 0.0
    %2545 = vmatpush2.msra.mxu0 0.0
    %2546 = vmatprep.subr.mxu0 0.0
    %2547 = vmatpush2.msra.mxu0 0.0
    %2548 = vmatprep.subr.mxu0 0.0
    %2549 = vmatpush2.msra.mxu0 0.0
    %2550 = vmatprep.subr.mxu0 0.0
    %2551 = vmatpush2.msra.mxu0 0.0
    %2552 = vmatprep.mubr.f32.mxu0 0.0
    %2553 = vmatmul.mubr.f32.gmra.mxu0 %v2484
    %v2554 = vpop.f32.mrf.mxu0
    %v2555 = vadd.f32 0.0, %v2554
    %v2556 = vpop.f32.mrf.mxu0
    %2557 = vmatprep.mubr.f32.mxu0 0.0
    %2558 = vmatmul.mubr.f32.gmra.mxu0 %v2486
    %v2559 = vpop.f32.mrf.mxu0
    %v2560 = vadd.f32 0.0, %v2559
    %v2561 = vpop.f32.mrf.mxu0
    %2562 = vdwg.mxu0
    %v2563 = vadd.f32 %v2476, %v2555
    %v2564 = vadd.f32 %v2477, %v2560
    %v2565 = vxor.u32 %v2563, 2147483648
    %v2566 = vxor.u32 %v2564, 2147483648
    %v2567 = vmul.f32 %v2565, 1.442695
    %v2568 = vpow.pop %v2567
    %v2569 = vmul.f32 %v2566, 1.442695
    %v2570 = vpow.pop %v2569
    %v2571 = vadd.f32 %v2568, 1.0
    %v2572 = vadd.f32 %v2570, 1.0
    %v2573 = vrcp.pop %v2571
    %v2574 = vmul.f32 1.0, %v2573
    %v2575 = vrcp.pop %v2572
    %v2576 = vmul.f32 1.0, %v2575
    %v2577 = vadd.f32 %v2555, %v831
    %v2578 = vadd.f32 %v2560, %v831
    %2581 = vrot.lane.b32.xlu0 %v2577, 64
    %v2582 = vpop.permute.xlu0 %2581
    %2583 = vrot.lane.b32.xlu0 %v2578, 64
    %v2584 = vpop.permute.xlu0 %2583
    %v2587 = vmul.f32 %v2574, %v2582
    %v2588 = vmul.f32 %v2576, %v2584
    %2591 = vrot.lane.b32.xlu0 %v2587, 64
    %v2592 = vpop.permute.xlu0 %2591
    %2593 = vrot.lane.b32.xlu0 %v2588, 64
    %v2594 = vpop.permute.xlu0 %2593
    %v2597 = vadd.f32 %v2476, %v2592
    %v2598 = vadd.f32 %v2477, %v2594
    %v2599 = vtanh.pop %v2597
    %v2600 = vtanh.pop %v2598
    %v2601 = vsub.f32 1.0, %v2574
    %v2602 = vsub.f32 1.0, %v2576
    %2605 = vrot.lane.b32.xlu0 %v2599, 96
    %v2606 = vpop.permute.xlu0 %2605
    %2607 = vrot.lane.b32.xlu0 %v2600, 96
    %v2608 = vpop.permute.xlu0 %2607
    %v2611 = vmul.f32 %v2601, %v2606
    %v2612 = vmul.f32 %v2602, %v2608
    %v2613 = vmul.f32 %v2574, %v2326
    %v2614 = vmul.f32 %v2576, %v2327
    %v2615 = vadd.f32 %v2611, %v2613
    %v2616 = vadd.f32 %v2612, %v2614
    %2617 = vst.msk [vmem:[#allocation3] sm:$0xff] %vm575, %v2615
    %2618 = vst.msk [vmem:[#allocation3 + $0x8] sm:$0xff] %vm575, %v2616
    %v2619 = vld [vmem:[#allocation3] sm:$0xff]
    %v2620 = vld [vmem:[#allocation3 + $0x8] sm:$0xff]
    %v2621 = vld [vmem:[#allocation3 + $0x10] sm:$0xff]
    %v2622 = vld [vmem:[#allocation3 + $0x18] sm:$0xff]
    %v2623 = vld [vmem:[#allocation3 + $0x20] sm:$0xff]
    %v2624 = vld [vmem:[#allocation3 + $0x28] sm:$0xff]
    %v2625 = vld [vmem:[#allocation3 + $0x30] sm:$0xff]
    %v2626 = vld [vmem:[#allocation3 + $0x38] sm:$0xff]
    %v2627 = vld [vmem:[#allocation3 + $0x40] sm:$0xff]
    %v2628 = vld [vmem:[#allocation3 + $0x48] sm:$0xff]
    %v2629 = vld [vmem:[#allocation3 + $0x50] sm:$0xff]
    %v2630 = vld [vmem:[#allocation3 + $0x58] sm:$0xff]
    %v2631 = vld [vmem:[#allocation3 + $0x60] sm:$0xff]
    %v2632 = vld [vmem:[#allocation3 + $0x68] sm:$0xff]
    %v2633 = vld [vmem:[#allocation3 + $0x70] sm:$0xff]
    %v2634 = vld [vmem:[#allocation3 + $0x78] sm:$0xff]
    %v2635 = vld [vmem:[%s2] sm:$0xff]
    %v2636 = vld [vmem:[%s2 + $0x8] sm:$0xff]
    %v2637 = vld [vmem:[%s2 + $0x10] sm:$0xff]
    %v2638 = vld [vmem:[%s2 + $0x18] sm:$0xff]
    %v2639 = vld [vmem:[%s2 + $0x20] sm:$0xff]
    %v2640 = vld [vmem:[%s2 + $0x28] sm:$0xff]
    %v2641 = vld [vmem:[%s2 + $0x30] sm:$0xff]
    %v2642 = vld [vmem:[%s2 + $0x38] sm:$0xff]
    %s2643 = scalar_lea.vmem %s4, 2
    %v2644 = vld [vmem:[%s2643] sm:$0x1]
    %v2646 = vlaneseq
    %v2647 = vshrl.u32 %v2646, 7
    %v2648 = vsub.s32 0, %v2647
    %v2649 = vrot.slane %v2644, %v2648
    %vm2651 = vcmask 523264
    %v2653 = vsel %vm2651, %v2619, 0
    %v2656 = vsel %vm2651, %v2620, 0
    %v2659 = vsel %vm2651, %v2621, 0
    %v2662 = vsel %vm2651, %v2622, 0
    %v2665 = vsel %vm2651, %v2623, 0
    %v2668 = vsel %vm2651, %v2624, 0
    %v2671 = vsel %vm2651, %v2625, 0
    %v2674 = vsel %vm2651, %v2626, 0
    %v2677 = vsel %vm2651, %v2627, 0
    %v2680 = vsel %vm2651, %v2628, 0
    %v2683 = vsel %vm2651, %v2629, 0
    %v2686 = vsel %vm2651, %v2630, 0
    %v2689 = vsel %vm2651, %v2631, 0
    %v2692 = vsel %vm2651, %v2632, 0
    %v2695 = vsel %vm2651, %v2633, 0
    %v2698 = vsel %vm2651, %v2634, 0
    %2700 = vmatprep.subr.mxu0 0.0
    %2701 = vmatpush1.msra.mxu0 0.0
    %2702 = vmatprep.subr.mxu0 0.0
    %2703 = vmatpush1.msra.mxu0 0.0
    %2704 = vmatprep.subr.mxu0 0.0
    %2705 = vmatpush1.msra.mxu0 0.0
    %2706 = vmatprep.subr.mxu0 0.0
    %2707 = vmatpush1.msra.mxu0 0.0
    %2708 = vmatprep.subr.mxu0 0.0
    %2709 = vmatpush1.msra.mxu0 0.0
    %2710 = vmatprep.subr.mxu0 0.0
    %2711 = vmatpush1.msra.mxu0 0.0
    %2712 = vmatprep.subr.mxu0 0.0
    %2713 = vmatpush1.msra.mxu0 0.0
    %2714 = vmatprep.subr.mxu0 0.0
    %2715 = vmatpush1.msra.mxu0 0.0
    %2716 = vmatprep.subr.mxu0 0.0
    %2717 = vmatpush1.msra.mxu0 %v2642
    %2718 = vmatprep.subr.mxu0 0.0
    %2719 = vmatpush1.msra.mxu0 %v2641
    %2720 = vmatprep.subr.mxu0 0.0
    %2721 = vmatpush1.msra.mxu0 %v2640
    %2722 = vmatprep.subr.mxu0 0.0
    %2723 = vmatpush1.msra.mxu0 %v2639
    %2724 = vmatprep.subr.mxu0 0.0
    %2725 = vmatpush1.msra.mxu0 %v2638
    %2726 = vmatprep.subr.mxu0 0.0
    %2727 = vmatpush1.msra.mxu0 %v2637
    %2728 = vmatprep.subr.mxu0 0.0
    %2729 = vmatpush1.msra.mxu0 %v2636
    %2730 = vmatprep.subr.mxu0 0.0
    %2731 = vmatpush1.msra.mxu0 %v2635
    %2732 = vmatprep.subr.mxu0 0.0
    %2733 = vmatpush2.msra.mxu0 0.0
    %2734 = vmatprep.subr.mxu0 0.0
    %2735 = vmatpush2.msra.mxu0 0.0
    %2736 = vmatprep.subr.mxu0 0.0
    %2737 = vmatpush2.msra.mxu0 0.0
    %2738 = vmatprep.subr.mxu0 0.0
    %2739 = vmatpush2.msra.mxu0 0.0
    %2740 = vmatprep.subr.mxu0 0.0
    %2741 = vmatpush2.msra.mxu0 0.0
    %2742 = vmatprep.subr.mxu0 0.0
    %2743 = vmatpush2.msra.mxu0 0.0
    %2744 = vmatprep.subr.mxu0 0.0
    %2745 = vmatpush2.msra.mxu0 0.0
    %2746 = vmatprep.subr.mxu0 0.0
    %2747 = vmatpush2.msra.mxu0 0.0
    %2748 = vmatprep.subr.mxu0 0.0
    %2749 = vmatpush2.msra.mxu0 0.0
    %2750 = vmatprep.subr.mxu0 0.0
    %2751 = vmatpush2.msra.mxu0 0.0
    %2752 = vmatprep.subr.mxu0 0.0
    %2753 = vmatpush2.msra.mxu0 0.0
    %2754 = vmatprep.subr.mxu0 0.0
    %2755 = vmatpush2.msra.mxu0 0.0
    %2756 = vmatprep.subr.mxu0 0.0
    %2757 = vmatpush2.msra.mxu0 0.0
    %2758 = vmatprep.subr.mxu0 0.0
    %2759 = vmatpush2.msra.mxu0 0.0
    %2760 = vmatprep.subr.mxu0 0.0
    %2761 = vmatpush2.msra.mxu0 0.0
    %2762 = vmatprep.subr.mxu0 0.0
    %2763 = vmatpush2.msra.mxu0 0.0
    %2764 = vmatprep.mubr.f32.mxu0 0.0
    %2765 = vmatmul.mubr.f32.gmra.mxu0 %v2653
    %v2766 = vpop.f32.mrf.mxu0
    %v2767 = vadd.f32 %v2649, %v2766
    %v2768 = vpop.f32.mrf.mxu0
    %2769 = vmatprep.mubr.f32.mxu0 0.0
    %2770 = vmatmul.mubr.f32.gmra.mxu0 %v2656
    %v2771 = vpop.f32.mrf.mxu0
    %v2772 = vadd.f32 %v2649, %v2771
    %v2773 = vpop.f32.mrf.mxu0
    %2774 = vmatprep.mubr.f32.mxu0 0.0
    %2775 = vmatmul.mubr.f32.gmra.mxu0 %v2659
    %v2776 = vpop.f32.mrf.mxu0
    %v2777 = vadd.f32 %v2649, %v2776
    %v2778 = vpop.f32.mrf.mxu0
    %2779 = vmatprep.mubr.f32.mxu0 0.0
    %2780 = vmatmul.mubr.f32.gmra.mxu0 %v2662
    %v2781 = vpop.f32.mrf.mxu0
    %v2782 = vadd.f32 %v2649, %v2781
    %v2783 = vpop.f32.mrf.mxu0
    %2784 = vmatprep.mubr.f32.mxu0 0.0
    %2785 = vmatmul.mubr.f32.gmra.mxu0 %v2665
    %v2786 = vpop.f32.mrf.mxu0
    %v2787 = vadd.f32 %v2649, %v2786
    %v2788 = vpop.f32.mrf.mxu0
    %2789 = vmatprep.mubr.f32.mxu0 0.0
    %2790 = vmatmul.mubr.f32.gmra.mxu0 %v2668
    %v2791 = vpop.f32.mrf.mxu0
    %v2792 = vadd.f32 %v2649, %v2791
    %v2793 = vpop.f32.mrf.mxu0
    %2794 = vmatprep.mubr.f32.mxu0 0.0
    %2795 = vmatmul.mubr.f32.gmra.mxu0 %v2671
    %v2796 = vpop.f32.mrf.mxu0
    %v2797 = vadd.f32 %v2649, %v2796
    %v2798 = vpop.f32.mrf.mxu0
    %2799 = vmatprep.mubr.f32.mxu0 0.0
    %2800 = vmatmul.mubr.f32.gmra.mxu0 %v2674
    %v2801 = vpop.f32.mrf.mxu0
    %v2802 = vadd.f32 %v2649, %v2801
    %v2803 = vpop.f32.mrf.mxu0
    %2804 = vmatprep.mubr.f32.mxu0 0.0
    %2805 = vmatmul.mubr.f32.gmra.mxu0 %v2677
    %v2806 = vpop.f32.mrf.mxu0
    %v2807 = vadd.f32 %v2649, %v2806
    %v2808 = vpop.f32.mrf.mxu0
    %2809 = vmatprep.mubr.f32.mxu0 0.0
    %2810 = vmatmul.mubr.f32.gmra.mxu0 %v2680
    %v2811 = vpop.f32.mrf.mxu0
    %v2812 = vadd.f32 %v2649, %v2811
    %v2813 = vpop.f32.mrf.mxu0
    %2814 = vmatprep.mubr.f32.mxu0 0.0
    %2815 = vmatmul.mubr.f32.gmra.mxu0 %v2683
    %v2816 = vpop.f32.mrf.mxu0
    %v2817 = vadd.f32 %v2649, %v2816
    %v2818 = vpop.f32.mrf.mxu0
    %2819 = vmatprep.mubr.f32.mxu0 0.0
    %2820 = vmatmul.mubr.f32.gmra.mxu0 %v2686
    %v2821 = vpop.f32.mrf.mxu0
    %v2822 = vadd.f32 %v2649, %v2821
    %v2823 = vpop.f32.mrf.mxu0
    %2824 = vmatprep.mubr.f32.mxu0 0.0
    %2825 = vmatmul.mubr.f32.gmra.mxu0 %v2689
    %v2826 = vpop.f32.mrf.mxu0
    %v2827 = vadd.f32 %v2649, %v2826
    %v2828 = vpop.f32.mrf.mxu0
    %2829 = vmatprep.mubr.f32.mxu0 0.0
    %2830 = vmatmul.mubr.f32.gmra.mxu0 %v2692
    %v2831 = vpop.f32.mrf.mxu0
    %v2832 = vadd.f32 %v2649, %v2831
    %v2833 = vpop.f32.mrf.mxu0
    %2834 = vmatprep.mubr.f32.mxu0 0.0
    %2835 = vmatmul.mubr.f32.gmra.mxu0 %v2695
    %v2836 = vpop.f32.mrf.mxu0
    %v2837 = vadd.f32 %v2649, %v2836
    %v2838 = vpop.f32.mrf.mxu0
    %2839 = vmatprep.mubr.f32.mxu0 0.0
    %2840 = vmatmul.mubr.f32.gmra.mxu0 %v2698
    %v2841 = vpop.f32.mrf.mxu0
    %v2842 = vadd.f32 %v2649, %v2841
    %v2843 = vpop.f32.mrf.mxu0
    %2844 = vdwg.mxu0
    %2845 = vst.msk [vmem:[#allocation2] sm:$0xff] %vm266, %v2767
    %2846 = vst.msk [vmem:[#allocation2 + $0x8] sm:$0xff] %vm266, %v2772
    %2847 = vst.msk [vmem:[#allocation2 + $0x10] sm:$0xff] %vm266, %v2777
    %2848 = vst.msk [vmem:[#allocation2 + $0x18] sm:$0xff] %vm266, %v2782
    %2849 = vst.msk [vmem:[#allocation2 + $0x20] sm:$0xff] %vm266, %v2787
    %2850 = vst.msk [vmem:[#allocation2 + $0x28] sm:$0xff] %vm266, %v2792
    %2851 = vst.msk [vmem:[#allocation2 + $0x30] sm:$0xff] %vm266, %v2797
    %2852 = vst.msk [vmem:[#allocation2 + $0x38] sm:$0xff] %vm266, %v2802
    %2853 = vst.msk [vmem:[#allocation2 + $0x40] sm:$0xff] %vm266, %v2807
    %2854 = vst.msk [vmem:[#allocation2 + $0x48] sm:$0xff] %vm266, %v2812
    %2855 = vst.msk [vmem:[#allocation2 + $0x50] sm:$0xff] %vm266, %v2817
    %2856 = vst.msk [vmem:[#allocation2 + $0x58] sm:$0xff] %vm266, %v2822
    %2857 = vst.msk [vmem:[#allocation2 + $0x60] sm:$0xff] %vm266, %v2827
    %2858 = vst.msk [vmem:[#allocation2 + $0x68] sm:$0xff] %vm266, %v2832
    %2859 = vst.msk [vmem:[#allocation2 + $0x70] sm:$0xff] %vm266, %v2837
    %2860 = vst.msk [vmem:[#allocation2 + $0x78] sm:$0xff] %vm266, %v2842
    %s2861 = scalar_lea.vmem %s2, 64
    %v2862 = vld [vmem:[%s2861] sm:$0xff]
    %v2863 = vld [vmem:[%s2861 + $0x8] sm:$0xff]
    %v2864 = vld [vmem:[%s2861 + $0x10] sm:$0xff]
    %v2865 = vld [vmem:[%s2861 + $0x18] sm:$0xff]
    %v2866 = vld [vmem:[%s2861 + $0x20] sm:$0xff]
    %v2867 = vld [vmem:[%s2861 + $0x28] sm:$0xff]
    %v2868 = vld [vmem:[%s2861 + $0x30] sm:$0xff]
    %v2869 = vld [vmem:[%s2861 + $0x38] sm:$0xff]
    %s2870 = scalar_lea.vmem %s4, 3
    %v2871 = vld [vmem:[%s2870] sm:$0x1]
    %v2873 = vlaneseq
    %v2874 = vshrl.u32 %v2873, 7
    %v2875 = vsub.s32 0, %v2874
    %v2876 = vrot.slane %v2871, %v2875
    %2878 = vmatprep.subr.mxu0 0.0
    %2879 = vmatpush1.msra.mxu0 0.0
    %2880 = vmatprep.subr.mxu0 0.0
    %2881 = vmatpush1.msra.mxu0 0.0
    %2882 = vmatprep.subr.mxu0 0.0
    %2883 = vmatpush1.msra.mxu0 0.0
    %2884 = vmatprep.subr.mxu0 0.0
    %2885 = vmatpush1.msra.mxu0 0.0
    %2886 = vmatprep.subr.mxu0 0.0
    %2887 = vmatpush1.msra.mxu0 0.0
    %2888 = vmatprep.subr.mxu0 0.0
    %2889 = vmatpush1.msra.mxu0 0.0
    %2890 = vmatprep.subr.mxu0 0.0
    %2891 = vmatpush1.msra.mxu0 0.0
    %2892 = vmatprep.subr.mxu0 0.0
    %2893 = vmatpush1.msra.mxu0 0.0
    %2894 = vmatprep.subr.mxu0 0.0
    %2895 = vmatpush1.msra.mxu0 %v2869
    %2896 = vmatprep.subr.mxu0 0.0
    %2897 = vmatpush1.msra.mxu0 %v2868
    %2898 = vmatprep.subr.mxu0 0.0
    %2899 = vmatpush1.msra.mxu0 %v2867
    %2900 = vmatprep.subr.mxu0 0.0
    %2901 = vmatpush1.msra.mxu0 %v2866
    %2902 = vmatprep.subr.mxu0 0.0
    %2903 = vmatpush1.msra.mxu0 %v2865
    %2904 = vmatprep.subr.mxu0 0.0
    %2905 = vmatpush1.msra.mxu0 %v2864
    %2906 = vmatprep.subr.mxu0 0.0
    %2907 = vmatpush1.msra.mxu0 %v2863
    %2908 = vmatprep.subr.mxu0 0.0
    %2909 = vmatpush1.msra.mxu0 %v2862
    %2910 = vmatprep.subr.mxu0 0.0
    %2911 = vmatpush2.msra.mxu0 0.0
    %2912 = vmatprep.subr.mxu0 0.0
    %2913 = vmatpush2.msra.mxu0 0.0
    %2914 = vmatprep.subr.mxu0 0.0
    %2915 = vmatpush2.msra.mxu0 0.0
    %2916 = vmatprep.subr.mxu0 0.0
    %2917 = vmatpush2.msra.mxu0 0.0
    %2918 = vmatprep.subr.mxu0 0.0
    %2919 = vmatpush2.msra.mxu0 0.0
    %2920 = vmatprep.subr.mxu0 0.0
    %2921 = vmatpush2.msra.mxu0 0.0
    %2922 = vmatprep.subr.mxu0 0.0
    %2923 = vmatpush2.msra.mxu0 0.0
    %2924 = vmatprep.subr.mxu0 0.0
    %2925 = vmatpush2.msra.mxu0 0.0
    %2926 = vmatprep.subr.mxu0 0.0
    %2927 = vmatpush2.msra.mxu0 0.0
    %2928 = vmatprep.subr.mxu0 0.0
    %2929 = vmatpush2.msra.mxu0 0.0
    %2930 = vmatprep.subr.mxu0 0.0
    %2931 = vmatpush2.msra.mxu0 0.0
    %2932 = vmatprep.subr.mxu0 0.0
    %2933 = vmatpush2.msra.mxu0 0.0
    %2934 = vmatprep.subr.mxu0 0.0
    %2935 = vmatpush2.msra.mxu0 0.0
    %2936 = vmatprep.subr.mxu0 0.0
    %2937 = vmatpush2.msra.mxu0 0.0
    %2938 = vmatprep.subr.mxu0 0.0
    %2939 = vmatpush2.msra.mxu0 0.0
    %2940 = vmatprep.subr.mxu0 0.0
    %2941 = vmatpush2.msra.mxu0 0.0
    %2942 = vmatprep.mubr.f32.mxu0 0.0
    %2943 = vmatmul.mubr.f32.gmra.mxu0 %v2653
    %v2944 = vpop.f32.mrf.mxu0
    %v2945 = vadd.f32 %v2876, %v2944
    %v2946 = vpop.f32.mrf.mxu0
    %2947 = vmatprep.mubr.f32.mxu0 0.0
    %2948 = vmatmul.mubr.f32.gmra.mxu0 %v2656
    %v2949 = vpop.f32.mrf.mxu0
    %v2950 = vadd.f32 %v2876, %v2949
    %v2951 = vpop.f32.mrf.mxu0
    %2952 = vmatprep.mubr.f32.mxu0 0.0
    %2953 = vmatmul.mubr.f32.gmra.mxu0 %v2659
    %v2954 = vpop.f32.mrf.mxu0
    %v2955 = vadd.f32 %v2876, %v2954
    %v2956 = vpop.f32.mrf.mxu0
    %2957 = vmatprep.mubr.f32.mxu0 0.0
    %2958 = vmatmul.mubr.f32.gmra.mxu0 %v2662
    %v2959 = vpop.f32.mrf.mxu0
    %v2960 = vadd.f32 %v2876, %v2959
    %v2961 = vpop.f32.mrf.mxu0
    %2962 = vmatprep.mubr.f32.mxu0 0.0
    %2963 = vmatmul.mubr.f32.gmra.mxu0 %v2665
    %v2964 = vpop.f32.mrf.mxu0
    %v2965 = vadd.f32 %v2876, %v2964
    %v2966 = vpop.f32.mrf.mxu0
    %2967 = vmatprep.mubr.f32.mxu0 0.0
    %2968 = vmatmul.mubr.f32.gmra.mxu0 %v2668
    %v2969 = vpop.f32.mrf.mxu0
    %v2970 = vadd.f32 %v2876, %v2969
    %v2971 = vpop.f32.mrf.mxu0
    %2972 = vmatprep.mubr.f32.mxu0 0.0
    %2973 = vmatmul.mubr.f32.gmra.mxu0 %v2671
    %v2974 = vpop.f32.mrf.mxu0
    %v2975 = vadd.f32 %v2876, %v2974
    %v2976 = vpop.f32.mrf.mxu0
    %2977 = vmatprep.mubr.f32.mxu0 0.0
    %2978 = vmatmul.mubr.f32.gmra.mxu0 %v2674
    %v2979 = vpop.f32.mrf.mxu0
    %v2980 = vadd.f32 %v2876, %v2979
    %v2981 = vpop.f32.mrf.mxu0
    %2982 = vmatprep.mubr.f32.mxu0 0.0
    %2983 = vmatmul.mubr.f32.gmra.mxu0 %v2677
    %v2984 = vpop.f32.mrf.mxu0
    %v2985 = vadd.f32 %v2876, %v2984
    %v2986 = vpop.f32.mrf.mxu0
    %2987 = vmatprep.mubr.f32.mxu0 0.0
    %2988 = vmatmul.mubr.f32.gmra.mxu0 %v2680
    %v2989 = vpop.f32.mrf.mxu0
    %v2990 = vadd.f32 %v2876, %v2989
    %v2991 = vpop.f32.mrf.mxu0
    %2992 = vmatprep.mubr.f32.mxu0 0.0
    %2993 = vmatmul.mubr.f32.gmra.mxu0 %v2683
    %v2994 = vpop.f32.mrf.mxu0
    %v2995 = vadd.f32 %v2876, %v2994
    %v2996 = vpop.f32.mrf.mxu0
    %2997 = vmatprep.mubr.f32.mxu0 0.0
    %2998 = vmatmul.mubr.f32.gmra.mxu0 %v2686
    %v2999 = vpop.f32.mrf.mxu0
    %v3000 = vadd.f32 %v2876, %v2999
    %v3001 = vpop.f32.mrf.mxu0
    %3002 = vmatprep.mubr.f32.mxu0 0.0
    %3003 = vmatmul.mubr.f32.gmra.mxu0 %v2689
    %v3004 = vpop.f32.mrf.mxu0
    %v3005 = vadd.f32 %v2876, %v3004
    %v3006 = vpop.f32.mrf.mxu0
    %3007 = vmatprep.mubr.f32.mxu0 0.0
    %3008 = vmatmul.mubr.f32.gmra.mxu0 %v2692
    %v3009 = vpop.f32.mrf.mxu0
    %v3010 = vadd.f32 %v2876, %v3009
    %v3011 = vpop.f32.mrf.mxu0
    %3012 = vmatprep.mubr.f32.mxu0 0.0
    %3013 = vmatmul.mubr.f32.gmra.mxu0 %v2695
    %v3014 = vpop.f32.mrf.mxu0
    %v3015 = vadd.f32 %v2876, %v3014
    %v3016 = vpop.f32.mrf.mxu0
    %3017 = vmatprep.mubr.f32.mxu0 0.0
    %3018 = vmatmul.mubr.f32.gmra.mxu0 %v2698
    %v3019 = vpop.f32.mrf.mxu0
    %v3020 = vadd.f32 %v2876, %v3019
    %v3021 = vpop.f32.mrf.mxu0
    %3022 = vdwg.mxu0
    %3023 = vst.msk [vmem:[%s441] sm:$0xff] %vm266, %v2945
    %3024 = vst.msk [vmem:[%s441 + $0x8] sm:$0xff] %vm266, %v2950
    %3025 = vst.msk [vmem:[%s441 + $0x10] sm:$0xff] %vm266, %v2955
    %3026 = vst.msk [vmem:[%s441 + $0x18] sm:$0xff] %vm266, %v2960
    %3027 = vst.msk [vmem:[%s441 + $0x20] sm:$0xff] %vm266, %v2965
    %3028 = vst.msk [vmem:[%s441 + $0x28] sm:$0xff] %vm266, %v2970
    %3029 = vst.msk [vmem:[%s441 + $0x30] sm:$0xff] %vm266, %v2975
    %3030 = vst.msk [vmem:[%s441 + $0x38] sm:$0xff] %vm266, %v2980
    %3031 = vst.msk [vmem:[%s441 + $0x40] sm:$0xff] %vm266, %v2985
    %3032 = vst.msk [vmem:[%s441 + $0x48] sm:$0xff] %vm266, %v2990
    %3033 = vst.msk [vmem:[%s441 + $0x50] sm:$0xff] %vm266, %v2995
    %3034 = vst.msk [vmem:[%s441 + $0x58] sm:$0xff] %vm266, %v3000
    %3035 = vst.msk [vmem:[%s441 + $0x60] sm:$0xff] %vm266, %v3005
    %3036 = vst.msk [vmem:[%s441 + $0x68] sm:$0xff] %vm266, %v3010
    %3037 = vst.msk [vmem:[%s441 + $0x70] sm:$0xff] %vm266, %v3015
    %3038 = vst.msk [vmem:[%s441 + $0x78] sm:$0xff] %vm266, %v3020
    %s3039 = scalar_lea.vmem [#allocation5], 64
    %v3040 = vld [vmem:[%s3039] sm:$0xff]
    %v3041 = vld [vmem:[%s3039 + $0x8] sm:$0xff]
    %v3042 = vld [vmem:[%s3039 + $0x10] sm:$0xff]
    %v3043 = vld [vmem:[%s3039 + $0x18] sm:$0xff]
    %s3044 = scalar_lea.vmem [#allocation5], 96
    %v3045 = vld [vmem:[%s3044] sm:$0xff]
    %v3046 = vld [vmem:[%s3044 + $0x8] sm:$0xff]
    %v3047 = vld [vmem:[%s3044 + $0x10] sm:$0xff]
    %v3048 = vld [vmem:[%s3044 + $0x18] sm:$0xff]
    %s3049 = scalar_lea.vmem %s5, 2
    %v3050 = vld [vmem:[%s3049] sm:$0x1]
    %s3051 = scalar_lea.vmem %s5, 3
    %v3052 = vld [vmem:[%s3051] sm:$0x1]
    %v3053 = vld [vmem:[#allocation2] sm:$0xff]
    %v3054 = vld [vmem:[#allocation2 + $0x8] sm:$0xff]
    %v3055 = vxor.u32 %v3053, 2147483648
    %v3056 = vxor.u32 %v3054, 2147483648
    %v3057 = vmul.f32 %v3055, 1.442695
    %v3058 = vpow.pop %v3057
    %v3059 = vmul.f32 %v3056, 1.442695
    %v3060 = vpow.pop %v3059
    %v3061 = vadd.f32 %v3058, 1.0
    %v3062 = vadd.f32 %v3060, 1.0
    %v3063 = vrcp.pop %v3061
    %v3064 = vmul.f32 1.0, %v3063
    %v3065 = vrcp.pop %v3062
    %v3066 = vmul.f32 1.0, %v3065
    %v3068 = vlaneseq
    %v3069 = vshrl.u32 %v3068, 7
    %v3070 = vsub.s32 0, %v3069
    %v3071 = vrot.slane %v3050, %v3070
    %v3073 = vmul.f32 %v3064, %v3071
    %v3074 = vmul.f32 %v3066, %v3071
    %3077 = vrot.lane.b32.xlu0 %v3073, 64
    %v3078 = vpop.permute.xlu0 %3077
    %3079 = vrot.lane.b32.xlu0 %v3074, 64
    %v3080 = vpop.permute.xlu0 %3079
    %v3083 = vadd.f32 %v3053, %v3078
    %v3084 = vadd.f32 %v3054, %v3080
    %v3085 = vtanh.pop %v3083
    %v3086 = vtanh.pop %v3084
    %v3087 = vsub.f32 1.0, %v3064
    %v3088 = vsub.f32 1.0, %v3066
    %3091 = vrot.lane.b32.xlu0 %v3085, 96
    %v3092 = vpop.permute.xlu0 %3091
    %3093 = vrot.lane.b32.xlu0 %v3086, 96
    %v3094 = vpop.permute.xlu0 %3093
    %v3097 = vmul.f32 %v3087, %v3092
    %v3098 = vmul.f32 %v3088, %v3094
    %3101 = vrot.lane.b32.xlu0 %v3097, 96
    %v3102 = vpop.permute.xlu0 %3101
    %3103 = vrot.lane.b32.xlu0 %v3098, 96
    %v3104 = vpop.permute.xlu0 %3103
    %3107 = vst.msk [vmem:[#allocation4] sm:$0xff] %vm524, %v3102
    %3108 = vst.msk [vmem:[#allocation4 + $0x8] sm:$0xff] %vm524, %v3104
    %v3109 = vld [vmem:[%s527] sm:$0xff]
    %v3110 = vld [vmem:[%s527 + $0x8] sm:$0xff]
    %v3111 = vxor.u32 %v3109, 2147483648
    %v3112 = vxor.u32 %v3110, 2147483648
    %v3113 = vmul.f32 %v3111, 1.442695
    %v3114 = vpow.pop %v3113
    %v3115 = vmul.f32 %v3112, 1.442695
    %v3116 = vpow.pop %v3115
    %v3117 = vadd.f32 %v3114, 1.0
    %v3118 = vadd.f32 %v3116, 1.0
    %v3119 = vrcp.pop %v3117
    %v3120 = vmul.f32 1.0, %v3119
    %v3121 = vrcp.pop %v3118
    %v3122 = vmul.f32 1.0, %v3121
    %v3124 = vlaneseq
    %v3125 = vshrl.u32 %v3124, 7
    %v3126 = vsub.s32 0, %v3125
    %v3127 = vrot.slane %v3052, %v3126
    %v3129 = vmul.f32 %v3120, %v3127
    %v3130 = vmul.f32 %v3122, %v3127
    %3133 = vrot.lane.b32.xlu0 %v3129, 64
    %v3134 = vpop.permute.xlu0 %3133
    %3135 = vrot.lane.b32.xlu0 %v3130, 64
    %v3136 = vpop.permute.xlu0 %3135
    %v3139 = vadd.f32 %v3109, %v3134
    %v3140 = vadd.f32 %v3110, %v3136
    %v3141 = vtanh.pop %v3139
    %v3142 = vtanh.pop %v3140
    %v3143 = vsub.f32 1.0, %v3120
    %v3144 = vsub.f32 1.0, %v3122
    %3147 = vrot.lane.b32.xlu0 %v3141, 96
    %v3148 = vpop.permute.xlu0 %3147
    %3149 = vrot.lane.b32.xlu0 %v3142, 96
    %v3150 = vpop.permute.xlu0 %3149
    %v3153 = vmul.f32 %v3143, %v3148
    %v3154 = vmul.f32 %v3144, %v3150
    %s3155 = scalar_lea.vmem [#allocation4], 112
    %3156 = vst.msk [vmem:[%s3155] sm:$0xff] %vm575, %v3153
    %3157 = vst.msk [vmem:[%s3155 + $0x8] sm:$0xff] %vm575, %v3154
    %v3158 = vld [vmem:[%s578] sm:$0xff]
    %v3159 = vld [vmem:[%s578 + $0x8] sm:$0xff]
    %v3160 = vsel %vm524, %v3102, 0
    %v3162 = vsel %vm524, %v3104, 0
    %3164 = vmatprep.subr.mxu0 0.0
    %3165 = vmatpush1.msra.mxu0 0.0
    %3166 = vmatprep.subr.mxu0 0.0
    %3167 = vmatpush1.msra.mxu0 0.0
    %3168 = vmatprep.subr.mxu0 0.0
    %3169 = vmatpush1.msra.mxu0 0.0
    %3170 = vmatprep.subr.mxu0 0.0
    %3171 = vmatpush1.msra.mxu0 0.0
    %3172 = vmatprep.subr.mxu0 0.0
    %3173 = vmatpush1.msra.mxu0 0.0
    %3174 = vmatprep.subr.mxu0 0.0
    %3175 = vmatpush1.msra.mxu0 0.0
    %3176 = vmatprep.subr.mxu0 0.0
    %3177 = vmatpush1.msra.mxu0 0.0
    %3178 = vmatprep.subr.mxu0 0.0
    %3179 = vmatpush1.msra.mxu0 0.0
    %3180 = vmatprep.subr.mxu0 0.0
    %3181 = vmatpush1.msra.mxu0 0.0
    %3182 = vmatprep.subr.mxu0 0.0
    %3183 = vmatpush1.msra.mxu0 0.0
    %3184 = vmatprep.subr.mxu0 0.0
    %3185 = vmatpush1.msra.mxu0 0.0
    %3186 = vmatprep.subr.mxu0 0.0
    %3187 = vmatpush1.msra.mxu0 0.0
    %3188 = vmatprep.subr.mxu0 0.0
    %3189 = vmatpush1.msra.mxu0 %v3043
    %3190 = vmatprep.subr.mxu0 0.0
    %3191 = vmatpush1.msra.mxu0 %v3042
    %3192 = vmatprep.subr.mxu0 0.0
    %3193 = vmatpush1.msra.mxu0 %v3041
    %3194 = vmatprep.subr.mxu0 0.0
    %3195 = vmatpush1.msra.mxu0 %v3040
    %3196 = vmatprep.subr.mxu0 0.0
    %3197 = vmatpush2.msra.mxu0 0.0
    %3198 = vmatprep.subr.mxu0 0.0
    %3199 = vmatpush2.msra.mxu0 0.0
    %3200 = vmatprep.subr.mxu0 0.0
    %3201 = vmatpush2.msra.mxu0 0.0
    %3202 = vmatprep.subr.mxu0 0.0
    %3203 = vmatpush2.msra.mxu0 0.0
    %3204 = vmatprep.subr.mxu0 0.0
    %3205 = vmatpush2.msra.mxu0 0.0
    %3206 = vmatprep.subr.mxu0 0.0
    %3207 = vmatpush2.msra.mxu0 0.0
    %3208 = vmatprep.subr.mxu0 0.0
    %3209 = vmatpush2.msra.mxu0 0.0
    %3210 = vmatprep.subr.mxu0 0.0
    %3211 = vmatpush2.msra.mxu0 0.0
    %3212 = vmatprep.subr.mxu0 0.0
    %3213 = vmatpush2.msra.mxu0 0.0
    %3214 = vmatprep.subr.mxu0 0.0
    %3215 = vmatpush2.msra.mxu0 0.0
    %3216 = vmatprep.subr.mxu0 0.0
    %3217 = vmatpush2.msra.mxu0 0.0
    %3218 = vmatprep.subr.mxu0 0.0
    %3219 = vmatpush2.msra.mxu0 0.0
    %3220 = vmatprep.subr.mxu0 0.0
    %3221 = vmatpush2.msra.mxu0 0.0
    %3222 = vmatprep.subr.mxu0 0.0
    %3223 = vmatpush2.msra.mxu0 0.0
    %3224 = vmatprep.subr.mxu0 0.0
    %3225 = vmatpush2.msra.mxu0 0.0
    %3226 = vmatprep.subr.mxu0 0.0
    %3227 = vmatpush2.msra.mxu0 0.0
    %3228 = vmatprep.mubr.f32.mxu0 0.0
    %3229 = vmatmul.mubr.f32.gmra.mxu0 %v3160
    %v3230 = vpop.f32.mrf.mxu0
    %v3231 = vadd.f32 0.0, %v3230
    %v3232 = vpop.f32.mrf.mxu0
    %3233 = vmatprep.mubr.f32.mxu0 0.0
    %3234 = vmatmul.mubr.f32.gmra.mxu0 %v3162
    %v3235 = vpop.f32.mrf.mxu0
    %v3236 = vadd.f32 0.0, %v3235
    %v3237 = vpop.f32.mrf.mxu0
    %3238 = vdwg.mxu0
    %v3239 = vadd.f32 %v3158, %v3231
    %v3240 = vadd.f32 %v3159, %v3236
    %v3241 = vxor.u32 %v3239, 2147483648
    %v3242 = vxor.u32 %v3240, 2147483648
    %v3243 = vmul.f32 %v3241, 1.442695
    %v3244 = vpow.pop %v3243
    %v3245 = vmul.f32 %v3242, 1.442695
    %v3246 = vpow.pop %v3245
    %v3247 = vadd.f32 %v3244, 1.0
    %v3248 = vadd.f32 %v3246, 1.0
    %v3249 = vrcp.pop %v3247
    %v3250 = vmul.f32 1.0, %v3249
    %v3251 = vrcp.pop %v3248
    %v3252 = vmul.f32 1.0, %v3251
    %3253 = vrot.lane.b32.xlu0 %v3071, 64
    %v3254 = vpop.permute.xlu0 %3253
    %v3256 = vadd.f32 %v3231, %v3254
    %v3257 = vadd.f32 %v3236, %v3254
    %3260 = vrot.lane.b32.xlu0 %v3256, 64
    %v3261 = vpop.permute.xlu0 %3260
    %3262 = vrot.lane.b32.xlu0 %v3257, 64
    %v3263 = vpop.permute.xlu0 %3262
    %v3266 = vmul.f32 %v3250, %v3261
    %v3267 = vmul.f32 %v3252, %v3263
    %3270 = vrot.lane.b32.xlu0 %v3266, 64
    %v3271 = vpop.permute.xlu0 %3270
    %3272 = vrot.lane.b32.xlu0 %v3267, 64
    %v3273 = vpop.permute.xlu0 %3272
    %v3276 = vadd.f32 %v3158, %v3271
    %v3277 = vadd.f32 %v3159, %v3273
    %v3278 = vtanh.pop %v3276
    %v3279 = vtanh.pop %v3277
    %v3280 = vsub.f32 1.0, %v3250
    %v3281 = vsub.f32 1.0, %v3252
    %3284 = vrot.lane.b32.xlu0 %v3278, 96
    %v3285 = vpop.permute.xlu0 %3284
    %3286 = vrot.lane.b32.xlu0 %v3279, 96
    %v3287 = vpop.permute.xlu0 %3286
    %v3290 = vmul.f32 %v3280, %v3285
    %v3291 = vmul.f32 %v3281, %v3287
    %v3292 = vmul.f32 %v3250, %v3097
    %v3293 = vmul.f32 %v3252, %v3098
    %v3294 = vadd.f32 %v3290, %v3292
    %v3295 = vadd.f32 %v3291, %v3293
    %3298 = vrot.lane.b32.xlu0 %v3294, 96
    %v3299 = vpop.permute.xlu0 %3298
    %3300 = vrot.lane.b32.xlu0 %v3295, 96
    %v3301 = vpop.permute.xlu0 %3300
    %s3304 = scalar_lea.vmem [#allocation4], 16
    %3305 = vst.msk [vmem:[%s3304] sm:$0xff] %vm524, %v3299
    %3306 = vst.msk [vmem:[%s3304 + $0x8] sm:$0xff] %vm524, %v3301
    %v3307 = vld [vmem:[%s728] sm:$0xff]
    %v3308 = vld [vmem:[%s728 + $0x8] sm:$0xff]
    %3311 = vrot.lane.b32.xlu0 %v3153, 96
    %v3312 = vpop.permute.xlu0 %3311
    %3313 = vrot.lane.b32.xlu0 %v3154, 96
    %v3314 = vpop.permute.xlu0 %3313
    %v3315 = vsel %vm524, %v3312, 0
    %v3317 = vsel %vm524, %v3314, 0
    %3319 = vmatprep.subr.mxu0 0.0
    %3320 = vmatpush1.msra.mxu0 0.0
    %3321 = vmatprep.subr.mxu0 0.0
    %3322 = vmatpush1.msra.mxu0 0.0
    %3323 = vmatprep.subr.mxu0 0.0
    %3324 = vmatpush1.msra.mxu0 0.0
    %3325 = vmatprep.subr.mxu0 0.0
    %3326 = vmatpush1.msra.mxu0 0.0
    %3327 = vmatprep.subr.mxu0 0.0
    %3328 = vmatpush1.msra.mxu0 0.0
    %3329 = vmatprep.subr.mxu0 0.0
    %3330 = vmatpush1.msra.mxu0 0.0
    %3331 = vmatprep.subr.mxu0 0.0
    %3332 = vmatpush1.msra.mxu0 0.0
    %3333 = vmatprep.subr.mxu0 0.0
    %3334 = vmatpush1.msra.mxu0 0.0
    %3335 = vmatprep.subr.mxu0 0.0
    %3336 = vmatpush1.msra.mxu0 0.0
    %3337 = vmatprep.subr.mxu0 0.0
    %3338 = vmatpush1.msra.mxu0 0.0
    %3339 = vmatprep.subr.mxu0 0.0
    %3340 = vmatpush1.msra.mxu0 0.0
    %3341 = vmatprep.subr.mxu0 0.0
    %3342 = vmatpush1.msra.mxu0 0.0
    %3343 = vmatprep.subr.mxu0 0.0
    %3344 = vmatpush1.msra.mxu0 %v3048
    %3345 = vmatprep.subr.mxu0 0.0
    %3346 = vmatpush1.msra.mxu0 %v3047
    %3347 = vmatprep.subr.mxu0 0.0
    %3348 = vmatpush1.msra.mxu0 %v3046
    %3349 = vmatprep.subr.mxu0 0.0
    %3350 = vmatpush1.msra.mxu0 %v3045
    %3351 = vmatprep.subr.mxu0 0.0
    %3352 = vmatpush2.msra.mxu0 0.0
    %3353 = vmatprep.subr.mxu0 0.0
    %3354 = vmatpush2.msra.mxu0 0.0
    %3355 = vmatprep.subr.mxu0 0.0
    %3356 = vmatpush2.msra.mxu0 0.0
    %3357 = vmatprep.subr.mxu0 0.0
    %3358 = vmatpush2.msra.mxu0 0.0
    %3359 = vmatprep.subr.mxu0 0.0
    %3360 = vmatpush2.msra.mxu0 0.0
    %3361 = vmatprep.subr.mxu0 0.0
    %3362 = vmatpush2.msra.mxu0 0.0
    %3363 = vmatprep.subr.mxu0 0.0
    %3364 = vmatpush2.msra.mxu0 0.0
    %3365 = vmatprep.subr.mxu0 0.0
    %3366 = vmatpush2.msra.mxu0 0.0
    %3367 = vmatprep.subr.mxu0 0.0
    %3368 = vmatpush2.msra.mxu0 0.0
    %3369 = vmatprep.subr.mxu0 0.0
    %3370 = vmatpush2.msra.mxu0 0.0
    %3371 = vmatprep.subr.mxu0 0.0
    %3372 = vmatpush2.msra.mxu0 0.0
    %3373 = vmatprep.subr.mxu0 0.0
    %3374 = vmatpush2.msra.mxu0 0.0
    %3375 = vmatprep.subr.mxu0 0.0
    %3376 = vmatpush2.msra.mxu0 0.0
    %3377 = vmatprep.subr.mxu0 0.0
    %3378 = vmatpush2.msra.mxu0 0.0
    %3379 = vmatprep.subr.mxu0 0.0
    %3380 = vmatpush2.msra.mxu0 0.0
    %3381 = vmatprep.subr.mxu0 0.0
    %3382 = vmatpush2.msra.mxu0 0.0
    %3383 = vmatprep.mubr.f32.mxu0 0.0
    %3384 = vmatmul.mubr.f32.gmra.mxu0 %v3315
    %v3385 = vpop.f32.mrf.mxu0
    %v3386 = vadd.f32 0.0, %v3385
    %v3387 = vpop.f32.mrf.mxu0
    %3388 = vmatprep.mubr.f32.mxu0 0.0
    %3389 = vmatmul.mubr.f32.gmra.mxu0 %v3317
    %v3390 = vpop.f32.mrf.mxu0
    %v3391 = vadd.f32 0.0, %v3390
    %v3392 = vpop.f32.mrf.mxu0
    %3393 = vdwg.mxu0
    %v3394 = vadd.f32 %v3307, %v3386
    %v3395 = vadd.f32 %v3308, %v3391
    %v3396 = vxor.u32 %v3394, 2147483648
    %v3397 = vxor.u32 %v3395, 2147483648
    %v3398 = vmul.f32 %v3396, 1.442695
    %v3399 = vpow.pop %v3398
    %v3400 = vmul.f32 %v3397, 1.442695
    %v3401 = vpow.pop %v3400
    %v3402 = vadd.f32 %v3399, 1.0
    %v3403 = vadd.f32 %v3401, 1.0
    %v3404 = vrcp.pop %v3402
    %v3405 = vmul.f32 1.0, %v3404
    %v3406 = vrcp.pop %v3403
    %v3407 = vmul.f32 1.0, %v3406
    %3408 = vrot.lane.b32.xlu0 %v3127, 64
    %v3409 = vpop.permute.xlu0 %3408
    %v3411 = vadd.f32 %v3386, %v3409
    %v3412 = vadd.f32 %v3391, %v3409
    %3415 = vrot.lane.b32.xlu0 %v3411, 64
    %v3416 = vpop.permute.xlu0 %3415
    %3417 = vrot.lane.b32.xlu0 %v3412, 64
    %v3418 = vpop.permute.xlu0 %3417
    %v3421 = vmul.f32 %v3405, %v3416
    %v3422 = vmul.f32 %v3407, %v3418
    %3425 = vrot.lane.b32.xlu0 %v3421, 64
    %v3426 = vpop.permute.xlu0 %3425
    %3427 = vrot.lane.b32.xlu0 %v3422, 64
    %v3428 = vpop.permute.xlu0 %3427
    %v3431 = vadd.f32 %v3307, %v3426
    %v3432 = vadd.f32 %v3308, %v3428
    %v3433 = vtanh.pop %v3431
    %v3434 = vtanh.pop %v3432
    %v3435 = vsub.f32 1.0, %v3405
    %v3436 = vsub.f32 1.0, %v3407
    %3439 = vrot.lane.b32.xlu0 %v3433, 96
    %v3440 = vpop.permute.xlu0 %3439
    %3441 = vrot.lane.b32.xlu0 %v3434, 96
    %v3442 = vpop.permute.xlu0 %3441
    %v3445 = vmul.f32 %v3435, %v3440
    %v3446 = vmul.f32 %v3436, %v3442
    %v3447 = vmul.f32 %v3405, %v3153
    %v3448 = vmul.f32 %v3407, %v3154
    %v3449 = vadd.f32 %v3445, %v3447
    %v3450 = vadd.f32 %v3446, %v3448
    %s3451 = scalar_lea.vmem [#allocation4], 96
    %3452 = vst.msk [vmem:[%s3451] sm:$0xff] %vm575, %v3449
    %3453 = vst.msk [vmem:[%s3451 + $0x8] sm:$0xff] %vm575, %v3450
    %v3454 = vld [vmem:[%s876] sm:$0xff]
    %v3455 = vld [vmem:[%s876 + $0x8] sm:$0xff]
    %v3456 = vsel %vm524, %v3299, 0
    %v3458 = vsel %vm524, %v3301, 0
    %3460 = vmatprep.subr.mxu0 0.0
    %3461 = vmatpush1.msra.mxu0 0.0
    %3462 = vmatprep.subr.mxu0 0.0
    %3463 = vmatpush1.msra.mxu0 0.0
    %3464 = vmatprep.subr.mxu0 0.0
    %3465 = vmatpush1.msra.mxu0 0.0
    %3466 = vmatprep.subr.mxu0 0.0
    %3467 = vmatpush1.msra.mxu0 0.0
    %3468 = vmatprep.subr.mxu0 0.0
    %3469 = vmatpush1.msra.mxu0 0.0
    %3470 = vmatprep.subr.mxu0 0.0
    %3471 = vmatpush1.msra.mxu0 0.0
    %3472 = vmatprep.subr.mxu0 0.0
    %3473 = vmatpush1.msra.mxu0 0.0
    %3474 = vmatprep.subr.mxu0 0.0
    %3475 = vmatpush1.msra.mxu0 0.0
    %3476 = vmatprep.subr.mxu0 0.0
    %3477 = vmatpush1.msra.mxu0 0.0
    %3478 = vmatprep.subr.mxu0 0.0
    %3479 = vmatpush1.msra.mxu0 0.0
    %3480 = vmatprep.subr.mxu0 0.0
    %3481 = vmatpush1.msra.mxu0 0.0
    %3482 = vmatprep.subr.mxu0 0.0
    %3483 = vmatpush1.msra.mxu0 0.0
    %3484 = vmatprep.subr.mxu0 0.0
    %3485 = vmatpush1.msra.mxu0 %v3043
    %3486 = vmatprep.subr.mxu0 0.0
    %3487 = vmatpush1.msra.mxu0 %v3042
    %3488 = vmatprep.subr.mxu0 0.0
    %3489 = vmatpush1.msra.mxu0 %v3041
    %3490 = vmatprep.subr.mxu0 0.0
    %3491 = vmatpush1.msra.mxu0 %v3040
    %3492 = vmatprep.subr.mxu0 0.0
    %3493 = vmatpush2.msra.mxu0 0.0
    %3494 = vmatprep.subr.mxu0 0.0
    %3495 = vmatpush2.msra.mxu0 0.0
    %3496 = vmatprep.subr.mxu0 0.0
    %3497 = vmatpush2.msra.mxu0 0.0
    %3498 = vmatprep.subr.mxu0 0.0
    %3499 = vmatpush2.msra.mxu0 0.0
    %3500 = vmatprep.subr.mxu0 0.0
    %3501 = vmatpush2.msra.mxu0 0.0
    %3502 = vmatprep.subr.mxu0 0.0
    %3503 = vmatpush2.msra.mxu0 0.0
    %3504 = vmatprep.subr.mxu0 0.0
    %3505 = vmatpush2.msra.mxu0 0.0
    %3506 = vmatprep.subr.mxu0 0.0
    %3507 = vmatpush2.msra.mxu0 0.0
    %3508 = vmatprep.subr.mxu0 0.0
    %3509 = vmatpush2.msra.mxu0 0.0
    %3510 = vmatprep.subr.mxu0 0.0
    %3511 = vmatpush2.msra.mxu0 0.0
    %3512 = vmatprep.subr.mxu0 0.0
    %3513 = vmatpush2.msra.mxu0 0.0
    %3514 = vmatprep.subr.mxu0 0.0
    %3515 = vmatpush2.msra.mxu0 0.0
    %3516 = vmatprep.subr.mxu0 0.0
    %3517 = vmatpush2.msra.mxu0 0.0
    %3518 = vmatprep.subr.mxu0 0.0
    %3519 = vmatpush2.msra.mxu0 0.0
    %3520 = vmatprep.subr.mxu0 0.0
    %3521 = vmatpush2.msra.mxu0 0.0
    %3522 = vmatprep.subr.mxu0 0.0
    %3523 = vmatpush2.msra.mxu0 0.0
    %3524 = vmatprep.mubr.f32.mxu0 0.0
    %3525 = vmatmul.mubr.f32.gmra.mxu0 %v3456
    %v3526 = vpop.f32.mrf.mxu0
    %v3527 = vadd.f32 0.0, %v3526
    %v3528 = vpop.f32.mrf.mxu0
    %3529 = vmatprep.mubr.f32.mxu0 0.0
    %3530 = vmatmul.mubr.f32.gmra.mxu0 %v3458
    %v3531 = vpop.f32.mrf.mxu0
    %v3532 = vadd.f32 0.0, %v3531
    %v3533 = vpop.f32.mrf.mxu0
    %3534 = vdwg.mxu0
    %v3535 = vadd.f32 %v3454, %v3527
    %v3536 = vadd.f32 %v3455, %v3532
    %v3537 = vxor.u32 %v3535, 2147483648
    %v3538 = vxor.u32 %v3536, 2147483648
    %v3539 = vmul.f32 %v3537, 1.442695
    %v3540 = vpow.pop %v3539
    %v3541 = vmul.f32 %v3538, 1.442695
    %v3542 = vpow.pop %v3541
    %v3543 = vadd.f32 %v3540, 1.0
    %v3544 = vadd.f32 %v3542, 1.0
    %v3545 = vrcp.pop %v3543
    %v3546 = vmul.f32 1.0, %v3545
    %v3547 = vrcp.pop %v3544
    %v3548 = vmul.f32 1.0, %v3547
    %v3549 = vadd.f32 %v3527, %v3254
    %v3550 = vadd.f32 %v3532, %v3254
    %3553 = vrot.lane.b32.xlu0 %v3549, 64
    %v3554 = vpop.permute.xlu0 %3553
    %3555 = vrot.lane.b32.xlu0 %v3550, 64
    %v3556 = vpop.permute.xlu0 %3555
    %v3559 = vmul.f32 %v3546, %v3554
    %v3560 = vmul.f32 %v3548, %v3556
    %3563 = vrot.lane.b32.xlu0 %v3559, 64
    %v3564 = vpop.permute.xlu0 %3563
    %3565 = vrot.lane.b32.xlu0 %v3560, 64
    %v3566 = vpop.permute.xlu0 %3565
    %v3569 = vadd.f32 %v3454, %v3564
    %v3570 = vadd.f32 %v3455, %v3566
    %v3571 = vtanh.pop %v3569
    %v3572 = vtanh.pop %v3570
    %v3573 = vsub.f32 1.0, %v3546
    %v3574 = vsub.f32 1.0, %v3548
    %3577 = vrot.lane.b32.xlu0 %v3571, 96
    %v3578 = vpop.permute.xlu0 %3577
    %3579 = vrot.lane.b32.xlu0 %v3572, 96
    %v3580 = vpop.permute.xlu0 %3579
    %v3583 = vmul.f32 %v3573, %v3578
    %v3584 = vmul.f32 %v3574, %v3580
    %v3585 = vmul.f32 %v3546, %v3294
    %v3586 = vmul.f32 %v3548, %v3295
    %v3587 = vadd.f32 %v3583, %v3585
    %v3588 = vadd.f32 %v3584, %v3586
    %3591 = vrot.lane.b32.xlu0 %v3587, 96
    %v3592 = vpop.permute.xlu0 %3591
    %3593 = vrot.lane.b32.xlu0 %v3588, 96
    %v3594 = vpop.permute.xlu0 %3593
    %s3597 = scalar_lea.vmem [#allocation4], 32
    %3598 = vst.msk [vmem:[%s3597] sm:$0xff] %vm524, %v3592
    %3599 = vst.msk [vmem:[%s3597 + $0x8] sm:$0xff] %vm524, %v3594
    %v3600 = vld [vmem:[%s1023] sm:$0xff]
    %v3601 = vld [vmem:[%s1023 + $0x8] sm:$0xff]
    %3604 = vrot.lane.b32.xlu0 %v3449, 96
    %v3605 = vpop.permute.xlu0 %3604
    %3606 = vrot.lane.b32.xlu0 %v3450, 96
    %v3607 = vpop.permute.xlu0 %3606
    %v3608 = vsel %vm524, %v3605, 0
    %v3610 = vsel %vm524, %v3607, 0
    %3612 = vmatprep.subr.mxu0 0.0
    %3613 = vmatpush1.msra.mxu0 0.0
    %3614 = vmatprep.subr.mxu0 0.0
    %3615 = vmatpush1.msra.mxu0 0.0
    %3616 = vmatprep.subr.mxu0 0.0
    %3617 = vmatpush1.msra.mxu0 0.0
    %3618 = vmatprep.subr.mxu0 0.0
    %3619 = vmatpush1.msra.mxu0 0.0
    %3620 = vmatprep.subr.mxu0 0.0
    %3621 = vmatpush1.msra.mxu0 0.0
    %3622 = vmatprep.subr.mxu0 0.0
    %3623 = vmatpush1.msra.mxu0 0.0
    %3624 = vmatprep.subr.mxu0 0.0
    %3625 = vmatpush1.msra.mxu0 0.0
    %3626 = vmatprep.subr.mxu0 0.0
    %3627 = vmatpush1.msra.mxu0 0.0
    %3628 = vmatprep.subr.mxu0 0.0
    %3629 = vmatpush1.msra.mxu0 0.0
    %3630 = vmatprep.subr.mxu0 0.0
    %3631 = vmatpush1.msra.mxu0 0.0
    %3632 = vmatprep.subr.mxu0 0.0
    %3633 = vmatpush1.msra.mxu0 0.0
    %3634 = vmatprep.subr.mxu0 0.0
    %3635 = vmatpush1.msra.mxu0 0.0
    %3636 = vmatprep.subr.mxu0 0.0
    %3637 = vmatpush1.msra.mxu0 %v3048
    %3638 = vmatprep.subr.mxu0 0.0
    %3639 = vmatpush1.msra.mxu0 %v3047
    %3640 = vmatprep.subr.mxu0 0.0
    %3641 = vmatpush1.msra.mxu0 %v3046
    %3642 = vmatprep.subr.mxu0 0.0
    %3643 = vmatpush1.msra.mxu0 %v3045
    %3644 = vmatprep.subr.mxu0 0.0
    %3645 = vmatpush2.msra.mxu0 0.0
    %3646 = vmatprep.subr.mxu0 0.0
    %3647 = vmatpush2.msra.mxu0 0.0
    %3648 = vmatprep.subr.mxu0 0.0
    %3649 = vmatpush2.msra.mxu0 0.0
    %3650 = vmatprep.subr.mxu0 0.0
    %3651 = vmatpush2.msra.mxu0 0.0
    %3652 = vmatprep.subr.mxu0 0.0
    %3653 = vmatpush2.msra.mxu0 0.0
    %3654 = vmatprep.subr.mxu0 0.0
    %3655 = vmatpush2.msra.mxu0 0.0
    %3656 = vmatprep.subr.mxu0 0.0
    %3657 = vmatpush2.msra.mxu0 0.0
    %3658 = vmatprep.subr.mxu0 0.0
    %3659 = vmatpush2.msra.mxu0 0.0
    %3660 = vmatprep.subr.mxu0 0.0
    %3661 = vmatpush2.msra.mxu0 0.0
    %3662 = vmatprep.subr.mxu0 0.0
    %3663 = vmatpush2.msra.mxu0 0.0
    %3664 = vmatprep.subr.mxu0 0.0
    %3665 = vmatpush2.msra.mxu0 0.0
    %3666 = vmatprep.subr.mxu0 0.0
    %3667 = vmatpush2.msra.mxu0 0.0
    %3668 = vmatprep.subr.mxu0 0.0
    %3669 = vmatpush2.msra.mxu0 0.0
    %3670 = vmatprep.subr.mxu0 0.0
    %3671 = vmatpush2.msra.mxu0 0.0
    %3672 = vmatprep.subr.mxu0 0.0
    %3673 = vmatpush2.msra.mxu0 0.0
    %3674 = vmatprep.subr.mxu0 0.0
    %3675 = vmatpush2.msra.mxu0 0.0
    %3676 = vmatprep.mubr.f32.mxu0 0.0
    %3677 = vmatmul.mubr.f32.gmra.mxu0 %v3608
    %v3678 = vpop.f32.mrf.mxu0
    %v3679 = vadd.f32 0.0, %v3678
    %v3680 = vpop.f32.mrf.mxu0
    %3681 = vmatprep.mubr.f32.mxu0 0.0
    %3682 = vmatmul.mubr.f32.gmra.mxu0 %v3610
    %v3683 = vpop.f32.mrf.mxu0
    %v3684 = vadd.f32 0.0, %v3683
    %v3685 = vpop.f32.mrf.mxu0
    %3686 = vdwg.mxu0
    %v3687 = vadd.f32 %v3600, %v3679
    %v3688 = vadd.f32 %v3601, %v3684
    %v3689 = vxor.u32 %v3687, 2147483648
    %v3690 = vxor.u32 %v3688, 2147483648
    %v3691 = vmul.f32 %v3689, 1.442695
    %v3692 = vpow.pop %v3691
    %v3693 = vmul.f32 %v3690, 1.442695
    %v3694 = vpow.pop %v3693
    %v3695 = vadd.f32 %v3692, 1.0
    %v3696 = vadd.f32 %v3694, 1.0
    %v3697 = vrcp.pop %v3695
    %v3698 = vmul.f32 1.0, %v3697
    %v3699 = vrcp.pop %v3696
    %v3700 = vmul.f32 1.0, %v3699
    %v3701 = vadd.f32 %v3679, %v3409
    %v3702 = vadd.f32 %v3684, %v3409
    %3705 = vrot.lane.b32.xlu0 %v3701, 64
    %v3706 = vpop.permute.xlu0 %3705
    %3707 = vrot.lane.b32.xlu0 %v3702, 64
    %v3708 = vpop.permute.xlu0 %3707
    %v3711 = vmul.f32 %v3698, %v3706
    %v3712 = vmul.f32 %v3700, %v3708
    %3715 = vrot.lane.b32.xlu0 %v3711, 64
    %v3716 = vpop.permute.xlu0 %3715
    %3717 = vrot.lane.b32.xlu0 %v3712, 64
    %v3718 = vpop.permute.xlu0 %3717
    %v3721 = vadd.f32 %v3600, %v3716
    %v3722 = vadd.f32 %v3601, %v3718
    %v3723 = vtanh.pop %v3721
    %v3724 = vtanh.pop %v3722
    %v3725 = vsub.f32 1.0, %v3698
    %v3726 = vsub.f32 1.0, %v3700
    %3729 = vrot.lane.b32.xlu0 %v3723, 96
    %v3730 = vpop.permute.xlu0 %3729
    %3731 = vrot.lane.b32.xlu0 %v3724, 96
    %v3732 = vpop.permute.xlu0 %3731
    %v3735 = vmul.f32 %v3725, %v3730
    %v3736 = vmul.f32 %v3726, %v3732
    %v3737 = vmul.f32 %v3698, %v3449
    %v3738 = vmul.f32 %v3700, %v3450
    %v3739 = vadd.f32 %v3735, %v3737
    %v3740 = vadd.f32 %v3736, %v3738
    %s3741 = scalar_lea.vmem [#allocation4], 80
    %3742 = vst.msk [vmem:[%s3741] sm:$0xff] %vm575, %v3739
    %3743 = vst.msk [vmem:[%s3741 + $0x8] sm:$0xff] %vm575, %v3740
    %v3744 = vld [vmem:[%s1168] sm:$0xff]
    %v3745 = vld [vmem:[%s1168 + $0x8] sm:$0xff]
    %v3746 = vsel %vm524, %v3592, 0
    %v3748 = vsel %vm524, %v3594, 0
    %3750 = vmatprep.subr.mxu0 0.0
    %3751 = vmatpush1.msra.mxu0 0.0
    %3752 = vmatprep.subr.mxu0 0.0
    %3753 = vmatpush1.msra.mxu0 0.0
    %3754 = vmatprep.subr.mxu0 0.0
    %3755 = vmatpush1.msra.mxu0 0.0
    %3756 = vmatprep.subr.mxu0 0.0
    %3757 = vmatpush1.msra.mxu0 0.0
    %3758 = vmatprep.subr.mxu0 0.0
    %3759 = vmatpush1.msra.mxu0 0.0
    %3760 = vmatprep.subr.mxu0 0.0
    %3761 = vmatpush1.msra.mxu0 0.0
    %3762 = vmatprep.subr.mxu0 0.0
    %3763 = vmatpush1.msra.mxu0 0.0
    %3764 = vmatprep.subr.mxu0 0.0
    %3765 = vmatpush1.msra.mxu0 0.0
    %3766 = vmatprep.subr.mxu0 0.0
    %3767 = vmatpush1.msra.mxu0 0.0
    %3768 = vmatprep.subr.mxu0 0.0
    %3769 = vmatpush1.msra.mxu0 0.0
    %3770 = vmatprep.subr.mxu0 0.0
    %3771 = vmatpush1.msra.mxu0 0.0
    %3772 = vmatprep.subr.mxu0 0.0
    %3773 = vmatpush1.msra.mxu0 0.0
    %3774 = vmatprep.subr.mxu0 0.0
    %3775 = vmatpush1.msra.mxu0 %v3043
    %3776 = vmatprep.subr.mxu0 0.0
    %3777 = vmatpush1.msra.mxu0 %v3042
    %3778 = vmatprep.subr.mxu0 0.0
    %3779 = vmatpush1.msra.mxu0 %v3041
    %3780 = vmatprep.subr.mxu0 0.0
    %3781 = vmatpush1.msra.mxu0 %v3040
    %3782 = vmatprep.subr.mxu0 0.0
    %3783 = vmatpush2.msra.mxu0 0.0
    %3784 = vmatprep.subr.mxu0 0.0
    %3785 = vmatpush2.msra.mxu0 0.0
    %3786 = vmatprep.subr.mxu0 0.0
    %3787 = vmatpush2.msra.mxu0 0.0
    %3788 = vmatprep.subr.mxu0 0.0
    %3789 = vmatpush2.msra.mxu0 0.0
    %3790 = vmatprep.subr.mxu0 0.0
    %3791 = vmatpush2.msra.mxu0 0.0
    %3792 = vmatprep.subr.mxu0 0.0
    %3793 = vmatpush2.msra.mxu0 0.0
    %3794 = vmatprep.subr.mxu0 0.0
    %3795 = vmatpush2.msra.mxu0 0.0
    %3796 = vmatprep.subr.mxu0 0.0
    %3797 = vmatpush2.msra.mxu0 0.0
    %3798 = vmatprep.subr.mxu0 0.0
    %3799 = vmatpush2.msra.mxu0 0.0
    %3800 = vmatprep.subr.mxu0 0.0
    %3801 = vmatpush2.msra.mxu0 0.0
    %3802 = vmatprep.subr.mxu0 0.0
    %3803 = vmatpush2.msra.mxu0 0.0
    %3804 = vmatprep.subr.mxu0 0.0
    %3805 = vmatpush2.msra.mxu0 0.0
    %3806 = vmatprep.subr.mxu0 0.0
    %3807 = vmatpush2.msra.mxu0 0.0
    %3808 = vmatprep.subr.mxu0 0.0
    %3809 = vmatpush2.msra.mxu0 0.0
    %3810 = vmatprep.subr.mxu0 0.0
    %3811 = vmatpush2.msra.mxu0 0.0
    %3812 = vmatprep.subr.mxu0 0.0
    %3813 = vmatpush2.msra.mxu0 0.0
    %3814 = vmatprep.mubr.f32.mxu0 0.0
    %3815 = vmatmul.mubr.f32.gmra.mxu0 %v3746
    %v3816 = vpop.f32.mrf.mxu0
    %v3817 = vadd.f32 0.0, %v3816
    %v3818 = vpop.f32.mrf.mxu0
    %3819 = vmatprep.mubr.f32.mxu0 0.0
    %3820 = vmatmul.mubr.f32.gmra.mxu0 %v3748
    %v3821 = vpop.f32.mrf.mxu0
    %v3822 = vadd.f32 0.0, %v3821
    %v3823 = vpop.f32.mrf.mxu0
    %3824 = vdwg.mxu0
    %v3825 = vadd.f32 %v3744, %v3817
    %v3826 = vadd.f32 %v3745, %v3822
    %v3827 = vxor.u32 %v3825, 2147483648
    %v3828 = vxor.u32 %v3826, 2147483648
    %v3829 = vmul.f32 %v3827, 1.442695
    %v3830 = vpow.pop %v3829
    %v3831 = vmul.f32 %v3828, 1.442695
    %v3832 = vpow.pop %v3831
    %v3833 = vadd.f32 %v3830, 1.0
    %v3834 = vadd.f32 %v3832, 1.0
    %v3835 = vrcp.pop %v3833
    %v3836 = vmul.f32 1.0, %v3835
    %v3837 = vrcp.pop %v3834
    %v3838 = vmul.f32 1.0, %v3837
    %v3839 = vadd.f32 %v3817, %v3254
    %v3840 = vadd.f32 %v3822, %v3254
    %3843 = vrot.lane.b32.xlu0 %v3839, 64
    %v3844 = vpop.permute.xlu0 %3843
    %3845 = vrot.lane.b32.xlu0 %v3840, 64
    %v3846 = vpop.permute.xlu0 %3845
    %v3849 = vmul.f32 %v3836, %v3844
    %v3850 = vmul.f32 %v3838, %v3846
    %3853 = vrot.lane.b32.xlu0 %v3849, 64
    %v3854 = vpop.permute.xlu0 %3853
    %3855 = vrot.lane.b32.xlu0 %v3850, 64
    %v3856 = vpop.permute.xlu0 %3855
    %v3859 = vadd.f32 %v3744, %v3854
    %v3860 = vadd.f32 %v3745, %v3856
    %v3861 = vtanh.pop %v3859
    %v3862 = vtanh.pop %v3860
    %v3863 = vsub.f32 1.0, %v3836
    %v3864 = vsub.f32 1.0, %v3838
    %3867 = vrot.lane.b32.xlu0 %v3861, 96
    %v3868 = vpop.permute.xlu0 %3867
    %3869 = vrot.lane.b32.xlu0 %v3862, 96
    %v3870 = vpop.permute.xlu0 %3869
    %v3873 = vmul.f32 %v3863, %v3868
    %v3874 = vmul.f32 %v3864, %v3870
    %v3875 = vmul.f32 %v3836, %v3587
    %v3876 = vmul.f32 %v3838, %v3588
    %v3877 = vadd.f32 %v3873, %v3875
    %v3878 = vadd.f32 %v3874, %v3876
    %3881 = vrot.lane.b32.xlu0 %v3877, 96
    %v3882 = vpop.permute.xlu0 %3881
    %3883 = vrot.lane.b32.xlu0 %v3878, 96
    %v3884 = vpop.permute.xlu0 %3883
    %s3887 = scalar_lea.vmem [#allocation4], 48
    %3888 = vst.msk [vmem:[%s3887] sm:$0xff] %vm524, %v3882
    %3889 = vst.msk [vmem:[%s3887 + $0x8] sm:$0xff] %vm524, %v3884
    %v3890 = vld [vmem:[%s1315] sm:$0xff]
    %v3891 = vld [vmem:[%s1315 + $0x8] sm:$0xff]
    %3894 = vrot.lane.b32.xlu0 %v3739, 96
    %v3895 = vpop.permute.xlu0 %3894
    %3896 = vrot.lane.b32.xlu0 %v3740, 96
    %v3897 = vpop.permute.xlu0 %3896
    %v3898 = vsel %vm524, %v3895, 0
    %v3900 = vsel %vm524, %v3897, 0
    %3902 = vmatprep.subr.mxu0 0.0
    %3903 = vmatpush1.msra.mxu0 0.0
    %3904 = vmatprep.subr.mxu0 0.0
    %3905 = vmatpush1.msra.mxu0 0.0
    %3906 = vmatprep.subr.mxu0 0.0
    %3907 = vmatpush1.msra.mxu0 0.0
    %3908 = vmatprep.subr.mxu0 0.0
    %3909 = vmatpush1.msra.mxu0 0.0
    %3910 = vmatprep.subr.mxu0 0.0
    %3911 = vmatpush1.msra.mxu0 0.0
    %3912 = vmatprep.subr.mxu0 0.0
    %3913 = vmatpush1.msra.mxu0 0.0
    %3914 = vmatprep.subr.mxu0 0.0
    %3915 = vmatpush1.msra.mxu0 0.0
    %3916 = vmatprep.subr.mxu0 0.0
    %3917 = vmatpush1.msra.mxu0 0.0
    %3918 = vmatprep.subr.mxu0 0.0
    %3919 = vmatpush1.msra.mxu0 0.0
    %3920 = vmatprep.subr.mxu0 0.0
    %3921 = vmatpush1.msra.mxu0 0.0
    %3922 = vmatprep.subr.mxu0 0.0
    %3923 = vmatpush1.msra.mxu0 0.0
    %3924 = vmatprep.subr.mxu0 0.0
    %3925 = vmatpush1.msra.mxu0 0.0
    %3926 = vmatprep.subr.mxu0 0.0
    %3927 = vmatpush1.msra.mxu0 %v3048
    %3928 = vmatprep.subr.mxu0 0.0
    %3929 = vmatpush1.msra.mxu0 %v3047
    %3930 = vmatprep.subr.mxu0 0.0
    %3931 = vmatpush1.msra.mxu0 %v3046
    %3932 = vmatprep.subr.mxu0 0.0
    %3933 = vmatpush1.msra.mxu0 %v3045
    %3934 = vmatprep.subr.mxu0 0.0
    %3935 = vmatpush2.msra.mxu0 0.0
    %3936 = vmatprep.subr.mxu0 0.0
    %3937 = vmatpush2.msra.mxu0 0.0
    %3938 = vmatprep.subr.mxu0 0.0
    %3939 = vmatpush2.msra.mxu0 0.0
    %3940 = vmatprep.subr.mxu0 0.0
    %3941 = vmatpush2.msra.mxu0 0.0
    %3942 = vmatprep.subr.mxu0 0.0
    %3943 = vmatpush2.msra.mxu0 0.0
    %3944 = vmatprep.subr.mxu0 0.0
    %3945 = vmatpush2.msra.mxu0 0.0
    %3946 = vmatprep.subr.mxu0 0.0
    %3947 = vmatpush2.msra.mxu0 0.0
    %3948 = vmatprep.subr.mxu0 0.0
    %3949 = vmatpush2.msra.mxu0 0.0
    %3950 = vmatprep.subr.mxu0 0.0
    %3951 = vmatpush2.msra.mxu0 0.0
    %3952 = vmatprep.subr.mxu0 0.0
    %3953 = vmatpush2.msra.mxu0 0.0
    %3954 = vmatprep.subr.mxu0 0.0
    %3955 = vmatpush2.msra.mxu0 0.0
    %3956 = vmatprep.subr.mxu0 0.0
    %3957 = vmatpush2.msra.mxu0 0.0
    %3958 = vmatprep.subr.mxu0 0.0
    %3959 = vmatpush2.msra.mxu0 0.0
    %3960 = vmatprep.subr.mxu0 0.0
    %3961 = vmatpush2.msra.mxu0 0.0
    %3962 = vmatprep.subr.mxu0 0.0
    %3963 = vmatpush2.msra.mxu0 0.0
    %3964 = vmatprep.subr.mxu0 0.0
    %3965 = vmatpush2.msra.mxu0 0.0
    %3966 = vmatprep.mubr.f32.mxu0 0.0
    %3967 = vmatmul.mubr.f32.gmra.mxu0 %v3898
    %v3968 = vpop.f32.mrf.mxu0
    %v3969 = vadd.f32 0.0, %v3968
    %v3970 = vpop.f32.mrf.mxu0
    %3971 = vmatprep.mubr.f32.mxu0 0.0
    %3972 = vmatmul.mubr.f32.gmra.mxu0 %v3900
    %v3973 = vpop.f32.mrf.mxu0
    %v3974 = vadd.f32 0.0, %v3973
    %v3975 = vpop.f32.mrf.mxu0
    %3976 = vdwg.mxu0
    %v3977 = vadd.f32 %v3890, %v3969
    %v3978 = vadd.f32 %v3891, %v3974
    %v3979 = vxor.u32 %v3977, 2147483648
    %v3980 = vxor.u32 %v3978, 2147483648
    %v3981 = vmul.f32 %v3979, 1.442695
    %v3982 = vpow.pop %v3981
    %v3983 = vmul.f32 %v3980, 1.442695
    %v3984 = vpow.pop %v3983
    %v3985 = vadd.f32 %v3982, 1.0
    %v3986 = vadd.f32 %v3984, 1.0
    %v3987 = vrcp.pop %v3985
    %v3988 = vmul.f32 1.0, %v3987
    %v3989 = vrcp.pop %v3986
    %v3990 = vmul.f32 1.0, %v3989
    %v3991 = vadd.f32 %v3969, %v3409
    %v3992 = vadd.f32 %v3974, %v3409
    %3995 = vrot.lane.b32.xlu0 %v3991, 64
    %v3996 = vpop.permute.xlu0 %3995
    %3997 = vrot.lane.b32.xlu0 %v3992, 64
    %v3998 = vpop.permute.xlu0 %3997
    %v4001 = vmul.f32 %v3988, %v3996
    %v4002 = vmul.f32 %v3990, %v3998
    %4005 = vrot.lane.b32.xlu0 %v4001, 64
    %v4006 = vpop.permute.xlu0 %4005
    %4007 = vrot.lane.b32.xlu0 %v4002, 64
    %v4008 = vpop.permute.xlu0 %4007
    %v4011 = vadd.f32 %v3890, %v4006
    %v4012 = vadd.f32 %v3891, %v4008
    %v4013 = vtanh.pop %v4011
    %v4014 = vtanh.pop %v4012
    %v4015 = vsub.f32 1.0, %v3988
    %v4016 = vsub.f32 1.0, %v3990
    %4019 = vrot.lane.b32.xlu0 %v4013, 96
    %v4020 = vpop.permute.xlu0 %4019
    %4021 = vrot.lane.b32.xlu0 %v4014, 96
    %v4022 = vpop.permute.xlu0 %4021
    %v4025 = vmul.f32 %v4015, %v4020
    %v4026 = vmul.f32 %v4016, %v4022
    %v4027 = vmul.f32 %v3988, %v3739
    %v4028 = vmul.f32 %v3990, %v3740
    %v4029 = vadd.f32 %v4025, %v4027
    %v4030 = vadd.f32 %v4026, %v4028
    %s4031 = scalar_lea.vmem [#allocation4], 64
    %4032 = vst.msk [vmem:[%s4031] sm:$0xff] %vm575, %v4029
    %4033 = vst.msk [vmem:[%s4031 + $0x8] sm:$0xff] %vm575, %v4030
    %v4034 = vld [vmem:[%s1460] sm:$0xff]
    %v4035 = vld [vmem:[%s1460 + $0x8] sm:$0xff]
    %v4036 = vsel %vm524, %v3882, 0
    %v4038 = vsel %vm524, %v3884, 0
    %4040 = vmatprep.subr.mxu0 0.0
    %4041 = vmatpush1.msra.mxu0 0.0
    %4042 = vmatprep.subr.mxu0 0.0
    %4043 = vmatpush1.msra.mxu0 0.0
    %4044 = vmatprep.subr.mxu0 0.0
    %4045 = vmatpush1.msra.mxu0 0.0
    %4046 = vmatprep.subr.mxu0 0.0
    %4047 = vmatpush1.msra.mxu0 0.0
    %4048 = vmatprep.subr.mxu0 0.0
    %4049 = vmatpush1.msra.mxu0 0.0
    %4050 = vmatprep.subr.mxu0 0.0
    %4051 = vmatpush1.msra.mxu0 0.0
    %4052 = vmatprep.subr.mxu0 0.0
    %4053 = vmatpush1.msra.mxu0 0.0
    %4054 = vmatprep.subr.mxu0 0.0
    %4055 = vmatpush1.msra.mxu0 0.0
    %4056 = vmatprep.subr.mxu0 0.0
    %4057 = vmatpush1.msra.mxu0 0.0
    %4058 = vmatprep.subr.mxu0 0.0
    %4059 = vmatpush1.msra.mxu0 0.0
    %4060 = vmatprep.subr.mxu0 0.0
    %4061 = vmatpush1.msra.mxu0 0.0
    %4062 = vmatprep.subr.mxu0 0.0
    %4063 = vmatpush1.msra.mxu0 0.0
    %4064 = vmatprep.subr.mxu0 0.0
    %4065 = vmatpush1.msra.mxu0 %v3043
    %4066 = vmatprep.subr.mxu0 0.0
    %4067 = vmatpush1.msra.mxu0 %v3042
    %4068 = vmatprep.subr.mxu0 0.0
    %4069 = vmatpush1.msra.mxu0 %v3041
    %4070 = vmatprep.subr.mxu0 0.0
    %4071 = vmatpush1.msra.mxu0 %v3040
    %4072 = vmatprep.subr.mxu0 0.0
    %4073 = vmatpush2.msra.mxu0 0.0
    %4074 = vmatprep.subr.mxu0 0.0
    %4075 = vmatpush2.msra.mxu0 0.0
    %4076 = vmatprep.subr.mxu0 0.0
    %4077 = vmatpush2.msra.mxu0 0.0
    %4078 = vmatprep.subr.mxu0 0.0
    %4079 = vmatpush2.msra.mxu0 0.0
    %4080 = vmatprep.subr.mxu0 0.0
    %4081 = vmatpush2.msra.mxu0 0.0
    %4082 = vmatprep.subr.mxu0 0.0
    %4083 = vmatpush2.msra.mxu0 0.0
    %4084 = vmatprep.subr.mxu0 0.0
    %4085 = vmatpush2.msra.mxu0 0.0
    %4086 = vmatprep.subr.mxu0 0.0
    %4087 = vmatpush2.msra.mxu0 0.0
    %4088 = vmatprep.subr.mxu0 0.0
    %4089 = vmatpush2.msra.mxu0 0.0
    %4090 = vmatprep.subr.mxu0 0.0
    %4091 = vmatpush2.msra.mxu0 0.0
    %4092 = vmatprep.subr.mxu0 0.0
    %4093 = vmatpush2.msra.mxu0 0.0
    %4094 = vmatprep.subr.mxu0 0.0
    %4095 = vmatpush2.msra.mxu0 0.0
    %4096 = vmatprep.subr.mxu0 0.0
    %4097 = vmatpush2.msra.mxu0 0.0
    %4098 = vmatprep.subr.mxu0 0.0
    %4099 = vmatpush2.msra.mxu0 0.0
    %4100 = vmatprep.subr.mxu0 0.0
    %4101 = vmatpush2.msra.mxu0 0.0
    %4102 = vmatprep.subr.mxu0 0.0
    %4103 = vmatpush2.msra.mxu0 0.0
    %4104 = vmatprep.mubr.f32.mxu0 0.0
    %4105 = vmatmul.mubr.f32.gmra.mxu0 %v4036
    %v4106 = vpop.f32.mrf.mxu0
    %v4107 = vadd.f32 0.0, %v4106
    %v4108 = vpop.f32.mrf.mxu0
    %4109 = vmatprep.mubr.f32.mxu0 0.0
    %4110 = vmatmul.mubr.f32.gmra.mxu0 %v4038
    %v4111 = vpop.f32.mrf.mxu0
    %v4112 = vadd.f32 0.0, %v4111
    %v4113 = vpop.f32.mrf.mxu0
    %4114 = vdwg.mxu0
    %v4115 = vadd.f32 %v4034, %v4107
    %v4116 = vadd.f32 %v4035, %v4112
    %v4117 = vxor.u32 %v4115, 2147483648
    %v4118 = vxor.u32 %v4116, 2147483648
    %v4119 = vmul.f32 %v4117, 1.442695
    %v4120 = vpow.pop %v4119
    %v4121 = vmul.f32 %v4118, 1.442695
    %v4122 = vpow.pop %v4121
    %v4123 = vadd.f32 %v4120, 1.0
    %v4124 = vadd.f32 %v4122, 1.0
    %v4125 = vrcp.pop %v4123
    %v4126 = vmul.f32 1.0, %v4125
    %v4127 = vrcp.pop %v4124
    %v4128 = vmul.f32 1.0, %v4127
    %v4129 = vadd.f32 %v4107, %v3254
    %v4130 = vadd.f32 %v4112, %v3254
    %4133 = vrot.lane.b32.xlu0 %v4129, 64
    %v4134 = vpop.permute.xlu0 %4133
    %4135 = vrot.lane.b32.xlu0 %v4130, 64
    %v4136 = vpop.permute.xlu0 %4135
    %v4139 = vmul.f32 %v4126, %v4134
    %v4140 = vmul.f32 %v4128, %v4136
    %4143 = vrot.lane.b32.xlu0 %v4139, 64
    %v4144 = vpop.permute.xlu0 %4143
    %4145 = vrot.lane.b32.xlu0 %v4140, 64
    %v4146 = vpop.permute.xlu0 %4145
    %v4149 = vadd.f32 %v4034, %v4144
    %v4150 = vadd.f32 %v4035, %v4146
    %v4151 = vtanh.pop %v4149
    %v4152 = vtanh.pop %v4150
    %v4153 = vsub.f32 1.0, %v4126
    %v4154 = vsub.f32 1.0, %v4128
    %4157 = vrot.lane.b32.xlu0 %v4151, 96
    %v4158 = vpop.permute.xlu0 %4157
    %4159 = vrot.lane.b32.xlu0 %v4152, 96
    %v4160 = vpop.permute.xlu0 %4159
    %v4163 = vmul.f32 %v4153, %v4158
    %v4164 = vmul.f32 %v4154, %v4160
    %v4165 = vmul.f32 %v4126, %v3877
    %v4166 = vmul.f32 %v4128, %v3878
    %v4167 = vadd.f32 %v4163, %v4165
    %v4168 = vadd.f32 %v4164, %v4166
    %4171 = vrot.lane.b32.xlu0 %v4167, 96
    %v4172 = vpop.permute.xlu0 %4171
    %4173 = vrot.lane.b32.xlu0 %v4168, 96
    %v4174 = vpop.permute.xlu0 %4173
    %4177 = vst.msk [vmem:[%s4031] sm:$0xff] %vm524, %v4172
    %4178 = vst.msk [vmem:[%s4031 + $0x8] sm:$0xff] %vm524, %v4174
    %v4179 = vld [vmem:[%s1606] sm:$0xff]
    %v4180 = vld [vmem:[%s1606 + $0x8] sm:$0xff]
    %4183 = vrot.lane.b32.xlu0 %v4029, 96
    %v4184 = vpop.permute.xlu0 %4183
    %4185 = vrot.lane.b32.xlu0 %v4030, 96
    %v4186 = vpop.permute.xlu0 %4185
    %v4187 = vsel %vm524, %v4184, 0
    %v4189 = vsel %vm524, %v4186, 0
    %4191 = vmatprep.subr.mxu0 0.0
    %4192 = vmatpush1.msra.mxu0 0.0
    %4193 = vmatprep.subr.mxu0 0.0
    %4194 = vmatpush1.msra.mxu0 0.0
    %4195 = vmatprep.subr.mxu0 0.0
    %4196 = vmatpush1.msra.mxu0 0.0
    %4197 = vmatprep.subr.mxu0 0.0
    %4198 = vmatpush1.msra.mxu0 0.0
    %4199 = vmatprep.subr.mxu0 0.0
    %4200 = vmatpush1.msra.mxu0 0.0
    %4201 = vmatprep.subr.mxu0 0.0
    %4202 = vmatpush1.msra.mxu0 0.0
    %4203 = vmatprep.subr.mxu0 0.0
    %4204 = vmatpush1.msra.mxu0 0.0
    %4205 = vmatprep.subr.mxu0 0.0
    %4206 = vmatpush1.msra.mxu0 0.0
    %4207 = vmatprep.subr.mxu0 0.0
    %4208 = vmatpush1.msra.mxu0 0.0
    %4209 = vmatprep.subr.mxu0 0.0
    %4210 = vmatpush1.msra.mxu0 0.0
    %4211 = vmatprep.subr.mxu0 0.0
    %4212 = vmatpush1.msra.mxu0 0.0
    %4213 = vmatprep.subr.mxu0 0.0
    %4214 = vmatpush1.msra.mxu0 0.0
    %4215 = vmatprep.subr.mxu0 0.0
    %4216 = vmatpush1.msra.mxu0 %v3048
    %4217 = vmatprep.subr.mxu0 0.0
    %4218 = vmatpush1.msra.mxu0 %v3047
    %4219 = vmatprep.subr.mxu0 0.0
    %4220 = vmatpush1.msra.mxu0 %v3046
    %4221 = vmatprep.subr.mxu0 0.0
    %4222 = vmatpush1.msra.mxu0 %v3045
    %4223 = vmatprep.subr.mxu0 0.0
    %4224 = vmatpush2.msra.mxu0 0.0
    %4225 = vmatprep.subr.mxu0 0.0
    %4226 = vmatpush2.msra.mxu0 0.0
    %4227 = vmatprep.subr.mxu0 0.0
    %4228 = vmatpush2.msra.mxu0 0.0
    %4229 = vmatprep.subr.mxu0 0.0
    %4230 = vmatpush2.msra.mxu0 0.0
    %4231 = vmatprep.subr.mxu0 0.0
    %4232 = vmatpush2.msra.mxu0 0.0
    %4233 = vmatprep.subr.mxu0 0.0
    %4234 = vmatpush2.msra.mxu0 0.0
    %4235 = vmatprep.subr.mxu0 0.0
    %4236 = vmatpush2.msra.mxu0 0.0
    %4237 = vmatprep.subr.mxu0 0.0
    %4238 = vmatpush2.msra.mxu0 0.0
    %4239 = vmatprep.subr.mxu0 0.0
    %4240 = vmatpush2.msra.mxu0 0.0
    %4241 = vmatprep.subr.mxu0 0.0
    %4242 = vmatpush2.msra.mxu0 0.0
    %4243 = vmatprep.subr.mxu0 0.0
    %4244 = vmatpush2.msra.mxu0 0.0
    %4245 = vmatprep.subr.mxu0 0.0
    %4246 = vmatpush2.msra.mxu0 0.0
    %4247 = vmatprep.subr.mxu0 0.0
    %4248 = vmatpush2.msra.mxu0 0.0
    %4249 = vmatprep.subr.mxu0 0.0
    %4250 = vmatpush2.msra.mxu0 0.0
    %4251 = vmatprep.subr.mxu0 0.0
    %4252 = vmatpush2.msra.mxu0 0.0
    %4253 = vmatprep.subr.mxu0 0.0
    %4254 = vmatpush2.msra.mxu0 0.0
    %4255 = vmatprep.mubr.f32.mxu0 0.0
    %4256 = vmatmul.mubr.f32.gmra.mxu0 %v4187
    %v4257 = vpop.f32.mrf.mxu0
    %v4258 = vadd.f32 0.0, %v4257
    %v4259 = vpop.f32.mrf.mxu0
    %4260 = vmatprep.mubr.f32.mxu0 0.0
    %4261 = vmatmul.mubr.f32.gmra.mxu0 %v4189
    %v4262 = vpop.f32.mrf.mxu0
    %v4263 = vadd.f32 0.0, %v4262
    %v4264 = vpop.f32.mrf.mxu0
    %4265 = vdwg.mxu0
    %v4266 = vadd.f32 %v4179, %v4258
    %v4267 = vadd.f32 %v4180, %v4263
    %v4268 = vxor.u32 %v4266, 2147483648
    %v4269 = vxor.u32 %v4267, 2147483648
    %v4270 = vmul.f32 %v4268, 1.442695
    %v4271 = vpow.pop %v4270
    %v4272 = vmul.f32 %v4269, 1.442695
    %v4273 = vpow.pop %v4272
    %v4274 = vadd.f32 %v4271, 1.0
    %v4275 = vadd.f32 %v4273, 1.0
    %v4276 = vrcp.pop %v4274
    %v4277 = vmul.f32 1.0, %v4276
    %v4278 = vrcp.pop %v4275
    %v4279 = vmul.f32 1.0, %v4278
    %v4280 = vadd.f32 %v4258, %v3409
    %v4281 = vadd.f32 %v4263, %v3409
    %4284 = vrot.lane.b32.xlu0 %v4280, 64
    %v4285 = vpop.permute.xlu0 %4284
    %4286 = vrot.lane.b32.xlu0 %v4281, 64
    %v4287 = vpop.permute.xlu0 %4286
    %v4290 = vmul.f32 %v4277, %v4285
    %v4291 = vmul.f32 %v4279, %v4287
    %4294 = vrot.lane.b32.xlu0 %v4290, 64
    %v4295 = vpop.permute.xlu0 %4294
    %4296 = vrot.lane.b32.xlu0 %v4291, 64
    %v4297 = vpop.permute.xlu0 %4296
    %v4300 = vadd.f32 %v4179, %v4295
    %v4301 = vadd.f32 %v4180, %v4297
    %v4302 = vtanh.pop %v4300
    %v4303 = vtanh.pop %v4301
    %v4304 = vsub.f32 1.0, %v4277
    %v4305 = vsub.f32 1.0, %v4279
    %4308 = vrot.lane.b32.xlu0 %v4302, 96
    %v4309 = vpop.permute.xlu0 %4308
    %4310 = vrot.lane.b32.xlu0 %v4303, 96
    %v4311 = vpop.permute.xlu0 %4310
    %v4314 = vmul.f32 %v4304, %v4309
    %v4315 = vmul.f32 %v4305, %v4311
    %v4316 = vmul.f32 %v4277, %v4029
    %v4317 = vmul.f32 %v4279, %v4030
    %v4318 = vadd.f32 %v4314, %v4316
    %v4319 = vadd.f32 %v4315, %v4317
    %4320 = vst.msk [vmem:[%s3887] sm:$0xff] %vm575, %v4318
    %4321 = vst.msk [vmem:[%s3887 + $0x8] sm:$0xff] %vm575, %v4319
    %v4322 = vld [vmem:[%s1750] sm:$0xff]
    %v4323 = vld [vmem:[%s1750 + $0x8] sm:$0xff]
    %v4324 = vsel %vm524, %v4172, 0
    %v4326 = vsel %vm524, %v4174, 0
    %4328 = vmatprep.subr.mxu0 0.0
    %4329 = vmatpush1.msra.mxu0 0.0
    %4330 = vmatprep.subr.mxu0 0.0
    %4331 = vmatpush1.msra.mxu0 0.0
    %4332 = vmatprep.subr.mxu0 0.0
    %4333 = vmatpush1.msra.mxu0 0.0
    %4334 = vmatprep.subr.mxu0 0.0
    %4335 = vmatpush1.msra.mxu0 0.0
    %4336 = vmatprep.subr.mxu0 0.0
    %4337 = vmatpush1.msra.mxu0 0.0
    %4338 = vmatprep.subr.mxu0 0.0
    %4339 = vmatpush1.msra.mxu0 0.0
    %4340 = vmatprep.subr.mxu0 0.0
    %4341 = vmatpush1.msra.mxu0 0.0
    %4342 = vmatprep.subr.mxu0 0.0
    %4343 = vmatpush1.msra.mxu0 0.0
    %4344 = vmatprep.subr.mxu0 0.0
    %4345 = vmatpush1.msra.mxu0 0.0
    %4346 = vmatprep.subr.mxu0 0.0
    %4347 = vmatpush1.msra.mxu0 0.0
    %4348 = vmatprep.subr.mxu0 0.0
    %4349 = vmatpush1.msra.mxu0 0.0
    %4350 = vmatprep.subr.mxu0 0.0
    %4351 = vmatpush1.msra.mxu0 0.0
    %4352 = vmatprep.subr.mxu0 0.0
    %4353 = vmatpush1.msra.mxu0 %v3043
    %4354 = vmatprep.subr.mxu0 0.0
    %4355 = vmatpush1.msra.mxu0 %v3042
    %4356 = vmatprep.subr.mxu0 0.0
    %4357 = vmatpush1.msra.mxu0 %v3041
    %4358 = vmatprep.subr.mxu0 0.0
    %4359 = vmatpush1.msra.mxu0 %v3040
    %4360 = vmatprep.subr.mxu0 0.0
    %4361 = vmatpush2.msra.mxu0 0.0
    %4362 = vmatprep.subr.mxu0 0.0
    %4363 = vmatpush2.msra.mxu0 0.0
    %4364 = vmatprep.subr.mxu0 0.0
    %4365 = vmatpush2.msra.mxu0 0.0
    %4366 = vmatprep.subr.mxu0 0.0
    %4367 = vmatpush2.msra.mxu0 0.0
    %4368 = vmatprep.subr.mxu0 0.0
    %4369 = vmatpush2.msra.mxu0 0.0
    %4370 = vmatprep.subr.mxu0 0.0
    %4371 = vmatpush2.msra.mxu0 0.0
    %4372 = vmatprep.subr.mxu0 0.0
    %4373 = vmatpush2.msra.mxu0 0.0
    %4374 = vmatprep.subr.mxu0 0.0
    %4375 = vmatpush2.msra.mxu0 0.0
    %4376 = vmatprep.subr.mxu0 0.0
    %4377 = vmatpush2.msra.mxu0 0.0
    %4378 = vmatprep.subr.mxu0 0.0
    %4379 = vmatpush2.msra.mxu0 0.0
    %4380 = vmatprep.subr.mxu0 0.0
    %4381 = vmatpush2.msra.mxu0 0.0
    %4382 = vmatprep.subr.mxu0 0.0
    %4383 = vmatpush2.msra.mxu0 0.0
    %4384 = vmatprep.subr.mxu0 0.0
    %4385 = vmatpush2.msra.mxu0 0.0
    %4386 = vmatprep.subr.mxu0 0.0
    %4387 = vmatpush2.msra.mxu0 0.0
    %4388 = vmatprep.subr.mxu0 0.0
    %4389 = vmatpush2.msra.mxu0 0.0
    %4390 = vmatprep.subr.mxu0 0.0
    %4391 = vmatpush2.msra.mxu0 0.0
    %4392 = vmatprep.mubr.f32.mxu0 0.0
    %4393 = vmatmul.mubr.f32.gmra.mxu0 %v4324
    %v4394 = vpop.f32.mrf.mxu0
    %v4395 = vadd.f32 0.0, %v4394
    %v4396 = vpop.f32.mrf.mxu0
    %4397 = vmatprep.mubr.f32.mxu0 0.0
    %4398 = vmatmul.mubr.f32.gmra.mxu0 %v4326
    %v4399 = vpop.f32.mrf.mxu0
    %v4400 = vadd.f32 0.0, %v4399
    %v4401 = vpop.f32.mrf.mxu0
    %4402 = vdwg.mxu0
    %v4403 = vadd.f32 %v4322, %v4395
    %v4404 = vadd.f32 %v4323, %v4400
    %v4405 = vxor.u32 %v4403, 2147483648
    %v4406 = vxor.u32 %v4404, 2147483648
    %v4407 = vmul.f32 %v4405, 1.442695
    %v4408 = vpow.pop %v4407
    %v4409 = vmul.f32 %v4406, 1.442695
    %v4410 = vpow.pop %v4409
    %v4411 = vadd.f32 %v4408, 1.0
    %v4412 = vadd.f32 %v4410, 1.0
    %v4413 = vrcp.pop %v4411
    %v4414 = vmul.f32 1.0, %v4413
    %v4415 = vrcp.pop %v4412
    %v4416 = vmul.f32 1.0, %v4415
    %v4417 = vadd.f32 %v4395, %v3254
    %v4418 = vadd.f32 %v4400, %v3254
    %4421 = vrot.lane.b32.xlu0 %v4417, 64
    %v4422 = vpop.permute.xlu0 %4421
    %4423 = vrot.lane.b32.xlu0 %v4418, 64
    %v4424 = vpop.permute.xlu0 %4423
    %v4427 = vmul.f32 %v4414, %v4422
    %v4428 = vmul.f32 %v4416, %v4424
    %4431 = vrot.lane.b32.xlu0 %v4427, 64
    %v4432 = vpop.permute.xlu0 %4431
    %4433 = vrot.lane.b32.xlu0 %v4428, 64
    %v4434 = vpop.permute.xlu0 %4433
    %v4437 = vadd.f32 %v4322, %v4432
    %v4438 = vadd.f32 %v4323, %v4434
    %v4439 = vtanh.pop %v4437
    %v4440 = vtanh.pop %v4438
    %v4441 = vsub.f32 1.0, %v4414
    %v4442 = vsub.f32 1.0, %v4416
    %4445 = vrot.lane.b32.xlu0 %v4439, 96
    %v4446 = vpop.permute.xlu0 %4445
    %4447 = vrot.lane.b32.xlu0 %v4440, 96
    %v4448 = vpop.permute.xlu0 %4447
    %v4451 = vmul.f32 %v4441, %v4446
    %v4452 = vmul.f32 %v4442, %v4448
    %v4453 = vmul.f32 %v4414, %v4167
    %v4454 = vmul.f32 %v4416, %v4168
    %v4455 = vadd.f32 %v4451, %v4453
    %v4456 = vadd.f32 %v4452, %v4454
    %4459 = vrot.lane.b32.xlu0 %v4455, 96
    %v4460 = vpop.permute.xlu0 %4459
    %4461 = vrot.lane.b32.xlu0 %v4456, 96
    %v4462 = vpop.permute.xlu0 %4461
    %4465 = vst.msk [vmem:[%s3741] sm:$0xff] %vm524, %v4460
    %4466 = vst.msk [vmem:[%s3741 + $0x8] sm:$0xff] %vm524, %v4462
    %v4467 = vld [vmem:[%s1896] sm:$0xff]
    %v4468 = vld [vmem:[%s1896 + $0x8] sm:$0xff]
    %4471 = vrot.lane.b32.xlu0 %v4318, 96
    %v4472 = vpop.permute.xlu0 %4471
    %4473 = vrot.lane.b32.xlu0 %v4319, 96
    %v4474 = vpop.permute.xlu0 %4473
    %v4475 = vsel %vm524, %v4472, 0
    %v4477 = vsel %vm524, %v4474, 0
    %4479 = vmatprep.subr.mxu0 0.0
    %4480 = vmatpush1.msra.mxu0 0.0
    %4481 = vmatprep.subr.mxu0 0.0
    %4482 = vmatpush1.msra.mxu0 0.0
    %4483 = vmatprep.subr.mxu0 0.0
    %4484 = vmatpush1.msra.mxu0 0.0
    %4485 = vmatprep.subr.mxu0 0.0
    %4486 = vmatpush1.msra.mxu0 0.0
    %4487 = vmatprep.subr.mxu0 0.0
    %4488 = vmatpush1.msra.mxu0 0.0
    %4489 = vmatprep.subr.mxu0 0.0
    %4490 = vmatpush1.msra.mxu0 0.0
    %4491 = vmatprep.subr.mxu0 0.0
    %4492 = vmatpush1.msra.mxu0 0.0
    %4493 = vmatprep.subr.mxu0 0.0
    %4494 = vmatpush1.msra.mxu0 0.0
    %4495 = vmatprep.subr.mxu0 0.0
    %4496 = vmatpush1.msra.mxu0 0.0
    %4497 = vmatprep.subr.mxu0 0.0
    %4498 = vmatpush1.msra.mxu0 0.0
    %4499 = vmatprep.subr.mxu0 0.0
    %4500 = vmatpush1.msra.mxu0 0.0
    %4501 = vmatprep.subr.mxu0 0.0
    %4502 = vmatpush1.msra.mxu0 0.0
    %4503 = vmatprep.subr.mxu0 0.0
    %4504 = vmatpush1.msra.mxu0 %v3048
    %4505 = vmatprep.subr.mxu0 0.0
    %4506 = vmatpush1.msra.mxu0 %v3047
    %4507 = vmatprep.subr.mxu0 0.0
    %4508 = vmatpush1.msra.mxu0 %v3046
    %4509 = vmatprep.subr.mxu0 0.0
    %4510 = vmatpush1.msra.mxu0 %v3045
    %4511 = vmatprep.subr.mxu0 0.0
    %4512 = vmatpush2.msra.mxu0 0.0
    %4513 = vmatprep.subr.mxu0 0.0
    %4514 = vmatpush2.msra.mxu0 0.0
    %4515 = vmatprep.subr.mxu0 0.0
    %4516 = vmatpush2.msra.mxu0 0.0
    %4517 = vmatprep.subr.mxu0 0.0
    %4518 = vmatpush2.msra.mxu0 0.0
    %4519 = vmatprep.subr.mxu0 0.0
    %4520 = vmatpush2.msra.mxu0 0.0
    %4521 = vmatprep.subr.mxu0 0.0
    %4522 = vmatpush2.msra.mxu0 0.0
    %4523 = vmatprep.subr.mxu0 0.0
    %4524 = vmatpush2.msra.mxu0 0.0
    %4525 = vmatprep.subr.mxu0 0.0
    %4526 = vmatpush2.msra.mxu0 0.0
    %4527 = vmatprep.subr.mxu0 0.0
    %4528 = vmatpush2.msra.mxu0 0.0
    %4529 = vmatprep.subr.mxu0 0.0
    %4530 = vmatpush2.msra.mxu0 0.0
    %4531 = vmatprep.subr.mxu0 0.0
    %4532 = vmatpush2.msra.mxu0 0.0
    %4533 = vmatprep.subr.mxu0 0.0
    %4534 = vmatpush2.msra.mxu0 0.0
    %4535 = vmatprep.subr.mxu0 0.0
    %4536 = vmatpush2.msra.mxu0 0.0
    %4537 = vmatprep.subr.mxu0 0.0
    %4538 = vmatpush2.msra.mxu0 0.0
    %4539 = vmatprep.subr.mxu0 0.0
    %4540 = vmatpush2.msra.mxu0 0.0
    %4541 = vmatprep.subr.mxu0 0.0
    %4542 = vmatpush2.msra.mxu0 0.0
    %4543 = vmatprep.mubr.f32.mxu0 0.0
    %4544 = vmatmul.mubr.f32.gmra.mxu0 %v4475
    %v4545 = vpop.f32.mrf.mxu0
    %v4546 = vadd.f32 0.0, %v4545
    %v4547 = vpop.f32.mrf.mxu0
    %4548 = vmatprep.mubr.f32.mxu0 0.0
    %4549 = vmatmul.mubr.f32.gmra.mxu0 %v4477
    %v4550 = vpop.f32.mrf.mxu0
    %v4551 = vadd.f32 0.0, %v4550
    %v4552 = vpop.f32.mrf.mxu0
    %4553 = vdwg.mxu0
    %v4554 = vadd.f32 %v4467, %v4546
    %v4555 = vadd.f32 %v4468, %v4551
    %v4556 = vxor.u32 %v4554, 2147483648
    %v4557 = vxor.u32 %v4555, 2147483648
    %v4558 = vmul.f32 %v4556, 1.442695
    %v4559 = vpow.pop %v4558
    %v4560 = vmul.f32 %v4557, 1.442695
    %v4561 = vpow.pop %v4560
    %v4562 = vadd.f32 %v4559, 1.0
    %v4563 = vadd.f32 %v4561, 1.0
    %v4564 = vrcp.pop %v4562
    %v4565 = vmul.f32 1.0, %v4564
    %v4566 = vrcp.pop %v4563
    %v4567 = vmul.f32 1.0, %v4566
    %v4568 = vadd.f32 %v4546, %v3409
    %v4569 = vadd.f32 %v4551, %v3409
    %4572 = vrot.lane.b32.xlu0 %v4568, 64
    %v4573 = vpop.permute.xlu0 %4572
    %4574 = vrot.lane.b32.xlu0 %v4569, 64
    %v4575 = vpop.permute.xlu0 %4574
    %v4578 = vmul.f32 %v4565, %v4573
    %v4579 = vmul.f32 %v4567, %v4575
    %4582 = vrot.lane.b32.xlu0 %v4578, 64
    %v4583 = vpop.permute.xlu0 %4582
    %4584 = vrot.lane.b32.xlu0 %v4579, 64
    %v4585 = vpop.permute.xlu0 %4584
    %v4588 = vadd.f32 %v4467, %v4583
    %v4589 = vadd.f32 %v4468, %v4585
    %v4590 = vtanh.pop %v4588
    %v4591 = vtanh.pop %v4589
    %v4592 = vsub.f32 1.0, %v4565
    %v4593 = vsub.f32 1.0, %v4567
    %4596 = vrot.lane.b32.xlu0 %v4590, 96
    %v4597 = vpop.permute.xlu0 %4596
    %4598 = vrot.lane.b32.xlu0 %v4591, 96
    %v4599 = vpop.permute.xlu0 %4598
    %v4602 = vmul.f32 %v4592, %v4597
    %v4603 = vmul.f32 %v4593, %v4599
    %v4604 = vmul.f32 %v4565, %v4318
    %v4605 = vmul.f32 %v4567, %v4319
    %v4606 = vadd.f32 %v4602, %v4604
    %v4607 = vadd.f32 %v4603, %v4605
    %4608 = vst.msk [vmem:[%s3597] sm:$0xff] %vm575, %v4606
    %4609 = vst.msk [vmem:[%s3597 + $0x8] sm:$0xff] %vm575, %v4607
    %v4610 = vld [vmem:[%s2040] sm:$0xff]
    %v4611 = vld [vmem:[%s2040 + $0x8] sm:$0xff]
    %v4612 = vsel %vm524, %v4460, 0
    %v4614 = vsel %vm524, %v4462, 0
    %4616 = vmatprep.subr.mxu0 0.0
    %4617 = vmatpush1.msra.mxu0 0.0
    %4618 = vmatprep.subr.mxu0 0.0
    %4619 = vmatpush1.msra.mxu0 0.0
    %4620 = vmatprep.subr.mxu0 0.0
    %4621 = vmatpush1.msra.mxu0 0.0
    %4622 = vmatprep.subr.mxu0 0.0
    %4623 = vmatpush1.msra.mxu0 0.0
    %4624 = vmatprep.subr.mxu0 0.0
    %4625 = vmatpush1.msra.mxu0 0.0
    %4626 = vmatprep.subr.mxu0 0.0
    %4627 = vmatpush1.msra.mxu0 0.0
    %4628 = vmatprep.subr.mxu0 0.0
    %4629 = vmatpush1.msra.mxu0 0.0
    %4630 = vmatprep.subr.mxu0 0.0
    %4631 = vmatpush1.msra.mxu0 0.0
    %4632 = vmatprep.subr.mxu0 0.0
    %4633 = vmatpush1.msra.mxu0 0.0
    %4634 = vmatprep.subr.mxu0 0.0
    %4635 = vmatpush1.msra.mxu0 0.0
    %4636 = vmatprep.subr.mxu0 0.0
    %4637 = vmatpush1.msra.mxu0 0.0
    %4638 = vmatprep.subr.mxu0 0.0
    %4639 = vmatpush1.msra.mxu0 0.0
    %4640 = vmatprep.subr.mxu0 0.0
    %4641 = vmatpush1.msra.mxu0 %v3043
    %4642 = vmatprep.subr.mxu0 0.0
    %4643 = vmatpush1.msra.mxu0 %v3042
    %4644 = vmatprep.subr.mxu0 0.0
    %4645 = vmatpush1.msra.mxu0 %v3041
    %4646 = vmatprep.subr.mxu0 0.0
    %4647 = vmatpush1.msra.mxu0 %v3040
    %4648 = vmatprep.subr.mxu0 0.0
    %4649 = vmatpush2.msra.mxu0 0.0
    %4650 = vmatprep.subr.mxu0 0.0
    %4651 = vmatpush2.msra.mxu0 0.0
    %4652 = vmatprep.subr.mxu0 0.0
    %4653 = vmatpush2.msra.mxu0 0.0
    %4654 = vmatprep.subr.mxu0 0.0
    %4655 = vmatpush2.msra.mxu0 0.0
    %4656 = vmatprep.subr.mxu0 0.0
    %4657 = vmatpush2.msra.mxu0 0.0
    %4658 = vmatprep.subr.mxu0 0.0
    %4659 = vmatpush2.msra.mxu0 0.0
    %4660 = vmatprep.subr.mxu0 0.0
    %4661 = vmatpush2.msra.mxu0 0.0
    %4662 = vmatprep.subr.mxu0 0.0
    %4663 = vmatpush2.msra.mxu0 0.0
    %4664 = vmatprep.subr.mxu0 0.0
    %4665 = vmatpush2.msra.mxu0 0.0
    %4666 = vmatprep.subr.mxu0 0.0
    %4667 = vmatpush2.msra.mxu0 0.0
    %4668 = vmatprep.subr.mxu0 0.0
    %4669 = vmatpush2.msra.mxu0 0.0
    %4670 = vmatprep.subr.mxu0 0.0
    %4671 = vmatpush2.msra.mxu0 0.0
    %4672 = vmatprep.subr.mxu0 0.0
    %4673 = vmatpush2.msra.mxu0 0.0
    %4674 = vmatprep.subr.mxu0 0.0
    %4675 = vmatpush2.msra.mxu0 0.0
    %4676 = vmatprep.subr.mxu0 0.0
    %4677 = vmatpush2.msra.mxu0 0.0
    %4678 = vmatprep.subr.mxu0 0.0
    %4679 = vmatpush2.msra.mxu0 0.0
    %4680 = vmatprep.mubr.f32.mxu0 0.0
    %4681 = vmatmul.mubr.f32.gmra.mxu0 %v4612
    %v4682 = vpop.f32.mrf.mxu0
    %v4683 = vadd.f32 0.0, %v4682
    %v4684 = vpop.f32.mrf.mxu0
    %4685 = vmatprep.mubr.f32.mxu0 0.0
    %4686 = vmatmul.mubr.f32.gmra.mxu0 %v4614
    %v4687 = vpop.f32.mrf.mxu0
    %v4688 = vadd.f32 0.0, %v4687
    %v4689 = vpop.f32.mrf.mxu0
    %4690 = vdwg.mxu0
    %v4691 = vadd.f32 %v4610, %v4683
    %v4692 = vadd.f32 %v4611, %v4688
    %v4693 = vxor.u32 %v4691, 2147483648
    %v4694 = vxor.u32 %v4692, 2147483648
    %v4695 = vmul.f32 %v4693, 1.442695
    %v4696 = vpow.pop %v4695
    %v4697 = vmul.f32 %v4694, 1.442695
    %v4698 = vpow.pop %v4697
    %v4699 = vadd.f32 %v4696, 1.0
    %v4700 = vadd.f32 %v4698, 1.0
    %v4701 = vrcp.pop %v4699
    %v4702 = vmul.f32 1.0, %v4701
    %v4703 = vrcp.pop %v4700
    %v4704 = vmul.f32 1.0, %v4703
    %v4705 = vadd.f32 %v4683, %v3254
    %v4706 = vadd.f32 %v4688, %v3254
    %4709 = vrot.lane.b32.xlu0 %v4705, 64
    %v4710 = vpop.permute.xlu0 %4709
    %4711 = vrot.lane.b32.xlu0 %v4706, 64
    %v4712 = vpop.permute.xlu0 %4711
    %v4715 = vmul.f32 %v4702, %v4710
    %v4716 = vmul.f32 %v4704, %v4712
    %4719 = vrot.lane.b32.xlu0 %v4715, 64
    %v4720 = vpop.permute.xlu0 %4719
    %4721 = vrot.lane.b32.xlu0 %v4716, 64
    %v4722 = vpop.permute.xlu0 %4721
    %v4725 = vadd.f32 %v4610, %v4720
    %v4726 = vadd.f32 %v4611, %v4722
    %v4727 = vtanh.pop %v4725
    %v4728 = vtanh.pop %v4726
    %v4729 = vsub.f32 1.0, %v4702
    %v4730 = vsub.f32 1.0, %v4704
    %4733 = vrot.lane.b32.xlu0 %v4727, 96
    %v4734 = vpop.permute.xlu0 %4733
    %4735 = vrot.lane.b32.xlu0 %v4728, 96
    %v4736 = vpop.permute.xlu0 %4735
    %v4739 = vmul.f32 %v4729, %v4734
    %v4740 = vmul.f32 %v4730, %v4736
    %v4741 = vmul.f32 %v4702, %v4455
    %v4742 = vmul.f32 %v4704, %v4456
    %v4743 = vadd.f32 %v4739, %v4741
    %v4744 = vadd.f32 %v4740, %v4742
    %4747 = vrot.lane.b32.xlu0 %v4743, 96
    %v4748 = vpop.permute.xlu0 %4747
    %4749 = vrot.lane.b32.xlu0 %v4744, 96
    %v4750 = vpop.permute.xlu0 %4749
    %4753 = vst.msk [vmem:[%s3451] sm:$0xff] %vm524, %v4748
    %4754 = vst.msk [vmem:[%s3451 + $0x8] sm:$0xff] %vm524, %v4750
    %v4755 = vld [vmem:[%s2186] sm:$0xff]
    %v4756 = vld [vmem:[%s2186 + $0x8] sm:$0xff]
    %4759 = vrot.lane.b32.xlu0 %v4606, 96
    %v4760 = vpop.permute.xlu0 %4759
    %4761 = vrot.lane.b32.xlu0 %v4607, 96
    %v4762 = vpop.permute.xlu0 %4761
    %v4763 = vsel %vm524, %v4760, 0
    %v4765 = vsel %vm524, %v4762, 0
    %4767 = vmatprep.subr.mxu0 0.0
    %4768 = vmatpush1.msra.mxu0 0.0
    %4769 = vmatprep.subr.mxu0 0.0
    %4770 = vmatpush1.msra.mxu0 0.0
    %4771 = vmatprep.subr.mxu0 0.0
    %4772 = vmatpush1.msra.mxu0 0.0
    %4773 = vmatprep.subr.mxu0 0.0
    %4774 = vmatpush1.msra.mxu0 0.0
    %4775 = vmatprep.subr.mxu0 0.0
    %4776 = vmatpush1.msra.mxu0 0.0
    %4777 = vmatprep.subr.mxu0 0.0
    %4778 = vmatpush1.msra.mxu0 0.0
    %4779 = vmatprep.subr.mxu0 0.0
    %4780 = vmatpush1.msra.mxu0 0.0
    %4781 = vmatprep.subr.mxu0 0.0
    %4782 = vmatpush1.msra.mxu0 0.0
    %4783 = vmatprep.subr.mxu0 0.0
    %4784 = vmatpush1.msra.mxu0 0.0
    %4785 = vmatprep.subr.mxu0 0.0
    %4786 = vmatpush1.msra.mxu0 0.0
    %4787 = vmatprep.subr.mxu0 0.0
    %4788 = vmatpush1.msra.mxu0 0.0
    %4789 = vmatprep.subr.mxu0 0.0
    %4790 = vmatpush1.msra.mxu0 0.0
    %4791 = vmatprep.subr.mxu0 0.0
    %4792 = vmatpush1.msra.mxu0 %v3048
    %4793 = vmatprep.subr.mxu0 0.0
    %4794 = vmatpush1.msra.mxu0 %v3047
    %4795 = vmatprep.subr.mxu0 0.0
    %4796 = vmatpush1.msra.mxu0 %v3046
    %4797 = vmatprep.subr.mxu0 0.0
    %4798 = vmatpush1.msra.mxu0 %v3045
    %4799 = vmatprep.subr.mxu0 0.0
    %4800 = vmatpush2.msra.mxu0 0.0
    %4801 = vmatprep.subr.mxu0 0.0
    %4802 = vmatpush2.msra.mxu0 0.0
    %4803 = vmatprep.subr.mxu0 0.0
    %4804 = vmatpush2.msra.mxu0 0.0
    %4805 = vmatprep.subr.mxu0 0.0
    %4806 = vmatpush2.msra.mxu0 0.0
    %4807 = vmatprep.subr.mxu0 0.0
    %4808 = vmatpush2.msra.mxu0 0.0
    %4809 = vmatprep.subr.mxu0 0.0
    %4810 = vmatpush2.msra.mxu0 0.0
    %4811 = vmatprep.subr.mxu0 0.0
    %4812 = vmatpush2.msra.mxu0 0.0
    %4813 = vmatprep.subr.mxu0 0.0
    %4814 = vmatpush2.msra.mxu0 0.0
    %4815 = vmatprep.subr.mxu0 0.0
    %4816 = vmatpush2.msra.mxu0 0.0
    %4817 = vmatprep.subr.mxu0 0.0
    %4818 = vmatpush2.msra.mxu0 0.0
    %4819 = vmatprep.subr.mxu0 0.0
    %4820 = vmatpush2.msra.mxu0 0.0
    %4821 = vmatprep.subr.mxu0 0.0
    %4822 = vmatpush2.msra.mxu0 0.0
    %4823 = vmatprep.subr.mxu0 0.0
    %4824 = vmatpush2.msra.mxu0 0.0
    %4825 = vmatprep.subr.mxu0 0.0
    %4826 = vmatpush2.msra.mxu0 0.0
    %4827 = vmatprep.subr.mxu0 0.0
    %4828 = vmatpush2.msra.mxu0 0.0
    %4829 = vmatprep.subr.mxu0 0.0
    %4830 = vmatpush2.msra.mxu0 0.0
    %4831 = vmatprep.mubr.f32.mxu0 0.0
    %4832 = vmatmul.mubr.f32.gmra.mxu0 %v4763
    %v4833 = vpop.f32.mrf.mxu0
    %v4834 = vadd.f32 0.0, %v4833
    %v4835 = vpop.f32.mrf.mxu0
    %4836 = vmatprep.mubr.f32.mxu0 0.0
    %4837 = vmatmul.mubr.f32.gmra.mxu0 %v4765
    %v4838 = vpop.f32.mrf.mxu0
    %v4839 = vadd.f32 0.0, %v4838
    %v4840 = vpop.f32.mrf.mxu0
    %4841 = vdwg.mxu0
    %v4842 = vadd.f32 %v4755, %v4834
    %v4843 = vadd.f32 %v4756, %v4839
    %v4844 = vxor.u32 %v4842, 2147483648
    %v4845 = vxor.u32 %v4843, 2147483648
    %v4846 = vmul.f32 %v4844, 1.442695
    %v4847 = vpow.pop %v4846
    %v4848 = vmul.f32 %v4845, 1.442695
    %v4849 = vpow.pop %v4848
    %v4850 = vadd.f32 %v4847, 1.0
    %v4851 = vadd.f32 %v4849, 1.0
    %v4852 = vrcp.pop %v4850
    %v4853 = vmul.f32 1.0, %v4852
    %v4854 = vrcp.pop %v4851
    %v4855 = vmul.f32 1.0, %v4854
    %v4856 = vadd.f32 %v4834, %v3409
    %v4857 = vadd.f32 %v4839, %v3409
    %4860 = vrot.lane.b32.xlu0 %v4856, 64
    %v4861 = vpop.permute.xlu0 %4860
    %4862 = vrot.lane.b32.xlu0 %v4857, 64
    %v4863 = vpop.permute.xlu0 %4862
    %v4866 = vmul.f32 %v4853, %v4861
    %v4867 = vmul.f32 %v4855, %v4863
    %4870 = vrot.lane.b32.xlu0 %v4866, 64
    %v4871 = vpop.permute.xlu0 %4870
    %4872 = vrot.lane.b32.xlu0 %v4867, 64
    %v4873 = vpop.permute.xlu0 %4872
    %v4876 = vadd.f32 %v4755, %v4871
    %v4877 = vadd.f32 %v4756, %v4873
    %v4878 = vtanh.pop %v4876
    %v4879 = vtanh.pop %v4877
    %v4880 = vsub.f32 1.0, %v4853
    %v4881 = vsub.f32 1.0, %v4855
    %4884 = vrot.lane.b32.xlu0 %v4878, 96
    %v4885 = vpop.permute.xlu0 %4884
    %4886 = vrot.lane.b32.xlu0 %v4879, 96
    %v4887 = vpop.permute.xlu0 %4886
    %v4890 = vmul.f32 %v4880, %v4885
    %v4891 = vmul.f32 %v4881, %v4887
    %v4892 = vmul.f32 %v4853, %v4606
    %v4893 = vmul.f32 %v4855, %v4607
    %v4894 = vadd.f32 %v4890, %v4892
    %v4895 = vadd.f32 %v4891, %v4893
    %4896 = vst.msk [vmem:[%s3304] sm:$0xff] %vm575, %v4894
    %4897 = vst.msk [vmem:[%s3304 + $0x8] sm:$0xff] %vm575, %v4895
    %v4898 = vld [vmem:[%s2330] sm:$0xff]
    %v4899 = vld [vmem:[%s2330 + $0x8] sm:$0xff]
    %v4900 = vsel %vm524, %v4748, 0
    %v4902 = vsel %vm524, %v4750, 0
    %4904 = vmatprep.subr.mxu0 0.0
    %4905 = vmatpush1.msra.mxu0 0.0
    %4906 = vmatprep.subr.mxu0 0.0
    %4907 = vmatpush1.msra.mxu0 0.0
    %4908 = vmatprep.subr.mxu0 0.0
    %4909 = vmatpush1.msra.mxu0 0.0
    %4910 = vmatprep.subr.mxu0 0.0
    %4911 = vmatpush1.msra.mxu0 0.0
    %4912 = vmatprep.subr.mxu0 0.0
    %4913 = vmatpush1.msra.mxu0 0.0
    %4914 = vmatprep.subr.mxu0 0.0
    %4915 = vmatpush1.msra.mxu0 0.0
    %4916 = vmatprep.subr.mxu0 0.0
    %4917 = vmatpush1.msra.mxu0 0.0
    %4918 = vmatprep.subr.mxu0 0.0
    %4919 = vmatpush1.msra.mxu0 0.0
    %4920 = vmatprep.subr.mxu0 0.0
    %4921 = vmatpush1.msra.mxu0 0.0
    %4922 = vmatprep.subr.mxu0 0.0
    %4923 = vmatpush1.msra.mxu0 0.0
    %4924 = vmatprep.subr.mxu0 0.0
    %4925 = vmatpush1.msra.mxu0 0.0
    %4926 = vmatprep.subr.mxu0 0.0
    %4927 = vmatpush1.msra.mxu0 0.0
    %4928 = vmatprep.subr.mxu0 0.0
    %4929 = vmatpush1.msra.mxu0 %v3043
    %4930 = vmatprep.subr.mxu0 0.0
    %4931 = vmatpush1.msra.mxu0 %v3042
    %4932 = vmatprep.subr.mxu0 0.0
    %4933 = vmatpush1.msra.mxu0 %v3041
    %4934 = vmatprep.subr.mxu0 0.0
    %4935 = vmatpush1.msra.mxu0 %v3040
    %4936 = vmatprep.subr.mxu0 0.0
    %4937 = vmatpush2.msra.mxu0 0.0
    %4938 = vmatprep.subr.mxu0 0.0
    %4939 = vmatpush2.msra.mxu0 0.0
    %4940 = vmatprep.subr.mxu0 0.0
    %4941 = vmatpush2.msra.mxu0 0.0
    %4942 = vmatprep.subr.mxu0 0.0
    %4943 = vmatpush2.msra.mxu0 0.0
    %4944 = vmatprep.subr.mxu0 0.0
    %4945 = vmatpush2.msra.mxu0 0.0
    %4946 = vmatprep.subr.mxu0 0.0
    %4947 = vmatpush2.msra.mxu0 0.0
    %4948 = vmatprep.subr.mxu0 0.0
    %4949 = vmatpush2.msra.mxu0 0.0
    %4950 = vmatprep.subr.mxu0 0.0
    %4951 = vmatpush2.msra.mxu0 0.0
    %4952 = vmatprep.subr.mxu0 0.0
    %4953 = vmatpush2.msra.mxu0 0.0
    %4954 = vmatprep.subr.mxu0 0.0
    %4955 = vmatpush2.msra.mxu0 0.0
    %4956 = vmatprep.subr.mxu0 0.0
    %4957 = vmatpush2.msra.mxu0 0.0
    %4958 = vmatprep.subr.mxu0 0.0
    %4959 = vmatpush2.msra.mxu0 0.0
    %4960 = vmatprep.subr.mxu0 0.0
    %4961 = vmatpush2.msra.mxu0 0.0
    %4962 = vmatprep.subr.mxu0 0.0
    %4963 = vmatpush2.msra.mxu0 0.0
    %4964 = vmatprep.subr.mxu0 0.0
    %4965 = vmatpush2.msra.mxu0 0.0
    %4966 = vmatprep.subr.mxu0 0.0
    %4967 = vmatpush2.msra.mxu0 0.0
    %4968 = vmatprep.mubr.f32.mxu0 0.0
    %4969 = vmatmul.mubr.f32.gmra.mxu0 %v4900
    %v4970 = vpop.f32.mrf.mxu0
    %v4971 = vadd.f32 0.0, %v4970
    %v4972 = vpop.f32.mrf.mxu0
    %4973 = vmatprep.mubr.f32.mxu0 0.0
    %4974 = vmatmul.mubr.f32.gmra.mxu0 %v4902
    %v4975 = vpop.f32.mrf.mxu0
    %v4976 = vadd.f32 0.0, %v4975
    %v4977 = vpop.f32.mrf.mxu0
    %4978 = vdwg.mxu0
    %v4979 = vadd.f32 %v4898, %v4971
    %v4980 = vadd.f32 %v4899, %v4976
    %v4981 = vxor.u32 %v4979, 2147483648
    %v4982 = vxor.u32 %v4980, 2147483648
    %v4983 = vmul.f32 %v4981, 1.442695
    %v4984 = vpow.pop %v4983
    %v4985 = vmul.f32 %v4982, 1.442695
    %v4986 = vpow.pop %v4985
    %v4987 = vadd.f32 %v4984, 1.0
    %v4988 = vadd.f32 %v4986, 1.0
    %v4989 = vrcp.pop %v4987
    %v4990 = vmul.f32 1.0, %v4989
    %v4991 = vrcp.pop %v4988
    %v4992 = vmul.f32 1.0, %v4991
    %v4993 = vadd.f32 %v4971, %v3254
    %v4994 = vadd.f32 %v4976, %v3254
    %4997 = vrot.lane.b32.xlu0 %v4993, 64
    %v4998 = vpop.permute.xlu0 %4997
    %4999 = vrot.lane.b32.xlu0 %v4994, 64
    %v5000 = vpop.permute.xlu0 %4999
    %v5003 = vmul.f32 %v4990, %v4998
    %v5004 = vmul.f32 %v4992, %v5000
    %5007 = vrot.lane.b32.xlu0 %v5003, 64
    %v5008 = vpop.permute.xlu0 %5007
    %5009 = vrot.lane.b32.xlu0 %v5004, 64
    %v5010 = vpop.permute.xlu0 %5009
    %v5013 = vadd.f32 %v4898, %v5008
    %v5014 = vadd.f32 %v4899, %v5010
    %v5015 = vtanh.pop %v5013
    %v5016 = vtanh.pop %v5014
    %v5017 = vsub.f32 1.0, %v4990
    %v5018 = vsub.f32 1.0, %v4992
    %5021 = vrot.lane.b32.xlu0 %v5015, 96
    %v5022 = vpop.permute.xlu0 %5021
    %5023 = vrot.lane.b32.xlu0 %v5016, 96
    %v5024 = vpop.permute.xlu0 %5023
    %v5027 = vmul.f32 %v5017, %v5022
    %v5028 = vmul.f32 %v5018, %v5024
    %v5029 = vmul.f32 %v4990, %v4743
    %v5030 = vmul.f32 %v4992, %v4744
    %v5031 = vadd.f32 %v5027, %v5029
    %v5032 = vadd.f32 %v5028, %v5030
    %5035 = vrot.lane.b32.xlu0 %v5031, 96
    %v5036 = vpop.permute.xlu0 %5035
    %5037 = vrot.lane.b32.xlu0 %v5032, 96
    %v5038 = vpop.permute.xlu0 %5037
    %5041 = vst.msk [vmem:[%s3155] sm:$0xff] %vm524, %v5036
    %5042 = vst.msk [vmem:[%s3155 + $0x8] sm:$0xff] %vm524, %v5038
    %v5043 = vld [vmem:[%s441] sm:$0xff]
    %v5044 = vld [vmem:[%s441 + $0x8] sm:$0xff]
    %5047 = vrot.lane.b32.xlu0 %v4894, 96
    %v5048 = vpop.permute.xlu0 %5047
    %5049 = vrot.lane.b32.xlu0 %v4895, 96
    %v5050 = vpop.permute.xlu0 %5049
    %v5051 = vsel %vm524, %v5048, 0
    %v5053 = vsel %vm524, %v5050, 0
    %5055 = vmatprep.subr.mxu0 0.0
    %5056 = vmatpush1.msra.mxu0 0.0
    %5057 = vmatprep.subr.mxu0 0.0
    %5058 = vmatpush1.msra.mxu0 0.0
    %5059 = vmatprep.subr.mxu0 0.0
    %5060 = vmatpush1.msra.mxu0 0.0
    %5061 = vmatprep.subr.mxu0 0.0
    %5062 = vmatpush1.msra.mxu0 0.0
    %5063 = vmatprep.subr.mxu0 0.0
    %5064 = vmatpush1.msra.mxu0 0.0
    %5065 = vmatprep.subr.mxu0 0.0
    %5066 = vmatpush1.msra.mxu0 0.0
    %5067 = vmatprep.subr.mxu0 0.0
    %5068 = vmatpush1.msra.mxu0 0.0
    %5069 = vmatprep.subr.mxu0 0.0
    %5070 = vmatpush1.msra.mxu0 0.0
    %5071 = vmatprep.subr.mxu0 0.0
    %5072 = vmatpush1.msra.mxu0 0.0
    %5073 = vmatprep.subr.mxu0 0.0
    %5074 = vmatpush1.msra.mxu0 0.0
    %5075 = vmatprep.subr.mxu0 0.0
    %5076 = vmatpush1.msra.mxu0 0.0
    %5077 = vmatprep.subr.mxu0 0.0
    %5078 = vmatpush1.msra.mxu0 0.0
    %5079 = vmatprep.subr.mxu0 0.0
    %5080 = vmatpush1.msra.mxu0 %v3048
    %5081 = vmatprep.subr.mxu0 0.0
    %5082 = vmatpush1.msra.mxu0 %v3047
    %5083 = vmatprep.subr.mxu0 0.0
    %5084 = vmatpush1.msra.mxu0 %v3046
    %5085 = vmatprep.subr.mxu0 0.0
    %5086 = vmatpush1.msra.mxu0 %v3045
    %5087 = vmatprep.subr.mxu0 0.0
    %5088 = vmatpush2.msra.mxu0 0.0
    %5089 = vmatprep.subr.mxu0 0.0
    %5090 = vmatpush2.msra.mxu0 0.0
    %5091 = vmatprep.subr.mxu0 0.0
    %5092 = vmatpush2.msra.mxu0 0.0
    %5093 = vmatprep.subr.mxu0 0.0
    %5094 = vmatpush2.msra.mxu0 0.0
    %5095 = vmatprep.subr.mxu0 0.0
    %5096 = vmatpush2.msra.mxu0 0.0
    %5097 = vmatprep.subr.mxu0 0.0
    %5098 = vmatpush2.msra.mxu0 0.0
    %5099 = vmatprep.subr.mxu0 0.0
    %5100 = vmatpush2.msra.mxu0 0.0
    %5101 = vmatprep.subr.mxu0 0.0
    %5102 = vmatpush2.msra.mxu0 0.0
    %5103 = vmatprep.subr.mxu0 0.0
    %5104 = vmatpush2.msra.mxu0 0.0
    %5105 = vmatprep.subr.mxu0 0.0
    %5106 = vmatpush2.msra.mxu0 0.0
    %5107 = vmatprep.subr.mxu0 0.0
    %5108 = vmatpush2.msra.mxu0 0.0
    %5109 = vmatprep.subr.mxu0 0.0
    %5110 = vmatpush2.msra.mxu0 0.0
    %5111 = vmatprep.subr.mxu0 0.0
    %5112 = vmatpush2.msra.mxu0 0.0
    %5113 = vmatprep.subr.mxu0 0.0
    %5114 = vmatpush2.msra.mxu0 0.0
    %5115 = vmatprep.subr.mxu0 0.0
    %5116 = vmatpush2.msra.mxu0 0.0
    %5117 = vmatprep.subr.mxu0 0.0
    %5118 = vmatpush2.msra.mxu0 0.0
    %5119 = vmatprep.mubr.f32.mxu0 0.0
    %5120 = vmatmul.mubr.f32.gmra.mxu0 %v5051
    %v5121 = vpop.f32.mrf.mxu0
    %v5122 = vadd.f32 0.0, %v5121
    %v5123 = vpop.f32.mrf.mxu0
    %5124 = vmatprep.mubr.f32.mxu0 0.0
    %5125 = vmatmul.mubr.f32.gmra.mxu0 %v5053
    %v5126 = vpop.f32.mrf.mxu0
    %v5127 = vadd.f32 0.0, %v5126
    %v5128 = vpop.f32.mrf.mxu0
    %5129 = vdwg.mxu0
    %v5130 = vadd.f32 %v5043, %v5122
    %v5131 = vadd.f32 %v5044, %v5127
    %v5132 = vxor.u32 %v5130, 2147483648
    %v5133 = vxor.u32 %v5131, 2147483648
    %v5134 = vmul.f32 %v5132, 1.442695
    %v5135 = vpow.pop %v5134
    %v5136 = vmul.f32 %v5133, 1.442695
    %v5137 = vpow.pop %v5136
    %v5138 = vadd.f32 %v5135, 1.0
    %v5139 = vadd.f32 %v5137, 1.0
    %v5140 = vrcp.pop %v5138
    %v5141 = vmul.f32 1.0, %v5140
    %v5142 = vrcp.pop %v5139
    %v5143 = vmul.f32 1.0, %v5142
    %v5144 = vadd.f32 %v5122, %v3409
    %v5145 = vadd.f32 %v5127, %v3409
    %5148 = vrot.lane.b32.xlu0 %v5144, 64
    %v5149 = vpop.permute.xlu0 %5148
    %5150 = vrot.lane.b32.xlu0 %v5145, 64
    %v5151 = vpop.permute.xlu0 %5150
    %v5154 = vmul.f32 %v5141, %v5149
    %v5155 = vmul.f32 %v5143, %v5151
    %5158 = vrot.lane.b32.xlu0 %v5154, 64
    %v5159 = vpop.permute.xlu0 %5158
    %5160 = vrot.lane.b32.xlu0 %v5155, 64
    %v5161 = vpop.permute.xlu0 %5160
    %v5164 = vadd.f32 %v5043, %v5159
    %v5165 = vadd.f32 %v5044, %v5161
    %v5166 = vtanh.pop %v5164
    %v5167 = vtanh.pop %v5165
    %v5168 = vsub.f32 1.0, %v5141
    %v5169 = vsub.f32 1.0, %v5143
    %5172 = vrot.lane.b32.xlu0 %v5166, 96
    %v5173 = vpop.permute.xlu0 %5172
    %5174 = vrot.lane.b32.xlu0 %v5167, 96
    %v5175 = vpop.permute.xlu0 %5174
    %v5178 = vmul.f32 %v5168, %v5173
    %v5179 = vmul.f32 %v5169, %v5175
    %v5180 = vmul.f32 %v5141, %v4894
    %v5181 = vmul.f32 %v5143, %v4895
    %v5182 = vadd.f32 %v5178, %v5180
    %v5183 = vadd.f32 %v5179, %v5181
    %5184 = vst.msk [vmem:[#allocation4] sm:$0xff] %vm575, %v5182
    %5185 = vst.msk [vmem:[#allocation4 + $0x8] sm:$0xff] %vm575, %v5183
    %v5186 = vld [vmem:[#allocation4] sm:$0xff]
    %v5187 = vld [vmem:[#allocation4 + $0x8] sm:$0xff]
    %v5188 = vld [vmem:[#allocation4 + $0x10] sm:$0xff]
    %v5189 = vld [vmem:[#allocation4 + $0x18] sm:$0xff]
    %v5190 = vld [vmem:[#allocation4 + $0x20] sm:$0xff]
    %v5191 = vld [vmem:[#allocation4 + $0x28] sm:$0xff]
    %v5192 = vld [vmem:[#allocation4 + $0x30] sm:$0xff]
    %v5193 = vld [vmem:[#allocation4 + $0x38] sm:$0xff]
    %v5194 = vld [vmem:[#allocation4 + $0x40] sm:$0xff]
    %v5195 = vld [vmem:[#allocation4 + $0x48] sm:$0xff]
    %v5196 = vld [vmem:[#allocation4 + $0x50] sm:$0xff]
    %v5197 = vld [vmem:[#allocation4 + $0x58] sm:$0xff]
    %v5198 = vld [vmem:[#allocation4 + $0x60] sm:$0xff]
    %v5199 = vld [vmem:[#allocation4 + $0x68] sm:$0xff]
    %v5200 = vld [vmem:[#allocation4 + $0x70] sm:$0xff]
    %v5201 = vld [vmem:[#allocation4 + $0x78] sm:$0xff]
    %v5202 = vsel %vm2651, %v5186, 0.0
    %v5203 = vsel %vm2651, %v5187, 0.0
    %v5204 = vadd.f32 %v5202, %v5203
    %v5205 = vrot.slane %v5204, 4
    %v5206 = vadd.f32 %v5204, %v5205
    %v5207 = vrot.slane %v5206, 2
    %v5208 = vadd.f32 %v5206, %v5207
    %v5209 = vrot.slane %v5208, 1
    %v5210 = vadd.f32 %v5208, %v5209
    %v5211 = vsel %vm2651, %v5188, 0.0
    %v5212 = vsel %vm2651, %v5189, 0.0
    %v5213 = vadd.f32 %v5211, %v5212
    %v5214 = vrot.slane %v5213, 4
    %v5215 = vadd.f32 %v5213, %v5214
    %v5216 = vrot.slane %v5215, 2
    %v5217 = vadd.f32 %v5215, %v5216
    %v5218 = vrot.slane %v5217, 1
    %v5219 = vadd.f32 %v5217, %v5218
    %v5220 = vsel %vm2651, %v5190, 0.0
    %v5221 = vsel %vm2651, %v5191, 0.0
    %v5222 = vadd.f32 %v5220, %v5221
    %v5223 = vrot.slane %v5222, 4
    %v5224 = vadd.f32 %v5222, %v5223
    %v5225 = vrot.slane %v5224, 2
    %v5226 = vadd.f32 %v5224, %v5225
    %v5227 = vrot.slane %v5226, 1
    %v5228 = vadd.f32 %v5226, %v5227
    %v5229 = vsel %vm2651, %v5192, 0.0
    %v5230 = vsel %vm2651, %v5193, 0.0
    %v5231 = vadd.f32 %v5229, %v5230
    %v5232 = vrot.slane %v5231, 4
    %v5233 = vadd.f32 %v5231, %v5232
    %v5234 = vrot.slane %v5233, 2
    %v5235 = vadd.f32 %v5233, %v5234
    %v5236 = vrot.slane %v5235, 1
    %v5237 = vadd.f32 %v5235, %v5236
    %v5238 = vsel %vm2651, %v5194, 0.0
    %v5239 = vsel %vm2651, %v5195, 0.0
    %v5240 = vadd.f32 %v5238, %v5239
    %v5241 = vrot.slane %v5240, 4
    %v5242 = vadd.f32 %v5240, %v5241
    %v5243 = vrot.slane %v5242, 2
    %v5244 = vadd.f32 %v5242, %v5243
    %v5245 = vrot.slane %v5244, 1
    %v5246 = vadd.f32 %v5244, %v5245
    %v5247 = vsel %vm2651, %v5196, 0.0
    %v5248 = vsel %vm2651, %v5197, 0.0
    %v5249 = vadd.f32 %v5247, %v5248
    %v5250 = vrot.slane %v5249, 4
    %v5251 = vadd.f32 %v5249, %v5250
    %v5252 = vrot.slane %v5251, 2
    %v5253 = vadd.f32 %v5251, %v5252
    %v5254 = vrot.slane %v5253, 1
    %v5255 = vadd.f32 %v5253, %v5254
    %v5256 = vsel %vm2651, %v5198, 0.0
    %v5257 = vsel %vm2651, %v5199, 0.0
    %v5258 = vadd.f32 %v5256, %v5257
    %v5259 = vrot.slane %v5258, 4
    %v5260 = vadd.f32 %v5258, %v5259
    %v5261 = vrot.slane %v5260, 2
    %v5262 = vadd.f32 %v5260, %v5261
    %v5263 = vrot.slane %v5262, 1
    %v5264 = vadd.f32 %v5262, %v5263
    %v5265 = vsel %vm2651, %v5200, 0.0
    %v5266 = vsel %vm2651, %v5201, 0.0
    %v5267 = vadd.f32 %v5265, %v5266
    %v5268 = vrot.slane %v5267, 4
    %v5269 = vadd.f32 %v5267, %v5268
    %v5270 = vrot.slane %v5269, 2
    %v5271 = vadd.f32 %v5269, %v5270
    %v5272 = vrot.slane %v5271, 1
    %v5273 = vadd.f32 %v5271, %v5272
    %v5274 = vrcp.pop 16.0
    %v5275 = vmul.f32 %v5210, %v5274
    %v5276 = vmul.f32 %v5219, %v5274
    %v5277 = vmul.f32 %v5228, %v5274
    %v5278 = vmul.f32 %v5237, %v5274
    %v5279 = vmul.f32 %v5246, %v5274
    %v5280 = vmul.f32 %v5255, %v5274
    %v5281 = vmul.f32 %v5264, %v5274
    %v5282 = vmul.f32 %v5273, %v5274
    %v5283 = vld [vmem:[%s6] sm:$0xff]
    %v5284 = vld [vmem:[%s6 + $0x8] sm:$0xff]
    %v5285 = vld [vmem:[%s6 + $0x10] sm:$0xff]
    %v5286 = vld [vmem:[%s6 + $0x18] sm:$0xff]
    %v5287 = vld [vmem:[%s6 + $0x20] sm:$0xff]
    %v5288 = vld [vmem:[%s6 + $0x28] sm:$0xff]
    %v5289 = vld [vmem:[%s6 + $0x30] sm:$0xff]
    %v5290 = vld [vmem:[%s6 + $0x38] sm:$0xff]
    %v5291 = vld [vmem:[%s7] sm:$0x1]
    %v5293 = vlaneseq
    %v5294 = vshrl.u32 %v5293, 7
    %v5295 = vsub.s32 0, %v5294
    %v5296 = vrot.slane %v5291, %v5295
    %vm5306 = vcmask 1041409
    %v5307 = vsel %vm5306, %v5276, %v5275
    %vm5308 = vcmask 1042434
    %v5309 = vsel %vm5308, %v5277, %v5307
    %vm5310 = vcmask 1043459
    %v5311 = vsel %vm5310, %v5278, %v5309
    %vm5312 = vcmask 1044484
    %v5313 = vsel %vm5312, %v5279, %v5311
    %vm5314 = vcmask 1045509
    %v5315 = vsel %vm5314, %v5280, %v5313
    %vm5316 = vcmask 1046534
    %v5317 = vsel %vm5316, %v5281, %v5315
    %vm5318 = vcmask 1047559
    %v5319 = vsel %vm5318, %v5282, %v5317
    %v5320 = vsel %vm2651, %v5319, 0
    %5322 = vmatprep.subr.mxu0 0.0
    %5323 = vmatpush1.msra.mxu0 0.0
    %5324 = vmatprep.subr.mxu0 0.0
    %5325 = vmatpush1.msra.mxu0 0.0
    %5326 = vmatprep.subr.mxu0 0.0
    %5327 = vmatpush1.msra.mxu0 0.0
    %5328 = vmatprep.subr.mxu0 0.0
    %5329 = vmatpush1.msra.mxu0 0.0
    %5330 = vmatprep.subr.mxu0 0.0
    %5331 = vmatpush1.msra.mxu0 0.0
    %5332 = vmatprep.subr.mxu0 0.0
    %5333 = vmatpush1.msra.mxu0 0.0
    %5334 = vmatprep.subr.mxu0 0.0
    %5335 = vmatpush1.msra.mxu0 0.0
    %5336 = vmatprep.subr.mxu0 0.0
    %5337 = vmatpush1.msra.mxu0 0.0
    %5338 = vmatprep.subr.mxu0 0.0
    %5339 = vmatpush1.msra.mxu0 %v5290
    %5340 = vmatprep.subr.mxu0 0.0
    %5341 = vmatpush1.msra.mxu0 %v5289
    %5342 = vmatprep.subr.mxu0 0.0
    %5343 = vmatpush1.msra.mxu0 %v5288
    %5344 = vmatprep.subr.mxu0 0.0
    %5345 = vmatpush1.msra.mxu0 %v5287
    %5346 = vmatprep.subr.mxu0 0.0
    %5347 = vmatpush1.msra.mxu0 %v5286
    %5348 = vmatprep.subr.mxu0 0.0
    %5349 = vmatpush1.msra.mxu0 %v5285
    %5350 = vmatprep.subr.mxu0 0.0
    %5351 = vmatpush1.msra.mxu0 %v5284
    %5352 = vmatprep.subr.mxu0 0.0
    %5353 = vmatpush1.msra.mxu0 %v5283
    %5354 = vmatprep.subr.mxu0 0.0
    %5355 = vmatpush2.msra.mxu0 0.0
    %5356 = vmatprep.subr.mxu0 0.0
    %5357 = vmatpush2.msra.mxu0 0.0
    %5358 = vmatprep.subr.mxu0 0.0
    %5359 = vmatpush2.msra.mxu0 0.0
    %5360 = vmatprep.subr.mxu0 0.0
    %5361 = vmatpush2.msra.mxu0 0.0
    %5362 = vmatprep.subr.mxu0 0.0
    %5363 = vmatpush2.msra.mxu0 0.0
    %5364 = vmatprep.subr.mxu0 0.0
    %5365 = vmatpush2.msra.mxu0 0.0
    %5366 = vmatprep.subr.mxu0 0.0
    %5367 = vmatpush2.msra.mxu0 0.0
    %5368 = vmatprep.subr.mxu0 0.0
    %5369 = vmatpush2.msra.mxu0 0.0
    %5370 = vmatprep.subr.mxu0 0.0
    %5371 = vmatpush2.msra.mxu0 0.0
    %5372 = vmatprep.subr.mxu0 0.0
    %5373 = vmatpush2.msra.mxu0 0.0
    %5374 = vmatprep.subr.mxu0 0.0
    %5375 = vmatpush2.msra.mxu0 0.0
    %5376 = vmatprep.subr.mxu0 0.0
    %5377 = vmatpush2.msra.mxu0 0.0
    %5378 = vmatprep.subr.mxu0 0.0
    %5379 = vmatpush2.msra.mxu0 0.0
    %5380 = vmatprep.subr.mxu0 0.0
    %5381 = vmatpush2.msra.mxu0 0.0
    %5382 = vmatprep.subr.mxu0 0.0
    %5383 = vmatpush2.msra.mxu0 0.0
    %5384 = vmatprep.subr.mxu0 0.0
    %5385 = vmatpush2.msra.mxu0 0.0
    %5386 = vmatprep.mubr.f32.mxu0 0.0
    %5387 = vmatmul.mubr.f32.gmra.mxu0 %v5320
    %v5388 = vpop.f32.mrf.mxu0
    %v5389 = vadd.f32 %v5296, %v5388
    %v5390 = vpop.f32.mrf.mxu0
    %5391 = vdwg.mxu0
    %vm5392 = vcmask 39936
    %5393 = vst.msk [vmem:[#allocation8] sm:$0xff] %vm5392, %v5389
    // Predicated region
    $region38: #{_lambda_.1} parent=1 // pred_check
      _
    $region39: #{_lambda_.1} parent=1 // pred_check_branch
      %5395 = sbr.rel (0) target = $region41
    $region40: #{_lambda_.1} parent=1 // pred_region
      %s5397 = ssub.s32 128, 128
      %5398 = vsyncadd [#allocation7], %s5397
      %s5400 = sshll.u32 [#allocation8], 4
      %s5401 = int_to_ptr.vmem [resolvable:$true] %s5400
      %5403 = dma.vmem_to_hbm [thread:$0]  %s5401, 128, %s8, [#allocation7]
    $region41: #{_lambda_.1} parent=1 // pred_fallthru
      _
    // Predicated region
    $region42: #{_lambda_.1} parent=1 // pred_check
      _
    $region43: #{_lambda_.1} parent=1 // pred_check_branch
      %5405 = sbr.rel (0) target = $region45
    $region44: #{_lambda_.1} parent=1 // pred_region
      %5406 = dma.done [#allocation7], 128
    $region45: #{_lambda_.1} parent=1 // pred_fallthru
      _
    %5407 = vsyncpa [#allocation6], 1
    %5408 = vsyncpa [#allocation7], 1

</llo_original>
